<compile_context>
chip_gen: v7x
topology: tpu7x:2x2x1
jax: 0.10.0
libtpu: 0.0.40
codegen_flags: <defaults>
</compile_context>

<pallas_src>
import functools
import math

import jax
import jax.numpy as jnp
from jax.experimental import pallas as pl
from jax.experimental.pallas import tpu as pltpu

LN_EPS = 1e-12
_COMPUTE_DTYPE = jnp.bfloat16   # MXU operand dtype; accumulation is float32


# ----------------------------------------------------------------------------
# in-kernel helpers (traced inside the Pallas kernel bodies)
# ----------------------------------------------------------------------------
def _layer_norm(x, gamma, beta):
    mu = jnp.mean(x, axis=-1, keepdims=True)
    var = jnp.mean((x - mu) ** 2, axis=-1, keepdims=True)
    return (x - mu) * jax.lax.rsqrt(var + LN_EPS) * gamma + beta


def _softmax_rows(s):
    # f32 logits; stable softmax, divide replaced by EUP reciprocal
    # (approx=True: ~1e-3 rel. error vs an exact divide).
    s = s - jnp.max(s, axis=-1, keepdims=True)
    p = jnp.exp(s)
    return p * pl.reciprocal(jnp.sum(p, axis=-1, keepdims=True), approx=True)


def _split_heads(x, n_head):
    # (rows, D) f32 -> (H, rows, dh) bf16 (lane dim stays dh).
    rows, d = x.shape
    dh = d // n_head
    xr = x.reshape(rows, n_head, dh)
    return pltpu.einshape("rhd->hrd", xr).astype(_COMPUTE_DTYPE)


def _merge_heads(o):
    # (H, rows, dh) f32 -> (rows, D) f32
    h, rows, dh = o.shape
    return pltpu.einshape("hrd->rhd", o).reshape(rows, h * dh)


def _project_q(x_ref, wq_r, bq_r, n_head):
    # 1/sqrt(dh) is folded into wq/bq at pack time (no per-score scale mult).
    q = jnp.dot(x_ref[...].astype(_COMPUTE_DTYPE), wq_r[...],
                preferred_element_type=jnp.float32) + bq_r[...]
    return _split_heads(q, n_head)


def _flash_update(q_sc, k, v, m_sc, l_sc, acc_sc):
    # One online-softmax update over a (H, block_kv, dh) key/value tile.
    s = jnp.einsum("hqd,hkd->hqk", q_sc[...], k,
                   preferred_element_type=jnp.float32)
    m_new = jnp.maximum(m_sc[...], jnp.max(s, axis=-1, keepdims=True))
    alpha = jnp.exp(m_sc[...] - m_new)
    p = jnp.exp(s - m_new)
    l_sc[...] = alpha * l_sc[...] + jnp.sum(p, axis=-1, keepdims=True)
    acc_sc[...] = alpha * acc_sc[...] + jnp.einsum(
        "hqk,hkd->hqd", p.astype(_COMPUTE_DTYPE), v,
        preferred_element_type=jnp.float32)
    m_sc[...] = m_new


def _post_attention_tail(x_q, attn, wo_r, bo_r, g1_r, b1_r, w1_r, bf1_r,
                         w2_r, bf2_r, g2_r, b2_r, o_ref):
    # output projection, residual + LN, FFN (Linear->ReLU->Linear), residual+LN
    out = jnp.dot(attn.astype(_COMPUTE_DTYPE), wo_r[...],
                  preferred_element_type=jnp.float32) + bo_r[...]
    x1 = _layer_norm(x_q + out, g1_r[...], b1_r[...])
    h = jnp.dot(x1.astype(_COMPUTE_DTYPE), w1_r[...],
                preferred_element_type=jnp.float32) + bf1_r[...]
    h = jnp.maximum(h, 0.0)
    h = jnp.dot(h.astype(_COMPUTE_DTYPE), w2_r[...],
                preferred_element_type=jnp.float32) + bf2_r[...]
    o_ref[...] = _layer_norm(x1 + h, g2_r[...], b2_r[...])


# ----------------------------------------------------------------------------
# Pallas kernels
# ----------------------------------------------------------------------------
def kv_project_kernel(n_head, x_ref, wkv_r, bkv_r, k_ref, v_ref):
    """Fused K/V projection + head split, computed ONCE per layer."""
    rows, d = x_ref.shape
    kv = jnp.dot(x_ref[...].astype(_COMPUTE_DTYPE), wkv_r[...],
                 preferred_element_type=jnp.float32) + bkv_r[...]
    k_ref[...] = _split_heads(kv[:, :d], n_head)     # (H, rows, dh) bf16
    v_ref[...] = _split_heads(kv[:, d:], n_head)     # (H, rows, dh) bf16


def attn_layer_kernel(n_head,
                      x_ref, k_ref, v_ref,
                      wq_r, bq_r, wo_r, bo_r,
                      g1_r, b1_r, w1_r, bf1_r, w2_r, bf2_r, g2_r, b2_r,
                      o_ref,
                      q_sc, m_sc, l_sc, acc_sc):
    ki = pl.program_id(2)

    @pl.when(ki == 0)
    def _():
        q_sc[...] = _project_q(x_ref, wq_r, bq_r, n_head)
        m_sc[...] = jnp.full(m_sc.shape, -jnp.inf, m_sc.dtype)
        l_sc[...] = jnp.zeros(l_sc.shape, l_sc.dtype)
        acc_sc[...] = jnp.zeros(acc_sc.shape, acc_sc.dtype)

    # TODO(synk): the reference AttentionLayer applies no causal mask here.
    _flash_update(q_sc, k_ref[...], v_ref[...], m_sc, l_sc, acc_sc)

    @pl.when(ki == pl.num_programs(2) - 1)
    def _():
        attn = _merge_heads(acc_sc[...] * pl.reciprocal(l_sc[...], approx=True))
        _post_attention_tail(x_ref[...], attn, wo_r, bo_r, g1_r, b1_r,
                             w1_r, bf1_r, w2_r, bf2_r, g2_r, b2_r, o_ref)


def mem_layer_kernel(n_head,
                     x_ref, k_ref, v_ref, mem_k_ref, mem_v_ref, mem_bias_ref,
                     gate_loc_ref, gate_mem_ref,
                     wq_r, bq_r, wo_r, bo_r,
                     g1_r, b1_r, w1_r, bf1_r, w2_r, bf2_r, g2_r, b2_r,
                     o_ref,
                     q_sc, m_sc, l_sc, acc_sc):
    ki = pl.program_id(2)

    @pl.when(ki == 0)
    def _():
        q_sc[...] = _project_q(x_ref, wq_r, bq_r, n_head)
        m_sc[...] = jnp.full(m_sc.shape, -jnp.inf, m_sc.dtype)
        l_sc[...] = jnp.zeros(l_sc.shape, l_sc.dtype)
        acc_sc[...] = jnp.zeros(acc_sc.shape, acc_sc.dtype)

    # local self-attention (flash / online-softmax over key tiles)
    _flash_update(q_sc, k_ref[...], v_ref[...], m_sc, l_sc, acc_sc)

    @pl.when(ki == pl.num_programs(2) - 1)
    def _():
        o_loc = _merge_heads(acc_sc[...] * pl.reciprocal(l_sc[...], approx=True))

        # attention over stored memory keys/values (max inner product retrieval)
        # TODO(synk): the reference retrieves memories via an approximate kNN
        # (faiss) index; here it is exact attention over the whole buffer.
        # TODO(synk): for production memory sizes (M >> VMEM) stream
        # mem_k/mem_v from HBM (pl.ANY + double-buffered pltpu.make_async_copy
        # over M-tiles with an online softmax) instead of keeping it resident.
        s_mem = jnp.einsum("hqd,hmd->hqm", q_sc[...], mem_k_ref[...],
                           preferred_element_type=jnp.float32) + mem_bias_ref[...]
        o_mem = _merge_heads(jnp.einsum(
            "hqm,hmd->hqd", _softmax_rows(s_mem).astype(_COMPUTE_DTYPE),
            mem_v_ref[...], preferred_element_type=jnp.float32))

        # gate_mem is pre-zeroed in the wrapper when no memory slot is valid.
        attn = gate_loc_ref[...] * o_loc + gate_mem_ref[...] * o_mem
        _post_attention_tail(x_ref[...], attn, wo_r, bo_r, g1_r, b1_r,
                             w1_r, bf1_r, w2_r, bf2_r, g2_r, b2_r, o_ref)


# ----------------------------------------------------------------------------
# wrappers (pallas_call plumbing)
# ----------------------------------------------------------------------------
_ATTN_KEYS = ("wq", "bq", "wo", "bo", "g1", "b1",
              "w1", "bf1", "w2", "bf2", "g2", "b2")

_BLOCK_CANDIDATES = (512, 256, 128, 64, 32, 16)


@functools.lru_cache(maxsize=None)
def _vmem_limit_bytes():
    # per-chip VMEM budget with headroom: ~56 MiB on v7x (64 MiB physical),
    # ~112 MiB on v5e/v6e (128 MiB physical).
    try:
        cap = int(pltpu.get_tpu_info().vmem_capacity_bytes)
    except Exception:
        cap = 128 * 1024 * 1024
    return (cap // 8) * 7


def _compiler_params(dim_sem):
    return pltpu.CompilerParams(dimension_semantics=dim_sem,
                                vmem_limit_bytes=_vmem_limit_bytes())


def _pick_block(n):
    if n <= 512:
        return n
    for c in _BLOCK_CANDIDATES:
        if n % c == 0:
            return c
    return n


def _pick_block_q(seq_len, batch):
    bq = _pick_block(seq_len)
    # v7x megacore: keep the "parallel" grid product >= 2 when possible.
    if batch * (seq_len // bq) < 2 and seq_len % 16 == 0:
        bq = seq_len // 2
    return bq


def _const_spec(a):
    # Constant operand: constant index map + single buffering (no prefetch
    # benefit, half the VMEM footprint).
    nd = a.ndim
    return pl.BlockSpec(a.shape, lambda *_: (0,) * nd,
                        pipeline_mode=pl.Buffered(1))


def _flash_scratch(n_head, block_q, dh):
    return [pltpu.VMEM((n_head, block_q, dh), _COMPUTE_DTYPE),   # q (scaled)
            pltpu.VMEM((n_head, block_q, 1), jnp.float32),       # running max
            pltpu.VMEM((n_head, block_q, 1), jnp.float32),       # running sum
            pltpu.VMEM((n_head, block_q, dh), jnp.float32)]      # running acc


def kv_project(x, packed, n_head):
    """Per-layer K/V projection + head split, hoisted out of the query grid."""
    B, S, D = x.shape
    dh = D // n_head
    block_s = _pick_block(S)
    n_sb = S // block_s
    wkv, bkv = packed["wkv"], packed["bkv"]
    x_spec = pl.BlockSpec((None, block_s, D), lambda b, s: (b, s, 0))
    kv_spec = pl.BlockSpec((None, n_head, block_s, dh), lambda b, s: (b, 0, s, 0))
    return pl.pallas_call(
        functools.partial(kv_project_kernel, n_head),
        out_shape=(jax.ShapeDtypeStruct((B, n_head, S, dh), _COMPUTE_DTYPE),
                   jax.ShapeDtypeStruct((B, n_head, S, dh), _COMPUTE_DTYPE)),
        grid=(B, n_sb),
        in_specs=[x_spec, _const_spec(wkv), _const_spec(bkv)],
        out_specs=(kv_spec, kv_spec),
        compiler_params=_compiler_params(("parallel", "parallel")),
    )(x, wkv, bkv)


def attention_layer(x, packed, n_head):
    B, S, D = x.shape
    dh = D // n_head
    k, v = kv_project(x, packed, n_head)

    block_q = _pick_block_q(S, B)
    block_kv = _pick_block(S)
    n_qb, n_kb = S // block_q, S // block_kv
    weights = [packed[name] for name in _ATTN_KEYS]

    x_spec = pl.BlockSpec((None, block_q, D), lambda b, qi, ki: (b, qi, 0))
    kv_spec = pl.BlockSpec((None, n_head, block_kv, dh),
                           lambda b, qi, ki: (b, 0, ki, 0))
    out_spec = pl.BlockSpec((None, block_q, D), lambda b, qi, ki: (b, qi, 0))

    return pl.pallas_call(
        functools.partial(attn_layer_kernel, n_head),
        out_shape=jax.ShapeDtypeStruct((B, S, D), jnp.float32),
        grid=(B, n_qb, n_kb),
        in_specs=[x_spec, kv_spec, kv_spec] + [_const_spec(w) for w in weights],
        out_specs=out_spec,
        scratch_shapes=_flash_scratch(n_head, block_q, dh),
        compiler_params=_compiler_params(("parallel", "parallel", "arbitrary")),
    )(x, k, v, *weights)


def memorizing_layer(x, packed, mem_k, mem_v, mem_bias, gate_loc, gate_mem,
                     n_head):
    B, S, D = x.shape
    dh = D // n_head
    k, v = kv_project(x, packed, n_head)

    block_q = _pick_block_q(S, B)
    block_kv = _pick_block(S)
    n_qb, n_kb = S // block_q, S // block_kv
    _, H, M, _ = mem_k.shape
    weights = [packed[name] for name in _ATTN_KEYS]

    x_spec = pl.BlockSpec((None, block_q, D), lambda b, qi, ki: (b, qi, 0))
    kv_spec = pl.BlockSpec((None, n_head, block_kv, dh),
                           lambda b, qi, ki: (b, 0, ki, 0))
    mem_spec = pl.BlockSpec((None, H, M, dh), lambda b, qi, ki: (b, 0, 0, 0),
                            pipeline_mode=pl.Buffered(1))
    out_spec = pl.BlockSpec((None, block_q, D), lambda b, qi, ki: (b, qi, 0))

    return pl.pallas_call(
        functools.partial(mem_layer_kernel, n_head),
        out_shape=jax.ShapeDtypeStruct((B, S, D), jnp.float32),
        grid=(B, n_qb, n_kb),
        in_specs=[x_spec, kv_spec, kv_spec, mem_spec, mem_spec,
                  _const_spec(mem_bias), _const_spec(gate_loc),
                  _const_spec(gate_mem)] + [_const_spec(w) for w in weights],
        out_specs=out_spec,
        scratch_shapes=_flash_scratch(n_head, block_q, dh),
        compiler_params=_compiler_params(("parallel", "parallel", "arbitrary")),
    )(x, k, v, mem_k, mem_v, mem_bias, gate_loc, gate_mem, *weights)


# ----------------------------------------------------------------------------
# one-time parameter packing (hoisted out of the forward pass)
# ----------------------------------------------------------------------------
def pack_layer_params(p, n_head):
    """Fuse K/V projection weights, fold 1/sqrt(dh) into the Q projection,
    cast matmul weights to bf16.  Biases / LN params stay f32."""
    d_model = p["wq"].shape[0]
    scale = 1.0 / math.sqrt(d_model // n_head)
    return {
        "wq": (p["wq"] * scale).astype(_COMPUTE_DTYPE),
        "bq": p["bq"] * scale,
        "wkv": jnp.concatenate([p["wk"], p["wv"]], axis=1).astype(_COMPUTE_DTYPE),
        "bkv": jnp.concatenate([p["bk"], p["bv"]], axis=1),
        "wo": p["wo"].astype(_COMPUTE_DTYPE), "bo": p["bo"],
        "g1": p["g1"], "b1": p["b1"],
        "w1": p["w1"].astype(_COMPUTE_DTYPE), "bf1": p["bf1"],
        "w2": p["w2"].astype(_COMPUTE_DTYPE), "bf2": p["bf2"],
        "g2": p["g2"], "b2": p["b2"],
    }


def pack_model_params(params, n_head):
    D = params["tok_emb"].shape[1]
    dh = D // n_head
    # per-head sigmoid gate expanded to a per-channel (1, D) vector;
    # the memory branch is zeroed if no memory slot is valid (reset() state).
    gate_vec = jnp.repeat(jax.nn.sigmoid(params["mem_gate"]), dh, axis=1)
    has_mem = (jnp.max(params["mem_mask"]) > 0).astype(jnp.float32)
    return {
        "tok_emb": params["tok_emb"],
        "pos_emb": params["pos_emb"],
        "layers1": [pack_layer_params(p, n_head) for p in params["layers1"]],
        "mem_layer": pack_layer_params(params["mem_layer"], n_head),
        "layers2": [pack_layer_params(p, n_head) for p in params["layers2"]],
        "mem_k": params["mem_k"].astype(_COMPUTE_DTYPE),
        "mem_v": params["mem_v"].astype(_COMPUTE_DTYPE),
        # additive bias: 0 for valid slots, -1e30 for empty (kept in f32)
        "mem_bias": (params["mem_mask"] - 1.0) * 1e30,
        "gate_loc": 1.0 - gate_vec,
        "gate_mem": gate_vec * has_mem,
    }


# ----------------------------------------------------------------------------
# parameter init + embedding glue (plain JAX)
# ----------------------------------------------------------------------------
def init_layer_params(key, d_model, ffn_hidden):
    ks = jax.random.split(key, 6)

    def lin(k, din, dout):
        w = jax.random.normal(k, (din, dout), jnp.float32) * 0.02
        b = jnp.zeros((1, dout), jnp.float32)
        return w, b

    p = {}
    p["wq"], p["bq"] = lin(ks[0], d_model, d_model)
    p["wk"], p["bk"] = lin(ks[1], d_model, d_model)
    p["wv"], p["bv"] = lin(ks[2], d_model, d_model)
    p["wo"], p["bo"] = lin(ks[3], d_model, d_model)
    p["g1"] = jnp.ones((1, d_model), jnp.float32)
    p["b1"] = jnp.zeros((1, d_model), jnp.float32)
    p["w1"], p["bf1"] = lin(ks[4], d_model, ffn_hidden)
    p["w2"], p["bf2"] = lin(ks[5], ffn_hidden, d_model)
    p["g2"] = jnp.ones((1, d_model), jnp.float32)
    p["b2"] = jnp.zeros((1, d_model), jnp.float32)
    return p


def sinusoidal_pos_encoding(max_len, d_model):
    pos = jnp.arange(max_len, dtype=jnp.float32)[:, None]
    i = jnp.arange(0, d_model, 2, dtype=jnp.float32)[None, :]
    angle = pos / jnp.power(10000.0, i / d_model)
    pe = jnp.zeros((max_len, d_model), jnp.float32)
    pe = pe.at[:, 0::2].set(jnp.sin(angle))
    pe = pe.at[:, 1::2].set(jnp.cos(angle))
    return pe


def memorizing_transformer_forward(ids, packed, n_head):
    # embedding: token embedding gather + sinusoidal positional encoding (glue)
    B, S = ids.shape
    x = packed["tok_emb"][ids] + packed["pos_emb"][:S][None, :, :]
    # dropout omitted (eval mode)

    # layers1 = n_layers // 2 attention layers
    for lp in packed["layers1"]:
        x = attention_layer(x, lp, n_head)

    # memorizing layer (memory buffer is empty right after reset())
    x = memorizing_layer(x, packed["mem_layer"], packed["mem_k"],
                         packed["mem_v"], packed["mem_bias"],
                         packed["gate_loc"], packed["gate_mem"], n_head)

    # layers2 = 1 - n_layers // 2  ->  empty for n_layers = 4
    for lp in packed["layers2"]:
        x = attention_layer(x, lp, n_head)
    return x


if __name__ == "__main__":
    # small config: vocab=50, B=2, S=8, d_model=32, n_head=4, n_layers=4
    vocab_size, B, S, D, H, n_layers = 50, 2, 8, 32, 4, 4
    M = 16                      # memory slots per head (empty after reset)
    dh = D // H
    ffn_hidden = 4 * D
    max_len = 64

    key = jax.random.PRNGKey(0)
    k_ids, k_emb, k_l0, k_l1, k_mem = jax.random.split(key, 5)

    params = {
        "tok_emb": jax.random.normal(k_emb, (vocab_size, D), jnp.float32),
        "pos_emb": sinusoidal_pos_encoding(max_len, D),
        "layers1": [init_layer_params(k_l0, D, ffn_hidden),
                    init_layer_params(k_l1, D, ffn_hidden)],
        "mem_layer": init_layer_params(k_mem, D, ffn_hidden),
        "layers2": [],  # 1 - n_layers//2 = -1  -> empty ModuleList
        # memorizing-layer state right after reset(): empty memory, gate init 0
        "mem_k": jnp.zeros((B, H, M, dh), jnp.float32),
        "mem_v": jnp.zeros((B, H, M, dh), jnp.float32),
        "mem_mask": jnp.zeros((1, M), jnp.float32),   # 0 = slot empty
        "mem_gate": jnp.zeros((1, H), jnp.float32),   # sigmoid(0) = 0.5
    }

    packed = pack_model_params(params, H)             # one-time packing
    ids = jax.random.randint(k_ids, (B, S), 0, vocab_size)

    fwd = jax.jit(functools.partial(memorizing_transformer_forward, n_head=H))
    out = jax.block_until_ready(fwd(ids, packed))
    assert out.shape == (B, S, D)
    assert bool(jnp.all(jnp.isfinite(out)))
    print("KERNEL_OK")
</pallas_src>

<mosaic_0001>
module attributes {stable_mosaic.version = 11 : i64} {
  func.func @kv_project_kernel(%arg0: i32, %arg1: i32, %arg2: memref<1x8x32xf32, #tpu.memory_space<vmem>>, %arg3: memref<32x64xbf16, #tpu.memory_space<vmem>>, %arg4: memref<1x64xf32, #tpu.memory_space<vmem>>, %arg5: memref<1x4x8x8xbf16, #tpu.memory_space<vmem>>, %arg6: memref<1x4x8x8xbf16, #tpu.memory_space<vmem>>) attributes {dimension_semantics = [#tpu.dimension_semantics<parallel>, #tpu.dimension_semantics<parallel>], iteration_bounds = array<i64: 2, 1>, scalar_prefetch = 0 : i64, scratch_operands = 0 : i64, tpu.core_type = #tpu.core_type<tc>, window_params = [{transform_indices = @transform_0, window_bounds = array<i64: 1, 8, 32>}, {pipeline_mode = #tpu.pipeline_mode<synchronous>, transform_indices = @transform_1, window_bounds = array<i64: 32, 64>}, {pipeline_mode = #tpu.pipeline_mode<synchronous>, transform_indices = @transform_2, window_bounds = array<i64: 1, 64>}, {transform_indices = @transform_3, window_bounds = array<i64: 1, 4, 8, 8>}, {transform_indices = @transform_4, window_bounds = array<i64: 1, 4, 8, 8>}]} {
    %c0 = arith.constant 0 : index
    %c0_0 = arith.constant 0 : index
    %c0_1 = arith.constant 0 : index
    %0 = vector.load %arg2[%c0, %c0_0, %c0_1] : memref<1x8x32xf32, #tpu.memory_space<vmem>>, vector<1x8x32xf32>
    %1 = vector.shape_cast %0 : vector<1x8x32xf32> to vector<8x32xf32>
    %2 = arith.truncf %1 : vector<8x32xf32> to vector<8x32xbf16>
    %c0_2 = arith.constant 0 : index
    %c0_3 = arith.constant 0 : index
    %3 = vector.load %arg3[%c0_2, %c0_3] : memref<32x64xbf16, #tpu.memory_space<vmem>>, vector<32x64xbf16>
    %cst = arith.constant dense<0.000000e+00> : vector<8x64xf32>
    %4 = tpu.matmul %2, %3, %cst {dimension_numbers = #tpu.dot_dimension_numbers<[1], [0], [0], [1], [0, 0, 1, 1], [], []>} : vector<8x32xbf16>, vector<32x64xbf16>, vector<8x64xf32> -> vector<8x64xf32>
    %c0_4 = arith.constant 0 : index
    %c0_5 = arith.constant 0 : index
    %5 = vector.load %arg4[%c0_4, %c0_5] : memref<1x64xf32, #tpu.memory_space<vmem>>, vector<1x64xf32>
    %6 = vector.broadcast %5 : vector<1x64xf32> to vector<8x64xf32>
    %7 = arith.addf %4, %6 : vector<8x64xf32>
    %8 = vector.extract_strided_slice %7 {offsets = [0, 0], sizes = [8, 32], strides = [1, 1]} : vector<8x64xf32> to vector<8x32xf32>
    %9 = vector.shape_cast %8 : vector<8x32xf32> to vector<8x4x8xf32>
    %10 = tpu.transpose %9, [1, 0, 2] : vector<8x4x8xf32> -> vector<4x8x8xf32>
    %11 = arith.truncf %10 : vector<4x8x8xf32> to vector<4x8x8xbf16>
    %c0_6 = arith.constant 0 : index
    %c0_7 = arith.constant 0 : index
    %c0_8 = arith.constant 0 : index
    %c0_9 = arith.constant 0 : index
    %12 = vector.load %arg5[%c0_6, %c0_7, %c0_8, %c0_9] : memref<1x4x8x8xbf16, #tpu.memory_space<vmem>>, vector<1x4x8x8xbf16>
    %13 = vector.shape_cast %12 : vector<1x4x8x8xbf16> to vector<4x8x8xbf16>
    %14 = vector.shape_cast %11 : vector<4x8x8xbf16> to vector<1x4x8x8xbf16>
    tpu.vector_store %arg5[%c0_6, %c0_7, %c0_8, %c0_9], %14 {strides = array<i32>} : memref<1x4x8x8xbf16, #tpu.memory_space<vmem>>, vector<1x4x8x8xbf16>,
    %15 = vector.extract_strided_slice %7 {offsets = [0, 32], sizes = [8, 32], strides = [1, 1]} : vector<8x64xf32> to vector<8x32xf32>
    %16 = vector.shape_cast %15 : vector<8x32xf32> to vector<8x4x8xf32>
    %17 = tpu.transpose %16, [1, 0, 2] : vector<8x4x8xf32> -> vector<4x8x8xf32>
    %18 = arith.truncf %17 : vector<4x8x8xf32> to vector<4x8x8xbf16>
    %c0_10 = arith.constant 0 : index
    %c0_11 = arith.constant 0 : index
    %c0_12 = arith.constant 0 : index
    %c0_13 = arith.constant 0 : index
    %19 = vector.load %arg6[%c0_10, %c0_11, %c0_12, %c0_13] : memref<1x4x8x8xbf16, #tpu.memory_space<vmem>>, vector<1x4x8x8xbf16>
    %20 = vector.shape_cast %19 : vector<1x4x8x8xbf16> to vector<4x8x8xbf16>
    %21 = vector.shape_cast %18 : vector<4x8x8xbf16> to vector<1x4x8x8xbf16>
    tpu.vector_store %arg6[%c0_10, %c0_11, %c0_12, %c0_13], %21 {strides = array<i32>} : memref<1x4x8x8xbf16, #tpu.memory_space<vmem>>, vector<1x4x8x8xbf16>,
    return
  }
  func.func @transform_0(%arg0: i32, %arg1: i32) -> (i32, i32, i32) {
    %c0_i32 = arith.constant 0 : i32
    %c0_i32_0 = arith.constant 0 : i32
    return %arg0, %arg1, %c0_i32 : i32, i32, i32
  }
  func.func @transform_1(%arg0: i32, %arg1: i32) -> (i32, i32) {
    %c0_i32 = arith.constant 0 : i32
    %c0_i32_0 = arith.constant 0 : i32
    %c0_i32_1 = arith.constant 0 : i32
    return %c0_i32, %c0_i32_0 : i32, i32
  }
  func.func @transform_2(%arg0: i32, %arg1: i32) -> (i32, i32) {
    %c0_i32 = arith.constant 0 : i32
    %c0_i32_0 = arith.constant 0 : i32
    %c0_i32_1 = arith.constant 0 : i32
    return %c0_i32, %c0_i32_0 : i32, i32
  }
  func.func @transform_3(%arg0: i32, %arg1: i32) -> (i32, i32, i32, i32) {
    %c0_i32 = arith.constant 0 : i32
    %c0_i32_0 = arith.constant 0 : i32
    %c0_i32_1 = arith.constant 0 : i32
    return %arg0, %c0_i32, %arg1, %c0_i32_0 : i32, i32, i32, i32
  }
  func.func @transform_4(%arg0: i32, %arg1: i32) -> (i32, i32, i32, i32) {
    %c0_i32 = arith.constant 0 : i32
    %c0_i32_0 = arith.constant 0 : i32
    %c0_i32_1 = arith.constant 0 : i32
    return %arg0, %c0_i32, %arg1, %c0_i32_0 : i32, i32, i32, i32
  }
}

module attributes {stable_mosaic.version = 11 : i64} {
  func.func @attn_layer_kernel(%arg0: i32, %arg1: i32, %arg2: i32, %arg3: memref<1x8x32xf32, #tpu.memory_space<vmem>>, %arg4: memref<1x4x8x8xbf16, #tpu.memory_space<vmem>>, %arg5: memref<1x4x8x8xbf16, #tpu.memory_space<vmem>>, %arg6: memref<32x32xbf16, #tpu.memory_space<vmem>>, %arg7: memref<1x32xf32, #tpu.memory_space<vmem>>, %arg8: memref<32x32xbf16, #tpu.memory_space<vmem>>, %arg9: memref<1x32xf32, #tpu.memory_space<vmem>>, %arg10: memref<1x32xf32, #tpu.memory_space<vmem>>, %arg11: memref<1x32xf32, #tpu.memory_space<vmem>>, %arg12: memref<32x128xbf16, #tpu.memory_space<vmem>>, %arg13: memref<1x128xf32, #tpu.memory_space<vmem>>, %arg14: memref<128x32xbf16, #tpu.memory_space<vmem>>, %arg15: memref<1x32xf32, #tpu.memory_space<vmem>>, %arg16: memref<1x32xf32, #tpu.memory_space<vmem>>, %arg17: memref<1x32xf32, #tpu.memory_space<vmem>>, %arg18: memref<1x8x32xf32, #tpu.memory_space<vmem>>, %arg19: memref<4x8x8xbf16, #tpu.memory_space<vmem>>, %arg20: memref<4x8x1xf32, #tpu.memory_space<vmem>>, %arg21: memref<4x8x1xf32, #tpu.memory_space<vmem>>, %arg22: memref<4x8x8xf32, #tpu.memory_space<vmem>>) attributes {dimension_semantics = [#tpu.dimension_semantics<parallel>, #tpu.dimension_semantics<parallel>, #tpu.dimension_semantics<arbitrary>], iteration_bounds = array<i64: 2, 1, 1>, scalar_prefetch = 0 : i64, scratch_operands = 4 : i64, tpu.core_type = #tpu.core_type<tc>, window_params = [{transform_indices = @transform_0, window_bounds = array<i64: 1, 8, 32>}, {transform_indices = @transform_1, window_bounds = array<i64: 1, 4, 8, 8>}, {transform_indices = @transform_2, window_bounds = array<i64: 1, 4, 8, 8>}, {pipeline_mode = #tpu.pipeline_mode<synchronous>, transform_indices = @transform_3, window_bounds = array<i64: 32, 32>}, {pipeline_mode = #tpu.pipeline_mode<synchronous>, transform_indices = @transform_4, window_bounds = array<i64: 1, 32>}, {pipeline_mode = #tpu.pipeline_mode<synchronous>, transform_indices = @transform_5, window_bounds = array<i64: 32, 32>}, {pipeline_mode = #tpu.pipeline_mode<synchronous>, transform_indices = @transform_6, window_bounds = array<i64: 1, 32>}, {pipeline_mode = #tpu.pipeline_mode<synchronous>, transform_indices = @transform_7, window_bounds = array<i64: 1, 32>}, {pipeline_mode = #tpu.pipeline_mode<synchronous>, transform_indices = @transform_8, window_bounds = array<i64: 1, 32>}, {pipeline_mode = #tpu.pipeline_mode<synchronous>, transform_indices = @transform_9, window_bounds = array<i64: 32, 128>}, {pipeline_mode = #tpu.pipeline_mode<synchronous>, transform_indices = @transform_10, window_bounds = array<i64: 1, 128>}, {pipeline_mode = #tpu.pipeline_mode<synchronous>, transform_indices = @transform_11, window_bounds = array<i64: 128, 32>}, {pipeline_mode = #tpu.pipeline_mode<synchronous>, transform_indices = @transform_12, window_bounds = array<i64: 1, 32>}, {pipeline_mode = #tpu.pipeline_mode<synchronous>, transform_indices = @transform_13, window_bounds = array<i64: 1, 32>}, {pipeline_mode = #tpu.pipeline_mode<synchronous>, transform_indices = @transform_14, window_bounds = array<i64: 1, 32>}, {transform_indices = @transform_15, window_bounds = array<i64: 1, 8, 32>}]} {
    %c0_i32 = arith.constant 0 : i32
    %0 = arith.cmpi eq, %arg2, %c0_i32 : i32
    %1 = arith.extui %0 : i1 to i32
    %c0_i32_0 = arith.constant 0 : i32
    %2 = arith.cmpi ne, %1, %c0_i32_0 : i32
    scf.if %2 {
      %c0_37 = arith.constant 0 : index
      %c0_38 = arith.constant 0 : index
      %c0_39 = arith.constant 0 : index
      %36 = vector.load %arg3[%c0_37, %c0_38, %c0_39] : memref<1x8x32xf32, #tpu.memory_space<vmem>>, vector<1x8x32xf32>
      %37 = vector.shape_cast %36 : vector<1x8x32xf32> to vector<8x32xf32>
      %38 = arith.truncf %37 : vector<8x32xf32> to vector<8x32xbf16>
      %c0_40 = arith.constant 0 : index
      %c0_41 = arith.constant 0 : index
      %39 = vector.load %arg6[%c0_40, %c0_41] : memref<32x32xbf16, #tpu.memory_space<vmem>>, vector<32x32xbf16>
      %cst_42 = arith.constant dense<0.000000e+00> : vector<8x32xf32>
      %40 = tpu.matmul %38, %39, %cst_42 {dimension_numbers = #tpu.dot_dimension_numbers<[1], [0], [0], [1], [0, 0, 1, 1], [], []>} : vector<8x32xbf16>, vector<32x32xbf16>, vector<8x32xf32> -> vector<8x32xf32>
      %c0_43 = arith.constant 0 : index
      %c0_44 = arith.constant 0 : index
      %41 = vector.load %arg7[%c0_43, %c0_44] : memref<1x32xf32, #tpu.memory_space<vmem>>, vector<1x32xf32>
      %42 = vector.broadcast %41 : vector<1x32xf32> to vector<8x32xf32>
      %43 = arith.addf %40, %42 : vector<8x32xf32>
      %44 = vector.shape_cast %43 : vector<8x32xf32> to vector<8x4x8xf32>
      %45 = tpu.transpose %44, [1, 0, 2] : vector<8x4x8xf32> -> vector<4x8x8xf32>
      %46 = arith.truncf %45 : vector<4x8x8xf32> to vector<4x8x8xbf16>
      %c0_45 = arith.constant 0 : index
      %c0_46 = arith.constant 0 : index
      %c0_47 = arith.constant 0 : index
      %47 = vector.load %arg19[%c0_45, %c0_46, %c0_47] : memref<4x8x8xbf16, #tpu.memory_space<vmem>>, vector<4x8x8xbf16>
      tpu.vector_store %arg19[%c0_45, %c0_46, %c0_47], %46 {strides = array<i32>} : memref<4x8x8xbf16, #tpu.memory_space<vmem>>, vector<4x8x8xbf16>,
      %cst_48 = arith.constant 0xFF800000 : f32
      %48 = vector.broadcast %cst_48 : f32 to vector<4x8x1xf32>
      %c0_49 = arith.constant 0 : index
      %c0_50 = arith.constant 0 : index
      %c0_51 = arith.constant 0 : index
      %49 = vector.load %arg20[%c0_49, %c0_50, %c0_51] : memref<4x8x1xf32, #tpu.memory_space<vmem>>, vector<4x8x1xf32>
      tpu.vector_store %arg20[%c0_49, %c0_50, %c0_51], %48 {strides = array<i32>} : memref<4x8x1xf32, #tpu.memory_space<vmem>>, vector<4x8x1xf32>,
      %cst_52 = arith.constant 0.000000e+00 : f32
      %50 = vector.broadcast %cst_52 : f32 to vector<4x8x1xf32>
      %c0_53 = arith.constant 0 : index
      %c0_54 = arith.constant 0 : index
      %c0_55 = arith.constant 0 : index
      %51 = vector.load %arg21[%c0_53, %c0_54, %c0_55] : memref<4x8x1xf32, #tpu.memory_space<vmem>>, vector<4x8x1xf32>
      tpu.vector_store %arg21[%c0_53, %c0_54, %c0_55], %50 {strides = array<i32>} : memref<4x8x1xf32, #tpu.memory_space<vmem>>, vector<4x8x1xf32>,
      %cst_56 = arith.constant 0.000000e+00 : f32
      %52 = vector.broadcast %cst_56 : f32 to vector<4x8x8xf32>
      %c0_57 = arith.constant 0 : index
      %c0_58 = arith.constant 0 : index
      %c0_59 = arith.constant 0 : index
      %53 = vector.load %arg22[%c0_57, %c0_58, %c0_59] : memref<4x8x8xf32, #tpu.memory_space<vmem>>, vector<4x8x8xf32>
      tpu.vector_store %arg22[%c0_57, %c0_58, %c0_59], %52 {strides = array<i32>} : memref<4x8x8xf32, #tpu.memory_space<vmem>>, vector<4x8x8xf32>,
    } else {
    }
    %c0 = arith.constant 0 : index
    %c0_1 = arith.constant 0 : index
    %c0_2 = arith.constant 0 : index
    %c0_3 = arith.constant 0 : index
    %3 = vector.load %arg4[%c0, %c0_1, %c0_2, %c0_3] : memref<1x4x8x8xbf16, #tpu.memory_space<vmem>>, vector<1x4x8x8xbf16>
    %4 = vector.shape_cast %3 : vector<1x4x8x8xbf16> to vector<4x8x8xbf16>
    %c0_4 = arith.constant 0 : index
    %c0_5 = arith.constant 0 : index
    %c0_6 = arith.constant 0 : index
    %c0_7 = arith.constant 0 : index
    %5 = vector.load %arg5[%c0_4, %c0_5, %c0_6, %c0_7] : memref<1x4x8x8xbf16, #tpu.memory_space<vmem>>, vector<1x4x8x8xbf16>
    %6 = vector.shape_cast %5 : vector<1x4x8x8xbf16> to vector<4x8x8xbf16>
    %c0_8 = arith.constant 0 : index
    %c0_9 = arith.constant 0 : index
    %c0_10 = arith.constant 0 : index
    %7 = vector.load %arg19[%c0_8, %c0_9, %c0_10] : memref<4x8x8xbf16, #tpu.memory_space<vmem>>, vector<4x8x8xbf16>
    "tpu.trace_start"() <{level = 10 : i32, message = "hqd,hkd->hqk"}> : () -> ()
    %cst = arith.constant dense<0.000000e+00> : vector<4x8x8xf32>
    %8 = tpu.matmul %7, %4, %cst {dimension_numbers = #tpu.dot_dimension_numbers<[2], [2], [1], [1], [0, 0, 0, 1, 1, 1], [0], [0]>} : vector<4x8x8xbf16>, vector<4x8x8xbf16>, vector<4x8x8xf32> -> vector<4x8x8xf32>
    "tpu.trace_stop"() : () -> ()
    %c0_11 = arith.constant 0 : index
    %c0_12 = arith.constant 0 : index
    %c0_13 = arith.constant 0 : index
    %9 = vector.load %arg20[%c0_11, %c0_12, %c0_13] : memref<4x8x1xf32, #tpu.memory_space<vmem>>, vector<4x8x1xf32>
    %cst_14 = arith.constant dense<0xFF800000> : vector<4x8xf32>
    %10 = vector.multi_reduction <maximumf>, %8, %cst_14 [2] : vector<4x8x8xf32> to vector<4x8xf32>
    %11 = vector.shape_cast %10 : vector<4x8xf32> to vector<4x8x1xf32>
    %12 = arith.maximumf %9, %11 : vector<4x8x1xf32>
    %c0_15 = arith.constant 0 : index
    %c0_16 = arith.constant 0 : index
    %c0_17 = arith.constant 0 : index
    %13 = vector.load %arg20[%c0_15, %c0_16, %c0_17] : memref<4x8x1xf32, #tpu.memory_space<vmem>>, vector<4x8x1xf32>
    %14 = arith.subf %13, %12 : vector<4x8x1xf32>
    %15 = math.exp %14 : vector<4x8x1xf32>
    %16 = vector.broadcast %12 : vector<4x8x1xf32> to vector<4x8x8xf32>
    %17 = arith.subf %8, %16 : vector<4x8x8xf32>
    %18 = math.exp %17 : vector<4x8x8xf32>
    %c0_18 = arith.constant 0 : index
    %c0_19 = arith.constant 0 : index
    %c0_20 = arith.constant 0 : index
    %19 = vector.load %arg21[%c0_18, %c0_19, %c0_20] : memref<4x8x1xf32, #tpu.memory_space<vmem>>, vector<4x8x1xf32>
    %20 = arith.mulf %15, %19 : vector<4x8x1xf32>
    %cst_21 = arith.constant dense<0.000000e+00> : vector<4x8xf32>
    %21 = vector.multi_reduction <add>, %18, %cst_21 [2] : vector<4x8x8xf32> to vector<4x8xf32>
    %22 = vector.shape_cast %21 : vector<4x8xf32> to vector<4x8x1xf32>
    %23 = arith.addf %20, %22 : vector<4x8x1xf32>
    %c0_22 = arith.constant 0 : index
    %c0_23 = arith.constant 0 : index
    %c0_24 = arith.constant 0 : index
    %24 = vector.load %arg21[%c0_22, %c0_23, %c0_24] : memref<4x8x1xf32, #tpu.memory_space<vmem>>, vector<4x8x1xf32>
    tpu.vector_store %arg21[%c0_22, %c0_23, %c0_24], %23 {strides = array<i32>} : memref<4x8x1xf32, #tpu.memory_space<vmem>>, vector<4x8x1xf32>,
    %c0_25 = arith.constant 0 : index
    %c0_26 = arith.constant 0 : index
    %c0_27 = arith.constant 0 : index
    %25 = vector.load %arg22[%c0_25, %c0_26, %c0_27] : memref<4x8x8xf32, #tpu.memory_space<vmem>>, vector<4x8x8xf32>
    %26 = vector.broadcast %15 : vector<4x8x1xf32> to vector<4x8x8xf32>
    %27 = arith.mulf %26, %25 : vector<4x8x8xf32>
    %28 = arith.truncf %18 : vector<4x8x8xf32> to vector<4x8x8xbf16>
    "tpu.trace_start"() <{level = 10 : i32, message = "hqk,hkd->hqd"}> : () -> ()
    %cst_28 = arith.constant dense<0.000000e+00> : vector<4x8x8xf32>
    %29 = tpu.matmul %28, %6, %cst_28 {dimension_numbers = #tpu.dot_dimension_numbers<[2], [1], [1], [2], [0, 0, 0, 1, 1, 2], [0], [0]>} : vector<4x8x8xbf16>, vector<4x8x8xbf16>, vector<4x8x8xf32> -> vector<4x8x8xf32>
    "tpu.trace_stop"() : () -> ()
    %30 = arith.addf %27, %29 : vector<4x8x8xf32>
    %c0_29 = arith.constant 0 : index
    %c0_30 = arith.constant 0 : index
    %c0_31 = arith.constant 0 : index
    %31 = vector.load %arg22[%c0_29, %c0_30, %c0_31] : memref<4x8x8xf32, #tpu.memory_space<vmem>>, vector<4x8x8xf32>
    tpu.vector_store %arg22[%c0_29, %c0_30, %c0_31], %30 {strides = array<i32>} : memref<4x8x8xf32, #tpu.memory_space<vmem>>, vector<4x8x8xf32>,
    %c0_32 = arith.constant 0 : index
    %c0_33 = arith.constant 0 : index
    %c0_34 = arith.constant 0 : index
    %32 = vector.load %arg20[%c0_32, %c0_33, %c0_34] : memref<4x8x1xf32, #tpu.memory_space<vmem>>, vector<4x8x1xf32>
    tpu.vector_store %arg20[%c0_32, %c0_33, %c0_34], %12 {strides = array<i32>} : memref<4x8x1xf32, #tpu.memory_space<vmem>>, vector<4x8x1xf32>,
    %c0_i32_35 = arith.constant 0 : i32
    %33 = arith.cmpi eq, %arg2, %c0_i32_35 : i32
    %34 = arith.extui %33 : i1 to i32
    %c0_i32_36 = arith.constant 0 : i32
    %35 = arith.cmpi ne, %34, %c0_i32_36 : i32
    scf.if %35 {
      %c0_37 = arith.constant 0 : index
      %c0_38 = arith.constant 0 : index
      %c0_39 = arith.constant 0 : index
      %36 = vector.load %arg22[%c0_37, %c0_38, %c0_39] : memref<4x8x8xf32, #tpu.memory_space<vmem>>, vector<4x8x8xf32>
      %c0_40 = arith.constant 0 : index
      %c0_41 = arith.constant 0 : index
      %c0_42 = arith.constant 0 : index
      %37 = vector.load %arg21[%c0_40, %c0_41, %c0_42] : memref<4x8x1xf32, #tpu.memory_space<vmem>>, vector<4x8x1xf32>
      %38 = tpu.reciprocal %37 {approx = true} : vector<4x8x1xf32> -> vector<4x8x1xf32>
      %39 = vector.broadcast %38 : vector<4x8x1xf32> to vector<4x8x8xf32>
      %40 = arith.mulf %36, %39 : vector<4x8x8xf32>
      %41 = tpu.transpose %40, [1, 0, 2] : vector<4x8x8xf32> -> vector<8x4x8xf32>
      %42 = vector.shape_cast %41 : vector<8x4x8xf32> to vector<8x32xf32>
      %c0_43 = arith.constant 0 : index
      %c0_44 = arith.constant 0 : index
      %c0_45 = arith.constant 0 : index
      %43 = vector.load %arg3[%c0_43, %c0_44, %c0_45] : memref<1x8x32xf32, #tpu.memory_space<vmem>>, vector<1x8x32xf32>
      %44 = vector.shape_cast %43 : vector<1x8x32xf32> to vector<8x32xf32>
      %45 = arith.truncf %42 : vector<8x32xf32> to vector<8x32xbf16>
      %c0_46 = arith.constant 0 : index
      %c0_47 = arith.constant 0 : index
      %46 = vector.load %arg8[%c0_46, %c0_47] : memref<32x32xbf16, #tpu.memory_space<vmem>>, vector<32x32xbf16>
      %cst_48 = arith.constant dense<0.000000e+00> : vector<8x32xf32>
      %47 = tpu.matmul %45, %46, %cst_48 {dimension_numbers = #tpu.dot_dimension_numbers<[1], [0], [0], [1], [0, 0, 1, 1], [], []>} : vector<8x32xbf16>, vector<32x32xbf16>, vector<8x32xf32> -> vector<8x32xf32>
      %c0_49 = arith.constant 0 : index
      %c0_50 = arith.constant 0 : index
      %48 = vector.load %arg9[%c0_49, %c0_50] : memref<1x32xf32, #tpu.memory_space<vmem>>, vector<1x32xf32>
      %49 = vector.broadcast %48 : vector<1x32xf32> to vector<8x32xf32>
      %50 = arith.addf %47, %49 : vector<8x32xf32>
      %51 = arith.addf %44, %50 : vector<8x32xf32>
      %c0_51 = arith.constant 0 : index
      %c0_52 = arith.constant 0 : index
      %52 = vector.load %arg10[%c0_51, %c0_52] : memref<1x32xf32, #tpu.memory_space<vmem>>, vector<1x32xf32>
      %c0_53 = arith.constant 0 : index
      %c0_54 = arith.constant 0 : index
      %53 = vector.load %arg11[%c0_53, %c0_54] : memref<1x32xf32, #tpu.memory_space<vmem>>, vector<1x32xf32>
      %cst_55 = arith.constant dense<0.000000e+00> : vector<8xf32>
      %54 = vector.multi_reduction <add>, %51, %cst_55 [1] : vector<8x32xf32> to vector<8xf32>
      %55 = vector.shape_cast %54 : vector<8xf32> to vector<8x1xf32>
      %cst_56 = arith.constant 3.200000e+01 : f32
      %56 = vector.broadcast %cst_56 : f32 to vector<8x1xf32>
      %57 = arith.divf %55, %56 : vector<8x1xf32>
      %58 = vector.broadcast %57 : vector<8x1xf32> to vector<8x32xf32>
      %59 = arith.subf %51, %58 : vector<8x32xf32>
      %60 = arith.mulf %59, %59 : vector<8x32xf32>
      %cst_57 = arith.constant dense<0.000000e+00> : vector<8xf32>
      %61 = vector.multi_reduction <add>, %60, %cst_57 [1] : vector<8x32xf32> to vector<8xf32>
      %62 = vector.shape_cast %61 : vector<8xf32> to vector<8x1xf32>
      %cst_58 = arith.constant 3.200000e+01 : f32
      %63 = vector.broadcast %cst_58 : f32 to vector<8x1xf32>
      %64 = arith.divf %62, %63 : vector<8x1xf32>
      %65 = vector.broadcast %57 : vector<8x1xf32> to vector<8x32xf32>
      %66 = arith.subf %51, %65 : vector<8x32xf32>
      %cst_59 = arith.constant 9.99999996E-13 : f32
      %67 = vector.broadcast %cst_59 : f32 to vector<8x1xf32>
      %68 = arith.addf %64, %67 : vector<8x1xf32>
      %69 = math.rsqrt %68 : vector<8x1xf32>
      %70 = vector.broadcast %69 : vector<8x1xf32> to vector<8x32xf32>
      %71 = arith.mulf %66, %70 : vector<8x32xf32>
      %72 = vector.broadcast %52 : vector<1x32xf32> to vector<8x32xf32>
      %73 = arith.mulf %71, %72 : vector<8x32xf32>
      %74 = vector.broadcast %53 : vector<1x32xf32> to vector<8x32xf32>
      %75 = arith.addf %73, %74 : vector<8x32xf32>
      %76 = arith.truncf %75 : vector<8x32xf32> to vector<8x32xbf16>
      %c0_60 = arith.constant 0 : index
      %c0_61 = arith.constant 0 : index
      %77 = vector.load %arg12[%c0_60, %c0_61] : memref<32x128xbf16, #tpu.memory_space<vmem>>, vector<32x128xbf16>
      %cst_62 = arith.constant dense<0.000000e+00> : vector<8x128xf32>
      %78 = tpu.matmul %76, %77, %cst_62 {dimension_numbers = #tpu.dot_dimension_numbers<[1], [0], [0], [1], [0, 0, 1, 1], [], []>} : vector<8x32xbf16>, vector<32x128xbf16>, vector<8x128xf32> -> vector<8x128xf32>
      %c0_63 = arith.constant 0 : index
      %c0_64 = arith.constant 0 : index
      %79 = vector.load %arg13[%c0_63, %c0_64] : memref<1x128xf32, #tpu.memory_space<vmem>>, vector<1x128xf32>
      %80 = vector.broadcast %79 : vector<1x128xf32> to vector<8x128xf32>
      %81 = arith.addf %78, %80 : vector<8x128xf32>
      %cst_65 = arith.constant 0.000000e+00 : f32
      %82 = vector.broadcast %cst_65 : f32 to vector<8x128xf32>
      %83 = arith.maximumf %81, %82 : vector<8x128xf32>
      %84 = arith.truncf %83 : vector<8x128xf32> to vector<8x128xbf16>
      %c0_66 = arith.constant 0 : index
      %c0_67 = arith.constant 0 : index
      %85 = vector.load %arg14[%c0_66, %c0_67] : memref<128x32xbf16, #tpu.memory_space<vmem>>, vector<128x32xbf16>
      %cst_68 = arith.constant dense<0.000000e+00> : vector<8x32xf32>
      %86 = tpu.matmul %84, %85, %cst_68 {dimension_numbers = #tpu.dot_dimension_numbers<[1], [0], [0], [1], [0, 0, 1, 1], [], []>} : vector<8x128xbf16>, vector<128x32xbf16>, vector<8x32xf32> -> vector<8x32xf32>
      %c0_69 = arith.constant 0 : index
      %c0_70 = arith.constant 0 : index
      %87 = vector.load %arg15[%c0_69, %c0_70] : memref<1x32xf32, #tpu.memory_space<vmem>>, vector<1x32xf32>
      %88 = vector.broadcast %87 : vector<1x32xf32> to vector<8x32xf32>
      %89 = arith.addf %86, %88 : vector<8x32xf32>
      %90 = arith.addf %75, %89 : vector<8x32xf32>
      %c0_71 = arith.constant 0 : index
      %c0_72 = arith.constant 0 : index
      %91 = vector.load %arg16[%c0_71, %c0_72] : memref<1x32xf32, #tpu.memory_space<vmem>>, vector<1x32xf32>
      %c0_73 = arith.constant 0 : index
      %c0_74 = arith.constant 0 : index
      %92 = vector.load %arg17[%c0_73, %c0_74] : memref<1x32xf32, #tpu.memory_space<vmem>>, vector<1x32xf32>
      %cst_75 = arith.constant dense<0.000000e+00> : vector<8xf32>
      %93 = vector.multi_reduction <add>, %90, %cst_75 [1] : vector<8x32xf32> to vector<8xf32>
      %94 = vector.shape_cast %93 : vector<8xf32> to vector<8x1xf32>
      %cst_76 = arith.constant 3.200000e+01 : f32
      %95 = vector.broadcast %cst_76 : f32 to vector<8x1xf32>
      %96 = arith.divf %94, %95 : vector<8x1xf32>
      %97 = vector.broadcast %96 : vector<8x1xf32> to vector<8x32xf32>
      %98 = arith.subf %90, %97 : vector<8x32xf32>
      %99 = arith.mulf %98, %98 : vector<8x32xf32>
      %cst_77 = arith.constant dense<0.000000e+00> : vector<8xf32>
      %100 = vector.multi_reduction <add>, %99, %cst_77 [1] : vector<8x32xf32> to vector<8xf32>
      %101 = vector.shape_cast %100 : vector<8xf32> to vector<8x1xf32>
      %cst_78 = arith.constant 3.200000e+01 : f32
      %102 = vector.broadcast %cst_78 : f32 to vector<8x1xf32>
      %103 = arith.divf %101, %102 : vector<8x1xf32>
      %104 = vector.broadcast %96 : vector<8x1xf32> to vector<8x32xf32>
      %105 = arith.subf %90, %104 : vector<8x32xf32>
      %cst_79 = arith.constant 9.99999996E-13 : f32
      %106 = vector.broadcast %cst_79 : f32 to vector<8x1xf32>
      %107 = arith.addf %103, %106 : vector<8x1xf32>
      %108 = math.rsqrt %107 : vector<8x1xf32>
      %109 = vector.broadcast %108 : vector<8x1xf32> to vector<8x32xf32>
      %110 = arith.mulf %105, %109 : vector<8x32xf32>
      %111 = vector.broadcast %91 : vector<1x32xf32> to vector<8x32xf32>
      %112 = arith.mulf %110, %111 : vector<8x32xf32>
      %113 = vector.broadcast %92 : vector<1x32xf32> to vector<8x32xf32>
      %114 = arith.addf %112, %113 : vector<8x32xf32>
      %c0_80 = arith.constant 0 : index
      %c0_81 = arith.constant 0 : index
      %c0_82 = arith.constant 0 : index
      %115 = vector.load %arg18[%c0_80, %c0_81, %c0_82] : memref<1x8x32xf32, #tpu.memory_space<vmem>>, vector<1x8x32xf32>
      %116 = vector.shape_cast %115 : vector<1x8x32xf32> to vector<8x32xf32>
      %117 = vector.shape_cast %114 : vector<8x32xf32> to vector<1x8x32xf32>
      tpu.vector_store %arg18[%c0_80, %c0_81, %c0_82], %117 {strides = array<i32>} : memref<1x8x32xf32, #tpu.memory_space<vmem>>, vector<1x8x32xf32>,
    } else {
    }
    return
  }
  func.func @transform_0(%arg0: i32, %arg1: i32, %arg2: i32) -> (i32, i32, i32) {
    %c0_i32 = arith.constant 0 : i32
    %c0_i32_0 = arith.constant 0 : i32
    return %arg0, %arg1, %c0_i32 : i32, i32, i32
  }
  func.func @transform_1(%arg0: i32, %arg1: i32, %arg2: i32) -> (i32, i32, i32, i32) {
    %c0_i32 = arith.constant 0 : i32
    %c0_i32_0 = arith.constant 0 : i32
    %c0_i32_1 = arith.constant 0 : i32
    return %arg0, %c0_i32, %arg2, %c0_i32_0 : i32, i32, i32, i32
  }
  func.func @transform_2(%arg0: i32, %arg1: i32, %arg2: i32) -> (i32, i32, i32, i32) {
    %c0_i32 = arith.constant 0 : i32
    %c0_i32_0 = arith.constant 0 : i32
    %c0_i32_1 = arith.constant 0 : i32
    return %arg0, %c0_i32, %arg2, %c0_i32_0 : i32, i32, i32, i32
  }
  func.func @transform_3(%arg0: i32, %arg1: i32, %arg2: i32) -> (i32, i32) {
    %c0_i32 = arith.constant 0 : i32
    %c0_i32_0 = arith.constant 0 : i32
    %c0_i32_1 = arith.constant 0 : i32
    return %c0_i32, %c0_i32_0 : i32, i32
  }
  func.func @transform_4(%arg0: i32, %arg1: i32, %arg2: i32) -> (i32, i32) {
    %c0_i32 = arith.constant 0 : i32
    %c0_i32_0 = arith.constant 0 : i32
    %c0_i32_1 = arith.constant 0 : i32
    return %c0_i32, %c0_i32_0 : i32, i32
  }
  func.func @transform_5(%arg0: i32, %arg1: i32, %arg2: i32) -> (i32, i32) {
    %c0_i32 = arith.constant 0 : i32
    %c0_i32_0 = arith.constant 0 : i32
    %c0_i32_1 = arith.constant 0 : i32
    return %c0_i32, %c0_i32_0 : i32, i32
  }
  func.func @transform_6(%arg0: i32, %arg1: i32, %arg2: i32) -> (i32, i32) {
    %c0_i32 = arith.constant 0 : i32
    %c0_i32_0 = arith.constant 0 : i32
    %c0_i32_1 = arith.constant 0 : i32
    return %c0_i32, %c0_i32_0 : i32, i32
  }
  func.func @transform_7(%arg0: i32, %arg1: i32, %arg2: i32) -> (i32, i32) {
    %c0_i32 = arith.constant 0 : i32
    %c0_i32_0 = arith.constant 0 : i32
    %c0_i32_1 = arith.constant 0 : i32
    return %c0_i32, %c0_i32_0 : i32, i32
  }
  func.func @transform_8(%arg0: i32, %arg1: i32, %arg2: i32) -> (i32, i32) {
    %c0_i32 = arith.constant 0 : i32
    %c0_i32_0 = arith.constant 0 : i32
    %c0_i32_1 = arith.constant 0 : i32
    return %c0_i32, %c0_i32_0 : i32, i32
  }
  func.func @transform_9(%arg0: i32, %arg1: i32, %arg2: i32) -> (i32, i32) {
    %c0_i32 = arith.constant 0 : i32
    %c0_i32_0 = arith.constant 0 : i32
    %c0_i32_1 = arith.constant 0 : i32
    return %c0_i32, %c0_i32_0 : i32, i32
  }
  func.func @transform_10(%arg0: i32, %arg1: i32, %arg2: i32) -> (i32, i32) {
    %c0_i32 = arith.constant 0 : i32
    %c0_i32_0 = arith.constant 0 : i32
    %c0_i32_1 = arith.constant 0 : i32
    return %c0_i32, %c0_i32_0 : i32, i32
  }
  func.func @transform_11(%arg0: i32, %arg1: i32, %arg2: i32) -> (i32, i32) {
    %c0_i32 = arith.constant 0 : i32
    %c0_i32_0 = arith.constant 0 : i32
    %c0_i32_1 = arith.constant 0 : i32
    return %c0_i32, %c0_i32_0 : i32, i32
  }
  func.func @transform_12(%arg0: i32, %arg1: i32, %arg2: i32) -> (i32, i32) {
    %c0_i32 = arith.constant 0 : i32
    %c0_i32_0 = arith.constant 0 : i32
    %c0_i32_1 = arith.constant 0 : i32
    return %c0_i32, %c0_i32_0 : i32, i32
  }
  func.func @transform_13(%arg0: i32, %arg1: i32, %arg2: i32) -> (i32, i32) {
    %c0_i32 = arith.constant 0 : i32
    %c0_i32_0 = arith.constant 0 : i32
    %c0_i32_1 = arith.constant 0 : i32
    return %c0_i32, %c0_i32_0 : i32, i32
  }
  func.func @transform_14(%arg0: i32, %arg1: i32, %arg2: i32) -> (i32, i32) {
    %c0_i32 = arith.constant 0 : i32
    %c0_i32_0 = arith.constant 0 : i32
    %c0_i32_1 = arith.constant 0 : i32
    return %c0_i32, %c0_i32_0 : i32, i32
  }
  func.func @transform_15(%arg0: i32, %arg1: i32, %arg2: i32) -> (i32, i32, i32) {
    %c0_i32 = arith.constant 0 : i32
    %c0_i32_0 = arith.constant 0 : i32
    return %arg0, %arg1, %c0_i32 : i32, i32, i32
  }
}

module attributes {stable_mosaic.version = 11 : i64} {
  func.func @mem_layer_kernel(%arg0: i32, %arg1: i32, %arg2: i32, %arg3: memref<1x8x32xf32, #tpu.memory_space<vmem>>, %arg4: memref<1x4x8x8xbf16, #tpu.memory_space<vmem>>, %arg5: memref<1x4x8x8xbf16, #tpu.memory_space<vmem>>, %arg6: memref<1x4x16x8xbf16, #tpu.memory_space<vmem>>, %arg7: memref<1x4x16x8xbf16, #tpu.memory_space<vmem>>, %arg8: memref<1x16xf32, #tpu.memory_space<vmem>>, %arg9: memref<1x32xf32, #tpu.memory_space<vmem>>, %arg10: memref<1x32xf32, #tpu.memory_space<vmem>>, %arg11: memref<32x32xbf16, #tpu.memory_space<vmem>>, %arg12: memref<1x32xf32, #tpu.memory_space<vmem>>, %arg13: memref<32x32xbf16, #tpu.memory_space<vmem>>, %arg14: memref<1x32xf32, #tpu.memory_space<vmem>>, %arg15: memref<1x32xf32, #tpu.memory_space<vmem>>, %arg16: memref<1x32xf32, #tpu.memory_space<vmem>>, %arg17: memref<32x128xbf16, #tpu.memory_space<vmem>>, %arg18: memref<1x128xf32, #tpu.memory_space<vmem>>, %arg19: memref<128x32xbf16, #tpu.memory_space<vmem>>, %arg20: memref<1x32xf32, #tpu.memory_space<vmem>>, %arg21: memref<1x32xf32, #tpu.memory_space<vmem>>, %arg22: memref<1x32xf32, #tpu.memory_space<vmem>>, %arg23: memref<1x8x32xf32, #tpu.memory_space<vmem>>, %arg24: memref<4x8x8xbf16, #tpu.memory_space<vmem>>, %arg25: memref<4x8x1xf32, #tpu.memory_space<vmem>>, %arg26: memref<4x8x1xf32, #tpu.memory_space<vmem>>, %arg27: memref<4x8x8xf32, #tpu.memory_space<vmem>>) attributes {dimension_semantics = [#tpu.dimension_semantics<parallel>, #tpu.dimension_semantics<parallel>, #tpu.dimension_semantics<arbitrary>], iteration_bounds = array<i64: 2, 1, 1>, scalar_prefetch = 0 : i64, scratch_operands = 4 : i64, tpu.core_type = #tpu.core_type<tc>, window_params = [{transform_indices = @transform_0, window_bounds = array<i64: 1, 8, 32>}, {transform_indices = @transform_1, window_bounds = array<i64: 1, 4, 8, 8>}, {transform_indices = @transform_2, window_bounds = array<i64: 1, 4, 8, 8>}, {pipeline_mode = #tpu.pipeline_mode<synchronous>, transform_indices = @transform_3, window_bounds = array<i64: 1, 4, 16, 8>}, {pipeline_mode = #tpu.pipeline_mode<synchronous>, transform_indices = @transform_4, window_bounds = array<i64: 1, 4, 16, 8>}, {pipeline_mode = #tpu.pipeline_mode<synchronous>, transform_indices = @transform_5, window_bounds = array<i64: 1, 16>}, {pipeline_mode = #tpu.pipeline_mode<synchronous>, transform_indices = @transform_6, window_bounds = array<i64: 1, 32>}, {pipeline_mode = #tpu.pipeline_mode<synchronous>, transform_indices = @transform_7, window_bounds = array<i64: 1, 32>}, {pipeline_mode = #tpu.pipeline_mode<synchronous>, transform_indices = @transform_8, window_bounds = array<i64: 32, 32>}, {pipeline_mode = #tpu.pipeline_mode<synchronous>, transform_indices = @transform_9, window_bounds = array<i64: 1, 32>}, {pipeline_mode = #tpu.pipeline_mode<synchronous>, transform_indices = @transform_10, window_bounds = array<i64: 32, 32>}, {pipeline_mode = #tpu.pipeline_mode<synchronous>, transform_indices = @transform_11, window_bounds = array<i64: 1, 32>}, {pipeline_mode = #tpu.pipeline_mode<synchronous>, transform_indices = @transform_12, window_bounds = array<i64: 1, 32>}, {pipeline_mode = #tpu.pipeline_mode<synchronous>, transform_indices = @transform_13, window_bounds = array<i64: 1, 32>}, {pipeline_mode = #tpu.pipeline_mode<synchronous>, transform_indices = @transform_14, window_bounds = array<i64: 32, 128>}, {pipeline_mode = #tpu.pipeline_mode<synchronous>, transform_indices = @transform_15, window_bounds = array<i64: 1, 128>}, {pipeline_mode = #tpu.pipeline_mode<synchronous>, transform_indices = @transform_16, window_bounds = array<i64: 128, 32>}, {pipeline_mode = #tpu.pipeline_mode<synchronous>, transform_indices = @transform_17, window_bounds = array<i64: 1, 32>}, {pipeline_mode = #tpu.pipeline_mode<synchronous>, transform_indices = @transform_18, window_bounds = array<i64: 1, 32>}, {pipeline_mode = #tpu.pipeline_mode<synchronous>, transform_indices = @transform_19, window_bounds = array<i64: 1, 32>}, {transform_indices = @transform_20, window_bounds = array<i64: 1, 8, 32>}]} {
    %c0_i32 = arith.constant 0 : i32
    %0 = arith.cmpi eq, %arg2, %c0_i32 : i32
    %1 = arith.extui %0 : i1 to i32
    %c0_i32_0 = arith.constant 0 : i32
    %2 = arith.cmpi ne, %1, %c0_i32_0 : i32
    scf.if %2 {
      %c0_37 = arith.constant 0 : index
      %c0_38 = arith.constant 0 : index
      %c0_39 = arith.constant 0 : index
      %36 = vector.load %arg3[%c0_37, %c0_38, %c0_39] : memref<1x8x32xf32, #tpu.memory_space<vmem>>, vector<1x8x32xf32>
      %37 = vector.shape_cast %36 : vector<1x8x32xf32> to vector<8x32xf32>
      %38 = arith.truncf %37 : vector<8x32xf32> to vector<8x32xbf16>
      %c0_40 = arith.constant 0 : index
      %c0_41 = arith.constant 0 : index
      %39 = vector.load %arg11[%c0_40, %c0_41] : memref<32x32xbf16, #tpu.memory_space<vmem>>, vector<32x32xbf16>
      %cst_42 = arith.constant dense<0.000000e+00> : vector<8x32xf32>
      %40 = tpu.matmul %38, %39, %cst_42 {dimension_numbers = #tpu.dot_dimension_numbers<[1], [0], [0], [1], [0, 0, 1, 1], [], []>} : vector<8x32xbf16>, vector<32x32xbf16>, vector<8x32xf32> -> vector<8x32xf32>
      %c0_43 = arith.constant 0 : index
      %c0_44 = arith.constant 0 : index
      %41 = vector.load %arg12[%c0_43, %c0_44] : memref<1x32xf32, #tpu.memory_space<vmem>>, vector<1x32xf32>
      %42 = vector.broadcast %41 : vector<1x32xf32> to vector<8x32xf32>
      %43 = arith.addf %40, %42 : vector<8x32xf32>
      %44 = vector.shape_cast %43 : vector<8x32xf32> to vector<8x4x8xf32>
      %45 = tpu.transpose %44, [1, 0, 2] : vector<8x4x8xf32> -> vector<4x8x8xf32>
      %46 = arith.truncf %45 : vector<4x8x8xf32> to vector<4x8x8xbf16>
      %c0_45 = arith.constant 0 : index
      %c0_46 = arith.constant 0 : index
      %c0_47 = arith.constant 0 : index
      %47 = vector.load %arg24[%c0_45, %c0_46, %c0_47] : memref<4x8x8xbf16, #tpu.memory_space<vmem>>, vector<4x8x8xbf16>
      tpu.vector_store %arg24[%c0_45, %c0_46, %c0_47], %46 {strides = array<i32>} : memref<4x8x8xbf16, #tpu.memory_space<vmem>>, vector<4x8x8xbf16>,
      %cst_48 = arith.constant 0xFF800000 : f32
      %48 = vector.broadcast %cst_48 : f32 to vector<4x8x1xf32>
      %c0_49 = arith.constant 0 : index
      %c0_50 = arith.constant 0 : index
      %c0_51 = arith.constant 0 : index
      %49 = vector.load %arg25[%c0_49, %c0_50, %c0_51] : memref<4x8x1xf32, #tpu.memory_space<vmem>>, vector<4x8x1xf32>
      tpu.vector_store %arg25[%c0_49, %c0_50, %c0_51], %48 {strides = array<i32>} : memref<4x8x1xf32, #tpu.memory_space<vmem>>, vector<4x8x1xf32>,
      %cst_52 = arith.constant 0.000000e+00 : f32
      %50 = vector.broadcast %cst_52 : f32 to vector<4x8x1xf32>
      %c0_53 = arith.constant 0 : index
      %c0_54 = arith.constant 0 : index
      %c0_55 = arith.constant 0 : index
      %51 = vector.load %arg26[%c0_53, %c0_54, %c0_55] : memref<4x8x1xf32, #tpu.memory_space<vmem>>, vector<4x8x1xf32>
      tpu.vector_store %arg26[%c0_53, %c0_54, %c0_55], %50 {strides = array<i32>} : memref<4x8x1xf32, #tpu.memory_space<vmem>>, vector<4x8x1xf32>,
      %cst_56 = arith.constant 0.000000e+00 : f32
      %52 = vector.broadcast %cst_56 : f32 to vector<4x8x8xf32>
      %c0_57 = arith.constant 0 : index
      %c0_58 = arith.constant 0 : index
      %c0_59 = arith.constant 0 : index
      %53 = vector.load %arg27[%c0_57, %c0_58, %c0_59] : memref<4x8x8xf32, #tpu.memory_space<vmem>>, vector<4x8x8xf32>
      tpu.vector_store %arg27[%c0_57, %c0_58, %c0_59], %52 {strides = array<i32>} : memref<4x8x8xf32, #tpu.memory_space<vmem>>, vector<4x8x8xf32>,
    } else {
    }
    %c0 = arith.constant 0 : index
    %c0_1 = arith.constant 0 : index
    %c0_2 = arith.constant 0 : index
    %c0_3 = arith.constant 0 : index
    %3 = vector.load %arg4[%c0, %c0_1, %c0_2, %c0_3] : memref<1x4x8x8xbf16, #tpu.memory_space<vmem>>, vector<1x4x8x8xbf16>
    %4 = vector.shape_cast %3 : vector<1x4x8x8xbf16> to vector<4x8x8xbf16>
    %c0_4 = arith.constant 0 : index
    %c0_5 = arith.constant 0 : index
    %c0_6 = arith.constant 0 : index
    %c0_7 = arith.constant 0 : index
    %5 = vector.load %arg5[%c0_4, %c0_5, %c0_6, %c0_7] : memref<1x4x8x8xbf16, #tpu.memory_space<vmem>>, vector<1x4x8x8xbf16>
    %6 = vector.shape_cast %5 : vector<1x4x8x8xbf16> to vector<4x8x8xbf16>
    %c0_8 = arith.constant 0 : index
    %c0_9 = arith.constant 0 : index
    %c0_10 = arith.constant 0 : index
    %7 = vector.load %arg24[%c0_8, %c0_9, %c0_10] : memref<4x8x8xbf16, #tpu.memory_space<vmem>>, vector<4x8x8xbf16>
    "tpu.trace_start"() <{level = 10 : i32, message = "hqd,hkd->hqk"}> : () -> ()
    %cst = arith.constant dense<0.000000e+00> : vector<4x8x8xf32>
    %8 = tpu.matmul %7, %4, %cst {dimension_numbers = #tpu.dot_dimension_numbers<[2], [2], [1], [1], [0, 0, 0, 1, 1, 1], [0], [0]>} : vector<4x8x8xbf16>, vector<4x8x8xbf16>, vector<4x8x8xf32> -> vector<4x8x8xf32>
    "tpu.trace_stop"() : () -> ()
    %c0_11 = arith.constant 0 : index
    %c0_12 = arith.constant 0 : index
    %c0_13 = arith.constant 0 : index
    %9 = vector.load %arg25[%c0_11, %c0_12, %c0_13] : memref<4x8x1xf32, #tpu.memory_space<vmem>>, vector<4x8x1xf32>
    %cst_14 = arith.constant dense<0xFF800000> : vector<4x8xf32>
    %10 = vector.multi_reduction <maximumf>, %8, %cst_14 [2] : vector<4x8x8xf32> to vector<4x8xf32>
    %11 = vector.shape_cast %10 : vector<4x8xf32> to vector<4x8x1xf32>
    %12 = arith.maximumf %9, %11 : vector<4x8x1xf32>
    %c0_15 = arith.constant 0 : index
    %c0_16 = arith.constant 0 : index
    %c0_17 = arith.constant 0 : index
    %13 = vector.load %arg25[%c0_15, %c0_16, %c0_17] : memref<4x8x1xf32, #tpu.memory_space<vmem>>, vector<4x8x1xf32>
    %14 = arith.subf %13, %12 : vector<4x8x1xf32>
    %15 = math.exp %14 : vector<4x8x1xf32>
    %16 = vector.broadcast %12 : vector<4x8x1xf32> to vector<4x8x8xf32>
    %17 = arith.subf %8, %16 : vector<4x8x8xf32>
    %18 = math.exp %17 : vector<4x8x8xf32>
    %c0_18 = arith.constant 0 : index
    %c0_19 = arith.constant 0 : index
    %c0_20 = arith.constant 0 : index
    %19 = vector.load %arg26[%c0_18, %c0_19, %c0_20] : memref<4x8x1xf32, #tpu.memory_space<vmem>>, vector<4x8x1xf32>
    %20 = arith.mulf %15, %19 : vector<4x8x1xf32>
    %cst_21 = arith.constant dense<0.000000e+00> : vector<4x8xf32>
    %21 = vector.multi_reduction <add>, %18, %cst_21 [2] : vector<4x8x8xf32> to vector<4x8xf32>
    %22 = vector.shape_cast %21 : vector<4x8xf32> to vector<4x8x1xf32>
    %23 = arith.addf %20, %22 : vector<4x8x1xf32>
    %c0_22 = arith.constant 0 : index
    %c0_23 = arith.constant 0 : index
    %c0_24 = arith.constant 0 : index
    %24 = vector.load %arg26[%c0_22, %c0_23, %c0_24] : memref<4x8x1xf32, #tpu.memory_space<vmem>>, vector<4x8x1xf32>
    tpu.vector_store %arg26[%c0_22, %c0_23, %c0_24], %23 {strides = array<i32>} : memref<4x8x1xf32, #tpu.memory_space<vmem>>, vector<4x8x1xf32>,
    %c0_25 = arith.constant 0 : index
    %c0_26 = arith.constant 0 : index
    %c0_27 = arith.constant 0 : index
    %25 = vector.load %arg27[%c0_25, %c0_26, %c0_27] : memref<4x8x8xf32, #tpu.memory_space<vmem>>, vector<4x8x8xf32>
    %26 = vector.broadcast %15 : vector<4x8x1xf32> to vector<4x8x8xf32>
    %27 = arith.mulf %26, %25 : vector<4x8x8xf32>
    %28 = arith.truncf %18 : vector<4x8x8xf32> to vector<4x8x8xbf16>
    "tpu.trace_start"() <{level = 10 : i32, message = "hqk,hkd->hqd"}> : () -> ()
    %cst_28 = arith.constant dense<0.000000e+00> : vector<4x8x8xf32>
    %29 = tpu.matmul %28, %6, %cst_28 {dimension_numbers = #tpu.dot_dimension_numbers<[2], [1], [1], [2], [0, 0, 0, 1, 1, 2], [0], [0]>} : vector<4x8x8xbf16>, vector<4x8x8xbf16>, vector<4x8x8xf32> -> vector<4x8x8xf32>
    "tpu.trace_stop"() : () -> ()
    %30 = arith.addf %27, %29 : vector<4x8x8xf32>
    %c0_29 = arith.constant 0 : index
    %c0_30 = arith.constant 0 : index
    %c0_31 = arith.constant 0 : index
    %31 = vector.load %arg27[%c0_29, %c0_30, %c0_31] : memref<4x8x8xf32, #tpu.memory_space<vmem>>, vector<4x8x8xf32>
    tpu.vector_store %arg27[%c0_29, %c0_30, %c0_31], %30 {strides = array<i32>} : memref<4x8x8xf32, #tpu.memory_space<vmem>>, vector<4x8x8xf32>,
    %c0_32 = arith.constant 0 : index
    %c0_33 = arith.constant 0 : index
    %c0_34 = arith.constant 0 : index
    %32 = vector.load %arg25[%c0_32, %c0_33, %c0_34] : memref<4x8x1xf32, #tpu.memory_space<vmem>>, vector<4x8x1xf32>
    tpu.vector_store %arg25[%c0_32, %c0_33, %c0_34], %12 {strides = array<i32>} : memref<4x8x1xf32, #tpu.memory_space<vmem>>, vector<4x8x1xf32>,
    %c0_i32_35 = arith.constant 0 : i32
    %33 = arith.cmpi eq, %arg2, %c0_i32_35 : i32
    %34 = arith.extui %33 : i1 to i32
    %c0_i32_36 = arith.constant 0 : i32
    %35 = arith.cmpi ne, %34, %c0_i32_36 : i32
    scf.if %35 {
      %c0_37 = arith.constant 0 : index
      %c0_38 = arith.constant 0 : index
      %c0_39 = arith.constant 0 : index
      %36 = vector.load %arg27[%c0_37, %c0_38, %c0_39] : memref<4x8x8xf32, #tpu.memory_space<vmem>>, vector<4x8x8xf32>
      %c0_40 = arith.constant 0 : index
      %c0_41 = arith.constant 0 : index
      %c0_42 = arith.constant 0 : index
      %37 = vector.load %arg26[%c0_40, %c0_41, %c0_42] : memref<4x8x1xf32, #tpu.memory_space<vmem>>, vector<4x8x1xf32>
      %38 = tpu.reciprocal %37 {approx = true} : vector<4x8x1xf32> -> vector<4x8x1xf32>
      %39 = vector.broadcast %38 : vector<4x8x1xf32> to vector<4x8x8xf32>
      %40 = arith.mulf %36, %39 : vector<4x8x8xf32>
      %41 = tpu.transpose %40, [1, 0, 2] : vector<4x8x8xf32> -> vector<8x4x8xf32>
      %42 = vector.shape_cast %41 : vector<8x4x8xf32> to vector<8x32xf32>
      %c0_43 = arith.constant 0 : index
      %c0_44 = arith.constant 0 : index
      %c0_45 = arith.constant 0 : index
      %43 = vector.load %arg24[%c0_43, %c0_44, %c0_45] : memref<4x8x8xbf16, #tpu.memory_space<vmem>>, vector<4x8x8xbf16>
      %c0_46 = arith.constant 0 : index
      %c0_47 = arith.constant 0 : index
      %c0_48 = arith.constant 0 : index
      %c0_49 = arith.constant 0 : index
      %44 = vector.load %arg6[%c0_46, %c0_47, %c0_48, %c0_49] : memref<1x4x16x8xbf16, #tpu.memory_space<vmem>>, vector<1x4x16x8xbf16>
      %45 = vector.shape_cast %44 : vector<1x4x16x8xbf16> to vector<4x16x8xbf16>
      "tpu.trace_start"() <{level = 10 : i32, message = "hqd,hmd->hqm"}> : () -> ()
      %cst_50 = arith.constant dense<0.000000e+00> : vector<4x8x16xf32>
      %46 = tpu.matmul %43, %45, %cst_50 {dimension_numbers = #tpu.dot_dimension_numbers<[2], [2], [1], [1], [0, 0, 0, 1, 1, 1], [0], [0]>} : vector<4x8x8xbf16>, vector<4x16x8xbf16>, vector<4x8x16xf32> -> vector<4x8x16xf32>
      "tpu.trace_stop"() : () -> ()
      %c0_51 = arith.constant 0 : index
      %c0_52 = arith.constant 0 : index
      %47 = vector.load %arg8[%c0_51, %c0_52] : memref<1x16xf32, #tpu.memory_space<vmem>>, vector<1x16xf32>
      %48 = vector.shape_cast %47 : vector<1x16xf32> to vector<1x1x16xf32>
      %49 = vector.broadcast %48 : vector<1x1x16xf32> to vector<4x8x16xf32>
      %50 = arith.addf %46, %49 : vector<4x8x16xf32>
      %cst_53 = arith.constant dense<0xFF800000> : vector<4x8xf32>
      %51 = vector.multi_reduction <maximumf>, %50, %cst_53 [2] : vector<4x8x16xf32> to vector<4x8xf32>
      %52 = vector.shape_cast %51 : vector<4x8xf32> to vector<4x8x1xf32>
      %53 = vector.broadcast %52 : vector<4x8x1xf32> to vector<4x8x16xf32>
      %54 = arith.subf %50, %53 : vector<4x8x16xf32>
      %55 = math.exp %54 : vector<4x8x16xf32>
      %cst_54 = arith.constant dense<0.000000e+00> : vector<4x8xf32>
      %56 = vector.multi_reduction <add>, %55, %cst_54 [2] : vector<4x8x16xf32> to vector<4x8xf32>
      %57 = vector.shape_cast %56 : vector<4x8xf32> to vector<4x8x1xf32>
      %58 = tpu.reciprocal %57 {approx = true} : vector<4x8x1xf32> -> vector<4x8x1xf32>
      %59 = vector.broadcast %58 : vector<4x8x1xf32> to vector<4x8x16xf32>
      %60 = arith.mulf %55, %59 : vector<4x8x16xf32>
      %61 = arith.truncf %60 : vector<4x8x16xf32> to vector<4x8x16xbf16>
      %c0_55 = arith.constant 0 : index
      %c0_56 = arith.constant 0 : index
      %c0_57 = arith.constant 0 : index
      %c0_58 = arith.constant 0 : index
      %62 = vector.load %arg7[%c0_55, %c0_56, %c0_57, %c0_58] : memref<1x4x16x8xbf16, #tpu.memory_space<vmem>>, vector<1x4x16x8xbf16>
      %63 = vector.shape_cast %62 : vector<1x4x16x8xbf16> to vector<4x16x8xbf16>
      "tpu.trace_start"() <{level = 10 : i32, message = "hqm,hmd->hqd"}> : () -> ()
      %cst_59 = arith.constant dense<0.000000e+00> : vector<4x8x8xf32>
      %64 = tpu.matmul %61, %63, %cst_59 {dimension_numbers = #tpu.dot_dimension_numbers<[2], [1], [1], [2], [0, 0, 0, 1, 1, 2], [0], [0]>} : vector<4x8x16xbf16>, vector<4x16x8xbf16>, vector<4x8x8xf32> -> vector<4x8x8xf32>
      "tpu.trace_stop"() : () -> ()
      %65 = tpu.transpose %64, [1, 0, 2] : vector<4x8x8xf32> -> vector<8x4x8xf32>
      %66 = vector.shape_cast %65 : vector<8x4x8xf32> to vector<8x32xf32>
      %c0_60 = arith.constant 0 : index
      %c0_61 = arith.constant 0 : index
      %67 = vector.load %arg9[%c0_60, %c0_61] : memref<1x32xf32, #tpu.memory_space<vmem>>, vector<1x32xf32>
      %68 = vector.broadcast %67 : vector<1x32xf32> to vector<8x32xf32>
      %69 = arith.mulf %68, %42 : vector<8x32xf32>
      %c0_62 = arith.constant 0 : index
      %c0_63 = arith.constant 0 : index
      %70 = vector.load %arg10[%c0_62, %c0_63] : memref<1x32xf32, #tpu.memory_space<vmem>>, vector<1x32xf32>
      %71 = vector.broadcast %70 : vector<1x32xf32> to vector<8x32xf32>
      %72 = arith.mulf %71, %66 : vector<8x32xf32>
      %73 = arith.addf %69, %72 : vector<8x32xf32>
      %c0_64 = arith.constant 0 : index
      %c0_65 = arith.constant 0 : index
      %c0_66 = arith.constant 0 : index
      %74 = vector.load %arg3[%c0_64, %c0_65, %c0_66] : memref<1x8x32xf32, #tpu.memory_space<vmem>>, vector<1x8x32xf32>
      %75 = vector.shape_cast %74 : vector<1x8x32xf32> to vector<8x32xf32>
      %76 = arith.truncf %73 : vector<8x32xf32> to vector<8x32xbf16>
      %c0_67 = arith.constant 0 : index
      %c0_68 = arith.constant 0 : index
      %77 = vector.load %arg13[%c0_67, %c0_68] : memref<32x32xbf16, #tpu.memory_space<vmem>>, vector<32x32xbf16>
      %cst_69 = arith.constant dense<0.000000e+00> : vector<8x32xf32>
      %78 = tpu.matmul %76, %77, %cst_69 {dimension_numbers = #tpu.dot_dimension_numbers<[1], [0], [0], [1], [0, 0, 1, 1], [], []>} : vector<8x32xbf16>, vector<32x32xbf16>, vector<8x32xf32> -> vector<8x32xf32>
      %c0_70 = arith.constant 0 : index
      %c0_71 = arith.constant 0 : index
      %79 = vector.load %arg14[%c0_70, %c0_71] : memref<1x32xf32, #tpu.memory_space<vmem>>, vector<1x32xf32>
      %80 = vector.broadcast %79 : vector<1x32xf32> to vector<8x32xf32>
      %81 = arith.addf %78, %80 : vector<8x32xf32>
      %82 = arith.addf %75, %81 : vector<8x32xf32>
      %c0_72 = arith.constant 0 : index
      %c0_73 = arith.constant 0 : index
      %83 = vector.load %arg15[%c0_72, %c0_73] : memref<1x32xf32, #tpu.memory_space<vmem>>, vector<1x32xf32>
      %c0_74 = arith.constant 0 : index
      %c0_75 = arith.constant 0 : index
      %84 = vector.load %arg16[%c0_74, %c0_75] : memref<1x32xf32, #tpu.memory_space<vmem>>, vector<1x32xf32>
      %cst_76 = arith.constant dense<0.000000e+00> : vector<8xf32>
      %85 = vector.multi_reduction <add>, %82, %cst_76 [1] : vector<8x32xf32> to vector<8xf32>
      %86 = vector.shape_cast %85 : vector<8xf32> to vector<8x1xf32>
      %cst_77 = arith.constant 3.200000e+01 : f32
      %87 = vector.broadcast %cst_77 : f32 to vector<8x1xf32>
      %88 = arith.divf %86, %87 : vector<8x1xf32>
      %89 = vector.broadcast %88 : vector<8x1xf32> to vector<8x32xf32>
      %90 = arith.subf %82, %89 : vector<8x32xf32>
      %91 = arith.mulf %90, %90 : vector<8x32xf32>
      %cst_78 = arith.constant dense<0.000000e+00> : vector<8xf32>
      %92 = vector.multi_reduction <add>, %91, %cst_78 [1] : vector<8x32xf32> to vector<8xf32>
      %93 = vector.shape_cast %92 : vector<8xf32> to vector<8x1xf32>
      %cst_79 = arith.constant 3.200000e+01 : f32
      %94 = vector.broadcast %cst_79 : f32 to vector<8x1xf32>
      %95 = arith.divf %93, %94 : vector<8x1xf32>
      %96 = vector.broadcast %88 : vector<8x1xf32> to vector<8x32xf32>
      %97 = arith.subf %82, %96 : vector<8x32xf32>
      %cst_80 = arith.constant 9.99999996E-13 : f32
      %98 = vector.broadcast %cst_80 : f32 to vector<8x1xf32>
      %99 = arith.addf %95, %98 : vector<8x1xf32>
      %100 = math.rsqrt %99 : vector<8x1xf32>
      %101 = vector.broadcast %100 : vector<8x1xf32> to vector<8x32xf32>
      %102 = arith.mulf %97, %101 : vector<8x32xf32>
      %103 = vector.broadcast %83 : vector<1x32xf32> to vector<8x32xf32>
      %104 = arith.mulf %102, %103 : vector<8x32xf32>
      %105 = vector.broadcast %84 : vector<1x32xf32> to vector<8x32xf32>
      %106 = arith.addf %104, %105 : vector<8x32xf32>
      %107 = arith.truncf %106 : vector<8x32xf32> to vector<8x32xbf16>
      %c0_81 = arith.constant 0 : index
      %c0_82 = arith.constant 0 : index
      %108 = vector.load %arg17[%c0_81, %c0_82] : memref<32x128xbf16, #tpu.memory_space<vmem>>, vector<32x128xbf16>
      %cst_83 = arith.constant dense<0.000000e+00> : vector<8x128xf32>
      %109 = tpu.matmul %107, %108, %cst_83 {dimension_numbers = #tpu.dot_dimension_numbers<[1], [0], [0], [1], [0, 0, 1, 1], [], []>} : vector<8x32xbf16>, vector<32x128xbf16>, vector<8x128xf32> -> vector<8x128xf32>
      %c0_84 = arith.constant 0 : index
      %c0_85 = arith.constant 0 : index
      %110 = vector.load %arg18[%c0_84, %c0_85] : memref<1x128xf32, #tpu.memory_space<vmem>>, vector<1x128xf32>
      %111 = vector.broadcast %110 : vector<1x128xf32> to vector<8x128xf32>
      %112 = arith.addf %109, %111 : vector<8x128xf32>
      %cst_86 = arith.constant 0.000000e+00 : f32
      %113 = vector.broadcast %cst_86 : f32 to vector<8x128xf32>
      %114 = arith.maximumf %112, %113 : vector<8x128xf32>
      %115 = arith.truncf %114 : vector<8x128xf32> to vector<8x128xbf16>
      %c0_87 = arith.constant 0 : index
      %c0_88 = arith.constant 0 : index
      %116 = vector.load %arg19[%c0_87, %c0_88] : memref<128x32xbf16, #tpu.memory_space<vmem>>, vector<128x32xbf16>
      %cst_89 = arith.constant dense<0.000000e+00> : vector<8x32xf32>
      %117 = tpu.matmul %115, %116, %cst_89 {dimension_numbers = #tpu.dot_dimension_numbers<[1], [0], [0], [1], [0, 0, 1, 1], [], []>} : vector<8x128xbf16>, vector<128x32xbf16>, vector<8x32xf32> -> vector<8x32xf32>
      %c0_90 = arith.constant 0 : index
      %c0_91 = arith.constant 0 : index
      %118 = vector.load %arg20[%c0_90, %c0_91] : memref<1x32xf32, #tpu.memory_space<vmem>>, vector<1x32xf32>
      %119 = vector.broadcast %118 : vector<1x32xf32> to vector<8x32xf32>
      %120 = arith.addf %117, %119 : vector<8x32xf32>
      %121 = arith.addf %106, %120 : vector<8x32xf32>
      %c0_92 = arith.constant 0 : index
      %c0_93 = arith.constant 0 : index
      %122 = vector.load %arg21[%c0_92, %c0_93] : memref<1x32xf32, #tpu.memory_space<vmem>>, vector<1x32xf32>
      %c0_94 = arith.constant 0 : index
      %c0_95 = arith.constant 0 : index
      %123 = vector.load %arg22[%c0_94, %c0_95] : memref<1x32xf32, #tpu.memory_space<vmem>>, vector<1x32xf32>
      %cst_96 = arith.constant dense<0.000000e+00> : vector<8xf32>
      %124 = vector.multi_reduction <add>, %121, %cst_96 [1] : vector<8x32xf32> to vector<8xf32>
      %125 = vector.shape_cast %124 : vector<8xf32> to vector<8x1xf32>
      %cst_97 = arith.constant 3.200000e+01 : f32
      %126 = vector.broadcast %cst_97 : f32 to vector<8x1xf32>
      %127 = arith.divf %125, %126 : vector<8x1xf32>
      %128 = vector.broadcast %127 : vector<8x1xf32> to vector<8x32xf32>
      %129 = arith.subf %121, %128 : vector<8x32xf32>
      %130 = arith.mulf %129, %129 : vector<8x32xf32>
      %cst_98 = arith.constant dense<0.000000e+00> : vector<8xf32>
      %131 = vector.multi_reduction <add>, %130, %cst_98 [1] : vector<8x32xf32> to vector<8xf32>
      %132 = vector.shape_cast %131 : vector<8xf32> to vector<8x1xf32>
      %cst_99 = arith.constant 3.200000e+01 : f32
      %133 = vector.broadcast %cst_99 : f32 to vector<8x1xf32>
      %134 = arith.divf %132, %133 : vector<8x1xf32>
      %135 = vector.broadcast %127 : vector<8x1xf32> to vector<8x32xf32>
      %136 = arith.subf %121, %135 : vector<8x32xf32>
      %cst_100 = arith.constant 9.99999996E-13 : f32
      %137 = vector.broadcast %cst_100 : f32 to vector<8x1xf32>
      %138 = arith.addf %134, %137 : vector<8x1xf32>
      %139 = math.rsqrt %138 : vector<8x1xf32>
      %140 = vector.broadcast %139 : vector<8x1xf32> to vector<8x32xf32>
      %141 = arith.mulf %136, %140 : vector<8x32xf32>
      %142 = vector.broadcast %122 : vector<1x32xf32> to vector<8x32xf32>
      %143 = arith.mulf %141, %142 : vector<8x32xf32>
      %144 = vector.broadcast %123 : vector<1x32xf32> to vector<8x32xf32>
      %145 = arith.addf %143, %144 : vector<8x32xf32>
      %c0_101 = arith.constant 0 : index
      %c0_102 = arith.constant 0 : index
      %c0_103 = arith.constant 0 : index
      %146 = vector.load %arg23[%c0_101, %c0_102, %c0_103] : memref<1x8x32xf32, #tpu.memory_space<vmem>>, vector<1x8x32xf32>
      %147 = vector.shape_cast %146 : vector<1x8x32xf32> to vector<8x32xf32>
      %148 = vector.shape_cast %145 : vector<8x32xf32> to vector<1x8x32xf32>
      tpu.vector_store %arg23[%c0_101, %c0_102, %c0_103], %148 {strides = array<i32>} : memref<1x8x32xf32, #tpu.memory_space<vmem>>, vector<1x8x32xf32>,
    } else {
    }
    return
  }
  func.func @transform_0(%arg0: i32, %arg1: i32, %arg2: i32) -> (i32, i32, i32) {
    %c0_i32 = arith.constant 0 : i32
    %c0_i32_0 = arith.constant 0 : i32
    return %arg0, %arg1, %c0_i32 : i32, i32, i32
  }
  func.func @transform_1(%arg0: i32, %arg1: i32, %arg2: i32) -> (i32, i32, i32, i32) {
    %c0_i32 = arith.constant 0 : i32
    %c0_i32_0 = arith.constant 0 : i32
    %c0_i32_1 = arith.constant 0 : i32
    return %arg0, %c0_i32, %arg2, %c0_i32_0 : i32, i32, i32, i32
  }
  func.func @transform_2(%arg0: i32, %arg1: i32, %arg2: i32) -> (i32, i32, i32, i32) {
    %c0_i32 = arith.constant 0 : i32
    %c0_i32_0 = arith.constant 0 : i32
    %c0_i32_1 = arith.constant 0 : i32
    return %arg0, %c0_i32, %arg2, %c0_i32_0 : i32, i32, i32, i32
  }
  func.func @transform_3(%arg0: i32, %arg1: i32, %arg2: i32) -> (i32, i32, i32, i32) {
    %c0_i32 = arith.constant 0 : i32
    %c0_i32_0 = arith.constant 0 : i32
    %c0_i32_1 = arith.constant 0 : i32
    %c0_i32_2 = arith.constant 0 : i32
    return %arg0, %c0_i32, %c0_i32_0, %c0_i32_1 : i32, i32, i32, i32
  }
  func.func @transform_4(%arg0: i32, %arg1: i32, %arg2: i32) -> (i32, i32, i32, i32) {
    %c0_i32 = arith.constant 0 : i32
    %c0_i32_0 = arith.constant 0 : i32
    %c0_i32_1 = arith.constant 0 : i32
    %c0_i32_2 = arith.constant 0 : i32
    return %arg0, %c0_i32, %c0_i32_0, %c0_i32_1 : i32, i32, i32, i32
  }
  func.func @transform_5(%arg0: i32, %arg1: i32, %arg2: i32) -> (i32, i32) {
    %c0_i32 = arith.constant 0 : i32
    %c0_i32_0 = arith.constant 0 : i32
    %c0_i32_1 = arith.constant 0 : i32
    return %c0_i32, %c0_i32_0 : i32, i32
  }
  func.func @transform_6(%arg0: i32, %arg1: i32, %arg2: i32) -> (i32, i32) {
    %c0_i32 = arith.constant 0 : i32
    %c0_i32_0 = arith.constant 0 : i32
    %c0_i32_1 = arith.constant 0 : i32
    return %c0_i32, %c0_i32_0 : i32, i32
  }
  func.func @transform_7(%arg0: i32, %arg1: i32, %arg2: i32) -> (i32, i32) {
    %c0_i32 = arith.constant 0 : i32
    %c0_i32_0 = arith.constant 0 : i32
    %c0_i32_1 = arith.constant 0 : i32
    return %c0_i32, %c0_i32_0 : i32, i32
  }
  func.func @transform_8(%arg0: i32, %arg1: i32, %arg2: i32) -> (i32, i32) {
    %c0_i32 = arith.constant 0 : i32
    %c0_i32_0 = arith.constant 0 : i32
    %c0_i32_1 = arith.constant 0 : i32
    return %c0_i32, %c0_i32_0 : i32, i32
  }
  func.func @transform_9(%arg0: i32, %arg1: i32, %arg2: i32) -> (i32, i32) {
    %c0_i32 = arith.constant 0 : i32
    %c0_i32_0 = arith.constant 0 : i32
    %c0_i32_1 = arith.constant 0 : i32
    return %c0_i32, %c0_i32_0 : i32, i32
  }
  func.func @transform_10(%arg0: i32, %arg1: i32, %arg2: i32) -> (i32, i32) {
    %c0_i32 = arith.constant 0 : i32
    %c0_i32_0 = arith.constant 0 : i32
    %c0_i32_1 = arith.constant 0 : i32
    return %c0_i32, %c0_i32_0 : i32, i32
  }
  func.func @transform_11(%arg0: i32, %arg1: i32, %arg2: i32) -> (i32, i32) {
    %c0_i32 = arith.constant 0 : i32
    %c0_i32_0 = arith.constant 0 : i32
    %c0_i32_1 = arith.constant 0 : i32
    return %c0_i32, %c0_i32_0 : i32, i32
  }
  func.func @transform_12(%arg0: i32, %arg1: i32, %arg2: i32) -> (i32, i32) {
    %c0_i32 = arith.constant 0 : i32
    %c0_i32_0 = arith.constant 0 : i32
    %c0_i32_1 = arith.constant 0 : i32
    return %c0_i32, %c0_i32_0 : i32, i32
  }
  func.func @transform_13(%arg0: i32, %arg1: i32, %arg2: i32) -> (i32, i32) {
    %c0_i32 = arith.constant 0 : i32
    %c0_i32_0 = arith.constant 0 : i32
    %c0_i32_1 = arith.constant 0 : i32
    return %c0_i32, %c0_i32_0 : i32, i32
  }
  func.func @transform_14(%arg0: i32, %arg1: i32, %arg2: i32) -> (i32, i32) {
    %c0_i32 = arith.constant 0 : i32
    %c0_i32_0 = arith.constant 0 : i32
    %c0_i32_1 = arith.constant 0 : i32
    return %c0_i32, %c0_i32_0 : i32, i32
  }
  func.func @transform_15(%arg0: i32, %arg1: i32, %arg2: i32) -> (i32, i32) {
    %c0_i32 = arith.constant 0 : i32
    %c0_i32_0 = arith.constant 0 : i32
    %c0_i32_1 = arith.constant 0 : i32
    return %c0_i32, %c0_i32_0 : i32, i32
  }
  func.func @transform_16(%arg0: i32, %arg1: i32, %arg2: i32) -> (i32, i32) {
    %c0_i32 = arith.constant 0 : i32
    %c0_i32_0 = arith.constant 0 : i32
    %c0_i32_1 = arith.constant 0 : i32
    return %c0_i32, %c0_i32_0 : i32, i32
  }
  func.func @transform_17(%arg0: i32, %arg1: i32, %arg2: i32) -> (i32, i32) {
    %c0_i32 = arith.constant 0 : i32
    %c0_i32_0 = arith.constant 0 : i32
    %c0_i32_1 = arith.constant 0 : i32
    return %c0_i32, %c0_i32_0 : i32, i32
  }
  func.func @transform_18(%arg0: i32, %arg1: i32, %arg2: i32) -> (i32, i32) {
    %c0_i32 = arith.constant 0 : i32
    %c0_i32_0 = arith.constant 0 : i32
    %c0_i32_1 = arith.constant 0 : i32
    return %c0_i32, %c0_i32_0 : i32, i32
  }
  func.func @transform_19(%arg0: i32, %arg1: i32, %arg2: i32) -> (i32, i32) {
    %c0_i32 = arith.constant 0 : i32
    %c0_i32_0 = arith.constant 0 : i32
    %c0_i32_1 = arith.constant 0 : i32
    return %c0_i32, %c0_i32_0 : i32, i32
  }
  func.func @transform_20(%arg0: i32, %arg1: i32, %arg2: i32) -> (i32, i32, i32) {
    %c0_i32 = arith.constant 0 : i32
    %c0_i32_0 = arith.constant 0 : i32
    return %arg0, %arg1, %c0_i32 : i32, i32, i32
  }
}

</mosaic_0001>

<llo_original>
// kernel: memorizing_transformer_forward.6
$region0: #{memorizing_transformer_forward.6}
  #allocation0 [shape = 'u32[]', space=smem, size = 0x4, offset = 0x4, fixed_abs, tag = 'smem constant byte address 0x4 - core index']
  #allocation1 [shape = 'u32[144,128]{1,0:T(1,128)}', space=vmem, size = 0x12000, scoped, tag = 'internal scratch']
  %s0 = inlined_call_operand.hbm [shape: f32[2,8,32], index: 0, kind: input, shape index: {}]
  %s1 = inlined_call_operand.hbm [shape: bf16[32,64], index: 1, kind: input, shape index: {}]
  %s2 = inlined_call_operand.hbm [shape: f32[1,64], index: 2, kind: input, shape index: {}]
  %s3 = inlined_call_operand.hbm [shape: bf16[2,4,8,8], index: 3, kind: output, shape index: {0}]
  %s4 = inlined_call_operand.hbm [shape: bf16[2,4,8,8], index: 4, kind: output, shape index: {1}]
  %5 = xla_tuple %s3, %s4
  %s6 = sld [smem:[#allocation0]]
  $region65: #{memorizing_transformer_forward.6} parent=0
    _
  %s8 = ssub.s32 1, %s6
  %s9 = scalar_select 0, %s8, %s6
  $region1: #{memorizing_transformer_forward.6} parent=0
    #allocation2 [shape = 'u8[8192]{0}', space=vmem, size = 0x2000, scoped, tag = 'input window, operand 0']
    #allocation3 [shape = 's32[2]{0}', space=sflag, size = 0x8, scoped, tag = 'scoped memory for memorizing_transformer_forward.6']
    #allocation4 [shape = 's32[2]{0}', space=sflag, size = 0x8, scoped, tag = 'scoped memory for memorizing_transformer_forward.6']
    #allocation5 [shape = 'u8[8192]{0}', space=vmem, size = 0x2000, scoped, tag = 'input window, operand 1, single buffered']
    #allocation6 [shape = 's32[1]{0}', space=sflag, size = 0x4, scoped, tag = 'scoped memory for memorizing_transformer_forward.6']
    #allocation7 [shape = 'u8[512]{0}', space=vmem, size = 0x400, scoped, tag = 'input window, operand 2, single buffered']
    #allocation8 [shape = 'u8[16384]{0}', space=vmem, size = 0x4000, scoped, tag = 'output window, operand 0']
    #allocation9 [shape = 'u8[16384]{0}', space=vmem, size = 0x4000, scoped, tag = 'output window, operand 1']
    #allocation10 [shape = 's32[2]{0}', space=sflag, size = 0x8, scoped, tag = 'scoped memory for memorizing_transformer_forward.6']
    %10 = vsyncpa [#allocation3], 0
    %s11 = scalar_lea.sflag [#allocation3], 1
    %12 = vsyncpa %s11, 0
    %13 = vsyncpa [#allocation6], 0
    %14 = vsyncpa [#allocation4], 0
    %s15 = scalar_lea.sflag [#allocation4], 1
    %16 = vsyncpa %s15, 0
    %17 = vsyncpa [#allocation10], 0
    %s18 = scalar_lea.sflag [#allocation10], 1
    %19 = vsyncpa %s18, 0
    loop: start=0, step=1, limit=4
    $region2: #{memorizing_transformer_forward.6} parent=1 // loop_pre_header
      _
    $region3: #{memorizing_transformer_forward.6} parent=1 // loop_header
      %s21 = sphi 0, %s25
      %p22 = scmp.ge.s32.totalorder %s21, 4
      %s28 = sphi 0, %s40
      %s29 = sphi 0, %s36
      %s30 = sphi 0, %s28
      %s31 = sphi 0, %s29
      %s32 = sphi 0, %s30
      %s33 = sphi 0, %s31
      %s45 = sphi 0, %s47
      %s48 = sphi 0, %s45
      %s49 = sphi 0, %s48
      %s65 = sphi 0, %s49
      %s69 = sphi 0, %s69
      %s71 = sphi 0, %s69
      %s72 = sphi 0, %s71
      %s86 = sphi 0, %s72
      %s90 = sphi 0, %s90
      %s92 = sphi 0, %s90
      %s93 = sphi 0, %s92
      %s107 = sphi 0, %s93
      %s115 = sphi 0, %s117
      %s118 = sphi 0, %s115
      %s119 = sphi 0, %s118
      %s135 = sphi 0, %s119
      %s143 = sphi 0, %s145
      %s146 = sphi 0, %s143
      %s147 = sphi 0, %s146
      %s163 = sphi 0, %s147
    $region4: #{memorizing_transformer_forward.6} parent=1 // loop_header_branch
      %24 = sbr.rel (%p22) target = $region8
    $region5: #{memorizing_transformer_forward.6} parent=1 // loop_body
      %s26 = ssub.s32 %s21, 1
      %s27 = ssub.s32 %s21, 2
      %s34 = sadd.s32 1, %s29
      %p35 = scmp.ge.s32.totalorder %s34, 1
      %s36 = scalar_select %p35, 0, %s34
      %s37 = sadd.s32 1, %s28
      %s38 = scalar_select %p35, %s37, %s28
      %p39 = scmp.ge.s32.totalorder %s38, 2
      %s40 = scalar_select %p39, 0, %s38
      %s41 = ssub.s32 %s28, %s40
      %s42 = ssub.s32 %s29, %s36
      %s43 = sor.u32 %s41, %s42
      %p44 = scmp.eq.s32.totalorder %s43, 0
      %s46 = sadd.s32 %s45, 1
      %s47 = scalar_select %p44, %s45, %s46
      %p50 = pneg %p44
      %p51 = scmp.eq.s32.totalorder %s21, 1
      %p52 = por %p50, %p51
      %p53 = scmp.ne.s32.totalorder %s45, %s48
      %p54 = scmp.eq.s32.totalorder %s21, 0
      %p55 = por %p53, %p54
      %p56 = scmp.ne.s32.totalorder %s45, %s48
      %p57 = scmp.eq.s32.totalorder %s26, 1
      %p58 = por %p56, %p57
      %p59 = scmp.ne.s32.totalorder %s48, %s49
      %p60 = scmp.eq.s32.totalorder %s26, 0
      %p61 = por %p59, %p60
      %p62 = scmp.ne.s32.totalorder %s48, %s49
      %p63 = scmp.eq.s32.totalorder %s27, 1
      %p64 = por %p62, %p63
      %p66 = scmp.ne.s32.totalorder %s49, %s65
      %p67 = scmp.eq.s32.totalorder %s27, 0
      %p68 = por %p66, %p67
      %s70 = sadd.s32 %s69, 1
      %p73 = scmp.eq.s32.totalorder %s21, 1
      %p74 = scmp.ne.s32.totalorder %s69, %s71
      %p75 = scmp.eq.s32.totalorder %s21, 0
      %p76 = por %p74, %p75
      %p77 = scmp.ne.s32.totalorder %s69, %s71
      %p78 = scmp.eq.s32.totalorder %s26, 1
      %p79 = por %p77, %p78
      %p80 = scmp.ne.s32.totalorder %s71, %s72
      %p81 = scmp.eq.s32.totalorder %s26, 0
      %p82 = por %p80, %p81
      %p83 = scmp.ne.s32.totalorder %s71, %s72
      %p84 = scmp.eq.s32.totalorder %s27, 1
      %p85 = por %p83, %p84
      %p87 = scmp.ne.s32.totalorder %s72, %s86
      %p88 = scmp.eq.s32.totalorder %s27, 0
      %p89 = por %p87, %p88
      %s91 = sadd.s32 %s90, 1
      %p94 = scmp.eq.s32.totalorder %s21, 1
      %p95 = scmp.ne.s32.totalorder %s90, %s92
      %p96 = scmp.eq.s32.totalorder %s21, 0
      %p97 = por %p95, %p96
      %p98 = scmp.ne.s32.totalorder %s90, %s92
      %p99 = scmp.eq.s32.totalorder %s26, 1
      %p100 = por %p98, %p99
      %p101 = scmp.ne.s32.totalorder %s92, %s93
      %p102 = scmp.eq.s32.totalorder %s26, 0
      %p103 = por %p101, %p102
      %p104 = scmp.ne.s32.totalorder %s92, %s93
      %p105 = scmp.eq.s32.totalorder %s27, 1
      %p106 = por %p104, %p105
      %p108 = scmp.ne.s32.totalorder %s93, %s107
      %p109 = scmp.eq.s32.totalorder %s27, 0
      %p110 = por %p108, %p109
      %s111 = ssub.s32 %s28, %s40
      %s112 = ssub.s32 %s29, %s36
      %s113 = sor.u32 %s111, %s112
      %p114 = scmp.eq.s32.totalorder %s113, 0
      %s116 = sadd.s32 %s115, 1
      %s117 = scalar_select %p114, %s115, %s116
      %p120 = pneg %p114
      %p121 = scmp.eq.s32.totalorder %s21, 1
      %p122 = por %p120, %p121
      %p123 = scmp.ne.s32.totalorder %s115, %s118
      %p124 = scmp.eq.s32.totalorder %s21, 0
      %p125 = por %p123, %p124
      %p126 = scmp.ne.s32.totalorder %s115, %s118
      %p127 = scmp.eq.s32.totalorder %s26, 1
      %p128 = por %p126, %p127
      %p129 = scmp.ne.s32.totalorder %s118, %s119
      %p130 = scmp.eq.s32.totalorder %s26, 0
      %p131 = por %p129, %p130
      %p132 = scmp.ne.s32.totalorder %s118, %s119
      %p133 = scmp.eq.s32.totalorder %s27, 1
      %p134 = por %p132, %p133
      %p136 = scmp.ne.s32.totalorder %s119, %s135
      %p137 = scmp.eq.s32.totalorder %s27, 0
      %p138 = por %p136, %p137
      %s139 = ssub.s32 %s28, %s40
      %s140 = ssub.s32 %s29, %s36
      %s141 = sor.u32 %s139, %s140
      %p142 = scmp.eq.s32.totalorder %s141, 0
      %s144 = sadd.s32 %s143, 1
      %s145 = scalar_select %p142, %s143, %s144
      %p148 = pneg %p142
      %p149 = scmp.eq.s32.totalorder %s21, 1
      %p150 = por %p148, %p149
      %p151 = scmp.ne.s32.totalorder %s143, %s146
      %p152 = scmp.eq.s32.totalorder %s21, 0
      %p153 = por %p151, %p152
      %p154 = scmp.ne.s32.totalorder %s143, %s146
      %p155 = scmp.eq.s32.totalorder %s26, 1
      %p156 = por %p154, %p155
      %p157 = scmp.ne.s32.totalorder %s146, %s147
      %p158 = scmp.eq.s32.totalorder %s26, 0
      %p159 = por %p157, %p158
      %p160 = scmp.ne.s32.totalorder %s146, %s147
      %p161 = scmp.eq.s32.totalorder %s27, 1
      %p162 = por %p160, %p161
      %p164 = scmp.ne.s32.totalorder %s147, %s163
      %p165 = scmp.eq.s32.totalorder %s27, 0
      %p166 = por %p164, %p165
      %p167 = scmp.le.s32.totalorder 1, %s21
      %p168 = scmp.lt.s32.totalorder %s21, 3
      %p169 = pnand %p167, %p168
      %p170 = pneg %p169
      // Predicated region
      $region9: #{memorizing_transformer_forward.6} parent=5 // pred_check
        _
      $region10: #{memorizing_transformer_forward.6} parent=5 // pred_check_branch
        %172 = sbr.rel (%p169) target = $region12
      $region11: #{memorizing_transformer_forward.6} parent=5 // pred_region
        %s173 = ssub.s32 %s21, 1
        // Predicated region
        $region13: #{memorizing_transformer_forward.6} parent=11 // pred_check
          %p174 = pneg %p82
        $region14: #{memorizing_transformer_forward.6} parent=11 // pred_check_branch
          %176 = sbr.rel (%p174) target = $region16
        $region15: #{memorizing_transformer_forward.6} parent=11 // pred_region
          %s178 = ssub.s32 256, 256
          %179 = vsyncadd [#allocation6], %s178
          %s180 = sshll.u32 [#allocation5], 4
          %s181 = int_to_ptr.vmem [resolvable:$true] %s180
          %186 = dma.hbm_to_vmem [thread:$0]  %s1, 256, %s181, [#allocation6], 64, 64, 4
        $region16: #{memorizing_transformer_forward.6} parent=11 // pred_fallthru
          _
        // Predicated region
        $region17: #{memorizing_transformer_forward.6} parent=11 // pred_check
          %p187 = pneg %p103
        $region18: #{memorizing_transformer_forward.6} parent=11 // pred_check_branch
          %189 = sbr.rel (%p187) target = $region20
        $region19: #{memorizing_transformer_forward.6} parent=11 // pred_region
          %s191 = ssub.s32 16, 16
          %192 = vsyncadd [#allocation6], %s191
          %s194 = sshll.u32 [#allocation7], 4
          %s195 = int_to_ptr.vmem [resolvable:$true] %s194
          %197 = dma.hbm_to_vmem [thread:$0]  %s2, 16, %s195, [#allocation6]
        $region20: #{memorizing_transformer_forward.6} parent=11 // pred_fallthru
          _
      $region12: #{memorizing_transformer_forward.6} parent=5 // pred_fallthru
        _
      %p198 = scmp.lt.s32.totalorder %s21, 2
      // Predicated region
      $region21: #{memorizing_transformer_forward.6} parent=5 // pred_check
        %p199 = pneg %p198
      $region22: #{memorizing_transformer_forward.6} parent=5 // pred_check_branch
        %201 = sbr.rel (%p199) target = $region24
      $region23: #{memorizing_transformer_forward.6} parent=5 // pred_region
        // Predicated region
        $region25: #{memorizing_transformer_forward.6} parent=23 // pred_check
          %p202 = pneg %p55
        $region26: #{memorizing_transformer_forward.6} parent=23 // pred_check_branch
          %204 = sbr.rel (%p202) target = $region28
        $region27: #{memorizing_transformer_forward.6} parent=23 // pred_region
          %s205 = sand.u32 %s45, 1
          %s206 = scalar_lea.sflag [#allocation3], %s205
          %s207 = sand.u32 %s45, 1
          %s208 = smul.addr %s207, 8
          %s209 = scalar_lea.vmem [#allocation2], %s208
          %s211 = ssub.s32 128, 128
          %212 = vsyncadd %s206, %s211
          %s213 = sadd.s32 %s29, %s28
          %s214 = smul.addr %s213, 128
          %s215 = scalar_lea.hbm %s0, %s214
          %s217 = sshll.u32 %s209, 4
          %s218 = int_to_ptr.vmem [resolvable:$true] %s217
          %220 = dma.hbm_to_vmem [thread:$0]  %s215, 128, %s218, %s206
        $region28: #{memorizing_transformer_forward.6} parent=23 // pred_fallthru
          _
      $region24: #{memorizing_transformer_forward.6} parent=5 // pred_fallthru
        _
      %p221 = scmp.le.s32.totalorder 1, %s21
      %p222 = scmp.lt.s32.totalorder %s21, 3
      %p223 = pnand %p221, %p222
      %p224 = pneg %p223
      // Predicated region
      $region29: #{memorizing_transformer_forward.6} parent=5 // pred_check
        _
      $region30: #{memorizing_transformer_forward.6} parent=5 // pred_check_branch
        %226 = sbr.rel (%p223) target = $region32
      $region31: #{memorizing_transformer_forward.6} parent=5 // pred_region
        %s227 = ssub.s32 %s21, 1
        %s228 = sand.u32 %s48, 1
        %s229 = scalar_lea.sflag [#allocation3], %s228
        %s230 = sand.u32 %s48, 1
        %s231 = smul.addr %s230, 8
        %s232 = scalar_lea.vmem [#allocation2], %s231
        // Predicated region
        $region33: #{memorizing_transformer_forward.6} parent=31 // pred_check
          %p233 = pneg %p61
        $region34: #{memorizing_transformer_forward.6} parent=31 // pred_check_branch
          %235 = sbr.rel (%p233) target = $region36
        $region35: #{memorizing_transformer_forward.6} parent=31 // pred_region
          %236 = dma.done %s229, 128
        $region36: #{memorizing_transformer_forward.6} parent=31 // pred_fallthru
          _
        // Predicated region
        $region37: #{memorizing_transformer_forward.6} parent=31 // pred_check
          %p237 = pneg %p82
        $region38: #{memorizing_transformer_forward.6} parent=31 // pred_check_branch
          %239 = sbr.rel (%p237) target = $region40
        $region39: #{memorizing_transformer_forward.6} parent=31 // pred_region
          %240 = dma.done [#allocation6], 256
        $region40: #{memorizing_transformer_forward.6} parent=31 // pred_fallthru
          _
        // Predicated region
        $region41: #{memorizing_transformer_forward.6} parent=31 // pred_check
          %p241 = pneg %p103
        $region42: #{memorizing_transformer_forward.6} parent=31 // pred_check_branch
          %243 = sbr.rel (%p241) target = $region44
        $region43: #{memorizing_transformer_forward.6} parent=31 // pred_region
          %244 = dma.done [#allocation6], 16
        $region44: #{memorizing_transformer_forward.6} parent=31 // pred_fallthru
          _
        %s245 = sand.u32 %s48, 1
        %s246 = scalar_lea.sflag [#allocation3], %s245
        %s247 = sand.u32 %s48, 1
        %s248 = smul.addr %s247, 8
        %s249 = scalar_lea.vmem [#allocation2], %s248
        %p250 = pneg %p61
        %p251 = pneg %p58
        %p252 = pneg %p82
        %p253 = pneg %p79
        %p254 = pneg %p103
        %p255 = pneg %p100
        %p256 = pneg %p131
        %p257 = pneg %p128
        %s258 = sand.u32 %s118, 1
        %s259 = scalar_lea.sflag [#allocation4], %s258
        %s260 = sand.u32 %s118, 1
        %s261 = smul.addr %s260, 16
        %s262 = scalar_lea.vmem [#allocation8], %s261
        %p263 = pneg %p159
        %p264 = pneg %p156
        %s265 = sand.u32 %s146, 1
        %s266 = scalar_lea.sflag [#allocation10], %s265
        %s267 = sand.u32 %s146, 1
        %s268 = smul.addr %s267, 16
        %s269 = scalar_lea.vmem [#allocation9], %s268
        %v271 = vld [vmem:[%s232] sm:$0xff]
        %v272 = vpack.c.bf16 %v271, %v271
        %v273 = vld [vmem:[#allocation5] sm:$0xf]
        %v274 = vld [vmem:[#allocation5 + $0x4] sm:$0xf]
        %v275 = vld [vmem:[#allocation5 + $0x8] sm:$0xf]
        %v276 = vld [vmem:[#allocation5 + $0xc] sm:$0xf]
        %v277 = vld [vmem:[#allocation7] sm:$0x1]
        %v279 = vlaneseq
        %v280 = vshrl.u32 %v279, 7
        %v281 = vsub.s32 0, %v280
        %v282 = vrot.slane %v277, %v281
        %v288 = vunpack.c.l.b16 %v273
        %v289 = vunpack.c.l.b16 %v274
        %v290 = vunpack.c.l.b16 %v275
        %v291 = vunpack.c.l.b16 %v276
        %v292 = vpack.c.b16 %v289, %v288
        %v293 = vpack.c.b16 %v291, %v290
        %vm296 = vcmask 261120
        %v298 = vsel %vm296, %v272, 0
        %300 = vmatprep.subr.bf16.mxu0 0
        %301 = vmatpush1.bf16.msra.mxu0 %v292
        %302 = vmatprep.subr.bf16.mxu0 0
        %303 = vmatpush1.bf16.msra.mxu0 %v293
        %304 = vmatprep.subr.bf16.mxu0 0
        %305 = vmatpush1.bf16.msra.mxu0 0
        %306 = vmatprep.subr.bf16.mxu0 0
        %307 = vmatpush1.bf16.msra.mxu0 0
        %308 = vmatprep.subr.bf16.mxu0 0
        %309 = vmatpush1.bf16.msra.mxu0 0
        %310 = vmatprep.subr.bf16.mxu0 0
        %311 = vmatpush1.bf16.msra.mxu0 0
        %312 = vmatprep.subr.bf16.mxu0 0
        %313 = vmatpush1.bf16.msra.mxu0 0
        %314 = vmatprep.subr.bf16.mxu0 0
        %315 = vmatpush1.bf16.msra.mxu0 0
        %316 = vmatprep.subr.bf16.mxu0 0
        %317 = vmatpush1.bf16.msra.mxu0 0
        %318 = vmatprep.subr.bf16.mxu0 0
        %319 = vmatpush1.bf16.msra.mxu0 0
        %320 = vmatprep.subr.bf16.mxu0 0
        %321 = vmatpush1.bf16.msra.mxu0 0
        %322 = vmatprep.subr.bf16.mxu0 0
        %323 = vmatpush1.bf16.msra.mxu0 0
        %324 = vmatprep.subr.bf16.mxu0 0
        %325 = vmatpush1.bf16.msra.mxu0 0
        %326 = vmatprep.subr.bf16.mxu0 0
        %327 = vmatpush1.bf16.msra.mxu0 0
        %328 = vmatprep.subr.bf16.mxu0 0
        %329 = vmatpush1.bf16.msra.mxu0 0
        %330 = vmatprep.subr.bf16.mxu0 0
        %331 = vmatpush1.bf16.msra.mxu0 0
        %332 = vmatprep.mubr.bf16.mxu0 0
        %333 = vmatmul.mubr.bf16.gmra.mrb[0].mxu0 %v298
        %v334 = vpop.f32.mrb[0].mxu0
        %v335 = vadd.f32 %v282, %v334
        %v336 = vpop.f32.mrb[0].mxu0
        %v337 = vpop.f32.mrb[0].mxu0
        %v338 = vpop.f32.mrb[0].mxu0
        %339 = vdwg.mxu0
        %341 = vrot.lane.b32.xlu0 %v335, 120
        %v342 = vpop.permute.xlu0 %341
        %344 = vrot.lane.b32.xlu0 %v335, 112
        %v345 = vpop.permute.xlu0 %344
        %347 = vrot.lane.b32.xlu0 %v335, 104
        %v348 = vpop.permute.xlu0 %347
        %v350 = vcombine.low %v335, %v345
        %v351 = vcombine.high %v335, %v345
        %v353 = vunpack.c.l.s4 1983009808
        %v354 = vunpack.c.0.s8 %v353
        %v355 = vlaneseq
        %v356 = vshrl.u32 %v355, 7
        %v357 = vsub.s32 %v354, %v356
        %v358 = vrot.slane %v350, %v357
        %v360 = vunpack.c.l.s4 1983009808
        %v361 = vunpack.c.0.s8 %v360
        %v362 = vlaneseq
        %v363 = vshrl.u32 %v362, 7
        %v364 = vsub.s32 %v361, %v363
        %v365 = vrot.slane %v351, %v364
        %v366 = vcombine.low %v342, %v348
        %v367 = vcombine.high %v342, %v348
        %v369 = vunpack.c.l.s4 1983009808
        %v370 = vunpack.c.0.s8 %v369
        %v371 = vlaneseq
        %v372 = vshrl.u32 %v371, 7
        %v373 = vsub.s32 %v370, %v372
        %v374 = vrot.slane %v366, %v373
        %v376 = vunpack.c.l.s4 1983009808
        %v377 = vunpack.c.0.s8 %v376
        %v378 = vlaneseq
        %v379 = vshrl.u32 %v378, 7
        %v380 = vsub.s32 %v377, %v379
        %v381 = vrot.slane %v367, %v380
        %v382 = vcombine.low %v358, %v374
        %v383 = vcombine.high %v358, %v374
        %v385 = vunpack.c.l.s4 1934713408
        %v386 = vunpack.c.0.s8 %v385
        %v387 = vlaneseq
        %v388 = vshrl.u32 %v387, 7
        %v389 = vsub.s32 %v386, %v388
        %v390 = vrot.slane %v382, %v389
        %v392 = vunpack.c.l.s4 1934713408
        %v393 = vunpack.c.0.s8 %v392
        %v394 = vlaneseq
        %v395 = vshrl.u32 %v394, 7
        %v396 = vsub.s32 %v393, %v395
        %v397 = vrot.slane %v383, %v396
        %v398 = vcombine.low %v365, %v381
        %v399 = vcombine.high %v365, %v381
        %v401 = vunpack.c.l.s4 1934713408
        %v402 = vunpack.c.0.s8 %v401
        %v403 = vlaneseq
        %v404 = vshrl.u32 %v403, 7
        %v405 = vsub.s32 %v402, %v404
        %v406 = vrot.slane %v398, %v405
        %v408 = vunpack.c.l.s4 1934713408
        %v409 = vunpack.c.0.s8 %v408
        %v410 = vlaneseq
        %v411 = vshrl.u32 %v410, 7
        %v412 = vsub.s32 %v409, %v411
        %v413 = vrot.slane %v399, %v412
        %v414 = vcombine.high %v390, 0.0
        %v415 = vcombine.high %v397, 0.0
        %v416 = vcombine.high %v406, 0.0
        %v417 = vcombine.high %v413, 0.0
        %v418 = vcombine.low %v390, %v397
        %v420 = vunpack.c.l.s4 1983009808
        %v421 = vunpack.c.0.s8 %v420
        %v422 = vlaneseq
        %v423 = vshrl.u32 %v422, 7
        %v424 = vsub.s32 %v421, %v423
        %v425 = vrot.slane %v418, %v424
        %v426 = vcombine.low %v414, %v415
        %v428 = vunpack.c.l.s4 1983009808
        %v429 = vunpack.c.0.s8 %v428
        %v430 = vlaneseq
        %v431 = vshrl.u32 %v430, 7
        %v432 = vsub.s32 %v429, %v431
        %v433 = vrot.slane %v426, %v432
        %v434 = vcombine.low %v406, %v413
        %v436 = vunpack.c.l.s4 1983009808
        %v437 = vunpack.c.0.s8 %v436
        %v438 = vlaneseq
        %v439 = vshrl.u32 %v438, 7
        %v440 = vsub.s32 %v437, %v439
        %v441 = vrot.slane %v434, %v440
        %v442 = vcombine.low %v416, %v417
        %v444 = vunpack.c.l.s4 1983009808
        %v445 = vunpack.c.0.s8 %v444
        %v446 = vlaneseq
        %v447 = vshrl.u32 %v446, 7
        %v448 = vsub.s32 %v445, %v447
        %v449 = vrot.slane %v442, %v448
        %v450 = vcombine.low %v425, %v433
        %v451 = vcombine.high %v425, %v433
        %v453 = vunpack.c.l.s4 1934713408
        %v454 = vunpack.c.0.s8 %v453
        %v455 = vlaneseq
        %v456 = vshrl.u32 %v455, 7
        %v457 = vsub.s32 %v454, %v456
        %v458 = vrot.slane %v450, %v457
        %v460 = vunpack.c.l.s4 1934713408
        %v461 = vunpack.c.0.s8 %v460
        %v462 = vlaneseq
        %v463 = vshrl.u32 %v462, 7
        %v464 = vsub.s32 %v461, %v463
        %v465 = vrot.slane %v451, %v464
        %v466 = vcombine.low %v441, %v449
        %v467 = vcombine.high %v441, %v449
        %v469 = vunpack.c.l.s4 1934713408
        %v470 = vunpack.c.0.s8 %v469
        %v471 = vlaneseq
        %v472 = vshrl.u32 %v471, 7
        %v473 = vsub.s32 %v470, %v472
        %v474 = vrot.slane %v466, %v473
        %v476 = vunpack.c.l.s4 1934713408
        %v477 = vunpack.c.0.s8 %v476
        %v478 = vlaneseq
        %v479 = vshrl.u32 %v478, 7
        %v480 = vsub.s32 %v477, %v479
        %v481 = vrot.slane %v467, %v480
        %v482 = vcombine.low %v458, %v474
        %v483 = vcombine.high %v458, %v474
        %v484 = vcombine.low %v465, %v481
        %v485 = vcombine.high %v465, %v481
        %v486 = vpack.c.bf16 %v482, %v482
        %v487 = vpack.c.bf16 %v483, %v483
        %v488 = vpack.c.bf16 %v484, %v484
        %v489 = vpack.c.bf16 %v485, %v485
        %vm490 = vcmask 60416
        %491 = vst.msk [vmem:[%s262] sm:$0xf] %vm490, %v486
        %492 = vst.msk [vmem:[%s262 + $0x4] sm:$0xf] %vm490, %v487
        %493 = vst.msk [vmem:[%s262 + $0x8] sm:$0xf] %vm490, %v488
        %494 = vst.msk [vmem:[%s262 + $0xc] sm:$0xf] %vm490, %v489
        %495 = vrot.lane.b32.xlu0 %v335, 96
        %v496 = vpop.permute.xlu0 %495
        %497 = vrot.lane.b32.xlu0 %v342, 96
        %v498 = vpop.permute.xlu0 %497
        %499 = vrot.lane.b32.xlu0 %v345, 96
        %v500 = vpop.permute.xlu0 %499
        %501 = vrot.lane.b32.xlu0 %v348, 96
        %v502 = vpop.permute.xlu0 %501
        %v507 = vcombine.low %v496, %v500
        %v508 = vcombine.high %v496, %v500
        %v510 = vunpack.c.l.s4 1983009808
        %v511 = vunpack.c.0.s8 %v510
        %v512 = vlaneseq
        %v513 = vshrl.u32 %v512, 7
        %v514 = vsub.s32 %v511, %v513
        %v515 = vrot.slane %v507, %v514
        %v517 = vunpack.c.l.s4 1983009808
        %v518 = vunpack.c.0.s8 %v517
        %v519 = vlaneseq
        %v520 = vshrl.u32 %v519, 7
        %v521 = vsub.s32 %v518, %v520
        %v522 = vrot.slane %v508, %v521
        %v523 = vcombine.low %v498, %v502
        %v524 = vcombine.high %v498, %v502
        %v526 = vunpack.c.l.s4 1983009808
        %v527 = vunpack.c.0.s8 %v526
        %v528 = vlaneseq
        %v529 = vshrl.u32 %v528, 7
        %v530 = vsub.s32 %v527, %v529
        %v531 = vrot.slane %v523, %v530
        %v533 = vunpack.c.l.s4 1983009808
        %v534 = vunpack.c.0.s8 %v533
        %v535 = vlaneseq
        %v536 = vshrl.u32 %v535, 7
        %v537 = vsub.s32 %v534, %v536
        %v538 = vrot.slane %v524, %v537
        %v539 = vcombine.low %v515, %v531
        %v540 = vcombine.high %v515, %v531
        %v542 = vunpack.c.l.s4 1934713408
        %v543 = vunpack.c.0.s8 %v542
        %v544 = vlaneseq
        %v545 = vshrl.u32 %v544, 7
        %v546 = vsub.s32 %v543, %v545
        %v547 = vrot.slane %v539, %v546
        %v549 = vunpack.c.l.s4 1934713408
        %v550 = vunpack.c.0.s8 %v549
        %v551 = vlaneseq
        %v552 = vshrl.u32 %v551, 7
        %v553 = vsub.s32 %v550, %v552
        %v554 = vrot.slane %v540, %v553
        %v555 = vcombine.low %v522, %v538
        %v556 = vcombine.high %v522, %v538
        %v558 = vunpack.c.l.s4 1934713408
        %v559 = vunpack.c.0.s8 %v558
        %v560 = vlaneseq
        %v561 = vshrl.u32 %v560, 7
        %v562 = vsub.s32 %v559, %v561
        %v563 = vrot.slane %v555, %v562
        %v565 = vunpack.c.l.s4 1934713408
        %v566 = vunpack.c.0.s8 %v565
        %v567 = vlaneseq
        %v568 = vshrl.u32 %v567, 7
        %v569 = vsub.s32 %v566, %v568
        %v570 = vrot.slane %v556, %v569
        %v571 = vcombine.high %v547, 0.0
        %v572 = vcombine.high %v554, 0.0
        %v573 = vcombine.high %v563, 0.0
        %v574 = vcombine.high %v570, 0.0
        %v575 = vcombine.low %v547, %v554
        %v577 = vunpack.c.l.s4 1983009808
        %v578 = vunpack.c.0.s8 %v577
        %v579 = vlaneseq
        %v580 = vshrl.u32 %v579, 7
        %v581 = vsub.s32 %v578, %v580
        %v582 = vrot.slane %v575, %v581
        %v583 = vcombine.low %v571, %v572
        %v585 = vunpack.c.l.s4 1983009808
        %v586 = vunpack.c.0.s8 %v585
        %v587 = vlaneseq
        %v588 = vshrl.u32 %v587, 7
        %v589 = vsub.s32 %v586, %v588
        %v590 = vrot.slane %v583, %v589
        %v591 = vcombine.low %v563, %v570
        %v593 = vunpack.c.l.s4 1983009808
        %v594 = vunpack.c.0.s8 %v593
        %v595 = vlaneseq
        %v596 = vshrl.u32 %v595, 7
        %v597 = vsub.s32 %v594, %v596
        %v598 = vrot.slane %v591, %v597
        %v599 = vcombine.low %v573, %v574
        %v601 = vunpack.c.l.s4 1983009808
        %v602 = vunpack.c.0.s8 %v601
        %v603 = vlaneseq
        %v604 = vshrl.u32 %v603, 7
        %v605 = vsub.s32 %v602, %v604
        %v606 = vrot.slane %v599, %v605
        %v607 = vcombine.low %v582, %v590
        %v608 = vcombine.high %v582, %v590
        %v610 = vunpack.c.l.s4 1934713408
        %v611 = vunpack.c.0.s8 %v610
        %v612 = vlaneseq
        %v613 = vshrl.u32 %v612, 7
        %v614 = vsub.s32 %v611, %v613
        %v615 = vrot.slane %v607, %v614
        %v617 = vunpack.c.l.s4 1934713408
        %v618 = vunpack.c.0.s8 %v617
        %v619 = vlaneseq
        %v620 = vshrl.u32 %v619, 7
        %v621 = vsub.s32 %v618, %v620
        %v622 = vrot.slane %v608, %v621
        %v623 = vcombine.low %v598, %v606
        %v624 = vcombine.high %v598, %v606
        %v626 = vunpack.c.l.s4 1934713408
        %v627 = vunpack.c.0.s8 %v626
        %v628 = vlaneseq
        %v629 = vshrl.u32 %v628, 7
        %v630 = vsub.s32 %v627, %v629
        %v631 = vrot.slane %v623, %v630
        %v633 = vunpack.c.l.s4 1934713408
        %v634 = vunpack.c.0.s8 %v633
        %v635 = vlaneseq
        %v636 = vshrl.u32 %v635, 7
        %v637 = vsub.s32 %v634, %v636
        %v638 = vrot.slane %v624, %v637
        %v639 = vcombine.low %v615, %v631
        %v640 = vcombine.high %v615, %v631
        %v641 = vcombine.low %v622, %v638
        %v642 = vcombine.high %v622, %v638
        %v643 = vpack.c.bf16 %v639, %v639
        %v644 = vpack.c.bf16 %v640, %v640
        %v645 = vpack.c.bf16 %v641, %v641
        %v646 = vpack.c.bf16 %v642, %v642
        %647 = vst.msk [vmem:[%s269] sm:$0xf] %vm490, %v643
        %648 = vst.msk [vmem:[%s269 + $0x4] sm:$0xf] %vm490, %v644
        %649 = vst.msk [vmem:[%s269 + $0x8] sm:$0xf] %vm490, %v645
        %650 = vst.msk [vmem:[%s269 + $0xc] sm:$0xf] %vm490, %v646
        %s651 = sand.u32 %s118, 1
        %s652 = scalar_lea.sflag [#allocation4], %s651
        %s653 = sand.u32 %s118, 1
        %s654 = smul.addr %s653, 16
        %s655 = scalar_lea.vmem [#allocation8], %s654
        %s656 = sand.u32 %s146, 1
        %s657 = scalar_lea.sflag [#allocation10], %s656
        %s658 = sand.u32 %s146, 1
        %s659 = smul.addr %s658, 16
        %s660 = scalar_lea.vmem [#allocation9], %s659
        // Predicated region
        $region45: #{memorizing_transformer_forward.6} parent=31 // pred_check
          %p661 = pneg %p128
        $region46: #{memorizing_transformer_forward.6} parent=31 // pred_check_branch
          %663 = sbr.rel (%p661) target = $region48
        $region47: #{memorizing_transformer_forward.6} parent=31 // pred_region
          %s665 = ssub.s32 256, 256
          %666 = vsyncadd %s652, %s665
          %s667 = smul.addr %s30, 4
          %s668 = sadd.s32 %s31, %s667
          %s669 = smul.addr %s668, 64
          %s670 = scalar_lea.hbm %s3, %s669
          %s671 = sshll.u32 %s655, 4
          %s672 = int_to_ptr.vmem [resolvable:$true] %s671
          %677 = dma.vmem_to_hbm [thread:$0]  %s672, 256, %s670, %s652, 64, 64, 4
        $region48: #{memorizing_transformer_forward.6} parent=31 // pred_fallthru
          _
        // Predicated region
        $region49: #{memorizing_transformer_forward.6} parent=31 // pred_check
          %p678 = pneg %p156
        $region50: #{memorizing_transformer_forward.6} parent=31 // pred_check_branch
          %680 = sbr.rel (%p678) target = $region52
        $region51: #{memorizing_transformer_forward.6} parent=31 // pred_region
          %s682 = ssub.s32 256, 256
          %683 = vsyncadd %s657, %s682
          %s684 = smul.addr %s30, 4
          %s685 = sadd.s32 %s31, %s684
          %s686 = smul.addr %s685, 64
          %s687 = scalar_lea.hbm %s4, %s686
          %s688 = sshll.u32 %s660, 4
          %s689 = int_to_ptr.vmem [resolvable:$true] %s688
          %694 = dma.vmem_to_hbm [thread:$0]  %s689, 256, %s687, %s657, 64, 64, 4
        $region52: #{memorizing_transformer_forward.6} parent=31 // pred_fallthru
          _
      $region32: #{memorizing_transformer_forward.6} parent=5 // pred_fallthru
        _
      %p695 = scmp.le.s32.totalorder 2, %s21
      // Predicated region
      $region53: #{memorizing_transformer_forward.6} parent=5 // pred_check
        %p696 = pneg %p695
      $region54: #{memorizing_transformer_forward.6} parent=5 // pred_check_branch
        %698 = sbr.rel (%p696) target = $region56
      $region55: #{memorizing_transformer_forward.6} parent=5 // pred_region
        %s699 = ssub.s32 %s21, 2
        // Predicated region
        $region57: #{memorizing_transformer_forward.6} parent=55 // pred_check
          %p700 = pneg %p134
        $region58: #{memorizing_transformer_forward.6} parent=55 // pred_check_branch
          %702 = sbr.rel (%p700) target = $region60
        $region59: #{memorizing_transformer_forward.6} parent=55 // pred_region
          %s703 = sand.u32 %s119, 1
          %s704 = scalar_lea.sflag [#allocation4], %s703
          %s705 = sand.u32 %s119, 1
          %s706 = smul.addr %s705, 16
          %s707 = scalar_lea.vmem [#allocation8], %s706
          %708 = dma.done %s704, 256
        $region60: #{memorizing_transformer_forward.6} parent=55 // pred_fallthru
          _
        // Predicated region
        $region61: #{memorizing_transformer_forward.6} parent=55 // pred_check
          %p709 = pneg %p162
        $region62: #{memorizing_transformer_forward.6} parent=55 // pred_check_branch
          %711 = sbr.rel (%p709) target = $region64
        $region63: #{memorizing_transformer_forward.6} parent=55 // pred_region
          %s712 = sand.u32 %s147, 1
          %s713 = scalar_lea.sflag [#allocation10], %s712
          %s714 = sand.u32 %s147, 1
          %s715 = smul.addr %s714, 16
          %s716 = scalar_lea.vmem [#allocation9], %s715
          %717 = dma.done %s713, 256
        $region64: #{memorizing_transformer_forward.6} parent=55 // pred_fallthru
          _
      $region56: #{memorizing_transformer_forward.6} parent=5 // pred_fallthru
        _
    $region6: #{memorizing_transformer_forward.6} parent=1 // loop_footer
      %s25 = sadd.s32 1, %s21
    $region7: #{memorizing_transformer_forward.6} parent=1 // loop_footer_branch
      %20 = sbr.rel target = $region3
    $region8: #{memorizing_transformer_forward.6} parent=1 // loop_exit
      _
    %718 = vsyncpa [#allocation3], 1
    %s719 = scalar_lea.sflag [#allocation3], 1
    %720 = vsyncpa %s719, 1
    %721 = vsyncpa [#allocation6], 1
    %722 = vsyncpa [#allocation4], 1
    %s723 = scalar_lea.sflag [#allocation4], 1
    %724 = vsyncpa %s723, 1
    %725 = vsyncpa [#allocation10], 1
    %s726 = scalar_lea.sflag [#allocation10], 1
    %727 = vsyncpa %s726, 1

// kernel: memorizing_transformer_forward.7
$region0: #{memorizing_transformer_forward.7}
  #allocation0 [shape = 'u32[]', space=smem, size = 0x4, offset = 0x4, fixed_abs, tag = 'smem constant byte address 0x4 - core index']
  #allocation1 [shape = 'u32[144,128]{1,0:T(1,128)}', space=vmem, size = 0x12000, scoped, tag = 'internal scratch']
  #allocation2 [shape = 'bf16[4,8,8]{2,1,0:T(8,128)(2,1)}', space=vmem, size = 0x2000, scoped, tag = 'scratch operand']
  #allocation3 [shape = 'f32[4,8,1]{2,1,0:T(8,128)}', space=vmem, size = 0x4000, scoped, tag = 'scratch operand']
  #allocation4 [shape = 'f32[4,8,1]{2,1,0:T(8,128)}', space=vmem, size = 0x4000, scoped, tag = 'scratch operand']
  #allocation5 [shape = 'f32[4,8,8]{2,1,0:T(8,128)}', space=vmem, size = 0x4000, scoped, tag = 'scratch operand']
  %s0 = inlined_call_operand.hbm [shape: f32[2,8,32], index: 0, kind: input, shape index: {}]
  %s1 = inlined_call_operand.hbm [shape: bf16[2,4,8,8], index: 1, kind: input, shape index: {}]
  %s2 = inlined_call_operand.hbm [shape: bf16[2,4,8,8], index: 2, kind: input, shape index: {}]
  %s3 = inlined_call_operand.hbm [shape: bf16[32,32], index: 3, kind: input, shape index: {}]
  %s4 = inlined_call_operand.hbm [shape: f32[1,32], index: 4, kind: input, shape index: {}]
  %s5 = inlined_call_operand.hbm [shape: bf16[32,32], index: 5, kind: input, shape index: {}]
  %s6 = inlined_call_operand.hbm [shape: f32[1,32], index: 6, kind: input, shape index: {}]
  %s7 = inlined_call_operand.hbm [shape: f32[1,32], index: 7, kind: input, shape index: {}]
  %s8 = inlined_call_operand.hbm [shape: f32[1,32], index: 8, kind: input, shape index: {}]
  %s9 = inlined_call_operand.hbm [shape: bf16[32,128], index: 9, kind: input, shape index: {}]
  %s10 = inlined_call_operand.hbm [shape: f32[1,128], index: 10, kind: input, shape index: {}]
  %s11 = inlined_call_operand.hbm [shape: bf16[128,32], index: 11, kind: input, shape index: {}]
  %s12 = inlined_call_operand.hbm [shape: f32[1,32], index: 12, kind: input, shape index: {}]
  %s13 = inlined_call_operand.hbm [shape: f32[1,32], index: 13, kind: input, shape index: {}]
  %s14 = inlined_call_operand.hbm [shape: f32[1,32], index: 14, kind: input, shape index: {}]
  %s15 = inlined_call_operand.hbm [shape: f32[2,8,32], index: 15, kind: output, shape index: {}]
  %s16 = sld [smem:[#allocation0]]
  $region161: #{memorizing_transformer_forward.7} parent=0
    _
  %s18 = ssub.s32 1, %s16
  %s19 = scalar_select 0, %s18, %s16
  $region1: #{memorizing_transformer_forward.7} parent=0
    #allocation6 [shape = 'u8[8192]{0}', space=vmem, size = 0x2000, scoped, tag = 'input window, operand 0']
    #allocation7 [shape = 's32[2]{0}', space=sflag, size = 0x8, scoped, tag = 'scoped memory for memorizing_transformer_forward.7']
    #allocation8 [shape = 's32[2]{0}', space=sflag, size = 0x8, scoped, tag = 'scoped memory for memorizing_transformer_forward.7']
    #allocation9 [shape = 'u8[16384]{0}', space=vmem, size = 0x4000, scoped, tag = 'input window, operand 1']
    #allocation10 [shape = 's32[2]{0}', space=sflag, size = 0x8, scoped, tag = 'scoped memory for memorizing_transformer_forward.7']
    #allocation11 [shape = 'u8[16384]{0}', space=vmem, size = 0x4000, scoped, tag = 'input window, operand 2']
    #allocation12 [shape = 'u8[8192]{0}', space=vmem, size = 0x2000, scoped, tag = 'input window, operand 3, single buffered']
    #allocation13 [shape = 's32[1]{0}', space=sflag, size = 0x4, scoped, tag = 'scoped memory for memorizing_transformer_forward.7']
    #allocation14 [shape = 'u8[512]{0}', space=vmem, size = 0x400, scoped, tag = 'input window, operand 4, single buffered']
    #allocation15 [shape = 'u8[8192]{0}', space=vmem, size = 0x2000, scoped, tag = 'input window, operand 5, single buffered']
    #allocation16 [shape = 's32[1]{0}', space=sflag, size = 0x4, scoped, tag = 'scoped memory for memorizing_transformer_forward.7']
    #allocation17 [shape = 'u8[512]{0}', space=vmem, size = 0x400, scoped, tag = 'input window, operand 6, single buffered']
    #allocation18 [shape = 'u8[512]{0}', space=vmem, size = 0x400, scoped, tag = 'input window, operand 7, single buffered']
    #allocation19 [shape = 's32[1]{0}', space=sflag, size = 0x4, scoped, tag = 'scoped memory for memorizing_transformer_forward.7']
    #allocation20 [shape = 'u8[512]{0}', space=vmem, size = 0x400, scoped, tag = 'input window, operand 8, single buffered']
    #allocation21 [shape = 'u8[8192]{0}', space=vmem, size = 0x2000, scoped, tag = 'input window, operand 9, single buffered']
    #allocation22 [shape = 's32[1]{0}', space=sflag, size = 0x4, scoped, tag = 'scoped memory for memorizing_transformer_forward.7']
    #allocation23 [shape = 'u8[512]{0}', space=vmem, size = 0x400, scoped, tag = 'input window, operand 10, single buffered']
    #allocation24 [shape = 'u8[32768]{0}', space=vmem, size = 0x8000, scoped, tag = 'input window, operand 11, single buffered']
    #allocation25 [shape = 's32[1]{0}', space=sflag, size = 0x4, scoped, tag = 'scoped memory for memorizing_transformer_forward.7']
    #allocation26 [shape = 'u8[512]{0}', space=vmem, size = 0x400, scoped, tag = 'input window, operand 12, single buffered']
    #allocation27 [shape = 'u8[512]{0}', space=vmem, size = 0x400, scoped, tag = 'input window, operand 13, single buffered']
    #allocation28 [shape = 's32[1]{0}', space=sflag, size = 0x4, scoped, tag = 'scoped memory for memorizing_transformer_forward.7']
    #allocation29 [shape = 'u8[512]{0}', space=vmem, size = 0x400, scoped, tag = 'input window, operand 14, single buffered']
    #allocation30 [shape = 'u8[8192]{0}', space=vmem, size = 0x2000, scoped, tag = 'output window, operand 0']
    %20 = vsyncpa [#allocation7], 0
    %s21 = scalar_lea.sflag [#allocation7], 1
    %22 = vsyncpa %s21, 0
    %23 = vsyncpa [#allocation10], 0
    %s24 = scalar_lea.sflag [#allocation10], 1
    %25 = vsyncpa %s24, 0
    %26 = vsyncpa [#allocation13], 0
    %27 = vsyncpa [#allocation16], 0
    %28 = vsyncpa [#allocation19], 0
    %29 = vsyncpa [#allocation22], 0
    %30 = vsyncpa [#allocation25], 0
    %31 = vsyncpa [#allocation28], 0
    %32 = vsyncpa [#allocation8], 0
    %s33 = scalar_lea.sflag [#allocation8], 1
    %34 = vsyncpa %s33, 0
    loop: start=0, step=1, limit=4
    $region2: #{memorizing_transformer_forward.7} parent=1 // loop_pre_header
      _
    $region3: #{memorizing_transformer_forward.7} parent=1 // loop_header
      %s36 = sphi 0, %s40
      %p37 = scmp.ge.s32.totalorder %s36, 4
      %s43 = sphi 0, %s62
      %s44 = sphi 0, %s58
      %s45 = sphi 0, %s54
      %s46 = sphi 0, %s43
      %s47 = sphi 0, %s44
      %s48 = sphi 0, %s45
      %s49 = sphi 0, %s46
      %s50 = sphi 0, %s47
      %s51 = sphi 0, %s48
      %s67 = sphi 0, %s69
      %s70 = sphi 0, %s67
      %s71 = sphi 0, %s70
      %s87 = sphi 0, %s71
      %s95 = sphi 0, %s97
      %s98 = sphi 0, %s95
      %s99 = sphi 0, %s98
      %s115 = sphi 0, %s99
      %s123 = sphi 0, %s125
      %s126 = sphi 0, %s123
      %s127 = sphi 0, %s126
      %s143 = sphi 0, %s127
      %s147 = sphi 0, %s147
      %s149 = sphi 0, %s147
      %s150 = sphi 0, %s149
      %s164 = sphi 0, %s150
      %s168 = sphi 0, %s168
      %s170 = sphi 0, %s168
      %s171 = sphi 0, %s170
      %s185 = sphi 0, %s171
      %s189 = sphi 0, %s189
      %s191 = sphi 0, %s189
      %s192 = sphi 0, %s191
      %s206 = sphi 0, %s192
      %s210 = sphi 0, %s210
      %s212 = sphi 0, %s210
      %s213 = sphi 0, %s212
      %s227 = sphi 0, %s213
      %s231 = sphi 0, %s231
      %s233 = sphi 0, %s231
      %s234 = sphi 0, %s233
      %s248 = sphi 0, %s234
      %s252 = sphi 0, %s252
      %s254 = sphi 0, %s252
      %s255 = sphi 0, %s254
      %s269 = sphi 0, %s255
      %s273 = sphi 0, %s273
      %s275 = sphi 0, %s273
      %s276 = sphi 0, %s275
      %s290 = sphi 0, %s276
      %s294 = sphi 0, %s294
      %s296 = sphi 0, %s294
      %s297 = sphi 0, %s296
      %s311 = sphi 0, %s297
      %s315 = sphi 0, %s315
      %s317 = sphi 0, %s315
      %s318 = sphi 0, %s317
      %s332 = sphi 0, %s318
      %s336 = sphi 0, %s336
      %s338 = sphi 0, %s336
      %s339 = sphi 0, %s338
      %s353 = sphi 0, %s339
      %s357 = sphi 0, %s357
      %s359 = sphi 0, %s357
      %s360 = sphi 0, %s359
      %s374 = sphi 0, %s360
      %s378 = sphi 0, %s378
      %s380 = sphi 0, %s378
      %s381 = sphi 0, %s380
      %s395 = sphi 0, %s381
      %s403 = sphi 0, %s405
      %s406 = sphi 0, %s403
      %s407 = sphi 0, %s406
      %s423 = sphi 0, %s407
    $region4: #{memorizing_transformer_forward.7} parent=1 // loop_header_branch
      %39 = sbr.rel (%p37) target = $region8
    $region5: #{memorizing_transformer_forward.7} parent=1 // loop_body
      %s41 = ssub.s32 %s36, 1
      %s42 = ssub.s32 %s36, 2
      %s52 = sadd.s32 1, %s45
      %p53 = scmp.ge.s32.totalorder %s52, 1
      %s54 = scalar_select %p53, 0, %s52
      %s55 = sadd.s32 1, %s44
      %s56 = scalar_select %p53, %s55, %s44
      %p57 = scmp.ge.s32.totalorder %s56, 1
      %s58 = scalar_select %p57, 0, %s56
      %s59 = sadd.s32 1, %s43
      %s60 = scalar_select %p57, %s59, %s43
      %p61 = scmp.ge.s32.totalorder %s60, 2
      %s62 = scalar_select %p61, 0, %s60
      %s63 = ssub.s32 %s43, %s62
      %s64 = ssub.s32 %s44, %s58
      %s65 = sor.u32 %s63, %s64
      %p66 = scmp.eq.s32.totalorder %s65, 0
      %s68 = sadd.s32 %s67, 1
      %s69 = scalar_select %p66, %s67, %s68
      %p72 = pneg %p66
      %p73 = scmp.eq.s32.totalorder %s36, 1
      %p74 = por %p72, %p73
      %p75 = scmp.ne.s32.totalorder %s67, %s70
      %p76 = scmp.eq.s32.totalorder %s36, 0
      %p77 = por %p75, %p76
      %p78 = scmp.ne.s32.totalorder %s67, %s70
      %p79 = scmp.eq.s32.totalorder %s41, 1
      %p80 = por %p78, %p79
      %p81 = scmp.ne.s32.totalorder %s70, %s71
      %p82 = scmp.eq.s32.totalorder %s41, 0
      %p83 = por %p81, %p82
      %p84 = scmp.ne.s32.totalorder %s70, %s71
      %p85 = scmp.eq.s32.totalorder %s42, 1
      %p86 = por %p84, %p85
      %p88 = scmp.ne.s32.totalorder %s71, %s87
      %p89 = scmp.eq.s32.totalorder %s42, 0
      %p90 = por %p88, %p89
      %s91 = ssub.s32 %s43, %s62
      %s92 = ssub.s32 %s45, %s54
      %s93 = sor.u32 %s91, %s92
      %p94 = scmp.eq.s32.totalorder %s93, 0
      %s96 = sadd.s32 %s95, 1
      %s97 = scalar_select %p94, %s95, %s96
      %p100 = pneg %p94
      %p101 = scmp.eq.s32.totalorder %s36, 1
      %p102 = por %p100, %p101
      %p103 = scmp.ne.s32.totalorder %s95, %s98
      %p104 = scmp.eq.s32.totalorder %s36, 0
      %p105 = por %p103, %p104
      %p106 = scmp.ne.s32.totalorder %s95, %s98
      %p107 = scmp.eq.s32.totalorder %s41, 1
      %p108 = por %p106, %p107
      %p109 = scmp.ne.s32.totalorder %s98, %s99
      %p110 = scmp.eq.s32.totalorder %s41, 0
      %p111 = por %p109, %p110
      %p112 = scmp.ne.s32.totalorder %s98, %s99
      %p113 = scmp.eq.s32.totalorder %s42, 1
      %p114 = por %p112, %p113
      %p116 = scmp.ne.s32.totalorder %s99, %s115
      %p117 = scmp.eq.s32.totalorder %s42, 0
      %p118 = por %p116, %p117
      %s119 = ssub.s32 %s43, %s62
      %s120 = ssub.s32 %s45, %s54
      %s121 = sor.u32 %s119, %s120
      %p122 = scmp.eq.s32.totalorder %s121, 0
      %s124 = sadd.s32 %s123, 1
      %s125 = scalar_select %p122, %s123, %s124
      %p128 = pneg %p122
      %p129 = scmp.eq.s32.totalorder %s36, 1
      %p130 = por %p128, %p129
      %p131 = scmp.ne.s32.totalorder %s123, %s126
      %p132 = scmp.eq.s32.totalorder %s36, 0
      %p133 = por %p131, %p132
      %p134 = scmp.ne.s32.totalorder %s123, %s126
      %p135 = scmp.eq.s32.totalorder %s41, 1
      %p136 = por %p134, %p135
      %p137 = scmp.ne.s32.totalorder %s126, %s127
      %p138 = scmp.eq.s32.totalorder %s41, 0
      %p139 = por %p137, %p138
      %p140 = scmp.ne.s32.totalorder %s126, %s127
      %p141 = scmp.eq.s32.totalorder %s42, 1
      %p142 = por %p140, %p141
      %p144 = scmp.ne.s32.totalorder %s127, %s143
      %p145 = scmp.eq.s32.totalorder %s42, 0
      %p146 = por %p144, %p145
      %s148 = sadd.s32 %s147, 1
      %p151 = scmp.eq.s32.totalorder %s36, 1
      %p152 = scmp.ne.s32.totalorder %s147, %s149
      %p153 = scmp.eq.s32.totalorder %s36, 0
      %p154 = por %p152, %p153
      %p155 = scmp.ne.s32.totalorder %s147, %s149
      %p156 = scmp.eq.s32.totalorder %s41, 1
      %p157 = por %p155, %p156
      %p158 = scmp.ne.s32.totalorder %s149, %s150
      %p159 = scmp.eq.s32.totalorder %s41, 0
      %p160 = por %p158, %p159
      %p161 = scmp.ne.s32.totalorder %s149, %s150
      %p162 = scmp.eq.s32.totalorder %s42, 1
      %p163 = por %p161, %p162
      %p165 = scmp.ne.s32.totalorder %s150, %s164
      %p166 = scmp.eq.s32.totalorder %s42, 0
      %p167 = por %p165, %p166
      %s169 = sadd.s32 %s168, 1
      %p172 = scmp.eq.s32.totalorder %s36, 1
      %p173 = scmp.ne.s32.totalorder %s168, %s170
      %p174 = scmp.eq.s32.totalorder %s36, 0
      %p175 = por %p173, %p174
      %p176 = scmp.ne.s32.totalorder %s168, %s170
      %p177 = scmp.eq.s32.totalorder %s41, 1
      %p178 = por %p176, %p177
      %p179 = scmp.ne.s32.totalorder %s170, %s171
      %p180 = scmp.eq.s32.totalorder %s41, 0
      %p181 = por %p179, %p180
      %p182 = scmp.ne.s32.totalorder %s170, %s171
      %p183 = scmp.eq.s32.totalorder %s42, 1
      %p184 = por %p182, %p183
      %p186 = scmp.ne.s32.totalorder %s171, %s185
      %p187 = scmp.eq.s32.totalorder %s42, 0
      %p188 = por %p186, %p187
      %s190 = sadd.s32 %s189, 1
      %p193 = scmp.eq.s32.totalorder %s36, 1
      %p194 = scmp.ne.s32.totalorder %s189, %s191
      %p195 = scmp.eq.s32.totalorder %s36, 0
      %p196 = por %p194, %p195
      %p197 = scmp.ne.s32.totalorder %s189, %s191
      %p198 = scmp.eq.s32.totalorder %s41, 1
      %p199 = por %p197, %p198
      %p200 = scmp.ne.s32.totalorder %s191, %s192
      %p201 = scmp.eq.s32.totalorder %s41, 0
      %p202 = por %p200, %p201
      %p203 = scmp.ne.s32.totalorder %s191, %s192
      %p204 = scmp.eq.s32.totalorder %s42, 1
      %p205 = por %p203, %p204
      %p207 = scmp.ne.s32.totalorder %s192, %s206
      %p208 = scmp.eq.s32.totalorder %s42, 0
      %p209 = por %p207, %p208
      %s211 = sadd.s32 %s210, 1
      %p214 = scmp.eq.s32.totalorder %s36, 1
      %p215 = scmp.ne.s32.totalorder %s210, %s212
      %p216 = scmp.eq.s32.totalorder %s36, 0
      %p217 = por %p215, %p216
      %p218 = scmp.ne.s32.totalorder %s210, %s212
      %p219 = scmp.eq.s32.totalorder %s41, 1
      %p220 = por %p218, %p219
      %p221 = scmp.ne.s32.totalorder %s212, %s213
      %p222 = scmp.eq.s32.totalorder %s41, 0
      %p223 = por %p221, %p222
      %p224 = scmp.ne.s32.totalorder %s212, %s213
      %p225 = scmp.eq.s32.totalorder %s42, 1
      %p226 = por %p224, %p225
      %p228 = scmp.ne.s32.totalorder %s213, %s227
      %p229 = scmp.eq.s32.totalorder %s42, 0
      %p230 = por %p228, %p229
      %s232 = sadd.s32 %s231, 1
      %p235 = scmp.eq.s32.totalorder %s36, 1
      %p236 = scmp.ne.s32.totalorder %s231, %s233
      %p237 = scmp.eq.s32.totalorder %s36, 0
      %p238 = por %p236, %p237
      %p239 = scmp.ne.s32.totalorder %s231, %s233
      %p240 = scmp.eq.s32.totalorder %s41, 1
      %p241 = por %p239, %p240
      %p242 = scmp.ne.s32.totalorder %s233, %s234
      %p243 = scmp.eq.s32.totalorder %s41, 0
      %p244 = por %p242, %p243
      %p245 = scmp.ne.s32.totalorder %s233, %s234
      %p246 = scmp.eq.s32.totalorder %s42, 1
      %p247 = por %p245, %p246
      %p249 = scmp.ne.s32.totalorder %s234, %s248
      %p250 = scmp.eq.s32.totalorder %s42, 0
      %p251 = por %p249, %p250
      %s253 = sadd.s32 %s252, 1
      %p256 = scmp.eq.s32.totalorder %s36, 1
      %p257 = scmp.ne.s32.totalorder %s252, %s254
      %p258 = scmp.eq.s32.totalorder %s36, 0
      %p259 = por %p257, %p258
      %p260 = scmp.ne.s32.totalorder %s252, %s254
      %p261 = scmp.eq.s32.totalorder %s41, 1
      %p262 = por %p260, %p261
      %p263 = scmp.ne.s32.totalorder %s254, %s255
      %p264 = scmp.eq.s32.totalorder %s41, 0
      %p265 = por %p263, %p264
      %p266 = scmp.ne.s32.totalorder %s254, %s255
      %p267 = scmp.eq.s32.totalorder %s42, 1
      %p268 = por %p266, %p267
      %p270 = scmp.ne.s32.totalorder %s255, %s269
      %p271 = scmp.eq.s32.totalorder %s42, 0
      %p272 = por %p270, %p271
      %s274 = sadd.s32 %s273, 1
      %p277 = scmp.eq.s32.totalorder %s36, 1
      %p278 = scmp.ne.s32.totalorder %s273, %s275
      %p279 = scmp.eq.s32.totalorder %s36, 0
      %p280 = por %p278, %p279
      %p281 = scmp.ne.s32.totalorder %s273, %s275
      %p282 = scmp.eq.s32.totalorder %s41, 1
      %p283 = por %p281, %p282
      %p284 = scmp.ne.s32.totalorder %s275, %s276
      %p285 = scmp.eq.s32.totalorder %s41, 0
      %p286 = por %p284, %p285
      %p287 = scmp.ne.s32.totalorder %s275, %s276
      %p288 = scmp.eq.s32.totalorder %s42, 1
      %p289 = por %p287, %p288
      %p291 = scmp.ne.s32.totalorder %s276, %s290
      %p292 = scmp.eq.s32.totalorder %s42, 0
      %p293 = por %p291, %p292
      %s295 = sadd.s32 %s294, 1
      %p298 = scmp.eq.s32.totalorder %s36, 1
      %p299 = scmp.ne.s32.totalorder %s294, %s296
      %p300 = scmp.eq.s32.totalorder %s36, 0
      %p301 = por %p299, %p300
      %p302 = scmp.ne.s32.totalorder %s294, %s296
      %p303 = scmp.eq.s32.totalorder %s41, 1
      %p304 = por %p302, %p303
      %p305 = scmp.ne.s32.totalorder %s296, %s297
      %p306 = scmp.eq.s32.totalorder %s41, 0
      %p307 = por %p305, %p306
      %p308 = scmp.ne.s32.totalorder %s296, %s297
      %p309 = scmp.eq.s32.totalorder %s42, 1
      %p310 = por %p308, %p309
      %p312 = scmp.ne.s32.totalorder %s297, %s311
      %p313 = scmp.eq.s32.totalorder %s42, 0
      %p314 = por %p312, %p313
      %s316 = sadd.s32 %s315, 1
      %p319 = scmp.eq.s32.totalorder %s36, 1
      %p320 = scmp.ne.s32.totalorder %s315, %s317
      %p321 = scmp.eq.s32.totalorder %s36, 0
      %p322 = por %p320, %p321
      %p323 = scmp.ne.s32.totalorder %s315, %s317
      %p324 = scmp.eq.s32.totalorder %s41, 1
      %p325 = por %p323, %p324
      %p326 = scmp.ne.s32.totalorder %s317, %s318
      %p327 = scmp.eq.s32.totalorder %s41, 0
      %p328 = por %p326, %p327
      %p329 = scmp.ne.s32.totalorder %s317, %s318
      %p330 = scmp.eq.s32.totalorder %s42, 1
      %p331 = por %p329, %p330
      %p333 = scmp.ne.s32.totalorder %s318, %s332
      %p334 = scmp.eq.s32.totalorder %s42, 0
      %p335 = por %p333, %p334
      %s337 = sadd.s32 %s336, 1
      %p340 = scmp.eq.s32.totalorder %s36, 1
      %p341 = scmp.ne.s32.totalorder %s336, %s338
      %p342 = scmp.eq.s32.totalorder %s36, 0
      %p343 = por %p341, %p342
      %p344 = scmp.ne.s32.totalorder %s336, %s338
      %p345 = scmp.eq.s32.totalorder %s41, 1
      %p346 = por %p344, %p345
      %p347 = scmp.ne.s32.totalorder %s338, %s339
      %p348 = scmp.eq.s32.totalorder %s41, 0
      %p349 = por %p347, %p348
      %p350 = scmp.ne.s32.totalorder %s338, %s339
      %p351 = scmp.eq.s32.totalorder %s42, 1
      %p352 = por %p350, %p351
      %p354 = scmp.ne.s32.totalorder %s339, %s353
      %p355 = scmp.eq.s32.totalorder %s42, 0
      %p356 = por %p354, %p355
      %s358 = sadd.s32 %s357, 1
      %p361 = scmp.eq.s32.totalorder %s36, 1
      %p362 = scmp.ne.s32.totalorder %s357, %s359
      %p363 = scmp.eq.s32.totalorder %s36, 0
      %p364 = por %p362, %p363
      %p365 = scmp.ne.s32.totalorder %s357, %s359
      %p366 = scmp.eq.s32.totalorder %s41, 1
      %p367 = por %p365, %p366
      %p368 = scmp.ne.s32.totalorder %s359, %s360
      %p369 = scmp.eq.s32.totalorder %s41, 0
      %p370 = por %p368, %p369
      %p371 = scmp.ne.s32.totalorder %s359, %s360
      %p372 = scmp.eq.s32.totalorder %s42, 1
      %p373 = por %p371, %p372
      %p375 = scmp.ne.s32.totalorder %s360, %s374
      %p376 = scmp.eq.s32.totalorder %s42, 0
      %p377 = por %p375, %p376
      %s379 = sadd.s32 %s378, 1
      %p382 = scmp.eq.s32.totalorder %s36, 1
      %p383 = scmp.ne.s32.totalorder %s378, %s380
      %p384 = scmp.eq.s32.totalorder %s36, 0
      %p385 = por %p383, %p384
      %p386 = scmp.ne.s32.totalorder %s378, %s380
      %p387 = scmp.eq.s32.totalorder %s41, 1
      %p388 = por %p386, %p387
      %p389 = scmp.ne.s32.totalorder %s380, %s381
      %p390 = scmp.eq.s32.totalorder %s41, 0
      %p391 = por %p389, %p390
      %p392 = scmp.ne.s32.totalorder %s380, %s381
      %p393 = scmp.eq.s32.totalorder %s42, 1
      %p394 = por %p392, %p393
      %p396 = scmp.ne.s32.totalorder %s381, %s395
      %p397 = scmp.eq.s32.totalorder %s42, 0
      %p398 = por %p396, %p397
      %s399 = ssub.s32 %s43, %s62
      %s400 = ssub.s32 %s44, %s58
      %s401 = sor.u32 %s399, %s400
      %p402 = scmp.eq.s32.totalorder %s401, 0
      %s404 = sadd.s32 %s403, 1
      %s405 = scalar_select %p402, %s403, %s404
      %p408 = pneg %p402
      %p409 = scmp.eq.s32.totalorder %s36, 1
      %p410 = por %p408, %p409
      %p411 = scmp.ne.s32.totalorder %s403, %s406
      %p412 = scmp.eq.s32.totalorder %s36, 0
      %p413 = por %p411, %p412
      %p414 = scmp.ne.s32.totalorder %s403, %s406
      %p415 = scmp.eq.s32.totalorder %s41, 1
      %p416 = por %p414, %p415
      %p417 = scmp.ne.s32.totalorder %s406, %s407
      %p418 = scmp.eq.s32.totalorder %s41, 0
      %p419 = por %p417, %p418
      %p420 = scmp.ne.s32.totalorder %s406, %s407
      %p421 = scmp.eq.s32.totalorder %s42, 1
      %p422 = por %p420, %p421
      %p424 = scmp.ne.s32.totalorder %s407, %s423
      %p425 = scmp.eq.s32.totalorder %s42, 0
      %p426 = por %p424, %p425
      %p427 = scmp.le.s32.totalorder 1, %s36
      %p428 = scmp.lt.s32.totalorder %s36, 3
      %p429 = pnand %p427, %p428
      %p430 = pneg %p429
      // Predicated region
      $region9: #{memorizing_transformer_forward.7} parent=5 // pred_check
        _
      $region10: #{memorizing_transformer_forward.7} parent=5 // pred_check_branch
        %432 = sbr.rel (%p429) target = $region12
      $region11: #{memorizing_transformer_forward.7} parent=5 // pred_region
        %s433 = ssub.s32 %s36, 1
        // Predicated region
        $region13: #{memorizing_transformer_forward.7} parent=11 // pred_check
          %p434 = pneg %p160
        $region14: #{memorizing_transformer_forward.7} parent=11 // pred_check_branch
          %436 = sbr.rel (%p434) target = $region16
        $region15: #{memorizing_transformer_forward.7} parent=11 // pred_region
          %s438 = ssub.s32 256, 256
          %439 = vsyncadd [#allocation13], %s438
          %s440 = sshll.u32 [#allocation12], 4
          %s441 = int_to_ptr.vmem [resolvable:$true] %s440
          %446 = dma.hbm_to_vmem [thread:$0]  %s3, 256, %s441, [#allocation13], 64, 64, 4
        $region16: #{memorizing_transformer_forward.7} parent=11 // pred_fallthru
          _
        // Predicated region
        $region17: #{memorizing_transformer_forward.7} parent=11 // pred_check
          %p447 = pneg %p181
        $region18: #{memorizing_transformer_forward.7} parent=11 // pred_check_branch
          %449 = sbr.rel (%p447) target = $region20
        $region19: #{memorizing_transformer_forward.7} parent=11 // pred_region
          %s451 = ssub.s32 16, 16
          %452 = vsyncadd [#allocation13], %s451
          %s454 = sshll.u32 [#allocation14], 4
          %s455 = int_to_ptr.vmem [resolvable:$true] %s454
          %457 = dma.hbm_to_vmem [thread:$0]  %s4, 16, %s455, [#allocation13]
        $region20: #{memorizing_transformer_forward.7} parent=11 // pred_fallthru
          _
        // Predicated region
        $region21: #{memorizing_transformer_forward.7} parent=11 // pred_check
          %p458 = pneg %p202
        $region22: #{memorizing_transformer_forward.7} parent=11 // pred_check_branch
          %460 = sbr.rel (%p458) target = $region24
        $region23: #{memorizing_transformer_forward.7} parent=11 // pred_region
          %s462 = ssub.s32 256, 256
          %463 = vsyncadd [#allocation16], %s462
          %s464 = sshll.u32 [#allocation15], 4
          %s465 = int_to_ptr.vmem [resolvable:$true] %s464
          %470 = dma.hbm_to_vmem [thread:$0]  %s5, 256, %s465, [#allocation16], 64, 64, 4
        $region24: #{memorizing_transformer_forward.7} parent=11 // pred_fallthru
          _
        // Predicated region
        $region25: #{memorizing_transformer_forward.7} parent=11 // pred_check
          %p471 = pneg %p223
        $region26: #{memorizing_transformer_forward.7} parent=11 // pred_check_branch
          %473 = sbr.rel (%p471) target = $region28
        $region27: #{memorizing_transformer_forward.7} parent=11 // pred_region
          %s475 = ssub.s32 16, 16
          %476 = vsyncadd [#allocation16], %s475
          %s478 = sshll.u32 [#allocation17], 4
          %s479 = int_to_ptr.vmem [resolvable:$true] %s478
          %481 = dma.hbm_to_vmem [thread:$0]  %s6, 16, %s479, [#allocation16]
        $region28: #{memorizing_transformer_forward.7} parent=11 // pred_fallthru
          _
        // Predicated region
        $region29: #{memorizing_transformer_forward.7} parent=11 // pred_check
          %p482 = pneg %p244
        $region30: #{memorizing_transformer_forward.7} parent=11 // pred_check_branch
          %484 = sbr.rel (%p482) target = $region32
        $region31: #{memorizing_transformer_forward.7} parent=11 // pred_region
          %s486 = ssub.s32 16, 16
          %487 = vsyncadd [#allocation19], %s486
          %s489 = sshll.u32 [#allocation18], 4
          %s490 = int_to_ptr.vmem [resolvable:$true] %s489
          %492 = dma.hbm_to_vmem [thread:$0]  %s7, 16, %s490, [#allocation19]
        $region32: #{memorizing_transformer_forward.7} parent=11 // pred_fallthru
          _
        // Predicated region
        $region33: #{memorizing_transformer_forward.7} parent=11 // pred_check
          %p493 = pneg %p265
        $region34: #{memorizing_transformer_forward.7} parent=11 // pred_check_branch
          %495 = sbr.rel (%p493) target = $region36
        $region35: #{memorizing_transformer_forward.7} parent=11 // pred_region
          %s497 = ssub.s32 16, 16
          %498 = vsyncadd [#allocation19], %s497
          %s500 = sshll.u32 [#allocation20], 4
          %s501 = int_to_ptr.vmem [resolvable:$true] %s500
          %503 = dma.hbm_to_vmem [thread:$0]  %s8, 16, %s501, [#allocation19]
        $region36: #{memorizing_transformer_forward.7} parent=11 // pred_fallthru
          _
        // Predicated region
        $region37: #{memorizing_transformer_forward.7} parent=11 // pred_check
          %p504 = pneg %p286
        $region38: #{memorizing_transformer_forward.7} parent=11 // pred_check_branch
          %506 = sbr.rel (%p504) target = $region40
        $region39: #{memorizing_transformer_forward.7} parent=11 // pred_region
          %s508 = ssub.s32 256, 256
          %509 = vsyncadd [#allocation22], %s508
          %s510 = sshll.u32 [#allocation21], 4
          %s511 = int_to_ptr.vmem [resolvable:$true] %s510
          %516 = dma.hbm_to_vmem [thread:$0]  %s9, 256, %s511, [#allocation22], 64, 64, 4
        $region40: #{memorizing_transformer_forward.7} parent=11 // pred_fallthru
          _
        // Predicated region
        $region41: #{memorizing_transformer_forward.7} parent=11 // pred_check
          %p517 = pneg %p307
        $region42: #{memorizing_transformer_forward.7} parent=11 // pred_check_branch
          %519 = sbr.rel (%p517) target = $region44
        $region43: #{memorizing_transformer_forward.7} parent=11 // pred_region
          %s521 = ssub.s32 16, 16
          %522 = vsyncadd [#allocation22], %s521
          %s524 = sshll.u32 [#allocation23], 4
          %s525 = int_to_ptr.vmem [resolvable:$true] %s524
          %527 = dma.hbm_to_vmem [thread:$0]  %s10, 16, %s525, [#allocation22]
        $region44: #{memorizing_transformer_forward.7} parent=11 // pred_fallthru
          _
        // Predicated region
        $region45: #{memorizing_transformer_forward.7} parent=11 // pred_check
          %p528 = pneg %p328
        $region46: #{memorizing_transformer_forward.7} parent=11 // pred_check_branch
          %530 = sbr.rel (%p528) target = $region48
        $region47: #{memorizing_transformer_forward.7} parent=11 // pred_region
          %s532 = ssub.s32 1024, 1024
          %533 = vsyncadd [#allocation25], %s532
          %s534 = sshll.u32 [#allocation24], 4
          %s535 = int_to_ptr.vmem [resolvable:$true] %s534
          %540 = dma.hbm_to_vmem [thread:$0]  %s11, 1024, %s535, [#allocation25], 64, 64, 4
        $region48: #{memorizing_transformer_forward.7} parent=11 // pred_fallthru
          _
        // Predicated region
        $region49: #{memorizing_transformer_forward.7} parent=11 // pred_check
          %p541 = pneg %p349
        $region50: #{memorizing_transformer_forward.7} parent=11 // pred_check_branch
          %543 = sbr.rel (%p541) target = $region52
        $region51: #{memorizing_transformer_forward.7} parent=11 // pred_region
          %s545 = ssub.s32 16, 16
          %546 = vsyncadd [#allocation25], %s545
          %s548 = sshll.u32 [#allocation26], 4
          %s549 = int_to_ptr.vmem [resolvable:$true] %s548
          %551 = dma.hbm_to_vmem [thread:$0]  %s12, 16, %s549, [#allocation25]
        $region52: #{memorizing_transformer_forward.7} parent=11 // pred_fallthru
          _
        // Predicated region
        $region53: #{memorizing_transformer_forward.7} parent=11 // pred_check
          %p552 = pneg %p370
        $region54: #{memorizing_transformer_forward.7} parent=11 // pred_check_branch
          %554 = sbr.rel (%p552) target = $region56
        $region55: #{memorizing_transformer_forward.7} parent=11 // pred_region
          %s556 = ssub.s32 16, 16
          %557 = vsyncadd [#allocation28], %s556
          %s559 = sshll.u32 [#allocation27], 4
          %s560 = int_to_ptr.vmem [resolvable:$true] %s559
          %562 = dma.hbm_to_vmem [thread:$0]  %s13, 16, %s560, [#allocation28]
        $region56: #{memorizing_transformer_forward.7} parent=11 // pred_fallthru
          _
        // Predicated region
        $region57: #{memorizing_transformer_forward.7} parent=11 // pred_check
          %p563 = pneg %p391
        $region58: #{memorizing_transformer_forward.7} parent=11 // pred_check_branch
          %565 = sbr.rel (%p563) target = $region60
        $region59: #{memorizing_transformer_forward.7} parent=11 // pred_region
          %s567 = ssub.s32 16, 16
          %568 = vsyncadd [#allocation28], %s567
          %s570 = sshll.u32 [#allocation29], 4
          %s571 = int_to_ptr.vmem [resolvable:$true] %s570
          %573 = dma.hbm_to_vmem [thread:$0]  %s14, 16, %s571, [#allocation28]
        $region60: #{memorizing_transformer_forward.7} parent=11 // pred_fallthru
          _
      $region12: #{memorizing_transformer_forward.7} parent=5 // pred_fallthru
        _
      %p574 = scmp.lt.s32.totalorder %s36, 2
      // Predicated region
      $region61: #{memorizing_transformer_forward.7} parent=5 // pred_check
        %p575 = pneg %p574
      $region62: #{memorizing_transformer_forward.7} parent=5 // pred_check_branch
        %577 = sbr.rel (%p575) target = $region64
      $region63: #{memorizing_transformer_forward.7} parent=5 // pred_region
        // Predicated region
        $region65: #{memorizing_transformer_forward.7} parent=63 // pred_check
          %p578 = pneg %p77
        $region66: #{memorizing_transformer_forward.7} parent=63 // pred_check_branch
          %580 = sbr.rel (%p578) target = $region68
        $region67: #{memorizing_transformer_forward.7} parent=63 // pred_region
          %s581 = sand.u32 %s67, 1
          %s582 = scalar_lea.sflag [#allocation7], %s581
          %s583 = sand.u32 %s67, 1
          %s584 = smul.addr %s583, 8
          %s585 = scalar_lea.vmem [#allocation6], %s584
          %s587 = ssub.s32 128, 128
          %588 = vsyncadd %s582, %s587
          %s589 = sadd.s32 %s44, %s43
          %s590 = smul.addr %s589, 128
          %s591 = scalar_lea.hbm %s0, %s590
          %s593 = sshll.u32 %s585, 4
          %s594 = int_to_ptr.vmem [resolvable:$true] %s593
          %596 = dma.hbm_to_vmem [thread:$0]  %s591, 128, %s594, %s582
        $region68: #{memorizing_transformer_forward.7} parent=63 // pred_fallthru
          _
        // Predicated region
        $region69: #{memorizing_transformer_forward.7} parent=63 // pred_check
          %p597 = pneg %p105
        $region70: #{memorizing_transformer_forward.7} parent=63 // pred_check_branch
          %599 = sbr.rel (%p597) target = $region72
        $region71: #{memorizing_transformer_forward.7} parent=63 // pred_region
          %s600 = sand.u32 %s36, 1
          %s601 = scalar_lea.sflag [#allocation10], %s600
          %s602 = sand.u32 %s95, 1
          %s603 = smul.addr %s602, 16
          %s604 = scalar_lea.vmem [#allocation9], %s603
          %s606 = ssub.s32 256, 256
          %607 = vsyncadd %s601, %s606
          %s608 = smul.addr %s43, 4
          %s609 = sadd.s32 %s45, %s608
          %s610 = smul.addr %s609, 64
          %s611 = scalar_lea.hbm %s1, %s610
          %s612 = sshll.u32 %s604, 4
          %s613 = int_to_ptr.vmem [resolvable:$true] %s612
          %618 = dma.hbm_to_vmem [thread:$0]  %s611, 256, %s613, %s601, 64, 64, 4
        $region72: #{memorizing_transformer_forward.7} parent=63 // pred_fallthru
          _
        // Predicated region
        $region73: #{memorizing_transformer_forward.7} parent=63 // pred_check
          %p619 = pneg %p133
        $region74: #{memorizing_transformer_forward.7} parent=63 // pred_check_branch
          %621 = sbr.rel (%p619) target = $region76
        $region75: #{memorizing_transformer_forward.7} parent=63 // pred_region
          %s622 = sand.u32 %s36, 1
          %s623 = scalar_lea.sflag [#allocation10], %s622
          %s624 = sand.u32 %s123, 1
          %s625 = smul.addr %s624, 16
          %s626 = scalar_lea.vmem [#allocation11], %s625
          %s628 = ssub.s32 256, 256
          %629 = vsyncadd %s623, %s628
          %s630 = smul.addr %s43, 4
          %s631 = sadd.s32 %s45, %s630
          %s632 = smul.addr %s631, 64
          %s633 = scalar_lea.hbm %s2, %s632
          %s634 = sshll.u32 %s626, 4
          %s635 = int_to_ptr.vmem [resolvable:$true] %s634
          %640 = dma.hbm_to_vmem [thread:$0]  %s633, 256, %s635, %s623, 64, 64, 4
        $region76: #{memorizing_transformer_forward.7} parent=63 // pred_fallthru
          _
      $region64: #{memorizing_transformer_forward.7} parent=5 // pred_fallthru
        _
      %p641 = scmp.le.s32.totalorder 1, %s36
      %p642 = scmp.lt.s32.totalorder %s36, 3
      %p643 = pnand %p641, %p642
      %p644 = pneg %p643
      // Predicated region
      $region77: #{memorizing_transformer_forward.7} parent=5 // pred_check
        _
      $region78: #{memorizing_transformer_forward.7} parent=5 // pred_check_branch
        %646 = sbr.rel (%p643) target = $region80
      $region79: #{memorizing_transformer_forward.7} parent=5 // pred_region
        %s647 = ssub.s32 %s36, 1
        %s648 = sand.u32 %s70, 1
        %s649 = scalar_lea.sflag [#allocation7], %s648
        %s650 = sand.u32 %s70, 1
        %s651 = smul.addr %s650, 8
        %s652 = scalar_lea.vmem [#allocation6], %s651
        // Predicated region
        $region81: #{memorizing_transformer_forward.7} parent=79 // pred_check
          %p653 = pneg %p83
        $region82: #{memorizing_transformer_forward.7} parent=79 // pred_check_branch
          %655 = sbr.rel (%p653) target = $region84
        $region83: #{memorizing_transformer_forward.7} parent=79 // pred_region
          %656 = dma.done %s649, 128
        $region84: #{memorizing_transformer_forward.7} parent=79 // pred_fallthru
          _
        %s657 = sand.u32 %s41, 1
        %s658 = scalar_lea.sflag [#allocation10], %s657
        %s659 = sand.u32 %s98, 1
        %s660 = smul.addr %s659, 16
        %s661 = scalar_lea.vmem [#allocation9], %s660
        // Predicated region
        $region85: #{memorizing_transformer_forward.7} parent=79 // pred_check
          %p662 = pneg %p111
        $region86: #{memorizing_transformer_forward.7} parent=79 // pred_check_branch
          %664 = sbr.rel (%p662) target = $region88
        $region87: #{memorizing_transformer_forward.7} parent=79 // pred_region
          %665 = dma.done %s658, 256
        $region88: #{memorizing_transformer_forward.7} parent=79 // pred_fallthru
          _
        %s666 = sand.u32 %s41, 1
        %s667 = scalar_lea.sflag [#allocation10], %s666
        %s668 = sand.u32 %s126, 1
        %s669 = smul.addr %s668, 16
        %s670 = scalar_lea.vmem [#allocation11], %s669
        // Predicated region
        $region89: #{memorizing_transformer_forward.7} parent=79 // pred_check
          %p671 = pneg %p139
        $region90: #{memorizing_transformer_forward.7} parent=79 // pred_check_branch
          %673 = sbr.rel (%p671) target = $region92
        $region91: #{memorizing_transformer_forward.7} parent=79 // pred_region
          %674 = dma.done %s667, 256
        $region92: #{memorizing_transformer_forward.7} parent=79 // pred_fallthru
          _
        // Predicated region
        $region93: #{memorizing_transformer_forward.7} parent=79 // pred_check
          %p675 = pneg %p160
        $region94: #{memorizing_transformer_forward.7} parent=79 // pred_check_branch
          %677 = sbr.rel (%p675) target = $region96
        $region95: #{memorizing_transformer_forward.7} parent=79 // pred_region
          %678 = dma.done [#allocation13], 256
        $region96: #{memorizing_transformer_forward.7} parent=79 // pred_fallthru
          _
        // Predicated region
        $region97: #{memorizing_transformer_forward.7} parent=79 // pred_check
          %p679 = pneg %p181
        $region98: #{memorizing_transformer_forward.7} parent=79 // pred_check_branch
          %681 = sbr.rel (%p679) target = $region100
        $region99: #{memorizing_transformer_forward.7} parent=79 // pred_region
          %682 = dma.done [#allocation13], 16
        $region100: #{memorizing_transformer_forward.7} parent=79 // pred_fallthru
          _
        // Predicated region
        $region101: #{memorizing_transformer_forward.7} parent=79 // pred_check
          %p683 = pneg %p202
        $region102: #{memorizing_transformer_forward.7} parent=79 // pred_check_branch
          %685 = sbr.rel (%p683) target = $region104
        $region103: #{memorizing_transformer_forward.7} parent=79 // pred_region
          %686 = dma.done [#allocation16], 256
        $region104: #{memorizing_transformer_forward.7} parent=79 // pred_fallthru
          _
        // Predicated region
        $region105: #{memorizing_transformer_forward.7} parent=79 // pred_check
          %p687 = pneg %p223
        $region106: #{memorizing_transformer_forward.7} parent=79 // pred_check_branch
          %689 = sbr.rel (%p687) target = $region108
        $region107: #{memorizing_transformer_forward.7} parent=79 // pred_region
          %690 = dma.done [#allocation16], 16
        $region108: #{memorizing_transformer_forward.7} parent=79 // pred_fallthru
          _
        // Predicated region
        $region109: #{memorizing_transformer_forward.7} parent=79 // pred_check
          %p691 = pneg %p244
        $region110: #{memorizing_transformer_forward.7} parent=79 // pred_check_branch
          %693 = sbr.rel (%p691) target = $region112
        $region111: #{memorizing_transformer_forward.7} parent=79 // pred_region
          %694 = dma.done [#allocation19], 16
        $region112: #{memorizing_transformer_forward.7} parent=79 // pred_fallthru
          _
        // Predicated region
        $region113: #{memorizing_transformer_forward.7} parent=79 // pred_check
          %p695 = pneg %p265
        $region114: #{memorizing_transformer_forward.7} parent=79 // pred_check_branch
          %697 = sbr.rel (%p695) target = $region116
        $region115: #{memorizing_transformer_forward.7} parent=79 // pred_region
          %698 = dma.done [#allocation19], 16
        $region116: #{memorizing_transformer_forward.7} parent=79 // pred_fallthru
          _
        // Predicated region
        $region117: #{memorizing_transformer_forward.7} parent=79 // pred_check
          %p699 = pneg %p286
        $region118: #{memorizing_transformer_forward.7} parent=79 // pred_check_branch
          %701 = sbr.rel (%p699) target = $region120
        $region119: #{memorizing_transformer_forward.7} parent=79 // pred_region
          %702 = dma.done [#allocation22], 256
        $region120: #{memorizing_transformer_forward.7} parent=79 // pred_fallthru
          _
        // Predicated region
        $region121: #{memorizing_transformer_forward.7} parent=79 // pred_check
          %p703 = pneg %p307
        $region122: #{memorizing_transformer_forward.7} parent=79 // pred_check_branch
          %705 = sbr.rel (%p703) target = $region124
        $region123: #{memorizing_transformer_forward.7} parent=79 // pred_region
          %706 = dma.done [#allocation22], 16
        $region124: #{memorizing_transformer_forward.7} parent=79 // pred_fallthru
          _
        // Predicated region
        $region125: #{memorizing_transformer_forward.7} parent=79 // pred_check
          %p707 = pneg %p328
        $region126: #{memorizing_transformer_forward.7} parent=79 // pred_check_branch
          %709 = sbr.rel (%p707) target = $region128
        $region127: #{memorizing_transformer_forward.7} parent=79 // pred_region
          %710 = dma.done [#allocation25], 1024
        $region128: #{memorizing_transformer_forward.7} parent=79 // pred_fallthru
          _
        // Predicated region
        $region129: #{memorizing_transformer_forward.7} parent=79 // pred_check
          %p711 = pneg %p349
        $region130: #{memorizing_transformer_forward.7} parent=79 // pred_check_branch
          %713 = sbr.rel (%p711) target = $region132
        $region131: #{memorizing_transformer_forward.7} parent=79 // pred_region
          %714 = dma.done [#allocation25], 16
        $region132: #{memorizing_transformer_forward.7} parent=79 // pred_fallthru
          _
        // Predicated region
        $region133: #{memorizing_transformer_forward.7} parent=79 // pred_check
          %p715 = pneg %p370
        $region134: #{memorizing_transformer_forward.7} parent=79 // pred_check_branch
          %717 = sbr.rel (%p715) target = $region136
        $region135: #{memorizing_transformer_forward.7} parent=79 // pred_region
          %718 = dma.done [#allocation28], 16
        $region136: #{memorizing_transformer_forward.7} parent=79 // pred_fallthru
          _
        // Predicated region
        $region137: #{memorizing_transformer_forward.7} parent=79 // pred_check
          %p719 = pneg %p391
        $region138: #{memorizing_transformer_forward.7} parent=79 // pred_check_branch
          %721 = sbr.rel (%p719) target = $region140
        $region139: #{memorizing_transformer_forward.7} parent=79 // pred_region
          %722 = dma.done [#allocation28], 16
        $region140: #{memorizing_transformer_forward.7} parent=79 // pred_fallthru
          _
        %s723 = sand.u32 %s70, 1
        %s724 = scalar_lea.sflag [#allocation7], %s723
        %s725 = sand.u32 %s70, 1
        %s726 = smul.addr %s725, 8
        %s727 = scalar_lea.vmem [#allocation6], %s726
        %p728 = pneg %p83
        %p729 = pneg %p80
        %s730 = sand.u32 %s41, 1
        %s731 = scalar_lea.sflag [#allocation10], %s730
        %s732 = sand.u32 %s98, 1
        %s733 = smul.addr %s732, 16
        %s734 = scalar_lea.vmem [#allocation9], %s733
        %p735 = pneg %p111
        %p736 = pneg %p108
        %s737 = sand.u32 %s41, 1
        %s738 = scalar_lea.sflag [#allocation10], %s737
        %s739 = sand.u32 %s126, 1
        %s740 = smul.addr %s739, 16
        %s741 = scalar_lea.vmem [#allocation11], %s740
        %p742 = pneg %p139
        %p743 = pneg %p136
        %p744 = pneg %p160
        %p745 = pneg %p157
        %p746 = pneg %p181
        %p747 = pneg %p178
        %p748 = pneg %p202
        %p749 = pneg %p199
        %p750 = pneg %p223
        %p751 = pneg %p220
        %p752 = pneg %p244
        %p753 = pneg %p241
        %p754 = pneg %p265
        %p755 = pneg %p262
        %p756 = pneg %p286
        %p757 = pneg %p283
        %p758 = pneg %p307
        %p759 = pneg %p304
        %p760 = pneg %p328
        %p761 = pneg %p325
        %p762 = pneg %p349
        %p763 = pneg %p346
        %p764 = pneg %p370
        %p765 = pneg %p367
        %p766 = pneg %p391
        %p767 = pneg %p388
        %p768 = pneg %p419
        %p769 = pneg %p416
        %s770 = sand.u32 %s406, 1
        %s771 = scalar_lea.sflag [#allocation8], %s770
        %s772 = sand.u32 %s406, 1
        %s773 = smul.addr %s772, 8
        %s774 = scalar_lea.vmem [#allocation30], %s773
        %p776 = scmp.eq.s32.totalorder %s48, 0
        // Predicated region
        $region141: #{memorizing_transformer_forward.7} parent=79 // pred_check
          %p777 = pneg %p776
        $region142: #{memorizing_transformer_forward.7} parent=79 // pred_check_branch
          %779 = sbr.rel (%p777) target = $region144
        $region143: #{memorizing_transformer_forward.7} parent=79 // pred_region
          %v780 = vld [vmem:[%s652] sm:$0xff]
          %v781 = vpack.c.bf16 %v780, %v780
          %v782 = vld [vmem:[#allocation12] sm:$0xf]
          %v783 = vld [vmem:[#allocation12 + $0x4] sm:$0xf]
          %v784 = vld [vmem:[#allocation12 + $0x8] sm:$0xf]
          %v785 = vld [vmem:[#allocation12 + $0xc] sm:$0xf]
          %v786 = vld [vmem:[#allocation14] sm:$0x1]
          %v788 = vlaneseq
          %v789 = vshrl.u32 %v788, 7
          %v790 = vsub.s32 0, %v789
          %v791 = vrot.slane %v786, %v790
          %v797 = vunpack.c.l.b16 %v782
          %v798 = vunpack.c.l.b16 %v783
          %v799 = vunpack.c.l.b16 %v784
          %v800 = vunpack.c.l.b16 %v785
          %v801 = vpack.c.b16 %v798, %v797
          %v802 = vpack.c.b16 %v800, %v799
          %vm805 = vcmask 261120
          %v807 = vsel %vm805, %v781, 0
          %809 = vmatprep.subr.bf16.mxu0 0
          %810 = vmatpush1.bf16.msra.mxu0 %v801
          %811 = vmatprep.subr.bf16.mxu0 0
          %812 = vmatpush1.bf16.msra.mxu0 %v802
          %813 = vmatprep.subr.bf16.mxu0 0
          %814 = vmatpush1.bf16.msra.mxu0 0
          %815 = vmatprep.subr.bf16.mxu0 0
          %816 = vmatpush1.bf16.msra.mxu0 0
          %817 = vmatprep.subr.bf16.mxu0 0
          %818 = vmatpush1.bf16.msra.mxu0 0
          %819 = vmatprep.subr.bf16.mxu0 0
          %820 = vmatpush1.bf16.msra.mxu0 0
          %821 = vmatprep.subr.bf16.mxu0 0
          %822 = vmatpush1.bf16.msra.mxu0 0
          %823 = vmatprep.subr.bf16.mxu0 0
          %824 = vmatpush1.bf16.msra.mxu0 0
          %825 = vmatprep.subr.bf16.mxu0 0
          %826 = vmatpush1.bf16.msra.mxu0 0
          %827 = vmatprep.subr.bf16.mxu0 0
          %828 = vmatpush1.bf16.msra.mxu0 0
          %829 = vmatprep.subr.bf16.mxu0 0
          %830 = vmatpush1.bf16.msra.mxu0 0
          %831 = vmatprep.subr.bf16.mxu0 0
          %832 = vmatpush1.bf16.msra.mxu0 0
          %833 = vmatprep.subr.bf16.mxu0 0
          %834 = vmatpush1.bf16.msra.mxu0 0
          %835 = vmatprep.subr.bf16.mxu0 0
          %836 = vmatpush1.bf16.msra.mxu0 0
          %837 = vmatprep.subr.bf16.mxu0 0
          %838 = vmatpush1.bf16.msra.mxu0 0
          %839 = vmatprep.subr.bf16.mxu0 0
          %840 = vmatpush1.bf16.msra.mxu0 0
          %841 = vmatprep.mubr.bf16.mxu0 0
          %842 = vmatmul.mubr.bf16.gmra.mrb[0].mxu0 %v807
          %v843 = vpop.f32.mrb[0].mxu0
          %v844 = vadd.f32 %v791, %v843
          %v845 = vpop.f32.mrb[0].mxu0
          %v846 = vpop.f32.mrb[0].mxu0
          %v847 = vpop.f32.mrb[0].mxu0
          %848 = vdwg.mxu0
          %850 = vrot.lane.b32.xlu0 %v844, 120
          %v851 = vpop.permute.xlu0 %850
          %853 = vrot.lane.b32.xlu0 %v844, 112
          %v854 = vpop.permute.xlu0 %853
          %856 = vrot.lane.b32.xlu0 %v844, 104
          %v857 = vpop.permute.xlu0 %856
          %v859 = vcombine.low %v844, %v854
          %v860 = vcombine.high %v844, %v854
          %v862 = vunpack.c.l.s4 1983009808
          %v863 = vunpack.c.0.s8 %v862
          %v864 = vlaneseq
          %v865 = vshrl.u32 %v864, 7
          %v866 = vsub.s32 %v863, %v865
          %v867 = vrot.slane %v859, %v866
          %v869 = vunpack.c.l.s4 1983009808
          %v870 = vunpack.c.0.s8 %v869
          %v871 = vlaneseq
          %v872 = vshrl.u32 %v871, 7
          %v873 = vsub.s32 %v870, %v872
          %v874 = vrot.slane %v860, %v873
          %v875 = vcombine.low %v851, %v857
          %v876 = vcombine.high %v851, %v857
          %v878 = vunpack.c.l.s4 1983009808
          %v879 = vunpack.c.0.s8 %v878
          %v880 = vlaneseq
          %v881 = vshrl.u32 %v880, 7
          %v882 = vsub.s32 %v879, %v881
          %v883 = vrot.slane %v875, %v882
          %v885 = vunpack.c.l.s4 1983009808
          %v886 = vunpack.c.0.s8 %v885
          %v887 = vlaneseq
          %v888 = vshrl.u32 %v887, 7
          %v889 = vsub.s32 %v886, %v888
          %v890 = vrot.slane %v876, %v889
          %v891 = vcombine.low %v867, %v883
          %v892 = vcombine.high %v867, %v883
          %v894 = vunpack.c.l.s4 1934713408
          %v895 = vunpack.c.0.s8 %v894
          %v896 = vlaneseq
          %v897 = vshrl.u32 %v896, 7
          %v898 = vsub.s32 %v895, %v897
          %v899 = vrot.slane %v891, %v898
          %v901 = vunpack.c.l.s4 1934713408
          %v902 = vunpack.c.0.s8 %v901
          %v903 = vlaneseq
          %v904 = vshrl.u32 %v903, 7
          %v905 = vsub.s32 %v902, %v904
          %v906 = vrot.slane %v892, %v905
          %v907 = vcombine.low %v874, %v890
          %v908 = vcombine.high %v874, %v890
          %v910 = vunpack.c.l.s4 1934713408
          %v911 = vunpack.c.0.s8 %v910
          %v912 = vlaneseq
          %v913 = vshrl.u32 %v912, 7
          %v914 = vsub.s32 %v911, %v913
          %v915 = vrot.slane %v907, %v914
          %v917 = vunpack.c.l.s4 1934713408
          %v918 = vunpack.c.0.s8 %v917
          %v919 = vlaneseq
          %v920 = vshrl.u32 %v919, 7
          %v921 = vsub.s32 %v918, %v920
          %v922 = vrot.slane %v908, %v921
          %v923 = vcombine.high %v899, 0.0
          %v924 = vcombine.high %v906, 0.0
          %v925 = vcombine.high %v915, 0.0
          %v926 = vcombine.high %v922, 0.0
          %v927 = vcombine.low %v899, %v906
          %v929 = vunpack.c.l.s4 1983009808
          %v930 = vunpack.c.0.s8 %v929
          %v931 = vlaneseq
          %v932 = vshrl.u32 %v931, 7
          %v933 = vsub.s32 %v930, %v932
          %v934 = vrot.slane %v927, %v933
          %v935 = vcombine.low %v923, %v924
          %v937 = vunpack.c.l.s4 1983009808
          %v938 = vunpack.c.0.s8 %v937
          %v939 = vlaneseq
          %v940 = vshrl.u32 %v939, 7
          %v941 = vsub.s32 %v938, %v940
          %v942 = vrot.slane %v935, %v941
          %v943 = vcombine.low %v915, %v922
          %v945 = vunpack.c.l.s4 1983009808
          %v946 = vunpack.c.0.s8 %v945
          %v947 = vlaneseq
          %v948 = vshrl.u32 %v947, 7
          %v949 = vsub.s32 %v946, %v948
          %v950 = vrot.slane %v943, %v949
          %v951 = vcombine.low %v925, %v926
          %v953 = vunpack.c.l.s4 1983009808
          %v954 = vunpack.c.0.s8 %v953
          %v955 = vlaneseq
          %v956 = vshrl.u32 %v955, 7
          %v957 = vsub.s32 %v954, %v956
          %v958 = vrot.slane %v951, %v957
          %v959 = vcombine.low %v934, %v942
          %v960 = vcombine.high %v934, %v942
          %v962 = vunpack.c.l.s4 1934713408
          %v963 = vunpack.c.0.s8 %v962
          %v964 = vlaneseq
          %v965 = vshrl.u32 %v964, 7
          %v966 = vsub.s32 %v963, %v965
          %v967 = vrot.slane %v959, %v966
          %v969 = vunpack.c.l.s4 1934713408
          %v970 = vunpack.c.0.s8 %v969
          %v971 = vlaneseq
          %v972 = vshrl.u32 %v971, 7
          %v973 = vsub.s32 %v970, %v972
          %v974 = vrot.slane %v960, %v973
          %v975 = vcombine.low %v950, %v958
          %v976 = vcombine.high %v950, %v958
          %v978 = vunpack.c.l.s4 1934713408
          %v979 = vunpack.c.0.s8 %v978
          %v980 = vlaneseq
          %v981 = vshrl.u32 %v980, 7
          %v982 = vsub.s32 %v979, %v981
          %v983 = vrot.slane %v975, %v982
          %v985 = vunpack.c.l.s4 1934713408
          %v986 = vunpack.c.0.s8 %v985
          %v987 = vlaneseq
          %v988 = vshrl.u32 %v987, 7
          %v989 = vsub.s32 %v986, %v988
          %v990 = vrot.slane %v976, %v989
          %v991 = vcombine.low %v967, %v983
          %v992 = vcombine.high %v967, %v983
          %v993 = vcombine.low %v974, %v990
          %v994 = vcombine.high %v974, %v990
          %v995 = vpack.c.bf16 %v991, %v991
          %v996 = vpack.c.bf16 %v992, %v992
          %v997 = vpack.c.bf16 %v993, %v993
          %v998 = vpack.c.bf16 %v994, %v994
          %vm999 = vcmask 60416
          %1000 = vst.msk [vmem:[#allocation2] sm:$0xf] %vm999, %v995
          %1001 = vst.msk [vmem:[#allocation2 + $0x4] sm:$0xf] %vm999, %v996
          %1002 = vst.msk [vmem:[#allocation2 + $0x8] sm:$0xf] %vm999, %v997
          %1003 = vst.msk [vmem:[#allocation2 + $0xc] sm:$0xf] %vm999, %v998
          %vm1004 = vcmask 7168
          %1005 = vst.msk [vmem:[#allocation3] sm:$0xff] %vm1004, -inf
          %1006 = vst.msk [vmem:[#allocation3 + $0x8] sm:$0xff] %vm1004, -inf
          %1007 = vst.msk [vmem:[#allocation3 + $0x10] sm:$0xff] %vm1004, -inf
          %1008 = vst.msk [vmem:[#allocation3 + $0x18] sm:$0xff] %vm1004, -inf
          %1009 = vst.msk [vmem:[#allocation4] sm:$0xff] %vm1004, 0.0
          %1010 = vst.msk [vmem:[#allocation4 + $0x8] sm:$0xff] %vm1004, 0.0
          %1011 = vst.msk [vmem:[#allocation4 + $0x10] sm:$0xff] %vm1004, 0.0
          %1012 = vst.msk [vmem:[#allocation4 + $0x18] sm:$0xff] %vm1004, 0.0
          %vm1013 = vcmask 64512
          %1014 = vst.msk [vmem:[#allocation5] sm:$0xff] %vm1013, 0.0
          %1015 = vst.msk [vmem:[#allocation5 + $0x8] sm:$0xff] %vm1013, 0.0
          %1016 = vst.msk [vmem:[#allocation5 + $0x10] sm:$0xff] %vm1013, 0.0
          %1017 = vst.msk [vmem:[#allocation5 + $0x18] sm:$0xff] %vm1013, 0.0
        $region144: #{memorizing_transformer_forward.7} parent=79 // pred_fallthru
          _
        %v1018 = vld [vmem:[%s661] sm:$0xf]
        %v1019 = vld [vmem:[%s661 + $0x4] sm:$0xf]
        %v1020 = vld [vmem:[%s661 + $0x8] sm:$0xf]
        %v1021 = vld [vmem:[%s661 + $0xc] sm:$0xf]
        %v1022 = vld [vmem:[%s670] sm:$0xf]
        %v1023 = vld [vmem:[%s670 + $0x4] sm:$0xf]
        %v1024 = vld [vmem:[%s670 + $0x8] sm:$0xf]
        %v1025 = vld [vmem:[%s670 + $0xc] sm:$0xf]
        %v1026 = vld [vmem:[#allocation2] sm:$0xf]
        %v1027 = vld [vmem:[#allocation2 + $0x4] sm:$0xf]
        %v1028 = vld [vmem:[#allocation2 + $0x8] sm:$0xf]
        %v1029 = vld [vmem:[#allocation2 + $0xc] sm:$0xf]
        %vm1030 = vcmask 64512
        %v1032 = vsel %vm1030, %v1026, 0
        %v1035 = vsel %vm1030, %v1018, 0
        %1037 = vmatprep.subr.bf16.mxu0 0
        %1038 = vmatpush1.bf16.xpose.msra.mxu0 %v1035
        %1039 = vmatprep.subr.bf16.mxu0 0
        %1040 = vmatpush1.bf16.xpose.msra.mxu0 0
        %1041 = vmatprep.subr.bf16.mxu0 0
        %1042 = vmatpush1.bf16.xpose.msra.mxu0 0
        %1043 = vmatprep.subr.bf16.mxu0 0
        %1044 = vmatpush1.bf16.xpose.msra.mxu0 0
        %1045 = vmatprep.subr.bf16.mxu0 0
        %1046 = vmatpush1.bf16.xpose.msra.mxu0 0
        %1047 = vmatprep.subr.bf16.mxu0 0
        %1048 = vmatpush1.bf16.xpose.msra.mxu0 0
        %1049 = vmatprep.subr.bf16.mxu0 0
        %1050 = vmatpush1.bf16.xpose.msra.mxu0 0
        %1051 = vmatprep.subr.bf16.mxu0 0
        %1052 = vmatpush1.bf16.xpose.msra.mxu0 0
        %1053 = vmatprep.subr.bf16.mxu0 0
        %1054 = vmatpush1.bf16.xpose.msra.mxu0 0
        %1055 = vmatprep.subr.bf16.mxu0 0
        %1056 = vmatpush1.bf16.xpose.msra.mxu0 0
        %1057 = vmatprep.subr.bf16.mxu0 0
        %1058 = vmatpush1.bf16.xpose.msra.mxu0 0
        %1059 = vmatprep.subr.bf16.mxu0 0
        %1060 = vmatpush1.bf16.xpose.msra.mxu0 0
        %1061 = vmatprep.subr.bf16.mxu0 0
        %1062 = vmatpush1.bf16.xpose.msra.mxu0 0
        %1063 = vmatprep.subr.bf16.mxu0 0
        %1064 = vmatpush1.bf16.xpose.msra.mxu0 0
        %1065 = vmatprep.subr.bf16.mxu0 0
        %1066 = vmatpush1.bf16.xpose.msra.mxu0 0
        %1067 = vmatprep.subr.bf16.mxu0 0
        %1068 = vmatpush1.bf16.xpose.msra.mxu0 0
        %1069 = vmatprep.mubr.bf16.mxu0 0
        %1070 = vmatmul.mubr.bf16.gmra.mrb[0].mxu0 %v1032
        %v1071 = vpop.f32.mrb[0].mxu0
        %v1072 = vadd.f32 0.0, %v1071
        %v1073 = vpop.f32.mrb[0].mxu0
        %v1074 = vpop.f32.mrb[0].mxu0
        %v1075 = vpop.f32.mrb[0].mxu0
        %1076 = vdwg.mxu0
        %v1078 = vsel %vm1030, %v1027, 0
        %v1081 = vsel %vm1030, %v1019, 0
        %1083 = vmatprep.subr.bf16.mxu0 0
        %1084 = vmatpush1.bf16.xpose.msra.mxu0 %v1081
        %1085 = vmatprep.subr.bf16.mxu0 0
        %1086 = vmatpush1.bf16.xpose.msra.mxu0 0
        %1087 = vmatprep.subr.bf16.mxu0 0
        %1088 = vmatpush1.bf16.xpose.msra.mxu0 0
        %1089 = vmatprep.subr.bf16.mxu0 0
        %1090 = vmatpush1.bf16.xpose.msra.mxu0 0
        %1091 = vmatprep.subr.bf16.mxu0 0
        %1092 = vmatpush1.bf16.xpose.msra.mxu0 0
        %1093 = vmatprep.subr.bf16.mxu0 0
        %1094 = vmatpush1.bf16.xpose.msra.mxu0 0
        %1095 = vmatprep.subr.bf16.mxu0 0
        %1096 = vmatpush1.bf16.xpose.msra.mxu0 0
        %1097 = vmatprep.subr.bf16.mxu0 0
        %1098 = vmatpush1.bf16.xpose.msra.mxu0 0
        %1099 = vmatprep.subr.bf16.mxu0 0
        %1100 = vmatpush1.bf16.xpose.msra.mxu0 0
        %1101 = vmatprep.subr.bf16.mxu0 0
        %1102 = vmatpush1.bf16.xpose.msra.mxu0 0
        %1103 = vmatprep.subr.bf16.mxu0 0
        %1104 = vmatpush1.bf16.xpose.msra.mxu0 0
        %1105 = vmatprep.subr.bf16.mxu0 0
        %1106 = vmatpush1.bf16.xpose.msra.mxu0 0
        %1107 = vmatprep.subr.bf16.mxu0 0
        %1108 = vmatpush1.bf16.xpose.msra.mxu0 0
        %1109 = vmatprep.subr.bf16.mxu0 0
        %1110 = vmatpush1.bf16.xpose.msra.mxu0 0
        %1111 = vmatprep.subr.bf16.mxu0 0
        %1112 = vmatpush1.bf16.xpose.msra.mxu0 0
        %1113 = vmatprep.subr.bf16.mxu0 0
        %1114 = vmatpush1.bf16.xpose.msra.mxu0 0
        %1115 = vmatprep.mubr.bf16.mxu0 0
        %1116 = vmatmul.mubr.bf16.gmra.mrb[0].mxu0 %v1078
        %v1117 = vpop.f32.mrb[0].mxu0
        %v1118 = vadd.f32 0.0, %v1117
        %v1119 = vpop.f32.mrb[0].mxu0
        %v1120 = vpop.f32.mrb[0].mxu0
        %v1121 = vpop.f32.mrb[0].mxu0
        %1122 = vdwg.mxu0
        %v1124 = vsel %vm1030, %v1028, 0
        %v1127 = vsel %vm1030, %v1020, 0
        %1129 = vmatprep.subr.bf16.mxu0 0
        %1130 = vmatpush1.bf16.xpose.msra.mxu0 %v1127
        %1131 = vmatprep.subr.bf16.mxu0 0
        %1132 = vmatpush1.bf16.xpose.msra.mxu0 0
        %1133 = vmatprep.subr.bf16.mxu0 0
        %1134 = vmatpush1.bf16.xpose.msra.mxu0 0
        %1135 = vmatprep.subr.bf16.mxu0 0
        %1136 = vmatpush1.bf16.xpose.msra.mxu0 0
        %1137 = vmatprep.subr.bf16.mxu0 0
        %1138 = vmatpush1.bf16.xpose.msra.mxu0 0
        %1139 = vmatprep.subr.bf16.mxu0 0
        %1140 = vmatpush1.bf16.xpose.msra.mxu0 0
        %1141 = vmatprep.subr.bf16.mxu0 0
        %1142 = vmatpush1.bf16.xpose.msra.mxu0 0
        %1143 = vmatprep.subr.bf16.mxu0 0
        %1144 = vmatpush1.bf16.xpose.msra.mxu0 0
        %1145 = vmatprep.subr.bf16.mxu0 0
        %1146 = vmatpush1.bf16.xpose.msra.mxu0 0
        %1147 = vmatprep.subr.bf16.mxu0 0
        %1148 = vmatpush1.bf16.xpose.msra.mxu0 0
        %1149 = vmatprep.subr.bf16.mxu0 0
        %1150 = vmatpush1.bf16.xpose.msra.mxu0 0
        %1151 = vmatprep.subr.bf16.mxu0 0
        %1152 = vmatpush1.bf16.xpose.msra.mxu0 0
        %1153 = vmatprep.subr.bf16.mxu0 0
        %1154 = vmatpush1.bf16.xpose.msra.mxu0 0
        %1155 = vmatprep.subr.bf16.mxu0 0
        %1156 = vmatpush1.bf16.xpose.msra.mxu0 0
        %1157 = vmatprep.subr.bf16.mxu0 0
        %1158 = vmatpush1.bf16.xpose.msra.mxu0 0
        %1159 = vmatprep.subr.bf16.mxu0 0
        %1160 = vmatpush1.bf16.xpose.msra.mxu0 0
        %1161 = vmatprep.mubr.bf16.mxu0 0
        %1162 = vmatmul.mubr.bf16.gmra.mrb[0].mxu0 %v1124
        %v1163 = vpop.f32.mrb[0].mxu0
        %v1164 = vadd.f32 0.0, %v1163
        %v1165 = vpop.f32.mrb[0].mxu0
        %v1166 = vpop.f32.mrb[0].mxu0
        %v1167 = vpop.f32.mrb[0].mxu0
        %1168 = vdwg.mxu0
        %v1170 = vsel %vm1030, %v1029, 0
        %v1173 = vsel %vm1030, %v1021, 0
        %1175 = vmatprep.subr.bf16.mxu0 0
        %1176 = vmatpush1.bf16.xpose.msra.mxu0 %v1173
        %1177 = vmatprep.subr.bf16.mxu0 0
        %1178 = vmatpush1.bf16.xpose.msra.mxu0 0
        %1179 = vmatprep.subr.bf16.mxu0 0
        %1180 = vmatpush1.bf16.xpose.msra.mxu0 0
        %1181 = vmatprep.subr.bf16.mxu0 0
        %1182 = vmatpush1.bf16.xpose.msra.mxu0 0
        %1183 = vmatprep.subr.bf16.mxu0 0
        %1184 = vmatpush1.bf16.xpose.msra.mxu0 0
        %1185 = vmatprep.subr.bf16.mxu0 0
        %1186 = vmatpush1.bf16.xpose.msra.mxu0 0
        %1187 = vmatprep.subr.bf16.mxu0 0
        %1188 = vmatpush1.bf16.xpose.msra.mxu0 0
        %1189 = vmatprep.subr.bf16.mxu0 0
        %1190 = vmatpush1.bf16.xpose.msra.mxu0 0
        %1191 = vmatprep.subr.bf16.mxu0 0
        %1192 = vmatpush1.bf16.xpose.msra.mxu0 0
        %1193 = vmatprep.subr.bf16.mxu0 0
        %1194 = vmatpush1.bf16.xpose.msra.mxu0 0
        %1195 = vmatprep.subr.bf16.mxu0 0
        %1196 = vmatpush1.bf16.xpose.msra.mxu0 0
        %1197 = vmatprep.subr.bf16.mxu0 0
        %1198 = vmatpush1.bf16.xpose.msra.mxu0 0
        %1199 = vmatprep.subr.bf16.mxu0 0
        %1200 = vmatpush1.bf16.xpose.msra.mxu0 0
        %1201 = vmatprep.subr.bf16.mxu0 0
        %1202 = vmatpush1.bf16.xpose.msra.mxu0 0
        %1203 = vmatprep.subr.bf16.mxu0 0
        %1204 = vmatpush1.bf16.xpose.msra.mxu0 0
        %1205 = vmatprep.subr.bf16.mxu0 0
        %1206 = vmatpush1.bf16.xpose.msra.mxu0 0
        %1207 = vmatprep.mubr.bf16.mxu0 0
        %1208 = vmatmul.mubr.bf16.gmra.mrb[0].mxu0 %v1170
        %v1209 = vpop.f32.mrb[0].mxu0
        %v1210 = vadd.f32 0.0, %v1209
        %v1211 = vpop.f32.mrb[0].mxu0
        %v1212 = vpop.f32.mrb[0].mxu0
        %v1213 = vpop.f32.mrb[0].mxu0
        %1214 = vdwg.mxu0
        %v1215 = vld [vmem:[#allocation3] sm:$0xff]
        %v1216 = vld [vmem:[#allocation3 + $0x8] sm:$0xff]
        %v1217 = vld [vmem:[#allocation3 + $0x10] sm:$0xff]
        %v1218 = vld [vmem:[#allocation3 + $0x18] sm:$0xff]
        %v1219 = vsel %vm1030, %v1072, -inf
        %1220 = vmax.xlane.f32.xlu0 %v1219
        %v1221 = vpop.xlane.xlu0 %1220
        %v1222 = vsel %vm1030, %v1118, -inf
        %1223 = vmax.xlane.f32.xlu0 %v1222
        %v1224 = vpop.xlane.xlu0 %1223
        %v1225 = vsel %vm1030, %v1164, -inf
        %1226 = vmax.xlane.f32.xlu0 %v1225
        %v1227 = vpop.xlane.xlu0 %1226
        %v1228 = vsel %vm1030, %v1210, -inf
        %1229 = vmax.xlane.f32.xlu0 %v1228
        %v1230 = vpop.xlane.xlu0 %1229
        %v1231 = vmax.f32 %v1215, %v1221
        %v1232 = vmax.f32 %v1216, %v1224
        %v1233 = vmax.f32 %v1217, %v1227
        %v1234 = vmax.f32 %v1218, %v1230
        %v1235 = vsub.f32 %v1215, %v1231
        %v1236 = vsub.f32 %v1216, %v1232
        %v1237 = vsub.f32 %v1217, %v1233
        %v1238 = vsub.f32 %v1218, %v1234
        %v1239 = vmul.f32 %v1235, 1.442695
        %v1240 = vpow.pop %v1239
        %v1241 = vmul.f32 %v1236, 1.442695
        %v1242 = vpow.pop %v1241
        %v1243 = vmul.f32 %v1237, 1.442695
        %v1244 = vpow.pop %v1243
        %v1245 = vmul.f32 %v1238, 1.442695
        %v1246 = vpow.pop %v1245
        %1248 = vset.pattern.permute.xlu0 0
        %1249 = vperm.xlu0 %1248, %v1231
        %v1250 = vpop.permute.xlu0 %1249
        %1253 = vset.pattern.permute.xlu0 0
        %1254 = vperm.xlu0 %1253, %v1232
        %v1255 = vpop.permute.xlu0 %1254
        %1258 = vset.pattern.permute.xlu0 0
        %1259 = vperm.xlu0 %1258, %v1233
        %v1260 = vpop.permute.xlu0 %1259
        %1263 = vset.pattern.permute.xlu0 0
        %1264 = vperm.xlu0 %1263, %v1234
        %v1265 = vpop.permute.xlu0 %1264
        %v1267 = vsub.f32 %v1072, %v1250
        %v1268 = vsub.f32 %v1118, %v1255
        %v1269 = vsub.f32 %v1164, %v1260
        %v1270 = vsub.f32 %v1210, %v1265
        %v1271 = vmul.f32 %v1267, 1.442695
        %v1272 = vpow.pop %v1271
        %v1273 = vmul.f32 %v1268, 1.442695
        %v1274 = vpow.pop %v1273
        %v1275 = vmul.f32 %v1269, 1.442695
        %v1276 = vpow.pop %v1275
        %v1277 = vmul.f32 %v1270, 1.442695
        %v1278 = vpow.pop %v1277
        %v1279 = vld [vmem:[#allocation4] sm:$0xff]
        %v1280 = vld [vmem:[#allocation4 + $0x8] sm:$0xff]
        %v1281 = vld [vmem:[#allocation4 + $0x10] sm:$0xff]
        %v1282 = vld [vmem:[#allocation4 + $0x18] sm:$0xff]
        %v1283 = vmul.f32 %v1240, %v1279
        %v1284 = vmul.f32 %v1242, %v1280
        %v1285 = vmul.f32 %v1244, %v1281
        %v1286 = vmul.f32 %v1246, %v1282
        %v1287 = vsel %vm1030, %v1272, 0.0
        %1288 = vadd.xlane.f32.xlu0 %v1287
        %v1289 = vpop.xlane.xlu0 %1288
        %v1290 = vsel %vm1030, %v1274, 0.0
        %1291 = vadd.xlane.f32.xlu0 %v1290
        %v1292 = vpop.xlane.xlu0 %1291
        %v1293 = vsel %vm1030, %v1276, 0.0
        %1294 = vadd.xlane.f32.xlu0 %v1293
        %v1295 = vpop.xlane.xlu0 %1294
        %v1296 = vsel %vm1030, %v1278, 0.0
        %1297 = vadd.xlane.f32.xlu0 %v1296
        %v1298 = vpop.xlane.xlu0 %1297
        %v1299 = vadd.f32 %v1283, %v1289
        %v1300 = vadd.f32 %v1284, %v1292
        %v1301 = vadd.f32 %v1285, %v1295
        %v1302 = vadd.f32 %v1286, %v1298
        %vm1303 = vcmask 7168
        %1304 = vst.msk [vmem:[#allocation4] sm:$0xff] %vm1303, %v1299
        %1305 = vst.msk [vmem:[#allocation4 + $0x8] sm:$0xff] %vm1303, %v1300
        %1306 = vst.msk [vmem:[#allocation4 + $0x10] sm:$0xff] %vm1303, %v1301
        %1307 = vst.msk [vmem:[#allocation4 + $0x18] sm:$0xff] %vm1303, %v1302
        %v1308 = vld [vmem:[#allocation5] sm:$0xff]
        %v1309 = vld [vmem:[#allocation5 + $0x8] sm:$0xff]
        %v1310 = vld [vmem:[#allocation5 + $0x10] sm:$0xff]
        %v1311 = vld [vmem:[#allocation5 + $0x18] sm:$0xff]
        %1313 = vset.pattern.permute.xlu0 0
        %1314 = vperm.xlu0 %1313, %v1240
        %v1315 = vpop.permute.xlu0 %1314
        %1318 = vset.pattern.permute.xlu0 0
        %1319 = vperm.xlu0 %1318, %v1242
        %v1320 = vpop.permute.xlu0 %1319
        %1323 = vset.pattern.permute.xlu0 0
        %1324 = vperm.xlu0 %1323, %v1244
        %v1325 = vpop.permute.xlu0 %1324
        %1328 = vset.pattern.permute.xlu0 0
        %1329 = vperm.xlu0 %1328, %v1246
        %v1330 = vpop.permute.xlu0 %1329
        %v1332 = vmul.f32 %v1315, %v1308
        %v1333 = vmul.f32 %v1320, %v1309
        %v1334 = vmul.f32 %v1325, %v1310
        %v1335 = vmul.f32 %v1330, %v1311
        %v1336 = vpack.c.bf16 %v1272, %v1272
        %v1337 = vpack.c.bf16 %v1274, %v1274
        %v1338 = vpack.c.bf16 %v1276, %v1276
        %v1339 = vpack.c.bf16 %v1278, %v1278
        %v1341 = vsel %vm1030, %v1336, 0
        %vm1343 = vcmask 1043456
        %v1345 = vsel %vm1343, %v1022, 0
        %1347 = vmatprep.subr.bf16.mxu0 0
        %1348 = vmatpush1.bf16.msra.mxu0 %v1345
        %1349 = vmatprep.subr.bf16.mxu0 0
        %1350 = vmatpush1.bf16.msra.mxu0 0
        %1351 = vmatprep.subr.bf16.mxu0 0
        %1352 = vmatpush1.bf16.msra.mxu0 0
        %1353 = vmatprep.subr.bf16.mxu0 0
        %1354 = vmatpush1.bf16.msra.mxu0 0
        %1355 = vmatprep.subr.bf16.mxu0 0
        %1356 = vmatpush1.bf16.msra.mxu0 0
        %1357 = vmatprep.subr.bf16.mxu0 0
        %1358 = vmatpush1.bf16.msra.mxu0 0
        %1359 = vmatprep.subr.bf16.mxu0 0
        %1360 = vmatpush1.bf16.msra.mxu0 0
        %1361 = vmatprep.subr.bf16.mxu0 0
        %1362 = vmatpush1.bf16.msra.mxu0 0
        %1363 = vmatprep.subr.bf16.mxu0 0
        %1364 = vmatpush1.bf16.msra.mxu0 0
        %1365 = vmatprep.subr.bf16.mxu0 0
        %1366 = vmatpush1.bf16.msra.mxu0 0
        %1367 = vmatprep.subr.bf16.mxu0 0
        %1368 = vmatpush1.bf16.msra.mxu0 0
        %1369 = vmatprep.subr.bf16.mxu0 0
        %1370 = vmatpush1.bf16.msra.mxu0 0
        %1371 = vmatprep.subr.bf16.mxu0 0
        %1372 = vmatpush1.bf16.msra.mxu0 0
        %1373 = vmatprep.subr.bf16.mxu0 0
        %1374 = vmatpush1.bf16.msra.mxu0 0
        %1375 = vmatprep.subr.bf16.mxu0 0
        %1376 = vmatpush1.bf16.msra.mxu0 0
        %1377 = vmatprep.subr.bf16.mxu0 0
        %1378 = vmatpush1.bf16.msra.mxu0 0
        %1379 = vmatprep.mubr.bf16.mxu0 0
        %1380 = vmatmul.mubr.bf16.gmra.mrb[0].mxu0 %v1341
        %v1381 = vpop.f32.mrb[0].mxu0
        %v1382 = vadd.f32 0.0, %v1381
        %v1383 = vpop.f32.mrb[0].mxu0
        %v1384 = vpop.f32.mrb[0].mxu0
        %v1385 = vpop.f32.mrb[0].mxu0
        %1386 = vdwg.mxu0
        %v1388 = vsel %vm1030, %v1337, 0
        %v1391 = vsel %vm1343, %v1023, 0
        %1393 = vmatprep.subr.bf16.mxu0 0
        %1394 = vmatpush1.bf16.msra.mxu0 %v1391
        %1395 = vmatprep.subr.bf16.mxu0 0
        %1396 = vmatpush1.bf16.msra.mxu0 0
        %1397 = vmatprep.subr.bf16.mxu0 0
        %1398 = vmatpush1.bf16.msra.mxu0 0
        %1399 = vmatprep.subr.bf16.mxu0 0
        %1400 = vmatpush1.bf16.msra.mxu0 0
        %1401 = vmatprep.subr.bf16.mxu0 0
        %1402 = vmatpush1.bf16.msra.mxu0 0
        %1403 = vmatprep.subr.bf16.mxu0 0
        %1404 = vmatpush1.bf16.msra.mxu0 0
        %1405 = vmatprep.subr.bf16.mxu0 0
        %1406 = vmatpush1.bf16.msra.mxu0 0
        %1407 = vmatprep.subr.bf16.mxu0 0
        %1408 = vmatpush1.bf16.msra.mxu0 0
        %1409 = vmatprep.subr.bf16.mxu0 0
        %1410 = vmatpush1.bf16.msra.mxu0 0
        %1411 = vmatprep.subr.bf16.mxu0 0
        %1412 = vmatpush1.bf16.msra.mxu0 0
        %1413 = vmatprep.subr.bf16.mxu0 0
        %1414 = vmatpush1.bf16.msra.mxu0 0
        %1415 = vmatprep.subr.bf16.mxu0 0
        %1416 = vmatpush1.bf16.msra.mxu0 0
        %1417 = vmatprep.subr.bf16.mxu0 0
        %1418 = vmatpush1.bf16.msra.mxu0 0
        %1419 = vmatprep.subr.bf16.mxu0 0
        %1420 = vmatpush1.bf16.msra.mxu0 0
        %1421 = vmatprep.subr.bf16.mxu0 0
        %1422 = vmatpush1.bf16.msra.mxu0 0
        %1423 = vmatprep.subr.bf16.mxu0 0
        %1424 = vmatpush1.bf16.msra.mxu0 0
        %1425 = vmatprep.mubr.bf16.mxu0 0
        %1426 = vmatmul.mubr.bf16.gmra.mrb[0].mxu0 %v1388
        %v1427 = vpop.f32.mrb[0].mxu0
        %v1428 = vadd.f32 0.0, %v1427
        %v1429 = vpop.f32.mrb[0].mxu0
        %v1430 = vpop.f32.mrb[0].mxu0
        %v1431 = vpop.f32.mrb[0].mxu0
        %1432 = vdwg.mxu0
        %v1434 = vsel %vm1030, %v1338, 0
        %v1437 = vsel %vm1343, %v1024, 0
        %1439 = vmatprep.subr.bf16.mxu0 0
        %1440 = vmatpush1.bf16.msra.mxu0 %v1437
        %1441 = vmatprep.subr.bf16.mxu0 0
        %1442 = vmatpush1.bf16.msra.mxu0 0
        %1443 = vmatprep.subr.bf16.mxu0 0
        %1444 = vmatpush1.bf16.msra.mxu0 0
        %1445 = vmatprep.subr.bf16.mxu0 0
        %1446 = vmatpush1.bf16.msra.mxu0 0
        %1447 = vmatprep.subr.bf16.mxu0 0
        %1448 = vmatpush1.bf16.msra.mxu0 0
        %1449 = vmatprep.subr.bf16.mxu0 0
        %1450 = vmatpush1.bf16.msra.mxu0 0
        %1451 = vmatprep.subr.bf16.mxu0 0
        %1452 = vmatpush1.bf16.msra.mxu0 0
        %1453 = vmatprep.subr.bf16.mxu0 0
        %1454 = vmatpush1.bf16.msra.mxu0 0
        %1455 = vmatprep.subr.bf16.mxu0 0
        %1456 = vmatpush1.bf16.msra.mxu0 0
        %1457 = vmatprep.subr.bf16.mxu0 0
        %1458 = vmatpush1.bf16.msra.mxu0 0
        %1459 = vmatprep.subr.bf16.mxu0 0
        %1460 = vmatpush1.bf16.msra.mxu0 0
        %1461 = vmatprep.subr.bf16.mxu0 0
        %1462 = vmatpush1.bf16.msra.mxu0 0
        %1463 = vmatprep.subr.bf16.mxu0 0
        %1464 = vmatpush1.bf16.msra.mxu0 0
        %1465 = vmatprep.subr.bf16.mxu0 0
        %1466 = vmatpush1.bf16.msra.mxu0 0
        %1467 = vmatprep.subr.bf16.mxu0 0
        %1468 = vmatpush1.bf16.msra.mxu0 0
        %1469 = vmatprep.subr.bf16.mxu0 0
        %1470 = vmatpush1.bf16.msra.mxu0 0
        %1471 = vmatprep.mubr.bf16.mxu0 0
        %1472 = vmatmul.mubr.bf16.gmra.mrb[0].mxu0 %v1434
        %v1473 = vpop.f32.mrb[0].mxu0
        %v1474 = vadd.f32 0.0, %v1473
        %v1475 = vpop.f32.mrb[0].mxu0
        %v1476 = vpop.f32.mrb[0].mxu0
        %v1477 = vpop.f32.mrb[0].mxu0
        %1478 = vdwg.mxu0
        %v1480 = vsel %vm1030, %v1339, 0
        %v1483 = vsel %vm1343, %v1025, 0
        %1485 = vmatprep.subr.bf16.mxu0 0
        %1486 = vmatpush1.bf16.msra.mxu0 %v1483
        %1487 = vmatprep.subr.bf16.mxu0 0
        %1488 = vmatpush1.bf16.msra.mxu0 0
        %1489 = vmatprep.subr.bf16.mxu0 0
        %1490 = vmatpush1.bf16.msra.mxu0 0
        %1491 = vmatprep.subr.bf16.mxu0 0
        %1492 = vmatpush1.bf16.msra.mxu0 0
        %1493 = vmatprep.subr.bf16.mxu0 0
        %1494 = vmatpush1.bf16.msra.mxu0 0
        %1495 = vmatprep.subr.bf16.mxu0 0
        %1496 = vmatpush1.bf16.msra.mxu0 0
        %1497 = vmatprep.subr.bf16.mxu0 0
        %1498 = vmatpush1.bf16.msra.mxu0 0
        %1499 = vmatprep.subr.bf16.mxu0 0
        %1500 = vmatpush1.bf16.msra.mxu0 0
        %1501 = vmatprep.subr.bf16.mxu0 0
        %1502 = vmatpush1.bf16.msra.mxu0 0
        %1503 = vmatprep.subr.bf16.mxu0 0
        %1504 = vmatpush1.bf16.msra.mxu0 0
        %1505 = vmatprep.subr.bf16.mxu0 0
        %1506 = vmatpush1.bf16.msra.mxu0 0
        %1507 = vmatprep.subr.bf16.mxu0 0
        %1508 = vmatpush1.bf16.msra.mxu0 0
        %1509 = vmatprep.subr.bf16.mxu0 0
        %1510 = vmatpush1.bf16.msra.mxu0 0
        %1511 = vmatprep.subr.bf16.mxu0 0
        %1512 = vmatpush1.bf16.msra.mxu0 0
        %1513 = vmatprep.subr.bf16.mxu0 0
        %1514 = vmatpush1.bf16.msra.mxu0 0
        %1515 = vmatprep.subr.bf16.mxu0 0
        %1516 = vmatpush1.bf16.msra.mxu0 0
        %1517 = vmatprep.mubr.bf16.mxu0 0
        %1518 = vmatmul.mubr.bf16.gmra.mrb[0].mxu0 %v1480
        %v1519 = vpop.f32.mrb[0].mxu0
        %v1520 = vadd.f32 0.0, %v1519
        %v1521 = vpop.f32.mrb[0].mxu0
        %v1522 = vpop.f32.mrb[0].mxu0
        %v1523 = vpop.f32.mrb[0].mxu0
        %1524 = vdwg.mxu0
        %v1525 = vadd.f32 %v1332, %v1382
        %v1526 = vadd.f32 %v1333, %v1428
        %v1527 = vadd.f32 %v1334, %v1474
        %v1528 = vadd.f32 %v1335, %v1520
        %1529 = vst.msk [vmem:[#allocation5] sm:$0xff] %vm1030, %v1525
        %1530 = vst.msk [vmem:[#allocation5 + $0x8] sm:$0xff] %vm1030, %v1526
        %1531 = vst.msk [vmem:[#allocation5 + $0x10] sm:$0xff] %vm1030, %v1527
        %1532 = vst.msk [vmem:[#allocation5 + $0x18] sm:$0xff] %vm1030, %v1528
        %1533 = vst.msk [vmem:[#allocation3] sm:$0xff] %vm1303, %v1231
        %1534 = vst.msk [vmem:[#allocation3 + $0x8] sm:$0xff] %vm1303, %v1232
        %1535 = vst.msk [vmem:[#allocation3 + $0x10] sm:$0xff] %vm1303, %v1233
        %1536 = vst.msk [vmem:[#allocation3 + $0x18] sm:$0xff] %vm1303, %v1234
        // Predicated region
        $region145: #{memorizing_transformer_forward.7} parent=79 // pred_check
          %p1537 = pneg %p776
        $region146: #{memorizing_transformer_forward.7} parent=79 // pred_check_branch
          %1539 = sbr.rel (%p1537) target = $region148
        $region147: #{memorizing_transformer_forward.7} parent=79 // pred_region
          %v1540 = vld [vmem:[#allocation5] sm:$0xff]
          %v1541 = vld [vmem:[#allocation5 + $0x8] sm:$0xff]
          %v1542 = vld [vmem:[#allocation5 + $0x10] sm:$0xff]
          %v1543 = vld [vmem:[#allocation5 + $0x18] sm:$0xff]
          %v1544 = vld [vmem:[#allocation4] sm:$0xff]
          %v1545 = vld [vmem:[#allocation4 + $0x8] sm:$0xff]
          %v1546 = vld [vmem:[#allocation4 + $0x10] sm:$0xff]
          %v1547 = vld [vmem:[#allocation4 + $0x18] sm:$0xff]
          %v1548 = vrcp.pop %v1544
          %v1549 = vrcp.pop %v1545
          %v1550 = vrcp.pop %v1546
          %v1551 = vrcp.pop %v1547
          %1553 = vset.pattern.permute.xlu0 0
          %1554 = vperm.xlu0 %1553, %v1548
          %v1555 = vpop.permute.xlu0 %1554
          %1558 = vset.pattern.permute.xlu0 0
          %1559 = vperm.xlu0 %1558, %v1549
          %v1560 = vpop.permute.xlu0 %1559
          %1563 = vset.pattern.permute.xlu0 0
          %1564 = vperm.xlu0 %1563, %v1550
          %v1565 = vpop.permute.xlu0 %1564
          %1568 = vset.pattern.permute.xlu0 0
          %1569 = vperm.xlu0 %1568, %v1551
          %v1570 = vpop.permute.xlu0 %1569
          %v1572 = vmul.f32 %v1540, %v1555
          %v1573 = vmul.f32 %v1541, %v1560
          %v1574 = vmul.f32 %v1542, %v1565
          %v1575 = vmul.f32 %v1543, %v1570
          %v1576 = vcombine.low %v1572, %v1574
          %v1577 = vcombine.high %v1572, %v1574
          %v1579 = vunpack.c.l.s4 1983009808
          %v1580 = vunpack.c.0.s8 %v1579
          %v1581 = vlaneseq
          %v1582 = vshrl.u32 %v1581, 7
          %v1583 = vsub.s32 %v1580, %v1582
          %v1584 = vrot.slane %v1576, %v1583
          %v1586 = vunpack.c.l.s4 1983009808
          %v1587 = vunpack.c.0.s8 %v1586
          %v1588 = vlaneseq
          %v1589 = vshrl.u32 %v1588, 7
          %v1590 = vsub.s32 %v1587, %v1589
          %v1591 = vrot.slane %v1577, %v1590
          %v1592 = vcombine.low %v1573, %v1575
          %v1593 = vcombine.high %v1573, %v1575
          %v1595 = vunpack.c.l.s4 1983009808
          %v1596 = vunpack.c.0.s8 %v1595
          %v1597 = vlaneseq
          %v1598 = vshrl.u32 %v1597, 7
          %v1599 = vsub.s32 %v1596, %v1598
          %v1600 = vrot.slane %v1592, %v1599
          %v1602 = vunpack.c.l.s4 1983009808
          %v1603 = vunpack.c.0.s8 %v1602
          %v1604 = vlaneseq
          %v1605 = vshrl.u32 %v1604, 7
          %v1606 = vsub.s32 %v1603, %v1605
          %v1607 = vrot.slane %v1593, %v1606
          %v1608 = vcombine.low %v1584, %v1600
          %v1609 = vcombine.high %v1584, %v1600
          %v1611 = vunpack.c.l.s4 1934713408
          %v1612 = vunpack.c.0.s8 %v1611
          %v1613 = vlaneseq
          %v1614 = vshrl.u32 %v1613, 7
          %v1615 = vsub.s32 %v1612, %v1614
          %v1616 = vrot.slane %v1608, %v1615
          %v1618 = vunpack.c.l.s4 1934713408
          %v1619 = vunpack.c.0.s8 %v1618
          %v1620 = vlaneseq
          %v1621 = vshrl.u32 %v1620, 7
          %v1622 = vsub.s32 %v1619, %v1621
          %v1623 = vrot.slane %v1609, %v1622
          %v1624 = vcombine.low %v1591, %v1607
          %v1625 = vcombine.high %v1591, %v1607
          %v1627 = vunpack.c.l.s4 1934713408
          %v1628 = vunpack.c.0.s8 %v1627
          %v1629 = vlaneseq
          %v1630 = vshrl.u32 %v1629, 7
          %v1631 = vsub.s32 %v1628, %v1630
          %v1632 = vrot.slane %v1624, %v1631
          %v1634 = vunpack.c.l.s4 1934713408
          %v1635 = vunpack.c.0.s8 %v1634
          %v1636 = vlaneseq
          %v1637 = vshrl.u32 %v1636, 7
          %v1638 = vsub.s32 %v1635, %v1637
          %v1639 = vrot.slane %v1625, %v1638
          %v1640 = vcombine.high %v1616, 0.0
          %v1641 = vcombine.high %v1623, 0.0
          %v1642 = vcombine.high %v1632, 0.0
          %v1643 = vcombine.high %v1639, 0.0
          %v1644 = vcombine.low %v1616, %v1623
          %v1646 = vunpack.c.l.s4 1983009808
          %v1647 = vunpack.c.0.s8 %v1646
          %v1648 = vlaneseq
          %v1649 = vshrl.u32 %v1648, 7
          %v1650 = vsub.s32 %v1647, %v1649
          %v1651 = vrot.slane %v1644, %v1650
          %v1652 = vcombine.low %v1640, %v1641
          %v1654 = vunpack.c.l.s4 1983009808
          %v1655 = vunpack.c.0.s8 %v1654
          %v1656 = vlaneseq
          %v1657 = vshrl.u32 %v1656, 7
          %v1658 = vsub.s32 %v1655, %v1657
          %v1659 = vrot.slane %v1652, %v1658
          %v1660 = vcombine.low %v1632, %v1639
          %v1662 = vunpack.c.l.s4 1983009808
          %v1663 = vunpack.c.0.s8 %v1662
          %v1664 = vlaneseq
          %v1665 = vshrl.u32 %v1664, 7
          %v1666 = vsub.s32 %v1663, %v1665
          %v1667 = vrot.slane %v1660, %v1666
          %v1668 = vcombine.low %v1642, %v1643
          %v1670 = vunpack.c.l.s4 1983009808
          %v1671 = vunpack.c.0.s8 %v1670
          %v1672 = vlaneseq
          %v1673 = vshrl.u32 %v1672, 7
          %v1674 = vsub.s32 %v1671, %v1673
          %v1675 = vrot.slane %v1668, %v1674
          %v1676 = vcombine.low %v1651, %v1659
          %v1677 = vcombine.high %v1651, %v1659
          %v1679 = vunpack.c.l.s4 1934713408
          %v1680 = vunpack.c.0.s8 %v1679
          %v1681 = vlaneseq
          %v1682 = vshrl.u32 %v1681, 7
          %v1683 = vsub.s32 %v1680, %v1682
          %v1684 = vrot.slane %v1676, %v1683
          %v1686 = vunpack.c.l.s4 1934713408
          %v1687 = vunpack.c.0.s8 %v1686
          %v1688 = vlaneseq
          %v1689 = vshrl.u32 %v1688, 7
          %v1690 = vsub.s32 %v1687, %v1689
          %v1691 = vrot.slane %v1677, %v1690
          %v1692 = vcombine.low %v1667, %v1675
          %v1693 = vcombine.high %v1667, %v1675
          %v1695 = vunpack.c.l.s4 1934713408
          %v1696 = vunpack.c.0.s8 %v1695
          %v1697 = vlaneseq
          %v1698 = vshrl.u32 %v1697, 7
          %v1699 = vsub.s32 %v1696, %v1698
          %v1700 = vrot.slane %v1692, %v1699
          %v1702 = vunpack.c.l.s4 1934713408
          %v1703 = vunpack.c.0.s8 %v1702
          %v1704 = vlaneseq
          %v1705 = vshrl.u32 %v1704, 7
          %v1706 = vsub.s32 %v1703, %v1705
          %v1707 = vrot.slane %v1693, %v1706
          %v1708 = vcombine.low %v1684, %v1700
          %v1709 = vcombine.high %v1684, %v1700
          %v1710 = vcombine.low %v1691, %v1707
          %v1711 = vcombine.high %v1691, %v1707
          %1713 = vrot.lane.b32.xlu0 %v1709, 8
          %v1714 = vpop.permute.xlu0 %1713
          %1717 = vrot.lane.b32.xlu0 %v1710, 16
          %v1718 = vpop.permute.xlu0 %1717
          %1721 = vrot.lane.b32.xlu0 %v1711, 24
          %v1722 = vpop.permute.xlu0 %1721
          %v1724 = vsel %vm1030, %v1708, %v1714
          %vm1725 = vcmask 130048
          %v1726 = vsel %vm1725, %v1724, %v1718
          %vm1727 = vcmask 195584
          %v1728 = vsel %vm1727, %v1726, %v1722
          %v1729 = vld [vmem:[%s652] sm:$0xff]
          %v1730 = vpack.c.bf16 %v1728, %v1728
          %v1731 = vld [vmem:[#allocation15] sm:$0xf]
          %v1732 = vld [vmem:[#allocation15 + $0x4] sm:$0xf]
          %v1733 = vld [vmem:[#allocation15 + $0x8] sm:$0xf]
          %v1734 = vld [vmem:[#allocation15 + $0xc] sm:$0xf]
          %v1735 = vld [vmem:[#allocation17] sm:$0x1]
          %v1737 = vlaneseq
          %v1738 = vshrl.u32 %v1737, 7
          %v1739 = vsub.s32 0, %v1738
          %v1740 = vrot.slane %v1735, %v1739
          %v1746 = vunpack.c.l.b16 %v1731
          %v1747 = vunpack.c.l.b16 %v1732
          %v1748 = vunpack.c.l.b16 %v1733
          %v1749 = vunpack.c.l.b16 %v1734
          %v1750 = vpack.c.b16 %v1747, %v1746
          %v1751 = vpack.c.b16 %v1749, %v1748
          %vm1754 = vcmask 261120
          %v1756 = vsel %vm1754, %v1730, 0
          %1758 = vmatprep.subr.bf16.mxu0 0
          %1759 = vmatpush1.bf16.msra.mxu0 %v1750
          %1760 = vmatprep.subr.bf16.mxu0 0
          %1761 = vmatpush1.bf16.msra.mxu0 %v1751
          %1762 = vmatprep.subr.bf16.mxu0 0
          %1763 = vmatpush1.bf16.msra.mxu0 0
          %1764 = vmatprep.subr.bf16.mxu0 0
          %1765 = vmatpush1.bf16.msra.mxu0 0
          %1766 = vmatprep.subr.bf16.mxu0 0
          %1767 = vmatpush1.bf16.msra.mxu0 0
          %1768 = vmatprep.subr.bf16.mxu0 0
          %1769 = vmatpush1.bf16.msra.mxu0 0
          %1770 = vmatprep.subr.bf16.mxu0 0
          %1771 = vmatpush1.bf16.msra.mxu0 0
          %1772 = vmatprep.subr.bf16.mxu0 0
          %1773 = vmatpush1.bf16.msra.mxu0 0
          %1774 = vmatprep.subr.bf16.mxu0 0
          %1775 = vmatpush1.bf16.msra.mxu0 0
          %1776 = vmatprep.subr.bf16.mxu0 0
          %1777 = vmatpush1.bf16.msra.mxu0 0
          %1778 = vmatprep.subr.bf16.mxu0 0
          %1779 = vmatpush1.bf16.msra.mxu0 0
          %1780 = vmatprep.subr.bf16.mxu0 0
          %1781 = vmatpush1.bf16.msra.mxu0 0
          %1782 = vmatprep.subr.bf16.mxu0 0
          %1783 = vmatpush1.bf16.msra.mxu0 0
          %1784 = vmatprep.subr.bf16.mxu0 0
          %1785 = vmatpush1.bf16.msra.mxu0 0
          %1786 = vmatprep.subr.bf16.mxu0 0
          %1787 = vmatpush1.bf16.msra.mxu0 0
          %1788 = vmatprep.subr.bf16.mxu0 0
          %1789 = vmatpush1.bf16.msra.mxu0 0
          %1790 = vmatprep.mubr.bf16.mxu0 0
          %1791 = vmatmul.mubr.bf16.gmra.mrb[0].mxu0 %v1756
          %v1792 = vpop.f32.mrb[0].mxu0
          %v1793 = vadd.f32 %v1740, %v1792
          %v1794 = vpop.f32.mrb[0].mxu0
          %v1795 = vpop.f32.mrb[0].mxu0
          %v1796 = vpop.f32.mrb[0].mxu0
          %1797 = vdwg.mxu0
          %v1798 = vadd.f32 %v1729, %v1793
          %v1799 = vld [vmem:[#allocation18] sm:$0x1]
          %v1800 = vld [vmem:[#allocation20] sm:$0x1]
          %v1801 = vsel %vm1754, %v1798, 0.0
          %1802 = vadd.xlane.f32.xlu0 %v1801
          %v1803 = vpop.xlane.xlu0 %1802
          %v1804 = vrcp.pop 32.0
          %v1805 = vmul.f32 %v1803, %v1804
          %v1806 = vsub.f32 %v1798, %v1805
          %v1807 = vmul.f32 %v1806, %v1806
          %v1808 = vsel %vm1754, %v1807, 0.0
          %1809 = vadd.xlane.f32.xlu0 %v1808
          %v1810 = vpop.xlane.xlu0 %1809
          %v1811 = vmul.f32 %v1810, %v1804
          %v1812 = vadd.f32 %v1811, 1e-12
          %v1813 = vrsqrt.pop %v1812
          %v1814 = vmul.f32 %v1806, %v1813
          %v1816 = vlaneseq
          %v1817 = vshrl.u32 %v1816, 7
          %v1818 = vsub.s32 0, %v1817
          %v1819 = vrot.slane %v1799, %v1818
          %v1821 = vmul.f32 %v1814, %v1819
          %v1823 = vlaneseq
          %v1824 = vshrl.u32 %v1823, 7
          %v1825 = vsub.s32 0, %v1824
          %v1826 = vrot.slane %v1800, %v1825
          %v1828 = vadd.f32 %v1821, %v1826
          %v1829 = vpack.c.bf16 %v1828, %v1828
          %v1830 = vld [vmem:[#allocation21] sm:$0xf]
          %v1831 = vld [vmem:[#allocation21 + $0x4] sm:$0xf]
          %v1832 = vld [vmem:[#allocation21 + $0x8] sm:$0xf]
          %v1833 = vld [vmem:[#allocation21 + $0xc] sm:$0xf]
          %v1834 = vld [vmem:[#allocation23] sm:$0x1]
          %v1836 = vlaneseq
          %v1837 = vshrl.u32 %v1836, 7
          %v1838 = vsub.s32 0, %v1837
          %v1839 = vrot.slane %v1834, %v1838
          %v1845 = vunpack.c.l.b16 %v1830
          %v1846 = vunpack.c.l.b16 %v1831
          %v1847 = vunpack.c.l.b16 %v1832
          %v1848 = vunpack.c.l.b16 %v1833
          %v1849 = vpack.c.b16 %v1846, %v1845
          %v1850 = vpack.c.b16 %v1848, %v1847
          %v1854 = vsel %vm1754, %v1829, 0
          %1856 = vmatprep.subr.bf16.mxu0 0
          %1857 = vmatpush1.bf16.msra.mxu0 %v1849
          %1858 = vmatprep.subr.bf16.mxu0 0
          %1859 = vmatpush1.bf16.msra.mxu0 %v1850
          %1860 = vmatprep.subr.bf16.mxu0 0
          %1861 = vmatpush1.bf16.msra.mxu0 0
          %1862 = vmatprep.subr.bf16.mxu0 0
          %1863 = vmatpush1.bf16.msra.mxu0 0
          %1864 = vmatprep.subr.bf16.mxu0 0
          %1865 = vmatpush1.bf16.msra.mxu0 0
          %1866 = vmatprep.subr.bf16.mxu0 0
          %1867 = vmatpush1.bf16.msra.mxu0 0
          %1868 = vmatprep.subr.bf16.mxu0 0
          %1869 = vmatpush1.bf16.msra.mxu0 0
          %1870 = vmatprep.subr.bf16.mxu0 0
          %1871 = vmatpush1.bf16.msra.mxu0 0
          %1872 = vmatprep.subr.bf16.mxu0 0
          %1873 = vmatpush1.bf16.msra.mxu0 0
          %1874 = vmatprep.subr.bf16.mxu0 0
          %1875 = vmatpush1.bf16.msra.mxu0 0
          %1876 = vmatprep.subr.bf16.mxu0 0
          %1877 = vmatpush1.bf16.msra.mxu0 0
          %1878 = vmatprep.subr.bf16.mxu0 0
          %1879 = vmatpush1.bf16.msra.mxu0 0
          %1880 = vmatprep.subr.bf16.mxu0 0
          %1881 = vmatpush1.bf16.msra.mxu0 0
          %1882 = vmatprep.subr.bf16.mxu0 0
          %1883 = vmatpush1.bf16.msra.mxu0 0
          %1884 = vmatprep.subr.bf16.mxu0 0
          %1885 = vmatpush1.bf16.msra.mxu0 0
          %1886 = vmatprep.subr.bf16.mxu0 0
          %1887 = vmatpush1.bf16.msra.mxu0 0
          %1888 = vmatprep.mubr.bf16.mxu0 0
          %1889 = vmatmul.mubr.bf16.gmra.mrb[0].mxu0 %v1854
          %v1890 = vpop.f32.mrb[0].mxu0
          %v1891 = vadd.f32 %v1839, %v1890
          %v1892 = vpop.f32.mrb[0].mxu0
          %v1893 = vpop.f32.mrb[0].mxu0
          %v1894 = vpop.f32.mrb[0].mxu0
          %1895 = vdwg.mxu0
          %v1896 = vmax.f32 %v1891, 0.0
          %v1897 = vpack.c.bf16 %v1896, %v1896
          %v1898 = vld [vmem:[#allocation24] sm:$0xf]
          %v1899 = vld [vmem:[#allocation24 + $0x4] sm:$0xf]
          %v1900 = vld [vmem:[#allocation24 + $0x8] sm:$0xf]
          %v1901 = vld [vmem:[#allocation24 + $0xc] sm:$0xf]
          %v1902 = vld [vmem:[#allocation24 + $0x10] sm:$0xf]
          %v1903 = vld [vmem:[#allocation24 + $0x14] sm:$0xf]
          %v1904 = vld [vmem:[#allocation24 + $0x18] sm:$0xf]
          %v1905 = vld [vmem:[#allocation24 + $0x1c] sm:$0xf]
          %v1906 = vld [vmem:[#allocation24 + $0x20] sm:$0xf]
          %v1907 = vld [vmem:[#allocation24 + $0x24] sm:$0xf]
          %v1908 = vld [vmem:[#allocation24 + $0x28] sm:$0xf]
          %v1909 = vld [vmem:[#allocation24 + $0x2c] sm:$0xf]
          %v1910 = vld [vmem:[#allocation24 + $0x30] sm:$0xf]
          %v1911 = vld [vmem:[#allocation24 + $0x34] sm:$0xf]
          %v1912 = vld [vmem:[#allocation24 + $0x38] sm:$0xf]
          %v1913 = vld [vmem:[#allocation24 + $0x3c] sm:$0xf]
          %v1914 = vld [vmem:[#allocation26] sm:$0x1]
          %v1916 = vlaneseq
          %v1917 = vshrl.u32 %v1916, 7
          %v1918 = vsub.s32 0, %v1917
          %v1919 = vrot.slane %v1914, %v1918
          %v1937 = vunpack.c.l.b16 %v1898
          %v1938 = vunpack.c.l.b16 %v1899
          %v1939 = vunpack.c.l.b16 %v1900
          %v1940 = vunpack.c.l.b16 %v1901
          %v1941 = vunpack.c.l.b16 %v1902
          %v1942 = vunpack.c.l.b16 %v1903
          %v1943 = vunpack.c.l.b16 %v1904
          %v1944 = vunpack.c.l.b16 %v1905
          %v1945 = vunpack.c.l.b16 %v1906
          %v1946 = vunpack.c.l.b16 %v1907
          %v1947 = vunpack.c.l.b16 %v1908
          %v1948 = vunpack.c.l.b16 %v1909
          %v1949 = vunpack.c.l.b16 %v1910
          %v1950 = vunpack.c.l.b16 %v1911
          %v1951 = vunpack.c.l.b16 %v1912
          %v1952 = vunpack.c.l.b16 %v1913
          %v1953 = vpack.c.b16 %v1938, %v1937
          %v1954 = vpack.c.b16 %v1940, %v1939
          %v1955 = vpack.c.b16 %v1942, %v1941
          %v1956 = vpack.c.b16 %v1944, %v1943
          %v1957 = vpack.c.b16 %v1946, %v1945
          %v1958 = vpack.c.b16 %v1948, %v1947
          %v1959 = vpack.c.b16 %v1950, %v1949
          %v1960 = vpack.c.b16 %v1952, %v1951
          %1969 = vmatprep.subr.bf16.mxu0 0
          %1970 = vmatpush1.bf16.msra.mxu0 %v1953
          %1971 = vmatprep.subr.bf16.mxu0 0
          %1972 = vmatpush1.bf16.msra.mxu0 %v1954
          %1973 = vmatprep.subr.bf16.mxu0 0
          %1974 = vmatpush1.bf16.msra.mxu0 %v1955
          %1975 = vmatprep.subr.bf16.mxu0 0
          %1976 = vmatpush1.bf16.msra.mxu0 %v1956
          %1977 = vmatprep.subr.bf16.mxu0 0
          %1978 = vmatpush1.bf16.msra.mxu0 %v1957
          %1979 = vmatprep.subr.bf16.mxu0 0
          %1980 = vmatpush1.bf16.msra.mxu0 %v1958
          %1981 = vmatprep.subr.bf16.mxu0 0
          %1982 = vmatpush1.bf16.msra.mxu0 %v1959
          %1983 = vmatprep.subr.bf16.mxu0 0
          %1984 = vmatpush1.bf16.msra.mxu0 %v1960
          %1985 = vmatprep.subr.bf16.mxu0 0
          %1986 = vmatpush1.bf16.msra.mxu0 0
          %1987 = vmatprep.subr.bf16.mxu0 0
          %1988 = vmatpush1.bf16.msra.mxu0 0
          %1989 = vmatprep.subr.bf16.mxu0 0
          %1990 = vmatpush1.bf16.msra.mxu0 0
          %1991 = vmatprep.subr.bf16.mxu0 0
          %1992 = vmatpush1.bf16.msra.mxu0 0
          %1993 = vmatprep.subr.bf16.mxu0 0
          %1994 = vmatpush1.bf16.msra.mxu0 0
          %1995 = vmatprep.subr.bf16.mxu0 0
          %1996 = vmatpush1.bf16.msra.mxu0 0
          %1997 = vmatprep.subr.bf16.mxu0 0
          %1998 = vmatpush1.bf16.msra.mxu0 0
          %1999 = vmatprep.subr.bf16.mxu0 0
          %2000 = vmatpush1.bf16.msra.mxu0 0
          %2001 = vmatprep.mubr.bf16.mxu0 0
          %2002 = vmatmul.mubr.bf16.gmra.mrb[0].mxu0 %v1897
          %v2003 = vpop.f32.mrb[0].mxu0
          %v2004 = vadd.f32 %v1919, %v2003
          %v2005 = vpop.f32.mrb[0].mxu0
          %v2006 = vpop.f32.mrb[0].mxu0
          %v2007 = vpop.f32.mrb[0].mxu0
          %2008 = vdwg.mxu0
          %v2009 = vadd.f32 %v1828, %v2004
          %v2010 = vld [vmem:[#allocation27] sm:$0x1]
          %v2011 = vld [vmem:[#allocation29] sm:$0x1]
          %v2012 = vsel %vm1754, %v2009, 0.0
          %2013 = vadd.xlane.f32.xlu0 %v2012
          %v2014 = vpop.xlane.xlu0 %2013
          %v2015 = vmul.f32 %v2014, %v1804
          %v2016 = vsub.f32 %v2009, %v2015
          %v2017 = vmul.f32 %v2016, %v2016
          %v2018 = vsel %vm1754, %v2017, 0.0
          %2019 = vadd.xlane.f32.xlu0 %v2018
          %v2020 = vpop.xlane.xlu0 %2019
          %v2021 = vmul.f32 %v2020, %v1804
          %v2022 = vadd.f32 %v2021, 1e-12
          %v2023 = vrsqrt.pop %v2022
          %v2024 = vmul.f32 %v2016, %v2023
          %v2026 = vlaneseq
          %v2027 = vshrl.u32 %v2026, 7
          %v2028 = vsub.s32 0, %v2027
          %v2029 = vrot.slane %v2010, %v2028
          %v2031 = vmul.f32 %v2024, %v2029
          %v2033 = vlaneseq
          %v2034 = vshrl.u32 %v2033, 7
          %v2035 = vsub.s32 0, %v2034
          %v2036 = vrot.slane %v2011, %v2035
          %v2038 = vadd.f32 %v2031, %v2036
          %2039 = vst.msk [vmem:[%s774] sm:$0xff] %vm1754, %v2038
        $region148: #{memorizing_transformer_forward.7} parent=79 // pred_fallthru
          _
        %s2040 = sand.u32 %s406, 1
        %s2041 = scalar_lea.sflag [#allocation8], %s2040
        %s2042 = sand.u32 %s406, 1
        %s2043 = smul.addr %s2042, 8
        %s2044 = scalar_lea.vmem [#allocation30], %s2043
        // Predicated region
        $region149: #{memorizing_transformer_forward.7} parent=79 // pred_check
          %p2045 = pneg %p416
        $region150: #{memorizing_transformer_forward.7} parent=79 // pred_check_branch
          %2047 = sbr.rel (%p2045) target = $region152
        $region151: #{memorizing_transformer_forward.7} parent=79 // pred_region
          %s2049 = ssub.s32 128, 128
          %2050 = vsyncadd %s2041, %s2049
          %s2051 = sadd.s32 %s47, %s46
          %s2052 = smul.addr %s2051, 128
          %s2053 = scalar_lea.hbm %s15, %s2052
          %s2055 = sshll.u32 %s2044, 4
          %s2056 = int_to_ptr.vmem [resolvable:$true] %s2055
          %2058 = dma.vmem_to_hbm [thread:$0]  %s2056, 128, %s2053, %s2041
        $region152: #{memorizing_transformer_forward.7} parent=79 // pred_fallthru
          _
      $region80: #{memorizing_transformer_forward.7} parent=5 // pred_fallthru
        _
      %p2059 = scmp.le.s32.totalorder 2, %s36
      // Predicated region
      $region153: #{memorizing_transformer_forward.7} parent=5 // pred_check
        %p2060 = pneg %p2059
      $region154: #{memorizing_transformer_forward.7} parent=5 // pred_check_branch
        %2062 = sbr.rel (%p2060) target = $region156
      $region155: #{memorizing_transformer_forward.7} parent=5 // pred_region
        %s2063 = ssub.s32 %s36, 2
        // Predicated region
        $region157: #{memorizing_transformer_forward.7} parent=155 // pred_check
          %p2064 = pneg %p422
        $region158: #{memorizing_transformer_forward.7} parent=155 // pred_check_branch
          %2066 = sbr.rel (%p2064) target = $region160
        $region159: #{memorizing_transformer_forward.7} parent=155 // pred_region
          %s2067 = sand.u32 %s407, 1
          %s2068 = scalar_lea.sflag [#allocation8], %s2067
          %s2069 = sand.u32 %s407, 1
          %s2070 = smul.addr %s2069, 8
          %s2071 = scalar_lea.vmem [#allocation30], %s2070
          %2072 = dma.done %s2068, 128
        $region160: #{memorizing_transformer_forward.7} parent=155 // pred_fallthru
          _
      $region156: #{memorizing_transformer_forward.7} parent=5 // pred_fallthru
        _
    $region6: #{memorizing_transformer_forward.7} parent=1 // loop_footer
      %s40 = sadd.s32 1, %s36
    $region7: #{memorizing_transformer_forward.7} parent=1 // loop_footer_branch
      %35 = sbr.rel target = $region3
    $region8: #{memorizing_transformer_forward.7} parent=1 // loop_exit
      _
    %2073 = vsyncpa [#allocation7], 1
    %s2074 = scalar_lea.sflag [#allocation7], 1
    %2075 = vsyncpa %s2074, 1
    %2076 = vsyncpa [#allocation10], 1
    %s2077 = scalar_lea.sflag [#allocation10], 1
    %2078 = vsyncpa %s2077, 1
    %2079 = vsyncpa [#allocation13], 1
    %2080 = vsyncpa [#allocation16], 1
    %2081 = vsyncpa [#allocation19], 1
    %2082 = vsyncpa [#allocation22], 1
    %2083 = vsyncpa [#allocation25], 1
    %2084 = vsyncpa [#allocation28], 1
    %2085 = vsyncpa [#allocation8], 1
    %s2086 = scalar_lea.sflag [#allocation8], 1
    %2087 = vsyncpa %s2086, 1

// kernel: memorizing_transformer_forward.11
$region0: #{memorizing_transformer_forward.11}
  #allocation0 [shape = 'u32[]', space=smem, size = 0x4, offset = 0x4, fixed_abs, tag = 'smem constant byte address 0x4 - core index']
  #allocation1 [shape = 'u32[144,128]{1,0:T(1,128)}', space=vmem, size = 0x12000, scoped, tag = 'internal scratch']
  #allocation2 [shape = 'bf16[4,8,8]{2,1,0:T(8,128)(2,1)}', space=vmem, size = 0x2000, scoped, tag = 'scratch operand']
  #allocation3 [shape = 'f32[4,8,1]{2,1,0:T(8,128)}', space=vmem, size = 0x4000, scoped, tag = 'scratch operand']
  #allocation4 [shape = 'f32[4,8,1]{2,1,0:T(8,128)}', space=vmem, size = 0x4000, scoped, tag = 'scratch operand']
  #allocation5 [shape = 'f32[4,8,8]{2,1,0:T(8,128)}', space=vmem, size = 0x4000, scoped, tag = 'scratch operand']
  %s0 = inlined_call_operand.hbm [shape: f32[2,8,32], index: 0, kind: input, shape index: {}]
  %s1 = inlined_call_operand.hbm [shape: bf16[2,4,8,8], index: 1, kind: input, shape index: {}]
  %s2 = inlined_call_operand.hbm [shape: bf16[2,4,8,8], index: 2, kind: input, shape index: {}]
  %s3 = inlined_call_operand.hbm [shape: bf16[2,4,16,8], index: 3, kind: input, shape index: {}]
  %s4 = inlined_call_operand.hbm [shape: bf16[2,4,16,8], index: 4, kind: input, shape index: {}]
  %s5 = inlined_call_operand.hbm [shape: f32[1,16], index: 5, kind: input, shape index: {}]
  %s6 = inlined_call_operand.hbm [shape: f32[1,32], index: 6, kind: input, shape index: {}]
  %s7 = inlined_call_operand.hbm [shape: f32[1,32], index: 7, kind: input, shape index: {}]
  %s8 = inlined_call_operand.hbm [shape: bf16[32,32], index: 8, kind: input, shape index: {}]
  %s9 = inlined_call_operand.hbm [shape: f32[1,32], index: 9, kind: input, shape index: {}]
  %s10 = inlined_call_operand.hbm [shape: bf16[32,32], index: 10, kind: input, shape index: {}]
  %s11 = inlined_call_operand.hbm [shape: f32[1,32], index: 11, kind: input, shape index: {}]
  %s12 = inlined_call_operand.hbm [shape: f32[1,32], index: 12, kind: input, shape index: {}]
  %s13 = inlined_call_operand.hbm [shape: f32[1,32], index: 13, kind: input, shape index: {}]
  %s14 = inlined_call_operand.hbm [shape: bf16[32,128], index: 14, kind: input, shape index: {}]
  %s15 = inlined_call_operand.hbm [shape: f32[1,128], index: 15, kind: input, shape index: {}]
  %s16 = inlined_call_operand.hbm [shape: bf16[128,32], index: 16, kind: input, shape index: {}]
  %s17 = inlined_call_operand.hbm [shape: f32[1,32], index: 17, kind: input, shape index: {}]
  %s18 = inlined_call_operand.hbm [shape: f32[1,32], index: 18, kind: input, shape index: {}]
  %s19 = inlined_call_operand.hbm [shape: f32[1,32], index: 19, kind: input, shape index: {}]
  %s20 = inlined_call_operand.hbm [shape: f32[2,8,32], index: 20, kind: output, shape index: {}]
  %s21 = sld [smem:[#allocation0]]
  $region201: #{memorizing_transformer_forward.11} parent=0
    _
  %s23 = ssub.s32 1, %s21
  %s24 = scalar_select 0, %s23, %s21
  $region1: #{memorizing_transformer_forward.11} parent=0
    #allocation6 [shape = 'u8[8192]{0}', space=vmem, size = 0x2000, scoped, tag = 'input window, operand 0']
    #allocation7 [shape = 's32[2]{0}', space=sflag, size = 0x8, scoped, tag = 'scoped memory for memorizing_transformer_forward.11']
    #allocation8 [shape = 's32[2]{0}', space=sflag, size = 0x8, scoped, tag = 'scoped memory for memorizing_transformer_forward.11']
    #allocation9 [shape = 'u8[16384]{0}', space=vmem, size = 0x4000, scoped, tag = 'input window, operand 1']
    #allocation10 [shape = 's32[2]{0}', space=sflag, size = 0x8, scoped, tag = 'scoped memory for memorizing_transformer_forward.11']
    #allocation11 [shape = 'u8[16384]{0}', space=vmem, size = 0x4000, scoped, tag = 'input window, operand 2']
    #allocation12 [shape = 'u8[16384]{0}', space=vmem, size = 0x4000, scoped, tag = 'input window, operand 3, single buffered']
    #allocation13 [shape = 's32[1]{0}', space=sflag, size = 0x4, scoped, tag = 'scoped memory for memorizing_transformer_forward.11']
    #allocation14 [shape = 'u8[16384]{0}', space=vmem, size = 0x4000, scoped, tag = 'input window, operand 4, single buffered']
    #allocation15 [shape = 'u8[512]{0}', space=vmem, size = 0x400, scoped, tag = 'input window, operand 5, single buffered']
    #allocation16 [shape = 's32[1]{0}', space=sflag, size = 0x4, scoped, tag = 'scoped memory for memorizing_transformer_forward.11']
    #allocation17 [shape = 'u8[512]{0}', space=vmem, size = 0x400, scoped, tag = 'input window, operand 6, single buffered']
    #allocation18 [shape = 'u8[512]{0}', space=vmem, size = 0x400, scoped, tag = 'input window, operand 7, single buffered']
    #allocation19 [shape = 's32[1]{0}', space=sflag, size = 0x4, scoped, tag = 'scoped memory for memorizing_transformer_forward.11']
    #allocation20 [shape = 'u8[8192]{0}', space=vmem, size = 0x2000, scoped, tag = 'input window, operand 8, single buffered']
    #allocation21 [shape = 'u8[512]{0}', space=vmem, size = 0x400, scoped, tag = 'input window, operand 9, single buffered']
    #allocation22 [shape = 's32[1]{0}', space=sflag, size = 0x4, scoped, tag = 'scoped memory for memorizing_transformer_forward.11']
    #allocation23 [shape = 'u8[8192]{0}', space=vmem, size = 0x2000, scoped, tag = 'input window, operand 10, single buffered']
    #allocation24 [shape = 'u8[512]{0}', space=vmem, size = 0x400, scoped, tag = 'input window, operand 11, single buffered']
    #allocation25 [shape = 's32[1]{0}', space=sflag, size = 0x4, scoped, tag = 'scoped memory for memorizing_transformer_forward.11']
    #allocation26 [shape = 'u8[512]{0}', space=vmem, size = 0x400, scoped, tag = 'input window, operand 12, single buffered']
    #allocation27 [shape = 'u8[512]{0}', space=vmem, size = 0x400, scoped, tag = 'input window, operand 13, single buffered']
    #allocation28 [shape = 's32[1]{0}', space=sflag, size = 0x4, scoped, tag = 'scoped memory for memorizing_transformer_forward.11']
    #allocation29 [shape = 'u8[8192]{0}', space=vmem, size = 0x2000, scoped, tag = 'input window, operand 14, single buffered']
    #allocation30 [shape = 'u8[512]{0}', space=vmem, size = 0x400, scoped, tag = 'input window, operand 15, single buffered']
    #allocation31 [shape = 's32[1]{0}', space=sflag, size = 0x4, scoped, tag = 'scoped memory for memorizing_transformer_forward.11']
    #allocation32 [shape = 'u8[32768]{0}', space=vmem, size = 0x8000, scoped, tag = 'input window, operand 16, single buffered']
    #allocation33 [shape = 'u8[512]{0}', space=vmem, size = 0x400, scoped, tag = 'input window, operand 17, single buffered']
    #allocation34 [shape = 's32[1]{0}', space=sflag, size = 0x4, scoped, tag = 'scoped memory for memorizing_transformer_forward.11']
    #allocation35 [shape = 'u8[512]{0}', space=vmem, size = 0x400, scoped, tag = 'input window, operand 18, single buffered']
    #allocation36 [shape = 'u8[512]{0}', space=vmem, size = 0x400, scoped, tag = 'input window, operand 19, single buffered']
    #allocation37 [shape = 's32[1]{0}', space=sflag, size = 0x4, scoped, tag = 'scoped memory for memorizing_transformer_forward.11']
    #allocation38 [shape = 'u8[8192]{0}', space=vmem, size = 0x2000, scoped, tag = 'output window, operand 0']
    %25 = vsyncpa [#allocation7], 0
    %s26 = scalar_lea.sflag [#allocation7], 1
    %27 = vsyncpa %s26, 0
    %28 = vsyncpa [#allocation10], 0
    %s29 = scalar_lea.sflag [#allocation10], 1
    %30 = vsyncpa %s29, 0
    %31 = vsyncpa [#allocation13], 0
    %32 = vsyncpa [#allocation16], 0
    %33 = vsyncpa [#allocation19], 0
    %34 = vsyncpa [#allocation22], 0
    %35 = vsyncpa [#allocation25], 0
    %36 = vsyncpa [#allocation28], 0
    %37 = vsyncpa [#allocation31], 0
    %38 = vsyncpa [#allocation34], 0
    %39 = vsyncpa [#allocation37], 0
    %40 = vsyncpa [#allocation8], 0
    %s41 = scalar_lea.sflag [#allocation8], 1
    %42 = vsyncpa %s41, 0
    loop: start=0, step=1, limit=4
    $region2: #{memorizing_transformer_forward.11} parent=1 // loop_pre_header
      _
    $region3: #{memorizing_transformer_forward.11} parent=1 // loop_header
      %s44 = sphi 0, %s48
      %p45 = scmp.ge.s32.totalorder %s44, 4
      %s51 = sphi 0, %s70
      %s52 = sphi 0, %s66
      %s53 = sphi 0, %s62
      %s54 = sphi 0, %s51
      %s55 = sphi 0, %s52
      %s56 = sphi 0, %s53
      %s57 = sphi 0, %s54
      %s58 = sphi 0, %s55
      %s59 = sphi 0, %s56
      %s75 = sphi 0, %s77
      %s78 = sphi 0, %s75
      %s79 = sphi 0, %s78
      %s95 = sphi 0, %s79
      %s103 = sphi 0, %s105
      %s106 = sphi 0, %s103
      %s107 = sphi 0, %s106
      %s123 = sphi 0, %s107
      %s131 = sphi 0, %s133
      %s134 = sphi 0, %s131
      %s135 = sphi 0, %s134
      %s151 = sphi 0, %s135
      %s157 = sphi 0, %s159
      %s160 = sphi 0, %s157
      %s161 = sphi 0, %s160
      %s177 = sphi 0, %s161
      %s183 = sphi 0, %s185
      %s186 = sphi 0, %s183
      %s187 = sphi 0, %s186
      %s203 = sphi 0, %s187
      %s207 = sphi 0, %s207
      %s209 = sphi 0, %s207
      %s210 = sphi 0, %s209
      %s224 = sphi 0, %s210
      %s228 = sphi 0, %s228
      %s230 = sphi 0, %s228
      %s231 = sphi 0, %s230
      %s245 = sphi 0, %s231
      %s249 = sphi 0, %s249
      %s251 = sphi 0, %s249
      %s252 = sphi 0, %s251
      %s266 = sphi 0, %s252
      %s270 = sphi 0, %s270
      %s272 = sphi 0, %s270
      %s273 = sphi 0, %s272
      %s287 = sphi 0, %s273
      %s291 = sphi 0, %s291
      %s293 = sphi 0, %s291
      %s294 = sphi 0, %s293
      %s308 = sphi 0, %s294
      %s312 = sphi 0, %s312
      %s314 = sphi 0, %s312
      %s315 = sphi 0, %s314
      %s329 = sphi 0, %s315
      %s333 = sphi 0, %s333
      %s335 = sphi 0, %s333
      %s336 = sphi 0, %s335
      %s350 = sphi 0, %s336
      %s354 = sphi 0, %s354
      %s356 = sphi 0, %s354
      %s357 = sphi 0, %s356
      %s371 = sphi 0, %s357
      %s375 = sphi 0, %s375
      %s377 = sphi 0, %s375
      %s378 = sphi 0, %s377
      %s392 = sphi 0, %s378
      %s396 = sphi 0, %s396
      %s398 = sphi 0, %s396
      %s399 = sphi 0, %s398
      %s413 = sphi 0, %s399
      %s417 = sphi 0, %s417
      %s419 = sphi 0, %s417
      %s420 = sphi 0, %s419
      %s434 = sphi 0, %s420
      %s438 = sphi 0, %s438
      %s440 = sphi 0, %s438
      %s441 = sphi 0, %s440
      %s455 = sphi 0, %s441
      %s459 = sphi 0, %s459
      %s461 = sphi 0, %s459
      %s462 = sphi 0, %s461
      %s476 = sphi 0, %s462
      %s480 = sphi 0, %s480
      %s482 = sphi 0, %s480
      %s483 = sphi 0, %s482
      %s497 = sphi 0, %s483
      %s501 = sphi 0, %s501
      %s503 = sphi 0, %s501
      %s504 = sphi 0, %s503
      %s518 = sphi 0, %s504
      %s526 = sphi 0, %s528
      %s529 = sphi 0, %s526
      %s530 = sphi 0, %s529
      %s546 = sphi 0, %s530
    $region4: #{memorizing_transformer_forward.11} parent=1 // loop_header_branch
      %47 = sbr.rel (%p45) target = $region8
    $region5: #{memorizing_transformer_forward.11} parent=1 // loop_body
      %s49 = ssub.s32 %s44, 1
      %s50 = ssub.s32 %s44, 2
      %s60 = sadd.s32 1, %s53
      %p61 = scmp.ge.s32.totalorder %s60, 1
      %s62 = scalar_select %p61, 0, %s60
      %s63 = sadd.s32 1, %s52
      %s64 = scalar_select %p61, %s63, %s52
      %p65 = scmp.ge.s32.totalorder %s64, 1
      %s66 = scalar_select %p65, 0, %s64
      %s67 = sadd.s32 1, %s51
      %s68 = scalar_select %p65, %s67, %s51
      %p69 = scmp.ge.s32.totalorder %s68, 2
      %s70 = scalar_select %p69, 0, %s68
      %s71 = ssub.s32 %s51, %s70
      %s72 = ssub.s32 %s52, %s66
      %s73 = sor.u32 %s71, %s72
      %p74 = scmp.eq.s32.totalorder %s73, 0
      %s76 = sadd.s32 %s75, 1
      %s77 = scalar_select %p74, %s75, %s76
      %p80 = pneg %p74
      %p81 = scmp.eq.s32.totalorder %s44, 1
      %p82 = por %p80, %p81
      %p83 = scmp.ne.s32.totalorder %s75, %s78
      %p84 = scmp.eq.s32.totalorder %s44, 0
      %p85 = por %p83, %p84
      %p86 = scmp.ne.s32.totalorder %s75, %s78
      %p87 = scmp.eq.s32.totalorder %s49, 1
      %p88 = por %p86, %p87
      %p89 = scmp.ne.s32.totalorder %s78, %s79
      %p90 = scmp.eq.s32.totalorder %s49, 0
      %p91 = por %p89, %p90
      %p92 = scmp.ne.s32.totalorder %s78, %s79
      %p93 = scmp.eq.s32.totalorder %s50, 1
      %p94 = por %p92, %p93
      %p96 = scmp.ne.s32.totalorder %s79, %s95
      %p97 = scmp.eq.s32.totalorder %s50, 0
      %p98 = por %p96, %p97
      %s99 = ssub.s32 %s51, %s70
      %s100 = ssub.s32 %s53, %s62
      %s101 = sor.u32 %s99, %s100
      %p102 = scmp.eq.s32.totalorder %s101, 0
      %s104 = sadd.s32 %s103, 1
      %s105 = scalar_select %p102, %s103, %s104
      %p108 = pneg %p102
      %p109 = scmp.eq.s32.totalorder %s44, 1
      %p110 = por %p108, %p109
      %p111 = scmp.ne.s32.totalorder %s103, %s106
      %p112 = scmp.eq.s32.totalorder %s44, 0
      %p113 = por %p111, %p112
      %p114 = scmp.ne.s32.totalorder %s103, %s106
      %p115 = scmp.eq.s32.totalorder %s49, 1
      %p116 = por %p114, %p115
      %p117 = scmp.ne.s32.totalorder %s106, %s107
      %p118 = scmp.eq.s32.totalorder %s49, 0
      %p119 = por %p117, %p118
      %p120 = scmp.ne.s32.totalorder %s106, %s107
      %p121 = scmp.eq.s32.totalorder %s50, 1
      %p122 = por %p120, %p121
      %p124 = scmp.ne.s32.totalorder %s107, %s123
      %p125 = scmp.eq.s32.totalorder %s50, 0
      %p126 = por %p124, %p125
      %s127 = ssub.s32 %s51, %s70
      %s128 = ssub.s32 %s53, %s62
      %s129 = sor.u32 %s127, %s128
      %p130 = scmp.eq.s32.totalorder %s129, 0
      %s132 = sadd.s32 %s131, 1
      %s133 = scalar_select %p130, %s131, %s132
      %p136 = pneg %p130
      %p137 = scmp.eq.s32.totalorder %s44, 1
      %p138 = por %p136, %p137
      %p139 = scmp.ne.s32.totalorder %s131, %s134
      %p140 = scmp.eq.s32.totalorder %s44, 0
      %p141 = por %p139, %p140
      %p142 = scmp.ne.s32.totalorder %s131, %s134
      %p143 = scmp.eq.s32.totalorder %s49, 1
      %p144 = por %p142, %p143
      %p145 = scmp.ne.s32.totalorder %s134, %s135
      %p146 = scmp.eq.s32.totalorder %s49, 0
      %p147 = por %p145, %p146
      %p148 = scmp.ne.s32.totalorder %s134, %s135
      %p149 = scmp.eq.s32.totalorder %s50, 1
      %p150 = por %p148, %p149
      %p152 = scmp.ne.s32.totalorder %s135, %s151
      %p153 = scmp.eq.s32.totalorder %s50, 0
      %p154 = por %p152, %p153
      %s155 = ssub.s32 %s51, %s70
      %p156 = scmp.eq.s32.totalorder %s155, 0
      %s158 = sadd.s32 %s157, 1
      %s159 = scalar_select %p156, %s157, %s158
      %p162 = pneg %p156
      %p163 = scmp.eq.s32.totalorder %s44, 1
      %p164 = por %p162, %p163
      %p165 = scmp.ne.s32.totalorder %s157, %s160
      %p166 = scmp.eq.s32.totalorder %s44, 0
      %p167 = por %p165, %p166
      %p168 = scmp.ne.s32.totalorder %s157, %s160
      %p169 = scmp.eq.s32.totalorder %s49, 1
      %p170 = por %p168, %p169
      %p171 = scmp.ne.s32.totalorder %s160, %s161
      %p172 = scmp.eq.s32.totalorder %s49, 0
      %p173 = por %p171, %p172
      %p174 = scmp.ne.s32.totalorder %s160, %s161
      %p175 = scmp.eq.s32.totalorder %s50, 1
      %p176 = por %p174, %p175
      %p178 = scmp.ne.s32.totalorder %s161, %s177
      %p179 = scmp.eq.s32.totalorder %s50, 0
      %p180 = por %p178, %p179
      %s181 = ssub.s32 %s51, %s70
      %p182 = scmp.eq.s32.totalorder %s181, 0
      %s184 = sadd.s32 %s183, 1
      %s185 = scalar_select %p182, %s183, %s184
      %p188 = pneg %p182
      %p189 = scmp.eq.s32.totalorder %s44, 1
      %p190 = por %p188, %p189
      %p191 = scmp.ne.s32.totalorder %s183, %s186
      %p192 = scmp.eq.s32.totalorder %s44, 0
      %p193 = por %p191, %p192
      %p194 = scmp.ne.s32.totalorder %s183, %s186
      %p195 = scmp.eq.s32.totalorder %s49, 1
      %p196 = por %p194, %p195
      %p197 = scmp.ne.s32.totalorder %s186, %s187
      %p198 = scmp.eq.s32.totalorder %s49, 0
      %p199 = por %p197, %p198
      %p200 = scmp.ne.s32.totalorder %s186, %s187
      %p201 = scmp.eq.s32.totalorder %s50, 1
      %p202 = por %p200, %p201
      %p204 = scmp.ne.s32.totalorder %s187, %s203
      %p205 = scmp.eq.s32.totalorder %s50, 0
      %p206 = por %p204, %p205
      %s208 = sadd.s32 %s207, 1
      %p211 = scmp.eq.s32.totalorder %s44, 1
      %p212 = scmp.ne.s32.totalorder %s207, %s209
      %p213 = scmp.eq.s32.totalorder %s44, 0
      %p214 = por %p212, %p213
      %p215 = scmp.ne.s32.totalorder %s207, %s209
      %p216 = scmp.eq.s32.totalorder %s49, 1
      %p217 = por %p215, %p216
      %p218 = scmp.ne.s32.totalorder %s209, %s210
      %p219 = scmp.eq.s32.totalorder %s49, 0
      %p220 = por %p218, %p219
      %p221 = scmp.ne.s32.totalorder %s209, %s210
      %p222 = scmp.eq.s32.totalorder %s50, 1
      %p223 = por %p221, %p222
      %p225 = scmp.ne.s32.totalorder %s210, %s224
      %p226 = scmp.eq.s32.totalorder %s50, 0
      %p227 = por %p225, %p226
      %s229 = sadd.s32 %s228, 1
      %p232 = scmp.eq.s32.totalorder %s44, 1
      %p233 = scmp.ne.s32.totalorder %s228, %s230
      %p234 = scmp.eq.s32.totalorder %s44, 0
      %p235 = por %p233, %p234
      %p236 = scmp.ne.s32.totalorder %s228, %s230
      %p237 = scmp.eq.s32.totalorder %s49, 1
      %p238 = por %p236, %p237
      %p239 = scmp.ne.s32.totalorder %s230, %s231
      %p240 = scmp.eq.s32.totalorder %s49, 0
      %p241 = por %p239, %p240
      %p242 = scmp.ne.s32.totalorder %s230, %s231
      %p243 = scmp.eq.s32.totalorder %s50, 1
      %p244 = por %p242, %p243
      %p246 = scmp.ne.s32.totalorder %s231, %s245
      %p247 = scmp.eq.s32.totalorder %s50, 0
      %p248 = por %p246, %p247
      %s250 = sadd.s32 %s249, 1
      %p253 = scmp.eq.s32.totalorder %s44, 1
      %p254 = scmp.ne.s32.totalorder %s249, %s251
      %p255 = scmp.eq.s32.totalorder %s44, 0
      %p256 = por %p254, %p255
      %p257 = scmp.ne.s32.totalorder %s249, %s251
      %p258 = scmp.eq.s32.totalorder %s49, 1
      %p259 = por %p257, %p258
      %p260 = scmp.ne.s32.totalorder %s251, %s252
      %p261 = scmp.eq.s32.totalorder %s49, 0
      %p262 = por %p260, %p261
      %p263 = scmp.ne.s32.totalorder %s251, %s252
      %p264 = scmp.eq.s32.totalorder %s50, 1
      %p265 = por %p263, %p264
      %p267 = scmp.ne.s32.totalorder %s252, %s266
      %p268 = scmp.eq.s32.totalorder %s50, 0
      %p269 = por %p267, %p268
      %s271 = sadd.s32 %s270, 1
      %p274 = scmp.eq.s32.totalorder %s44, 1
      %p275 = scmp.ne.s32.totalorder %s270, %s272
      %p276 = scmp.eq.s32.totalorder %s44, 0
      %p277 = por %p275, %p276
      %p278 = scmp.ne.s32.totalorder %s270, %s272
      %p279 = scmp.eq.s32.totalorder %s49, 1
      %p280 = por %p278, %p279
      %p281 = scmp.ne.s32.totalorder %s272, %s273
      %p282 = scmp.eq.s32.totalorder %s49, 0
      %p283 = por %p281, %p282
      %p284 = scmp.ne.s32.totalorder %s272, %s273
      %p285 = scmp.eq.s32.totalorder %s50, 1
      %p286 = por %p284, %p285
      %p288 = scmp.ne.s32.totalorder %s273, %s287
      %p289 = scmp.eq.s32.totalorder %s50, 0
      %p290 = por %p288, %p289
      %s292 = sadd.s32 %s291, 1
      %p295 = scmp.eq.s32.totalorder %s44, 1
      %p296 = scmp.ne.s32.totalorder %s291, %s293
      %p297 = scmp.eq.s32.totalorder %s44, 0
      %p298 = por %p296, %p297
      %p299 = scmp.ne.s32.totalorder %s291, %s293
      %p300 = scmp.eq.s32.totalorder %s49, 1
      %p301 = por %p299, %p300
      %p302 = scmp.ne.s32.totalorder %s293, %s294
      %p303 = scmp.eq.s32.totalorder %s49, 0
      %p304 = por %p302, %p303
      %p305 = scmp.ne.s32.totalorder %s293, %s294
      %p306 = scmp.eq.s32.totalorder %s50, 1
      %p307 = por %p305, %p306
      %p309 = scmp.ne.s32.totalorder %s294, %s308
      %p310 = scmp.eq.s32.totalorder %s50, 0
      %p311 = por %p309, %p310
      %s313 = sadd.s32 %s312, 1
      %p316 = scmp.eq.s32.totalorder %s44, 1
      %p317 = scmp.ne.s32.totalorder %s312, %s314
      %p318 = scmp.eq.s32.totalorder %s44, 0
      %p319 = por %p317, %p318
      %p320 = scmp.ne.s32.totalorder %s312, %s314
      %p321 = scmp.eq.s32.totalorder %s49, 1
      %p322 = por %p320, %p321
      %p323 = scmp.ne.s32.totalorder %s314, %s315
      %p324 = scmp.eq.s32.totalorder %s49, 0
      %p325 = por %p323, %p324
      %p326 = scmp.ne.s32.totalorder %s314, %s315
      %p327 = scmp.eq.s32.totalorder %s50, 1
      %p328 = por %p326, %p327
      %p330 = scmp.ne.s32.totalorder %s315, %s329
      %p331 = scmp.eq.s32.totalorder %s50, 0
      %p332 = por %p330, %p331
      %s334 = sadd.s32 %s333, 1
      %p337 = scmp.eq.s32.totalorder %s44, 1
      %p338 = scmp.ne.s32.totalorder %s333, %s335
      %p339 = scmp.eq.s32.totalorder %s44, 0
      %p340 = por %p338, %p339
      %p341 = scmp.ne.s32.totalorder %s333, %s335
      %p342 = scmp.eq.s32.totalorder %s49, 1
      %p343 = por %p341, %p342
      %p344 = scmp.ne.s32.totalorder %s335, %s336
      %p345 = scmp.eq.s32.totalorder %s49, 0
      %p346 = por %p344, %p345
      %p347 = scmp.ne.s32.totalorder %s335, %s336
      %p348 = scmp.eq.s32.totalorder %s50, 1
      %p349 = por %p347, %p348
      %p351 = scmp.ne.s32.totalorder %s336, %s350
      %p352 = scmp.eq.s32.totalorder %s50, 0
      %p353 = por %p351, %p352
      %s355 = sadd.s32 %s354, 1
      %p358 = scmp.eq.s32.totalorder %s44, 1
      %p359 = scmp.ne.s32.totalorder %s354, %s356
      %p360 = scmp.eq.s32.totalorder %s44, 0
      %p361 = por %p359, %p360
      %p362 = scmp.ne.s32.totalorder %s354, %s356
      %p363 = scmp.eq.s32.totalorder %s49, 1
      %p364 = por %p362, %p363
      %p365 = scmp.ne.s32.totalorder %s356, %s357
      %p366 = scmp.eq.s32.totalorder %s49, 0
      %p367 = por %p365, %p366
      %p368 = scmp.ne.s32.totalorder %s356, %s357
      %p369 = scmp.eq.s32.totalorder %s50, 1
      %p370 = por %p368, %p369
      %p372 = scmp.ne.s32.totalorder %s357, %s371
      %p373 = scmp.eq.s32.totalorder %s50, 0
      %p374 = por %p372, %p373
      %s376 = sadd.s32 %s375, 1
      %p379 = scmp.eq.s32.totalorder %s44, 1
      %p380 = scmp.ne.s32.totalorder %s375, %s377
      %p381 = scmp.eq.s32.totalorder %s44, 0
      %p382 = por %p380, %p381
      %p383 = scmp.ne.s32.totalorder %s375, %s377
      %p384 = scmp.eq.s32.totalorder %s49, 1
      %p385 = por %p383, %p384
      %p386 = scmp.ne.s32.totalorder %s377, %s378
      %p387 = scmp.eq.s32.totalorder %s49, 0
      %p388 = por %p386, %p387
      %p389 = scmp.ne.s32.totalorder %s377, %s378
      %p390 = scmp.eq.s32.totalorder %s50, 1
      %p391 = por %p389, %p390
      %p393 = scmp.ne.s32.totalorder %s378, %s392
      %p394 = scmp.eq.s32.totalorder %s50, 0
      %p395 = por %p393, %p394
      %s397 = sadd.s32 %s396, 1
      %p400 = scmp.eq.s32.totalorder %s44, 1
      %p401 = scmp.ne.s32.totalorder %s396, %s398
      %p402 = scmp.eq.s32.totalorder %s44, 0
      %p403 = por %p401, %p402
      %p404 = scmp.ne.s32.totalorder %s396, %s398
      %p405 = scmp.eq.s32.totalorder %s49, 1
      %p406 = por %p404, %p405
      %p407 = scmp.ne.s32.totalorder %s398, %s399
      %p408 = scmp.eq.s32.totalorder %s49, 0
      %p409 = por %p407, %p408
      %p410 = scmp.ne.s32.totalorder %s398, %s399
      %p411 = scmp.eq.s32.totalorder %s50, 1
      %p412 = por %p410, %p411
      %p414 = scmp.ne.s32.totalorder %s399, %s413
      %p415 = scmp.eq.s32.totalorder %s50, 0
      %p416 = por %p414, %p415
      %s418 = sadd.s32 %s417, 1
      %p421 = scmp.eq.s32.totalorder %s44, 1
      %p422 = scmp.ne.s32.totalorder %s417, %s419
      %p423 = scmp.eq.s32.totalorder %s44, 0
      %p424 = por %p422, %p423
      %p425 = scmp.ne.s32.totalorder %s417, %s419
      %p426 = scmp.eq.s32.totalorder %s49, 1
      %p427 = por %p425, %p426
      %p428 = scmp.ne.s32.totalorder %s419, %s420
      %p429 = scmp.eq.s32.totalorder %s49, 0
      %p430 = por %p428, %p429
      %p431 = scmp.ne.s32.totalorder %s419, %s420
      %p432 = scmp.eq.s32.totalorder %s50, 1
      %p433 = por %p431, %p432
      %p435 = scmp.ne.s32.totalorder %s420, %s434
      %p436 = scmp.eq.s32.totalorder %s50, 0
      %p437 = por %p435, %p436
      %s439 = sadd.s32 %s438, 1
      %p442 = scmp.eq.s32.totalorder %s44, 1
      %p443 = scmp.ne.s32.totalorder %s438, %s440
      %p444 = scmp.eq.s32.totalorder %s44, 0
      %p445 = por %p443, %p444
      %p446 = scmp.ne.s32.totalorder %s438, %s440
      %p447 = scmp.eq.s32.totalorder %s49, 1
      %p448 = por %p446, %p447
      %p449 = scmp.ne.s32.totalorder %s440, %s441
      %p450 = scmp.eq.s32.totalorder %s49, 0
      %p451 = por %p449, %p450
      %p452 = scmp.ne.s32.totalorder %s440, %s441
      %p453 = scmp.eq.s32.totalorder %s50, 1
      %p454 = por %p452, %p453
      %p456 = scmp.ne.s32.totalorder %s441, %s455
      %p457 = scmp.eq.s32.totalorder %s50, 0
      %p458 = por %p456, %p457
      %s460 = sadd.s32 %s459, 1
      %p463 = scmp.eq.s32.totalorder %s44, 1
      %p464 = scmp.ne.s32.totalorder %s459, %s461
      %p465 = scmp.eq.s32.totalorder %s44, 0
      %p466 = por %p464, %p465
      %p467 = scmp.ne.s32.totalorder %s459, %s461
      %p468 = scmp.eq.s32.totalorder %s49, 1
      %p469 = por %p467, %p468
      %p470 = scmp.ne.s32.totalorder %s461, %s462
      %p471 = scmp.eq.s32.totalorder %s49, 0
      %p472 = por %p470, %p471
      %p473 = scmp.ne.s32.totalorder %s461, %s462
      %p474 = scmp.eq.s32.totalorder %s50, 1
      %p475 = por %p473, %p474
      %p477 = scmp.ne.s32.totalorder %s462, %s476
      %p478 = scmp.eq.s32.totalorder %s50, 0
      %p479 = por %p477, %p478
      %s481 = sadd.s32 %s480, 1
      %p484 = scmp.eq.s32.totalorder %s44, 1
      %p485 = scmp.ne.s32.totalorder %s480, %s482
      %p486 = scmp.eq.s32.totalorder %s44, 0
      %p487 = por %p485, %p486
      %p488 = scmp.ne.s32.totalorder %s480, %s482
      %p489 = scmp.eq.s32.totalorder %s49, 1
      %p490 = por %p488, %p489
      %p491 = scmp.ne.s32.totalorder %s482, %s483
      %p492 = scmp.eq.s32.totalorder %s49, 0
      %p493 = por %p491, %p492
      %p494 = scmp.ne.s32.totalorder %s482, %s483
      %p495 = scmp.eq.s32.totalorder %s50, 1
      %p496 = por %p494, %p495
      %p498 = scmp.ne.s32.totalorder %s483, %s497
      %p499 = scmp.eq.s32.totalorder %s50, 0
      %p500 = por %p498, %p499
      %s502 = sadd.s32 %s501, 1
      %p505 = scmp.eq.s32.totalorder %s44, 1
      %p506 = scmp.ne.s32.totalorder %s501, %s503
      %p507 = scmp.eq.s32.totalorder %s44, 0
      %p508 = por %p506, %p507
      %p509 = scmp.ne.s32.totalorder %s501, %s503
      %p510 = scmp.eq.s32.totalorder %s49, 1
      %p511 = por %p509, %p510
      %p512 = scmp.ne.s32.totalorder %s503, %s504
      %p513 = scmp.eq.s32.totalorder %s49, 0
      %p514 = por %p512, %p513
      %p515 = scmp.ne.s32.totalorder %s503, %s504
      %p516 = scmp.eq.s32.totalorder %s50, 1
      %p517 = por %p515, %p516
      %p519 = scmp.ne.s32.totalorder %s504, %s518
      %p520 = scmp.eq.s32.totalorder %s50, 0
      %p521 = por %p519, %p520
      %s522 = ssub.s32 %s51, %s70
      %s523 = ssub.s32 %s52, %s66
      %s524 = sor.u32 %s522, %s523
      %p525 = scmp.eq.s32.totalorder %s524, 0
      %s527 = sadd.s32 %s526, 1
      %s528 = scalar_select %p525, %s526, %s527
      %p531 = pneg %p525
      %p532 = scmp.eq.s32.totalorder %s44, 1
      %p533 = por %p531, %p532
      %p534 = scmp.ne.s32.totalorder %s526, %s529
      %p535 = scmp.eq.s32.totalorder %s44, 0
      %p536 = por %p534, %p535
      %p537 = scmp.ne.s32.totalorder %s526, %s529
      %p538 = scmp.eq.s32.totalorder %s49, 1
      %p539 = por %p537, %p538
      %p540 = scmp.ne.s32.totalorder %s529, %s530
      %p541 = scmp.eq.s32.totalorder %s49, 0
      %p542 = por %p540, %p541
      %p543 = scmp.ne.s32.totalorder %s529, %s530
      %p544 = scmp.eq.s32.totalorder %s50, 1
      %p545 = por %p543, %p544
      %p547 = scmp.ne.s32.totalorder %s530, %s546
      %p548 = scmp.eq.s32.totalorder %s50, 0
      %p549 = por %p547, %p548
      %p550 = scmp.le.s32.totalorder 1, %s44
      %p551 = scmp.lt.s32.totalorder %s44, 3
      %p552 = pnand %p550, %p551
      %p553 = pneg %p552
      // Predicated region
      $region9: #{memorizing_transformer_forward.11} parent=5 // pred_check
        _
      $region10: #{memorizing_transformer_forward.11} parent=5 // pred_check_branch
        %555 = sbr.rel (%p552) target = $region12
      $region11: #{memorizing_transformer_forward.11} parent=5 // pred_region
        %s556 = ssub.s32 %s44, 1
        // Predicated region
        $region13: #{memorizing_transformer_forward.11} parent=11 // pred_check
          %p557 = pneg %p173
        $region14: #{memorizing_transformer_forward.11} parent=11 // pred_check_branch
          %559 = sbr.rel (%p557) target = $region16
        $region15: #{memorizing_transformer_forward.11} parent=11 // pred_region
          %s561 = ssub.s32 512, 512
          %562 = vsyncadd [#allocation13], %s561
          %s563 = smul.addr %s54, 8
          %s564 = smul.addr %s563, 64
          %s565 = scalar_lea.hbm %s3, %s564
          %s566 = sshll.u32 [#allocation12], 4
          %s567 = int_to_ptr.vmem [resolvable:$true] %s566
          %572 = dma.hbm_to_vmem [thread:$0]  %s565, 512, %s567, [#allocation13], 64, 64, 4
        $region16: #{memorizing_transformer_forward.11} parent=11 // pred_fallthru
          _
        // Predicated region
        $region17: #{memorizing_transformer_forward.11} parent=11 // pred_check
          %p573 = pneg %p199
        $region18: #{memorizing_transformer_forward.11} parent=11 // pred_check_branch
          %575 = sbr.rel (%p573) target = $region20
        $region19: #{memorizing_transformer_forward.11} parent=11 // pred_region
          %s577 = ssub.s32 512, 512
          %578 = vsyncadd [#allocation13], %s577
          %s579 = smul.addr %s54, 8
          %s580 = smul.addr %s579, 64
          %s581 = scalar_lea.hbm %s4, %s580
          %s582 = sshll.u32 [#allocation14], 4
          %s583 = int_to_ptr.vmem [resolvable:$true] %s582
          %588 = dma.hbm_to_vmem [thread:$0]  %s581, 512, %s583, [#allocation13], 64, 64, 4
        $region20: #{memorizing_transformer_forward.11} parent=11 // pred_fallthru
          _
        // Predicated region
        $region21: #{memorizing_transformer_forward.11} parent=11 // pred_check
          %p589 = pneg %p220
        $region22: #{memorizing_transformer_forward.11} parent=11 // pred_check_branch
          %591 = sbr.rel (%p589) target = $region24
        $region23: #{memorizing_transformer_forward.11} parent=11 // pred_region
          %s593 = ssub.s32 16, 16
          %594 = vsyncadd [#allocation16], %s593
          %s596 = sshll.u32 [#allocation15], 4
          %s597 = int_to_ptr.vmem [resolvable:$true] %s596
          %599 = dma.hbm_to_vmem [thread:$0]  %s5, 16, %s597, [#allocation16]
        $region24: #{memorizing_transformer_forward.11} parent=11 // pred_fallthru
          _
        // Predicated region
        $region25: #{memorizing_transformer_forward.11} parent=11 // pred_check
          %p600 = pneg %p241
        $region26: #{memorizing_transformer_forward.11} parent=11 // pred_check_branch
          %602 = sbr.rel (%p600) target = $region28
        $region27: #{memorizing_transformer_forward.11} parent=11 // pred_region
          %s604 = ssub.s32 16, 16
          %605 = vsyncadd [#allocation16], %s604
          %s607 = sshll.u32 [#allocation17], 4
          %s608 = int_to_ptr.vmem [resolvable:$true] %s607
          %610 = dma.hbm_to_vmem [thread:$0]  %s6, 16, %s608, [#allocation16]
        $region28: #{memorizing_transformer_forward.11} parent=11 // pred_fallthru
          _
        // Predicated region
        $region29: #{memorizing_transformer_forward.11} parent=11 // pred_check
          %p611 = pneg %p262
        $region30: #{memorizing_transformer_forward.11} parent=11 // pred_check_branch
          %613 = sbr.rel (%p611) target = $region32
        $region31: #{memorizing_transformer_forward.11} parent=11 // pred_region
          %s615 = ssub.s32 16, 16
          %616 = vsyncadd [#allocation19], %s615
          %s618 = sshll.u32 [#allocation18], 4
          %s619 = int_to_ptr.vmem [resolvable:$true] %s618
          %621 = dma.hbm_to_vmem [thread:$0]  %s7, 16, %s619, [#allocation19]
        $region32: #{memorizing_transformer_forward.11} parent=11 // pred_fallthru
          _
        // Predicated region
        $region33: #{memorizing_transformer_forward.11} parent=11 // pred_check
          %p622 = pneg %p283
        $region34: #{memorizing_transformer_forward.11} parent=11 // pred_check_branch
          %624 = sbr.rel (%p622) target = $region36
        $region35: #{memorizing_transformer_forward.11} parent=11 // pred_region
          %s626 = ssub.s32 256, 256
          %627 = vsyncadd [#allocation19], %s626
          %s628 = sshll.u32 [#allocation20], 4
          %s629 = int_to_ptr.vmem [resolvable:$true] %s628
          %634 = dma.hbm_to_vmem [thread:$0]  %s8, 256, %s629, [#allocation19], 64, 64, 4
        $region36: #{memorizing_transformer_forward.11} parent=11 // pred_fallthru
          _
        // Predicated region
        $region37: #{memorizing_transformer_forward.11} parent=11 // pred_check
          %p635 = pneg %p304
        $region38: #{memorizing_transformer_forward.11} parent=11 // pred_check_branch
          %637 = sbr.rel (%p635) target = $region40
        $region39: #{memorizing_transformer_forward.11} parent=11 // pred_region
          %s639 = ssub.s32 16, 16
          %640 = vsyncadd [#allocation22], %s639
          %s642 = sshll.u32 [#allocation21], 4
          %s643 = int_to_ptr.vmem [resolvable:$true] %s642
          %645 = dma.hbm_to_vmem [thread:$0]  %s9, 16, %s643, [#allocation22]
        $region40: #{memorizing_transformer_forward.11} parent=11 // pred_fallthru
          _
        // Predicated region
        $region41: #{memorizing_transformer_forward.11} parent=11 // pred_check
          %p646 = pneg %p325
        $region42: #{memorizing_transformer_forward.11} parent=11 // pred_check_branch
          %648 = sbr.rel (%p646) target = $region44
        $region43: #{memorizing_transformer_forward.11} parent=11 // pred_region
          %s650 = ssub.s32 256, 256
          %651 = vsyncadd [#allocation22], %s650
          %s652 = sshll.u32 [#allocation23], 4
          %s653 = int_to_ptr.vmem [resolvable:$true] %s652
          %658 = dma.hbm_to_vmem [thread:$0]  %s10, 256, %s653, [#allocation22], 64, 64, 4
        $region44: #{memorizing_transformer_forward.11} parent=11 // pred_fallthru
          _
        // Predicated region
        $region45: #{memorizing_transformer_forward.11} parent=11 // pred_check
          %p659 = pneg %p346
        $region46: #{memorizing_transformer_forward.11} parent=11 // pred_check_branch
          %661 = sbr.rel (%p659) target = $region48
        $region47: #{memorizing_transformer_forward.11} parent=11 // pred_region
          %s663 = ssub.s32 16, 16
          %664 = vsyncadd [#allocation25], %s663
          %s666 = sshll.u32 [#allocation24], 4
          %s667 = int_to_ptr.vmem [resolvable:$true] %s666
          %669 = dma.hbm_to_vmem [thread:$0]  %s11, 16, %s667, [#allocation25]
        $region48: #{memorizing_transformer_forward.11} parent=11 // pred_fallthru
          _
        // Predicated region
        $region49: #{memorizing_transformer_forward.11} parent=11 // pred_check
          %p670 = pneg %p367
        $region50: #{memorizing_transformer_forward.11} parent=11 // pred_check_branch
          %672 = sbr.rel (%p670) target = $region52
        $region51: #{memorizing_transformer_forward.11} parent=11 // pred_region
          %s674 = ssub.s32 16, 16
          %675 = vsyncadd [#allocation25], %s674
          %s677 = sshll.u32 [#allocation26], 4
          %s678 = int_to_ptr.vmem [resolvable:$true] %s677
          %680 = dma.hbm_to_vmem [thread:$0]  %s12, 16, %s678, [#allocation25]
        $region52: #{memorizing_transformer_forward.11} parent=11 // pred_fallthru
          _
        // Predicated region
        $region53: #{memorizing_transformer_forward.11} parent=11 // pred_check
          %p681 = pneg %p388
        $region54: #{memorizing_transformer_forward.11} parent=11 // pred_check_branch
          %683 = sbr.rel (%p681) target = $region56
        $region55: #{memorizing_transformer_forward.11} parent=11 // pred_region
          %s685 = ssub.s32 16, 16
          %686 = vsyncadd [#allocation28], %s685
          %s688 = sshll.u32 [#allocation27], 4
          %s689 = int_to_ptr.vmem [resolvable:$true] %s688
          %691 = dma.hbm_to_vmem [thread:$0]  %s13, 16, %s689, [#allocation28]
        $region56: #{memorizing_transformer_forward.11} parent=11 // pred_fallthru
          _
        // Predicated region
        $region57: #{memorizing_transformer_forward.11} parent=11 // pred_check
          %p692 = pneg %p409
        $region58: #{memorizing_transformer_forward.11} parent=11 // pred_check_branch
          %694 = sbr.rel (%p692) target = $region60
        $region59: #{memorizing_transformer_forward.11} parent=11 // pred_region
          %s696 = ssub.s32 256, 256
          %697 = vsyncadd [#allocation28], %s696
          %s698 = sshll.u32 [#allocation29], 4
          %s699 = int_to_ptr.vmem [resolvable:$true] %s698
          %704 = dma.hbm_to_vmem [thread:$0]  %s14, 256, %s699, [#allocation28], 64, 64, 4
        $region60: #{memorizing_transformer_forward.11} parent=11 // pred_fallthru
          _
        // Predicated region
        $region61: #{memorizing_transformer_forward.11} parent=11 // pred_check
          %p705 = pneg %p430
        $region62: #{memorizing_transformer_forward.11} parent=11 // pred_check_branch
          %707 = sbr.rel (%p705) target = $region64
        $region63: #{memorizing_transformer_forward.11} parent=11 // pred_region
          %s709 = ssub.s32 16, 16
          %710 = vsyncadd [#allocation31], %s709
          %s712 = sshll.u32 [#allocation30], 4
          %s713 = int_to_ptr.vmem [resolvable:$true] %s712
          %715 = dma.hbm_to_vmem [thread:$0]  %s15, 16, %s713, [#allocation31]
        $region64: #{memorizing_transformer_forward.11} parent=11 // pred_fallthru
          _
        // Predicated region
        $region65: #{memorizing_transformer_forward.11} parent=11 // pred_check
          %p716 = pneg %p451
        $region66: #{memorizing_transformer_forward.11} parent=11 // pred_check_branch
          %718 = sbr.rel (%p716) target = $region68
        $region67: #{memorizing_transformer_forward.11} parent=11 // pred_region
          %s720 = ssub.s32 1024, 1024
          %721 = vsyncadd [#allocation31], %s720
          %s722 = sshll.u32 [#allocation32], 4
          %s723 = int_to_ptr.vmem [resolvable:$true] %s722
          %728 = dma.hbm_to_vmem [thread:$0]  %s16, 1024, %s723, [#allocation31], 64, 64, 4
        $region68: #{memorizing_transformer_forward.11} parent=11 // pred_fallthru
          _
        // Predicated region
        $region69: #{memorizing_transformer_forward.11} parent=11 // pred_check
          %p729 = pneg %p472
        $region70: #{memorizing_transformer_forward.11} parent=11 // pred_check_branch
          %731 = sbr.rel (%p729) target = $region72
        $region71: #{memorizing_transformer_forward.11} parent=11 // pred_region
          %s733 = ssub.s32 16, 16
          %734 = vsyncadd [#allocation34], %s733
          %s736 = sshll.u32 [#allocation33], 4
          %s737 = int_to_ptr.vmem [resolvable:$true] %s736
          %739 = dma.hbm_to_vmem [thread:$0]  %s17, 16, %s737, [#allocation34]
        $region72: #{memorizing_transformer_forward.11} parent=11 // pred_fallthru
          _
        // Predicated region
        $region73: #{memorizing_transformer_forward.11} parent=11 // pred_check
          %p740 = pneg %p493
        $region74: #{memorizing_transformer_forward.11} parent=11 // pred_check_branch
          %742 = sbr.rel (%p740) target = $region76
        $region75: #{memorizing_transformer_forward.11} parent=11 // pred_region
          %s744 = ssub.s32 16, 16
          %745 = vsyncadd [#allocation34], %s744
          %s747 = sshll.u32 [#allocation35], 4
          %s748 = int_to_ptr.vmem [resolvable:$true] %s747
          %750 = dma.hbm_to_vmem [thread:$0]  %s18, 16, %s748, [#allocation34]
        $region76: #{memorizing_transformer_forward.11} parent=11 // pred_fallthru
          _
        // Predicated region
        $region77: #{memorizing_transformer_forward.11} parent=11 // pred_check
          %p751 = pneg %p514
        $region78: #{memorizing_transformer_forward.11} parent=11 // pred_check_branch
          %753 = sbr.rel (%p751) target = $region80
        $region79: #{memorizing_transformer_forward.11} parent=11 // pred_region
          %s755 = ssub.s32 16, 16
          %756 = vsyncadd [#allocation37], %s755
          %s758 = sshll.u32 [#allocation36], 4
          %s759 = int_to_ptr.vmem [resolvable:$true] %s758
          %761 = dma.hbm_to_vmem [thread:$0]  %s19, 16, %s759, [#allocation37]
        $region80: #{memorizing_transformer_forward.11} parent=11 // pred_fallthru
          _
      $region12: #{memorizing_transformer_forward.11} parent=5 // pred_fallthru
        _
      %p762 = scmp.lt.s32.totalorder %s44, 2
      // Predicated region
      $region81: #{memorizing_transformer_forward.11} parent=5 // pred_check
        %p763 = pneg %p762
      $region82: #{memorizing_transformer_forward.11} parent=5 // pred_check_branch
        %765 = sbr.rel (%p763) target = $region84
      $region83: #{memorizing_transformer_forward.11} parent=5 // pred_region
        // Predicated region
        $region85: #{memorizing_transformer_forward.11} parent=83 // pred_check
          %p766 = pneg %p85
        $region86: #{memorizing_transformer_forward.11} parent=83 // pred_check_branch
          %768 = sbr.rel (%p766) target = $region88
        $region87: #{memorizing_transformer_forward.11} parent=83 // pred_region
          %s769 = sand.u32 %s75, 1
          %s770 = scalar_lea.sflag [#allocation7], %s769
          %s771 = sand.u32 %s75, 1
          %s772 = smul.addr %s771, 8
          %s773 = scalar_lea.vmem [#allocation6], %s772
          %s775 = ssub.s32 128, 128
          %776 = vsyncadd %s770, %s775
          %s777 = sadd.s32 %s52, %s51
          %s778 = smul.addr %s777, 128
          %s779 = scalar_lea.hbm %s0, %s778
          %s781 = sshll.u32 %s773, 4
          %s782 = int_to_ptr.vmem [resolvable:$true] %s781
          %784 = dma.hbm_to_vmem [thread:$0]  %s779, 128, %s782, %s770
        $region88: #{memorizing_transformer_forward.11} parent=83 // pred_fallthru
          _
        // Predicated region
        $region89: #{memorizing_transformer_forward.11} parent=83 // pred_check
          %p785 = pneg %p113
        $region90: #{memorizing_transformer_forward.11} parent=83 // pred_check_branch
          %787 = sbr.rel (%p785) target = $region92
        $region91: #{memorizing_transformer_forward.11} parent=83 // pred_region
          %s788 = sand.u32 %s44, 1
          %s789 = scalar_lea.sflag [#allocation10], %s788
          %s790 = sand.u32 %s103, 1
          %s791 = smul.addr %s790, 16
          %s792 = scalar_lea.vmem [#allocation9], %s791
          %s794 = ssub.s32 256, 256
          %795 = vsyncadd %s789, %s794
          %s796 = smul.addr %s51, 4
          %s797 = sadd.s32 %s53, %s796
          %s798 = smul.addr %s797, 64
          %s799 = scalar_lea.hbm %s1, %s798
          %s800 = sshll.u32 %s792, 4
          %s801 = int_to_ptr.vmem [resolvable:$true] %s800
          %806 = dma.hbm_to_vmem [thread:$0]  %s799, 256, %s801, %s789, 64, 64, 4
        $region92: #{memorizing_transformer_forward.11} parent=83 // pred_fallthru
          _
        // Predicated region
        $region93: #{memorizing_transformer_forward.11} parent=83 // pred_check
          %p807 = pneg %p141
        $region94: #{memorizing_transformer_forward.11} parent=83 // pred_check_branch
          %809 = sbr.rel (%p807) target = $region96
        $region95: #{memorizing_transformer_forward.11} parent=83 // pred_region
          %s810 = sand.u32 %s44, 1
          %s811 = scalar_lea.sflag [#allocation10], %s810
          %s812 = sand.u32 %s131, 1
          %s813 = smul.addr %s812, 16
          %s814 = scalar_lea.vmem [#allocation11], %s813
          %s816 = ssub.s32 256, 256
          %817 = vsyncadd %s811, %s816
          %s818 = smul.addr %s51, 4
          %s819 = sadd.s32 %s53, %s818
          %s820 = smul.addr %s819, 64
          %s821 = scalar_lea.hbm %s2, %s820
          %s822 = sshll.u32 %s814, 4
          %s823 = int_to_ptr.vmem [resolvable:$true] %s822
          %828 = dma.hbm_to_vmem [thread:$0]  %s821, 256, %s823, %s811, 64, 64, 4
        $region96: #{memorizing_transformer_forward.11} parent=83 // pred_fallthru
          _
      $region84: #{memorizing_transformer_forward.11} parent=5 // pred_fallthru
        _
      %p829 = scmp.le.s32.totalorder 1, %s44
      %p830 = scmp.lt.s32.totalorder %s44, 3
      %p831 = pnand %p829, %p830
      %p832 = pneg %p831
      // Predicated region
      $region97: #{memorizing_transformer_forward.11} parent=5 // pred_check
        _
      $region98: #{memorizing_transformer_forward.11} parent=5 // pred_check_branch
        %834 = sbr.rel (%p831) target = $region100
      $region99: #{memorizing_transformer_forward.11} parent=5 // pred_region
        %s835 = ssub.s32 %s44, 1
        %s836 = sand.u32 %s78, 1
        %s837 = scalar_lea.sflag [#allocation7], %s836
        %s838 = sand.u32 %s78, 1
        %s839 = smul.addr %s838, 8
        %s840 = scalar_lea.vmem [#allocation6], %s839
        // Predicated region
        $region101: #{memorizing_transformer_forward.11} parent=99 // pred_check
          %p841 = pneg %p91
        $region102: #{memorizing_transformer_forward.11} parent=99 // pred_check_branch
          %843 = sbr.rel (%p841) target = $region104
        $region103: #{memorizing_transformer_forward.11} parent=99 // pred_region
          %844 = dma.done %s837, 128
        $region104: #{memorizing_transformer_forward.11} parent=99 // pred_fallthru
          _
        %s845 = sand.u32 %s49, 1
        %s846 = scalar_lea.sflag [#allocation10], %s845
        %s847 = sand.u32 %s106, 1
        %s848 = smul.addr %s847, 16
        %s849 = scalar_lea.vmem [#allocation9], %s848
        // Predicated region
        $region105: #{memorizing_transformer_forward.11} parent=99 // pred_check
          %p850 = pneg %p119
        $region106: #{memorizing_transformer_forward.11} parent=99 // pred_check_branch
          %852 = sbr.rel (%p850) target = $region108
        $region107: #{memorizing_transformer_forward.11} parent=99 // pred_region
          %853 = dma.done %s846, 256
        $region108: #{memorizing_transformer_forward.11} parent=99 // pred_fallthru
          _
        %s854 = sand.u32 %s49, 1
        %s855 = scalar_lea.sflag [#allocation10], %s854
        %s856 = sand.u32 %s134, 1
        %s857 = smul.addr %s856, 16
        %s858 = scalar_lea.vmem [#allocation11], %s857
        // Predicated region
        $region109: #{memorizing_transformer_forward.11} parent=99 // pred_check
          %p859 = pneg %p147
        $region110: #{memorizing_transformer_forward.11} parent=99 // pred_check_branch
          %861 = sbr.rel (%p859) target = $region112
        $region111: #{memorizing_transformer_forward.11} parent=99 // pred_region
          %862 = dma.done %s855, 256
        $region112: #{memorizing_transformer_forward.11} parent=99 // pred_fallthru
          _
        // Predicated region
        $region113: #{memorizing_transformer_forward.11} parent=99 // pred_check
          %p863 = pneg %p173
        $region114: #{memorizing_transformer_forward.11} parent=99 // pred_check_branch
          %865 = sbr.rel (%p863) target = $region116
        $region115: #{memorizing_transformer_forward.11} parent=99 // pred_region
          %866 = dma.done [#allocation13], 512
        $region116: #{memorizing_transformer_forward.11} parent=99 // pred_fallthru
          _
        // Predicated region
        $region117: #{memorizing_transformer_forward.11} parent=99 // pred_check
          %p867 = pneg %p199
        $region118: #{memorizing_transformer_forward.11} parent=99 // pred_check_branch
          %869 = sbr.rel (%p867) target = $region120
        $region119: #{memorizing_transformer_forward.11} parent=99 // pred_region
          %870 = dma.done [#allocation13], 512
        $region120: #{memorizing_transformer_forward.11} parent=99 // pred_fallthru
          _
        // Predicated region
        $region121: #{memorizing_transformer_forward.11} parent=99 // pred_check
          %p871 = pneg %p220
        $region122: #{memorizing_transformer_forward.11} parent=99 // pred_check_branch
          %873 = sbr.rel (%p871) target = $region124
        $region123: #{memorizing_transformer_forward.11} parent=99 // pred_region
          %874 = dma.done [#allocation16], 16
        $region124: #{memorizing_transformer_forward.11} parent=99 // pred_fallthru
          _
        // Predicated region
        $region125: #{memorizing_transformer_forward.11} parent=99 // pred_check
          %p875 = pneg %p241
        $region126: #{memorizing_transformer_forward.11} parent=99 // pred_check_branch
          %877 = sbr.rel (%p875) target = $region128
        $region127: #{memorizing_transformer_forward.11} parent=99 // pred_region
          %878 = dma.done [#allocation16], 16
        $region128: #{memorizing_transformer_forward.11} parent=99 // pred_fallthru
          _
        // Predicated region
        $region129: #{memorizing_transformer_forward.11} parent=99 // pred_check
          %p879 = pneg %p262
        $region130: #{memorizing_transformer_forward.11} parent=99 // pred_check_branch
          %881 = sbr.rel (%p879) target = $region132
        $region131: #{memorizing_transformer_forward.11} parent=99 // pred_region
          %882 = dma.done [#allocation19], 16
        $region132: #{memorizing_transformer_forward.11} parent=99 // pred_fallthru
          _
        // Predicated region
        $region133: #{memorizing_transformer_forward.11} parent=99 // pred_check
          %p883 = pneg %p283
        $region134: #{memorizing_transformer_forward.11} parent=99 // pred_check_branch
          %885 = sbr.rel (%p883) target = $region136
        $region135: #{memorizing_transformer_forward.11} parent=99 // pred_region
          %886 = dma.done [#allocation19], 256
        $region136: #{memorizing_transformer_forward.11} parent=99 // pred_fallthru
          _
        // Predicated region
        $region137: #{memorizing_transformer_forward.11} parent=99 // pred_check
          %p887 = pneg %p304
        $region138: #{memorizing_transformer_forward.11} parent=99 // pred_check_branch
          %889 = sbr.rel (%p887) target = $region140
        $region139: #{memorizing_transformer_forward.11} parent=99 // pred_region
          %890 = dma.done [#allocation22], 16
        $region140: #{memorizing_transformer_forward.11} parent=99 // pred_fallthru
          _
        // Predicated region
        $region141: #{memorizing_transformer_forward.11} parent=99 // pred_check
          %p891 = pneg %p325
        $region142: #{memorizing_transformer_forward.11} parent=99 // pred_check_branch
          %893 = sbr.rel (%p891) target = $region144
        $region143: #{memorizing_transformer_forward.11} parent=99 // pred_region
          %894 = dma.done [#allocation22], 256
        $region144: #{memorizing_transformer_forward.11} parent=99 // pred_fallthru
          _
        // Predicated region
        $region145: #{memorizing_transformer_forward.11} parent=99 // pred_check
          %p895 = pneg %p346
        $region146: #{memorizing_transformer_forward.11} parent=99 // pred_check_branch
          %897 = sbr.rel (%p895) target = $region148
        $region147: #{memorizing_transformer_forward.11} parent=99 // pred_region
          %898 = dma.done [#allocation25], 16
        $region148: #{memorizing_transformer_forward.11} parent=99 // pred_fallthru
          _
        // Predicated region
        $region149: #{memorizing_transformer_forward.11} parent=99 // pred_check
          %p899 = pneg %p367
        $region150: #{memorizing_transformer_forward.11} parent=99 // pred_check_branch
          %901 = sbr.rel (%p899) target = $region152
        $region151: #{memorizing_transformer_forward.11} parent=99 // pred_region
          %902 = dma.done [#allocation25], 16
        $region152: #{memorizing_transformer_forward.11} parent=99 // pred_fallthru
          _
        // Predicated region
        $region153: #{memorizing_transformer_forward.11} parent=99 // pred_check
          %p903 = pneg %p388
        $region154: #{memorizing_transformer_forward.11} parent=99 // pred_check_branch
          %905 = sbr.rel (%p903) target = $region156
        $region155: #{memorizing_transformer_forward.11} parent=99 // pred_region
          %906 = dma.done [#allocation28], 16
        $region156: #{memorizing_transformer_forward.11} parent=99 // pred_fallthru
          _
        // Predicated region
        $region157: #{memorizing_transformer_forward.11} parent=99 // pred_check
          %p907 = pneg %p409
        $region158: #{memorizing_transformer_forward.11} parent=99 // pred_check_branch
          %909 = sbr.rel (%p907) target = $region160
        $region159: #{memorizing_transformer_forward.11} parent=99 // pred_region
          %910 = dma.done [#allocation28], 256
        $region160: #{memorizing_transformer_forward.11} parent=99 // pred_fallthru
          _
        // Predicated region
        $region161: #{memorizing_transformer_forward.11} parent=99 // pred_check
          %p911 = pneg %p430
        $region162: #{memorizing_transformer_forward.11} parent=99 // pred_check_branch
          %913 = sbr.rel (%p911) target = $region164
        $region163: #{memorizing_transformer_forward.11} parent=99 // pred_region
          %914 = dma.done [#allocation31], 16
        $region164: #{memorizing_transformer_forward.11} parent=99 // pred_fallthru
          _
        // Predicated region
        $region165: #{memorizing_transformer_forward.11} parent=99 // pred_check
          %p915 = pneg %p451
        $region166: #{memorizing_transformer_forward.11} parent=99 // pred_check_branch
          %917 = sbr.rel (%p915) target = $region168
        $region167: #{memorizing_transformer_forward.11} parent=99 // pred_region
          %918 = dma.done [#allocation31], 1024
        $region168: #{memorizing_transformer_forward.11} parent=99 // pred_fallthru
          _
        // Predicated region
        $region169: #{memorizing_transformer_forward.11} parent=99 // pred_check
          %p919 = pneg %p472
        $region170: #{memorizing_transformer_forward.11} parent=99 // pred_check_branch
          %921 = sbr.rel (%p919) target = $region172
        $region171: #{memorizing_transformer_forward.11} parent=99 // pred_region
          %922 = dma.done [#allocation34], 16
        $region172: #{memorizing_transformer_forward.11} parent=99 // pred_fallthru
          _
        // Predicated region
        $region173: #{memorizing_transformer_forward.11} parent=99 // pred_check
          %p923 = pneg %p493
        $region174: #{memorizing_transformer_forward.11} parent=99 // pred_check_branch
          %925 = sbr.rel (%p923) target = $region176
        $region175: #{memorizing_transformer_forward.11} parent=99 // pred_region
          %926 = dma.done [#allocation34], 16
        $region176: #{memorizing_transformer_forward.11} parent=99 // pred_fallthru
          _
        // Predicated region
        $region177: #{memorizing_transformer_forward.11} parent=99 // pred_check
          %p927 = pneg %p514
        $region178: #{memorizing_transformer_forward.11} parent=99 // pred_check_branch
          %929 = sbr.rel (%p927) target = $region180
        $region179: #{memorizing_transformer_forward.11} parent=99 // pred_region
          %930 = dma.done [#allocation37], 16
        $region180: #{memorizing_transformer_forward.11} parent=99 // pred_fallthru
          _
        %s931 = sand.u32 %s78, 1
        %s932 = scalar_lea.sflag [#allocation7], %s931
        %s933 = sand.u32 %s78, 1
        %s934 = smul.addr %s933, 8
        %s935 = scalar_lea.vmem [#allocation6], %s934
        %p936 = pneg %p91
        %p937 = pneg %p88
        %s938 = sand.u32 %s49, 1
        %s939 = scalar_lea.sflag [#allocation10], %s938
        %s940 = sand.u32 %s106, 1
        %s941 = smul.addr %s940, 16
        %s942 = scalar_lea.vmem [#allocation9], %s941
        %p943 = pneg %p119
        %p944 = pneg %p116
        %s945 = sand.u32 %s49, 1
        %s946 = scalar_lea.sflag [#allocation10], %s945
        %s947 = sand.u32 %s134, 1
        %s948 = smul.addr %s947, 16
        %s949 = scalar_lea.vmem [#allocation11], %s948
        %p950 = pneg %p147
        %p951 = pneg %p144
        %p952 = pneg %p173
        %p953 = pneg %p170
        %p954 = pneg %p199
        %p955 = pneg %p196
        %p956 = pneg %p220
        %p957 = pneg %p217
        %p958 = pneg %p241
        %p959 = pneg %p238
        %p960 = pneg %p262
        %p961 = pneg %p259
        %p962 = pneg %p283
        %p963 = pneg %p280
        %p964 = pneg %p304
        %p965 = pneg %p301
        %p966 = pneg %p325
        %p967 = pneg %p322
        %p968 = pneg %p346
        %p969 = pneg %p343
        %p970 = pneg %p367
        %p971 = pneg %p364
        %p972 = pneg %p388
        %p973 = pneg %p385
        %p974 = pneg %p409
        %p975 = pneg %p406
        %p976 = pneg %p430
        %p977 = pneg %p427
        %p978 = pneg %p451
        %p979 = pneg %p448
        %p980 = pneg %p472
        %p981 = pneg %p469
        %p982 = pneg %p493
        %p983 = pneg %p490
        %p984 = pneg %p514
        %p985 = pneg %p511
        %p986 = pneg %p542
        %p987 = pneg %p539
        %s988 = sand.u32 %s529, 1
        %s989 = scalar_lea.sflag [#allocation8], %s988
        %s990 = sand.u32 %s529, 1
        %s991 = smul.addr %s990, 8
        %s992 = scalar_lea.vmem [#allocation38], %s991
        %p994 = scmp.eq.s32.totalorder %s56, 0
        // Predicated region
        $region181: #{memorizing_transformer_forward.11} parent=99 // pred_check
          %p995 = pneg %p994
        $region182: #{memorizing_transformer_forward.11} parent=99 // pred_check_branch
          %997 = sbr.rel (%p995) target = $region184
        $region183: #{memorizing_transformer_forward.11} parent=99 // pred_region
          %v998 = vld [vmem:[%s840] sm:$0xff]
          %v999 = vpack.c.bf16 %v998, %v998
          %v1000 = vld [vmem:[#allocation20] sm:$0xf]
          %v1001 = vld [vmem:[#allocation20 + $0x4] sm:$0xf]
          %v1002 = vld [vmem:[#allocation20 + $0x8] sm:$0xf]
          %v1003 = vld [vmem:[#allocation20 + $0xc] sm:$0xf]
          %v1004 = vld [vmem:[#allocation21] sm:$0x1]
          %v1006 = vlaneseq
          %v1007 = vshrl.u32 %v1006, 7
          %v1008 = vsub.s32 0, %v1007
          %v1009 = vrot.slane %v1004, %v1008
          %v1015 = vunpack.c.l.b16 %v1000
          %v1016 = vunpack.c.l.b16 %v1001
          %v1017 = vunpack.c.l.b16 %v1002
          %v1018 = vunpack.c.l.b16 %v1003
          %v1019 = vpack.c.b16 %v1016, %v1015
          %v1020 = vpack.c.b16 %v1018, %v1017
          %vm1023 = vcmask 261120
          %v1025 = vsel %vm1023, %v999, 0
          %1027 = vmatprep.subr.bf16.mxu0 0
          %1028 = vmatpush1.bf16.msra.mxu0 %v1019
          %1029 = vmatprep.subr.bf16.mxu0 0
          %1030 = vmatpush1.bf16.msra.mxu0 %v1020
          %1031 = vmatprep.subr.bf16.mxu0 0
          %1032 = vmatpush1.bf16.msra.mxu0 0
          %1033 = vmatprep.subr.bf16.mxu0 0
          %1034 = vmatpush1.bf16.msra.mxu0 0
          %1035 = vmatprep.subr.bf16.mxu0 0
          %1036 = vmatpush1.bf16.msra.mxu0 0
          %1037 = vmatprep.subr.bf16.mxu0 0
          %1038 = vmatpush1.bf16.msra.mxu0 0
          %1039 = vmatprep.subr.bf16.mxu0 0
          %1040 = vmatpush1.bf16.msra.mxu0 0
          %1041 = vmatprep.subr.bf16.mxu0 0
          %1042 = vmatpush1.bf16.msra.mxu0 0
          %1043 = vmatprep.subr.bf16.mxu0 0
          %1044 = vmatpush1.bf16.msra.mxu0 0
          %1045 = vmatprep.subr.bf16.mxu0 0
          %1046 = vmatpush1.bf16.msra.mxu0 0
          %1047 = vmatprep.subr.bf16.mxu0 0
          %1048 = vmatpush1.bf16.msra.mxu0 0
          %1049 = vmatprep.subr.bf16.mxu0 0
          %1050 = vmatpush1.bf16.msra.mxu0 0
          %1051 = vmatprep.subr.bf16.mxu0 0
          %1052 = vmatpush1.bf16.msra.mxu0 0
          %1053 = vmatprep.subr.bf16.mxu0 0
          %1054 = vmatpush1.bf16.msra.mxu0 0
          %1055 = vmatprep.subr.bf16.mxu0 0
          %1056 = vmatpush1.bf16.msra.mxu0 0
          %1057 = vmatprep.subr.bf16.mxu0 0
          %1058 = vmatpush1.bf16.msra.mxu0 0
          %1059 = vmatprep.mubr.bf16.mxu0 0
          %1060 = vmatmul.mubr.bf16.gmra.mrb[0].mxu0 %v1025
          %v1061 = vpop.f32.mrb[0].mxu0
          %v1062 = vadd.f32 %v1009, %v1061
          %v1063 = vpop.f32.mrb[0].mxu0
          %v1064 = vpop.f32.mrb[0].mxu0
          %v1065 = vpop.f32.mrb[0].mxu0
          %1066 = vdwg.mxu0
          %1068 = vrot.lane.b32.xlu0 %v1062, 120
          %v1069 = vpop.permute.xlu0 %1068
          %1071 = vrot.lane.b32.xlu0 %v1062, 112
          %v1072 = vpop.permute.xlu0 %1071
          %1074 = vrot.lane.b32.xlu0 %v1062, 104
          %v1075 = vpop.permute.xlu0 %1074
          %v1077 = vcombine.low %v1062, %v1072
          %v1078 = vcombine.high %v1062, %v1072
          %v1080 = vunpack.c.l.s4 1983009808
          %v1081 = vunpack.c.0.s8 %v1080
          %v1082 = vlaneseq
          %v1083 = vshrl.u32 %v1082, 7
          %v1084 = vsub.s32 %v1081, %v1083
          %v1085 = vrot.slane %v1077, %v1084
          %v1087 = vunpack.c.l.s4 1983009808
          %v1088 = vunpack.c.0.s8 %v1087
          %v1089 = vlaneseq
          %v1090 = vshrl.u32 %v1089, 7
          %v1091 = vsub.s32 %v1088, %v1090
          %v1092 = vrot.slane %v1078, %v1091
          %v1093 = vcombine.low %v1069, %v1075
          %v1094 = vcombine.high %v1069, %v1075
          %v1096 = vunpack.c.l.s4 1983009808
          %v1097 = vunpack.c.0.s8 %v1096
          %v1098 = vlaneseq
          %v1099 = vshrl.u32 %v1098, 7
          %v1100 = vsub.s32 %v1097, %v1099
          %v1101 = vrot.slane %v1093, %v1100
          %v1103 = vunpack.c.l.s4 1983009808
          %v1104 = vunpack.c.0.s8 %v1103
          %v1105 = vlaneseq
          %v1106 = vshrl.u32 %v1105, 7
          %v1107 = vsub.s32 %v1104, %v1106
          %v1108 = vrot.slane %v1094, %v1107
          %v1109 = vcombine.low %v1085, %v1101
          %v1110 = vcombine.high %v1085, %v1101
          %v1112 = vunpack.c.l.s4 1934713408
          %v1113 = vunpack.c.0.s8 %v1112
          %v1114 = vlaneseq
          %v1115 = vshrl.u32 %v1114, 7
          %v1116 = vsub.s32 %v1113, %v1115
          %v1117 = vrot.slane %v1109, %v1116
          %v1119 = vunpack.c.l.s4 1934713408
          %v1120 = vunpack.c.0.s8 %v1119
          %v1121 = vlaneseq
          %v1122 = vshrl.u32 %v1121, 7
          %v1123 = vsub.s32 %v1120, %v1122
          %v1124 = vrot.slane %v1110, %v1123
          %v1125 = vcombine.low %v1092, %v1108
          %v1126 = vcombine.high %v1092, %v1108
          %v1128 = vunpack.c.l.s4 1934713408
          %v1129 = vunpack.c.0.s8 %v1128
          %v1130 = vlaneseq
          %v1131 = vshrl.u32 %v1130, 7
          %v1132 = vsub.s32 %v1129, %v1131
          %v1133 = vrot.slane %v1125, %v1132
          %v1135 = vunpack.c.l.s4 1934713408
          %v1136 = vunpack.c.0.s8 %v1135
          %v1137 = vlaneseq
          %v1138 = vshrl.u32 %v1137, 7
          %v1139 = vsub.s32 %v1136, %v1138
          %v1140 = vrot.slane %v1126, %v1139
          %v1141 = vcombine.high %v1117, 0.0
          %v1142 = vcombine.high %v1124, 0.0
          %v1143 = vcombine.high %v1133, 0.0
          %v1144 = vcombine.high %v1140, 0.0
          %v1145 = vcombine.low %v1117, %v1124
          %v1147 = vunpack.c.l.s4 1983009808
          %v1148 = vunpack.c.0.s8 %v1147
          %v1149 = vlaneseq
          %v1150 = vshrl.u32 %v1149, 7
          %v1151 = vsub.s32 %v1148, %v1150
          %v1152 = vrot.slane %v1145, %v1151
          %v1153 = vcombine.low %v1141, %v1142
          %v1155 = vunpack.c.l.s4 1983009808
          %v1156 = vunpack.c.0.s8 %v1155
          %v1157 = vlaneseq
          %v1158 = vshrl.u32 %v1157, 7
          %v1159 = vsub.s32 %v1156, %v1158
          %v1160 = vrot.slane %v1153, %v1159
          %v1161 = vcombine.low %v1133, %v1140
          %v1163 = vunpack.c.l.s4 1983009808
          %v1164 = vunpack.c.0.s8 %v1163
          %v1165 = vlaneseq
          %v1166 = vshrl.u32 %v1165, 7
          %v1167 = vsub.s32 %v1164, %v1166
          %v1168 = vrot.slane %v1161, %v1167
          %v1169 = vcombine.low %v1143, %v1144
          %v1171 = vunpack.c.l.s4 1983009808
          %v1172 = vunpack.c.0.s8 %v1171
          %v1173 = vlaneseq
          %v1174 = vshrl.u32 %v1173, 7
          %v1175 = vsub.s32 %v1172, %v1174
          %v1176 = vrot.slane %v1169, %v1175
          %v1177 = vcombine.low %v1152, %v1160
          %v1178 = vcombine.high %v1152, %v1160
          %v1180 = vunpack.c.l.s4 1934713408
          %v1181 = vunpack.c.0.s8 %v1180
          %v1182 = vlaneseq
          %v1183 = vshrl.u32 %v1182, 7
          %v1184 = vsub.s32 %v1181, %v1183
          %v1185 = vrot.slane %v1177, %v1184
          %v1187 = vunpack.c.l.s4 1934713408
          %v1188 = vunpack.c.0.s8 %v1187
          %v1189 = vlaneseq
          %v1190 = vshrl.u32 %v1189, 7
          %v1191 = vsub.s32 %v1188, %v1190
          %v1192 = vrot.slane %v1178, %v1191
          %v1193 = vcombine.low %v1168, %v1176
          %v1194 = vcombine.high %v1168, %v1176
          %v1196 = vunpack.c.l.s4 1934713408
          %v1197 = vunpack.c.0.s8 %v1196
          %v1198 = vlaneseq
          %v1199 = vshrl.u32 %v1198, 7
          %v1200 = vsub.s32 %v1197, %v1199
          %v1201 = vrot.slane %v1193, %v1200
          %v1203 = vunpack.c.l.s4 1934713408
          %v1204 = vunpack.c.0.s8 %v1203
          %v1205 = vlaneseq
          %v1206 = vshrl.u32 %v1205, 7
          %v1207 = vsub.s32 %v1204, %v1206
          %v1208 = vrot.slane %v1194, %v1207
          %v1209 = vcombine.low %v1185, %v1201
          %v1210 = vcombine.high %v1185, %v1201
          %v1211 = vcombine.low %v1192, %v1208
          %v1212 = vcombine.high %v1192, %v1208
          %v1213 = vpack.c.bf16 %v1209, %v1209
          %v1214 = vpack.c.bf16 %v1210, %v1210
          %v1215 = vpack.c.bf16 %v1211, %v1211
          %v1216 = vpack.c.bf16 %v1212, %v1212
          %vm1217 = vcmask 60416
          %1218 = vst.msk [vmem:[#allocation2] sm:$0xf] %vm1217, %v1213
          %1219 = vst.msk [vmem:[#allocation2 + $0x4] sm:$0xf] %vm1217, %v1214
          %1220 = vst.msk [vmem:[#allocation2 + $0x8] sm:$0xf] %vm1217, %v1215
          %1221 = vst.msk [vmem:[#allocation2 + $0xc] sm:$0xf] %vm1217, %v1216
          %vm1222 = vcmask 7168
          %1223 = vst.msk [vmem:[#allocation3] sm:$0xff] %vm1222, -inf
          %1224 = vst.msk [vmem:[#allocation3 + $0x8] sm:$0xff] %vm1222, -inf
          %1225 = vst.msk [vmem:[#allocation3 + $0x10] sm:$0xff] %vm1222, -inf
          %1226 = vst.msk [vmem:[#allocation3 + $0x18] sm:$0xff] %vm1222, -inf
          %1227 = vst.msk [vmem:[#allocation4] sm:$0xff] %vm1222, 0.0
          %1228 = vst.msk [vmem:[#allocation4 + $0x8] sm:$0xff] %vm1222, 0.0
          %1229 = vst.msk [vmem:[#allocation4 + $0x10] sm:$0xff] %vm1222, 0.0
          %1230 = vst.msk [vmem:[#allocation4 + $0x18] sm:$0xff] %vm1222, 0.0
          %vm1231 = vcmask 64512
          %1232 = vst.msk [vmem:[#allocation5] sm:$0xff] %vm1231, 0.0
          %1233 = vst.msk [vmem:[#allocation5 + $0x8] sm:$0xff] %vm1231, 0.0
          %1234 = vst.msk [vmem:[#allocation5 + $0x10] sm:$0xff] %vm1231, 0.0
          %1235 = vst.msk [vmem:[#allocation5 + $0x18] sm:$0xff] %vm1231, 0.0
        $region184: #{memorizing_transformer_forward.11} parent=99 // pred_fallthru
          _
        %v1236 = vld [vmem:[%s849] sm:$0xf]
        %v1237 = vld [vmem:[%s849 + $0x4] sm:$0xf]
        %v1238 = vld [vmem:[%s849 + $0x8] sm:$0xf]
        %v1239 = vld [vmem:[%s849 + $0xc] sm:$0xf]
        %v1240 = vld [vmem:[%s858] sm:$0xf]
        %v1241 = vld [vmem:[%s858 + $0x4] sm:$0xf]
        %v1242 = vld [vmem:[%s858 + $0x8] sm:$0xf]
        %v1243 = vld [vmem:[%s858 + $0xc] sm:$0xf]
        %v1244 = vld [vmem:[#allocation2] sm:$0xf]
        %v1245 = vld [vmem:[#allocation2 + $0x4] sm:$0xf]
        %v1246 = vld [vmem:[#allocation2 + $0x8] sm:$0xf]
        %v1247 = vld [vmem:[#allocation2 + $0xc] sm:$0xf]
        %vm1248 = vcmask 64512
        %v1250 = vsel %vm1248, %v1244, 0
        %v1253 = vsel %vm1248, %v1236, 0
        %1255 = vmatprep.subr.bf16.mxu0 0
        %1256 = vmatpush1.bf16.xpose.msra.mxu0 %v1253
        %1257 = vmatprep.subr.bf16.mxu0 0
        %1258 = vmatpush1.bf16.xpose.msra.mxu0 0
        %1259 = vmatprep.subr.bf16.mxu0 0
        %1260 = vmatpush1.bf16.xpose.msra.mxu0 0
        %1261 = vmatprep.subr.bf16.mxu0 0
        %1262 = vmatpush1.bf16.xpose.msra.mxu0 0
        %1263 = vmatprep.subr.bf16.mxu0 0
        %1264 = vmatpush1.bf16.xpose.msra.mxu0 0
        %1265 = vmatprep.subr.bf16.mxu0 0
        %1266 = vmatpush1.bf16.xpose.msra.mxu0 0
        %1267 = vmatprep.subr.bf16.mxu0 0
        %1268 = vmatpush1.bf16.xpose.msra.mxu0 0
        %1269 = vmatprep.subr.bf16.mxu0 0
        %1270 = vmatpush1.bf16.xpose.msra.mxu0 0
        %1271 = vmatprep.subr.bf16.mxu0 0
        %1272 = vmatpush1.bf16.xpose.msra.mxu0 0
        %1273 = vmatprep.subr.bf16.mxu0 0
        %1274 = vmatpush1.bf16.xpose.msra.mxu0 0
        %1275 = vmatprep.subr.bf16.mxu0 0
        %1276 = vmatpush1.bf16.xpose.msra.mxu0 0
        %1277 = vmatprep.subr.bf16.mxu0 0
        %1278 = vmatpush1.bf16.xpose.msra.mxu0 0
        %1279 = vmatprep.subr.bf16.mxu0 0
        %1280 = vmatpush1.bf16.xpose.msra.mxu0 0
        %1281 = vmatprep.subr.bf16.mxu0 0
        %1282 = vmatpush1.bf16.xpose.msra.mxu0 0
        %1283 = vmatprep.subr.bf16.mxu0 0
        %1284 = vmatpush1.bf16.xpose.msra.mxu0 0
        %1285 = vmatprep.subr.bf16.mxu0 0
        %1286 = vmatpush1.bf16.xpose.msra.mxu0 0
        %1287 = vmatprep.mubr.bf16.mxu0 0
        %1288 = vmatmul.mubr.bf16.gmra.mrb[0].mxu0 %v1250
        %v1289 = vpop.f32.mrb[0].mxu0
        %v1290 = vadd.f32 0.0, %v1289
        %v1291 = vpop.f32.mrb[0].mxu0
        %v1292 = vpop.f32.mrb[0].mxu0
        %v1293 = vpop.f32.mrb[0].mxu0
        %1294 = vdwg.mxu0
        %v1296 = vsel %vm1248, %v1245, 0
        %v1299 = vsel %vm1248, %v1237, 0
        %1301 = vmatprep.subr.bf16.mxu0 0
        %1302 = vmatpush1.bf16.xpose.msra.mxu0 %v1299
        %1303 = vmatprep.subr.bf16.mxu0 0
        %1304 = vmatpush1.bf16.xpose.msra.mxu0 0
        %1305 = vmatprep.subr.bf16.mxu0 0
        %1306 = vmatpush1.bf16.xpose.msra.mxu0 0
        %1307 = vmatprep.subr.bf16.mxu0 0
        %1308 = vmatpush1.bf16.xpose.msra.mxu0 0
        %1309 = vmatprep.subr.bf16.mxu0 0
        %1310 = vmatpush1.bf16.xpose.msra.mxu0 0
        %1311 = vmatprep.subr.bf16.mxu0 0
        %1312 = vmatpush1.bf16.xpose.msra.mxu0 0
        %1313 = vmatprep.subr.bf16.mxu0 0
        %1314 = vmatpush1.bf16.xpose.msra.mxu0 0
        %1315 = vmatprep.subr.bf16.mxu0 0
        %1316 = vmatpush1.bf16.xpose.msra.mxu0 0
        %1317 = vmatprep.subr.bf16.mxu0 0
        %1318 = vmatpush1.bf16.xpose.msra.mxu0 0
        %1319 = vmatprep.subr.bf16.mxu0 0
        %1320 = vmatpush1.bf16.xpose.msra.mxu0 0
        %1321 = vmatprep.subr.bf16.mxu0 0
        %1322 = vmatpush1.bf16.xpose.msra.mxu0 0
        %1323 = vmatprep.subr.bf16.mxu0 0
        %1324 = vmatpush1.bf16.xpose.msra.mxu0 0
        %1325 = vmatprep.subr.bf16.mxu0 0
        %1326 = vmatpush1.bf16.xpose.msra.mxu0 0
        %1327 = vmatprep.subr.bf16.mxu0 0
        %1328 = vmatpush1.bf16.xpose.msra.mxu0 0
        %1329 = vmatprep.subr.bf16.mxu0 0
        %1330 = vmatpush1.bf16.xpose.msra.mxu0 0
        %1331 = vmatprep.subr.bf16.mxu0 0
        %1332 = vmatpush1.bf16.xpose.msra.mxu0 0
        %1333 = vmatprep.mubr.bf16.mxu0 0
        %1334 = vmatmul.mubr.bf16.gmra.mrb[0].mxu0 %v1296
        %v1335 = vpop.f32.mrb[0].mxu0
        %v1336 = vadd.f32 0.0, %v1335
        %v1337 = vpop.f32.mrb[0].mxu0
        %v1338 = vpop.f32.mrb[0].mxu0
        %v1339 = vpop.f32.mrb[0].mxu0
        %1340 = vdwg.mxu0
        %v1342 = vsel %vm1248, %v1246, 0
        %v1345 = vsel %vm1248, %v1238, 0
        %1347 = vmatprep.subr.bf16.mxu0 0
        %1348 = vmatpush1.bf16.xpose.msra.mxu0 %v1345
        %1349 = vmatprep.subr.bf16.mxu0 0
        %1350 = vmatpush1.bf16.xpose.msra.mxu0 0
        %1351 = vmatprep.subr.bf16.mxu0 0
        %1352 = vmatpush1.bf16.xpose.msra.mxu0 0
        %1353 = vmatprep.subr.bf16.mxu0 0
        %1354 = vmatpush1.bf16.xpose.msra.mxu0 0
        %1355 = vmatprep.subr.bf16.mxu0 0
        %1356 = vmatpush1.bf16.xpose.msra.mxu0 0
        %1357 = vmatprep.subr.bf16.mxu0 0
        %1358 = vmatpush1.bf16.xpose.msra.mxu0 0
        %1359 = vmatprep.subr.bf16.mxu0 0
        %1360 = vmatpush1.bf16.xpose.msra.mxu0 0
        %1361 = vmatprep.subr.bf16.mxu0 0
        %1362 = vmatpush1.bf16.xpose.msra.mxu0 0
        %1363 = vmatprep.subr.bf16.mxu0 0
        %1364 = vmatpush1.bf16.xpose.msra.mxu0 0
        %1365 = vmatprep.subr.bf16.mxu0 0
        %1366 = vmatpush1.bf16.xpose.msra.mxu0 0
        %1367 = vmatprep.subr.bf16.mxu0 0
        %1368 = vmatpush1.bf16.xpose.msra.mxu0 0
        %1369 = vmatprep.subr.bf16.mxu0 0
        %1370 = vmatpush1.bf16.xpose.msra.mxu0 0
        %1371 = vmatprep.subr.bf16.mxu0 0
        %1372 = vmatpush1.bf16.xpose.msra.mxu0 0
        %1373 = vmatprep.subr.bf16.mxu0 0
        %1374 = vmatpush1.bf16.xpose.msra.mxu0 0
        %1375 = vmatprep.subr.bf16.mxu0 0
        %1376 = vmatpush1.bf16.xpose.msra.mxu0 0
        %1377 = vmatprep.subr.bf16.mxu0 0
        %1378 = vmatpush1.bf16.xpose.msra.mxu0 0
        %1379 = vmatprep.mubr.bf16.mxu0 0
        %1380 = vmatmul.mubr.bf16.gmra.mrb[0].mxu0 %v1342
        %v1381 = vpop.f32.mrb[0].mxu0
        %v1382 = vadd.f32 0.0, %v1381
        %v1383 = vpop.f32.mrb[0].mxu0
        %v1384 = vpop.f32.mrb[0].mxu0
        %v1385 = vpop.f32.mrb[0].mxu0
        %1386 = vdwg.mxu0
        %v1388 = vsel %vm1248, %v1247, 0
        %v1391 = vsel %vm1248, %v1239, 0
        %1393 = vmatprep.subr.bf16.mxu0 0
        %1394 = vmatpush1.bf16.xpose.msra.mxu0 %v1391
        %1395 = vmatprep.subr.bf16.mxu0 0
        %1396 = vmatpush1.bf16.xpose.msra.mxu0 0
        %1397 = vmatprep.subr.bf16.mxu0 0
        %1398 = vmatpush1.bf16.xpose.msra.mxu0 0
        %1399 = vmatprep.subr.bf16.mxu0 0
        %1400 = vmatpush1.bf16.xpose.msra.mxu0 0
        %1401 = vmatprep.subr.bf16.mxu0 0
        %1402 = vmatpush1.bf16.xpose.msra.mxu0 0
        %1403 = vmatprep.subr.bf16.mxu0 0
        %1404 = vmatpush1.bf16.xpose.msra.mxu0 0
        %1405 = vmatprep.subr.bf16.mxu0 0
        %1406 = vmatpush1.bf16.xpose.msra.mxu0 0
        %1407 = vmatprep.subr.bf16.mxu0 0
        %1408 = vmatpush1.bf16.xpose.msra.mxu0 0
        %1409 = vmatprep.subr.bf16.mxu0 0
        %1410 = vmatpush1.bf16.xpose.msra.mxu0 0
        %1411 = vmatprep.subr.bf16.mxu0 0
        %1412 = vmatpush1.bf16.xpose.msra.mxu0 0
        %1413 = vmatprep.subr.bf16.mxu0 0
        %1414 = vmatpush1.bf16.xpose.msra.mxu0 0
        %1415 = vmatprep.subr.bf16.mxu0 0
        %1416 = vmatpush1.bf16.xpose.msra.mxu0 0
        %1417 = vmatprep.subr.bf16.mxu0 0
        %1418 = vmatpush1.bf16.xpose.msra.mxu0 0
        %1419 = vmatprep.subr.bf16.mxu0 0
        %1420 = vmatpush1.bf16.xpose.msra.mxu0 0
        %1421 = vmatprep.subr.bf16.mxu0 0
        %1422 = vmatpush1.bf16.xpose.msra.mxu0 0
        %1423 = vmatprep.subr.bf16.mxu0 0
        %1424 = vmatpush1.bf16.xpose.msra.mxu0 0
        %1425 = vmatprep.mubr.bf16.mxu0 0
        %1426 = vmatmul.mubr.bf16.gmra.mrb[0].mxu0 %v1388
        %v1427 = vpop.f32.mrb[0].mxu0
        %v1428 = vadd.f32 0.0, %v1427
        %v1429 = vpop.f32.mrb[0].mxu0
        %v1430 = vpop.f32.mrb[0].mxu0
        %v1431 = vpop.f32.mrb[0].mxu0
        %1432 = vdwg.mxu0
        %v1433 = vld [vmem:[#allocation3] sm:$0xff]
        %v1434 = vld [vmem:[#allocation3 + $0x8] sm:$0xff]
        %v1435 = vld [vmem:[#allocation3 + $0x10] sm:$0xff]
        %v1436 = vld [vmem:[#allocation3 + $0x18] sm:$0xff]
        %v1437 = vsel %vm1248, %v1290, -inf
        %1438 = vmax.xlane.f32.xlu0 %v1437
        %v1439 = vpop.xlane.xlu0 %1438
        %v1440 = vsel %vm1248, %v1336, -inf
        %1441 = vmax.xlane.f32.xlu0 %v1440
        %v1442 = vpop.xlane.xlu0 %1441
        %v1443 = vsel %vm1248, %v1382, -inf
        %1444 = vmax.xlane.f32.xlu0 %v1443
        %v1445 = vpop.xlane.xlu0 %1444
        %v1446 = vsel %vm1248, %v1428, -inf
        %1447 = vmax.xlane.f32.xlu0 %v1446
        %v1448 = vpop.xlane.xlu0 %1447
        %v1449 = vmax.f32 %v1433, %v1439
        %v1450 = vmax.f32 %v1434, %v1442
        %v1451 = vmax.f32 %v1435, %v1445
        %v1452 = vmax.f32 %v1436, %v1448
        %v1453 = vsub.f32 %v1433, %v1449
        %v1454 = vsub.f32 %v1434, %v1450
        %v1455 = vsub.f32 %v1435, %v1451
        %v1456 = vsub.f32 %v1436, %v1452
        %v1457 = vmul.f32 %v1453, 1.442695
        %v1458 = vpow.pop %v1457
        %v1459 = vmul.f32 %v1454, 1.442695
        %v1460 = vpow.pop %v1459
        %v1461 = vmul.f32 %v1455, 1.442695
        %v1462 = vpow.pop %v1461
        %v1463 = vmul.f32 %v1456, 1.442695
        %v1464 = vpow.pop %v1463
        %1466 = vset.pattern.permute.xlu0 0
        %1467 = vperm.xlu0 %1466, %v1449
        %v1468 = vpop.permute.xlu0 %1467
        %1471 = vset.pattern.permute.xlu0 0
        %1472 = vperm.xlu0 %1471, %v1450
        %v1473 = vpop.permute.xlu0 %1472
        %1476 = vset.pattern.permute.xlu0 0
        %1477 = vperm.xlu0 %1476, %v1451
        %v1478 = vpop.permute.xlu0 %1477
        %1481 = vset.pattern.permute.xlu0 0
        %1482 = vperm.xlu0 %1481, %v1452
        %v1483 = vpop.permute.xlu0 %1482
        %v1485 = vsub.f32 %v1290, %v1468
        %v1486 = vsub.f32 %v1336, %v1473
        %v1487 = vsub.f32 %v1382, %v1478
        %v1488 = vsub.f32 %v1428, %v1483
        %v1489 = vmul.f32 %v1485, 1.442695
        %v1490 = vpow.pop %v1489
        %v1491 = vmul.f32 %v1486, 1.442695
        %v1492 = vpow.pop %v1491
        %v1493 = vmul.f32 %v1487, 1.442695
        %v1494 = vpow.pop %v1493
        %v1495 = vmul.f32 %v1488, 1.442695
        %v1496 = vpow.pop %v1495
        %v1497 = vld [vmem:[#allocation4] sm:$0xff]
        %v1498 = vld [vmem:[#allocation4 + $0x8] sm:$0xff]
        %v1499 = vld [vmem:[#allocation4 + $0x10] sm:$0xff]
        %v1500 = vld [vmem:[#allocation4 + $0x18] sm:$0xff]
        %v1501 = vmul.f32 %v1458, %v1497
        %v1502 = vmul.f32 %v1460, %v1498
        %v1503 = vmul.f32 %v1462, %v1499
        %v1504 = vmul.f32 %v1464, %v1500
        %v1505 = vsel %vm1248, %v1490, 0.0
        %1506 = vadd.xlane.f32.xlu0 %v1505
        %v1507 = vpop.xlane.xlu0 %1506
        %v1508 = vsel %vm1248, %v1492, 0.0
        %1509 = vadd.xlane.f32.xlu0 %v1508
        %v1510 = vpop.xlane.xlu0 %1509
        %v1511 = vsel %vm1248, %v1494, 0.0
        %1512 = vadd.xlane.f32.xlu0 %v1511
        %v1513 = vpop.xlane.xlu0 %1512
        %v1514 = vsel %vm1248, %v1496, 0.0
        %1515 = vadd.xlane.f32.xlu0 %v1514
        %v1516 = vpop.xlane.xlu0 %1515
        %v1517 = vadd.f32 %v1501, %v1507
        %v1518 = vadd.f32 %v1502, %v1510
        %v1519 = vadd.f32 %v1503, %v1513
        %v1520 = vadd.f32 %v1504, %v1516
        %vm1521 = vcmask 7168
        %1522 = vst.msk [vmem:[#allocation4] sm:$0xff] %vm1521, %v1517
        %1523 = vst.msk [vmem:[#allocation4 + $0x8] sm:$0xff] %vm1521, %v1518
        %1524 = vst.msk [vmem:[#allocation4 + $0x10] sm:$0xff] %vm1521, %v1519
        %1525 = vst.msk [vmem:[#allocation4 + $0x18] sm:$0xff] %vm1521, %v1520
        %v1526 = vld [vmem:[#allocation5] sm:$0xff]
        %v1527 = vld [vmem:[#allocation5 + $0x8] sm:$0xff]
        %v1528 = vld [vmem:[#allocation5 + $0x10] sm:$0xff]
        %v1529 = vld [vmem:[#allocation5 + $0x18] sm:$0xff]
        %1531 = vset.pattern.permute.xlu0 0
        %1532 = vperm.xlu0 %1531, %v1458
        %v1533 = vpop.permute.xlu0 %1532
        %1536 = vset.pattern.permute.xlu0 0
        %1537 = vperm.xlu0 %1536, %v1460
        %v1538 = vpop.permute.xlu0 %1537
        %1541 = vset.pattern.permute.xlu0 0
        %1542 = vperm.xlu0 %1541, %v1462
        %v1543 = vpop.permute.xlu0 %1542
        %1546 = vset.pattern.permute.xlu0 0
        %1547 = vperm.xlu0 %1546, %v1464
        %v1548 = vpop.permute.xlu0 %1547
        %v1550 = vmul.f32 %v1533, %v1526
        %v1551 = vmul.f32 %v1538, %v1527
        %v1552 = vmul.f32 %v1543, %v1528
        %v1553 = vmul.f32 %v1548, %v1529
        %v1554 = vpack.c.bf16 %v1490, %v1490
        %v1555 = vpack.c.bf16 %v1492, %v1492
        %v1556 = vpack.c.bf16 %v1494, %v1494
        %v1557 = vpack.c.bf16 %v1496, %v1496
        %v1559 = vsel %vm1248, %v1554, 0
        %vm1561 = vcmask 1043456
        %v1563 = vsel %vm1561, %v1240, 0
        %1565 = vmatprep.subr.bf16.mxu0 0
        %1566 = vmatpush1.bf16.msra.mxu0 %v1563
        %1567 = vmatprep.subr.bf16.mxu0 0
        %1568 = vmatpush1.bf16.msra.mxu0 0
        %1569 = vmatprep.subr.bf16.mxu0 0
        %1570 = vmatpush1.bf16.msra.mxu0 0
        %1571 = vmatprep.subr.bf16.mxu0 0
        %1572 = vmatpush1.bf16.msra.mxu0 0
        %1573 = vmatprep.subr.bf16.mxu0 0
        %1574 = vmatpush1.bf16.msra.mxu0 0
        %1575 = vmatprep.subr.bf16.mxu0 0
        %1576 = vmatpush1.bf16.msra.mxu0 0
        %1577 = vmatprep.subr.bf16.mxu0 0
        %1578 = vmatpush1.bf16.msra.mxu0 0
        %1579 = vmatprep.subr.bf16.mxu0 0
        %1580 = vmatpush1.bf16.msra.mxu0 0
        %1581 = vmatprep.subr.bf16.mxu0 0
        %1582 = vmatpush1.bf16.msra.mxu0 0
        %1583 = vmatprep.subr.bf16.mxu0 0
        %1584 = vmatpush1.bf16.msra.mxu0 0
        %1585 = vmatprep.subr.bf16.mxu0 0
        %1586 = vmatpush1.bf16.msra.mxu0 0
        %1587 = vmatprep.subr.bf16.mxu0 0
        %1588 = vmatpush1.bf16.msra.mxu0 0
        %1589 = vmatprep.subr.bf16.mxu0 0
        %1590 = vmatpush1.bf16.msra.mxu0 0
        %1591 = vmatprep.subr.bf16.mxu0 0
        %1592 = vmatpush1.bf16.msra.mxu0 0
        %1593 = vmatprep.subr.bf16.mxu0 0
        %1594 = vmatpush1.bf16.msra.mxu0 0
        %1595 = vmatprep.subr.bf16.mxu0 0
        %1596 = vmatpush1.bf16.msra.mxu0 0
        %1597 = vmatprep.mubr.bf16.mxu0 0
        %1598 = vmatmul.mubr.bf16.gmra.mrb[0].mxu0 %v1559
        %v1599 = vpop.f32.mrb[0].mxu0
        %v1600 = vadd.f32 0.0, %v1599
        %v1601 = vpop.f32.mrb[0].mxu0
        %v1602 = vpop.f32.mrb[0].mxu0
        %v1603 = vpop.f32.mrb[0].mxu0
        %1604 = vdwg.mxu0
        %v1606 = vsel %vm1248, %v1555, 0
        %v1609 = vsel %vm1561, %v1241, 0
        %1611 = vmatprep.subr.bf16.mxu0 0
        %1612 = vmatpush1.bf16.msra.mxu0 %v1609
        %1613 = vmatprep.subr.bf16.mxu0 0
        %1614 = vmatpush1.bf16.msra.mxu0 0
        %1615 = vmatprep.subr.bf16.mxu0 0
        %1616 = vmatpush1.bf16.msra.mxu0 0
        %1617 = vmatprep.subr.bf16.mxu0 0
        %1618 = vmatpush1.bf16.msra.mxu0 0
        %1619 = vmatprep.subr.bf16.mxu0 0
        %1620 = vmatpush1.bf16.msra.mxu0 0
        %1621 = vmatprep.subr.bf16.mxu0 0
        %1622 = vmatpush1.bf16.msra.mxu0 0
        %1623 = vmatprep.subr.bf16.mxu0 0
        %1624 = vmatpush1.bf16.msra.mxu0 0
        %1625 = vmatprep.subr.bf16.mxu0 0
        %1626 = vmatpush1.bf16.msra.mxu0 0
        %1627 = vmatprep.subr.bf16.mxu0 0
        %1628 = vmatpush1.bf16.msra.mxu0 0
        %1629 = vmatprep.subr.bf16.mxu0 0
        %1630 = vmatpush1.bf16.msra.mxu0 0
        %1631 = vmatprep.subr.bf16.mxu0 0
        %1632 = vmatpush1.bf16.msra.mxu0 0
        %1633 = vmatprep.subr.bf16.mxu0 0
        %1634 = vmatpush1.bf16.msra.mxu0 0
        %1635 = vmatprep.subr.bf16.mxu0 0
        %1636 = vmatpush1.bf16.msra.mxu0 0
        %1637 = vmatprep.subr.bf16.mxu0 0
        %1638 = vmatpush1.bf16.msra.mxu0 0
        %1639 = vmatprep.subr.bf16.mxu0 0
        %1640 = vmatpush1.bf16.msra.mxu0 0
        %1641 = vmatprep.subr.bf16.mxu0 0
        %1642 = vmatpush1.bf16.msra.mxu0 0
        %1643 = vmatprep.mubr.bf16.mxu0 0
        %1644 = vmatmul.mubr.bf16.gmra.mrb[0].mxu0 %v1606
        %v1645 = vpop.f32.mrb[0].mxu0
        %v1646 = vadd.f32 0.0, %v1645
        %v1647 = vpop.f32.mrb[0].mxu0
        %v1648 = vpop.f32.mrb[0].mxu0
        %v1649 = vpop.f32.mrb[0].mxu0
        %1650 = vdwg.mxu0
        %v1652 = vsel %vm1248, %v1556, 0
        %v1655 = vsel %vm1561, %v1242, 0
        %1657 = vmatprep.subr.bf16.mxu0 0
        %1658 = vmatpush1.bf16.msra.mxu0 %v1655
        %1659 = vmatprep.subr.bf16.mxu0 0
        %1660 = vmatpush1.bf16.msra.mxu0 0
        %1661 = vmatprep.subr.bf16.mxu0 0
        %1662 = vmatpush1.bf16.msra.mxu0 0
        %1663 = vmatprep.subr.bf16.mxu0 0
        %1664 = vmatpush1.bf16.msra.mxu0 0
        %1665 = vmatprep.subr.bf16.mxu0 0
        %1666 = vmatpush1.bf16.msra.mxu0 0
        %1667 = vmatprep.subr.bf16.mxu0 0
        %1668 = vmatpush1.bf16.msra.mxu0 0
        %1669 = vmatprep.subr.bf16.mxu0 0
        %1670 = vmatpush1.bf16.msra.mxu0 0
        %1671 = vmatprep.subr.bf16.mxu0 0
        %1672 = vmatpush1.bf16.msra.mxu0 0
        %1673 = vmatprep.subr.bf16.mxu0 0
        %1674 = vmatpush1.bf16.msra.mxu0 0
        %1675 = vmatprep.subr.bf16.mxu0 0
        %1676 = vmatpush1.bf16.msra.mxu0 0
        %1677 = vmatprep.subr.bf16.mxu0 0
        %1678 = vmatpush1.bf16.msra.mxu0 0
        %1679 = vmatprep.subr.bf16.mxu0 0
        %1680 = vmatpush1.bf16.msra.mxu0 0
        %1681 = vmatprep.subr.bf16.mxu0 0
        %1682 = vmatpush1.bf16.msra.mxu0 0
        %1683 = vmatprep.subr.bf16.mxu0 0
        %1684 = vmatpush1.bf16.msra.mxu0 0
        %1685 = vmatprep.subr.bf16.mxu0 0
        %1686 = vmatpush1.bf16.msra.mxu0 0
        %1687 = vmatprep.subr.bf16.mxu0 0
        %1688 = vmatpush1.bf16.msra.mxu0 0
        %1689 = vmatprep.mubr.bf16.mxu0 0
        %1690 = vmatmul.mubr.bf16.gmra.mrb[0].mxu0 %v1652
        %v1691 = vpop.f32.mrb[0].mxu0
        %v1692 = vadd.f32 0.0, %v1691
        %v1693 = vpop.f32.mrb[0].mxu0
        %v1694 = vpop.f32.mrb[0].mxu0
        %v1695 = vpop.f32.mrb[0].mxu0
        %1696 = vdwg.mxu0
        %v1698 = vsel %vm1248, %v1557, 0
        %v1701 = vsel %vm1561, %v1243, 0
        %1703 = vmatprep.subr.bf16.mxu0 0
        %1704 = vmatpush1.bf16.msra.mxu0 %v1701
        %1705 = vmatprep.subr.bf16.mxu0 0
        %1706 = vmatpush1.bf16.msra.mxu0 0
        %1707 = vmatprep.subr.bf16.mxu0 0
        %1708 = vmatpush1.bf16.msra.mxu0 0
        %1709 = vmatprep.subr.bf16.mxu0 0
        %1710 = vmatpush1.bf16.msra.mxu0 0
        %1711 = vmatprep.subr.bf16.mxu0 0
        %1712 = vmatpush1.bf16.msra.mxu0 0
        %1713 = vmatprep.subr.bf16.mxu0 0
        %1714 = vmatpush1.bf16.msra.mxu0 0
        %1715 = vmatprep.subr.bf16.mxu0 0
        %1716 = vmatpush1.bf16.msra.mxu0 0
        %1717 = vmatprep.subr.bf16.mxu0 0
        %1718 = vmatpush1.bf16.msra.mxu0 0
        %1719 = vmatprep.subr.bf16.mxu0 0
        %1720 = vmatpush1.bf16.msra.mxu0 0
        %1721 = vmatprep.subr.bf16.mxu0 0
        %1722 = vmatpush1.bf16.msra.mxu0 0
        %1723 = vmatprep.subr.bf16.mxu0 0
        %1724 = vmatpush1.bf16.msra.mxu0 0
        %1725 = vmatprep.subr.bf16.mxu0 0
        %1726 = vmatpush1.bf16.msra.mxu0 0
        %1727 = vmatprep.subr.bf16.mxu0 0
        %1728 = vmatpush1.bf16.msra.mxu0 0
        %1729 = vmatprep.subr.bf16.mxu0 0
        %1730 = vmatpush1.bf16.msra.mxu0 0
        %1731 = vmatprep.subr.bf16.mxu0 0
        %1732 = vmatpush1.bf16.msra.mxu0 0
        %1733 = vmatprep.subr.bf16.mxu0 0
        %1734 = vmatpush1.bf16.msra.mxu0 0
        %1735 = vmatprep.mubr.bf16.mxu0 0
        %1736 = vmatmul.mubr.bf16.gmra.mrb[0].mxu0 %v1698
        %v1737 = vpop.f32.mrb[0].mxu0
        %v1738 = vadd.f32 0.0, %v1737
        %v1739 = vpop.f32.mrb[0].mxu0
        %v1740 = vpop.f32.mrb[0].mxu0
        %v1741 = vpop.f32.mrb[0].mxu0
        %1742 = vdwg.mxu0
        %v1743 = vadd.f32 %v1550, %v1600
        %v1744 = vadd.f32 %v1551, %v1646
        %v1745 = vadd.f32 %v1552, %v1692
        %v1746 = vadd.f32 %v1553, %v1738
        %1747 = vst.msk [vmem:[#allocation5] sm:$0xff] %vm1248, %v1743
        %1748 = vst.msk [vmem:[#allocation5 + $0x8] sm:$0xff] %vm1248, %v1744
        %1749 = vst.msk [vmem:[#allocation5 + $0x10] sm:$0xff] %vm1248, %v1745
        %1750 = vst.msk [vmem:[#allocation5 + $0x18] sm:$0xff] %vm1248, %v1746
        %1751 = vst.msk [vmem:[#allocation3] sm:$0xff] %vm1521, %v1449
        %1752 = vst.msk [vmem:[#allocation3 + $0x8] sm:$0xff] %vm1521, %v1450
        %1753 = vst.msk [vmem:[#allocation3 + $0x10] sm:$0xff] %vm1521, %v1451
        %1754 = vst.msk [vmem:[#allocation3 + $0x18] sm:$0xff] %vm1521, %v1452
        // Predicated region
        $region185: #{memorizing_transformer_forward.11} parent=99 // pred_check
          %p1755 = pneg %p994
        $region186: #{memorizing_transformer_forward.11} parent=99 // pred_check_branch
          %1757 = sbr.rel (%p1755) target = $region188
        $region187: #{memorizing_transformer_forward.11} parent=99 // pred_region
          %v1758 = vld [vmem:[#allocation5] sm:$0xff]
          %v1759 = vld [vmem:[#allocation5 + $0x8] sm:$0xff]
          %v1760 = vld [vmem:[#allocation5 + $0x10] sm:$0xff]
          %v1761 = vld [vmem:[#allocation5 + $0x18] sm:$0xff]
          %v1762 = vld [vmem:[#allocation4] sm:$0xff]
          %v1763 = vld [vmem:[#allocation4 + $0x8] sm:$0xff]
          %v1764 = vld [vmem:[#allocation4 + $0x10] sm:$0xff]
          %v1765 = vld [vmem:[#allocation4 + $0x18] sm:$0xff]
          %v1766 = vrcp.pop %v1762
          %v1767 = vrcp.pop %v1763
          %v1768 = vrcp.pop %v1764
          %v1769 = vrcp.pop %v1765
          %1771 = vset.pattern.permute.xlu0 0
          %1772 = vperm.xlu0 %1771, %v1766
          %v1773 = vpop.permute.xlu0 %1772
          %1776 = vset.pattern.permute.xlu0 0
          %1777 = vperm.xlu0 %1776, %v1767
          %v1778 = vpop.permute.xlu0 %1777
          %1781 = vset.pattern.permute.xlu0 0
          %1782 = vperm.xlu0 %1781, %v1768
          %v1783 = vpop.permute.xlu0 %1782
          %1786 = vset.pattern.permute.xlu0 0
          %1787 = vperm.xlu0 %1786, %v1769
          %v1788 = vpop.permute.xlu0 %1787
          %v1790 = vmul.f32 %v1758, %v1773
          %v1791 = vmul.f32 %v1759, %v1778
          %v1792 = vmul.f32 %v1760, %v1783
          %v1793 = vmul.f32 %v1761, %v1788
          %v1794 = vcombine.low %v1790, %v1792
          %v1795 = vcombine.high %v1790, %v1792
          %v1797 = vunpack.c.l.s4 1983009808
          %v1798 = vunpack.c.0.s8 %v1797
          %v1799 = vlaneseq
          %v1800 = vshrl.u32 %v1799, 7
          %v1801 = vsub.s32 %v1798, %v1800
          %v1802 = vrot.slane %v1794, %v1801
          %v1804 = vunpack.c.l.s4 1983009808
          %v1805 = vunpack.c.0.s8 %v1804
          %v1806 = vlaneseq
          %v1807 = vshrl.u32 %v1806, 7
          %v1808 = vsub.s32 %v1805, %v1807
          %v1809 = vrot.slane %v1795, %v1808
          %v1810 = vcombine.low %v1791, %v1793
          %v1811 = vcombine.high %v1791, %v1793
          %v1813 = vunpack.c.l.s4 1983009808
          %v1814 = vunpack.c.0.s8 %v1813
          %v1815 = vlaneseq
          %v1816 = vshrl.u32 %v1815, 7
          %v1817 = vsub.s32 %v1814, %v1816
          %v1818 = vrot.slane %v1810, %v1817
          %v1820 = vunpack.c.l.s4 1983009808
          %v1821 = vunpack.c.0.s8 %v1820
          %v1822 = vlaneseq
          %v1823 = vshrl.u32 %v1822, 7
          %v1824 = vsub.s32 %v1821, %v1823
          %v1825 = vrot.slane %v1811, %v1824
          %v1826 = vcombine.low %v1802, %v1818
          %v1827 = vcombine.high %v1802, %v1818
          %v1829 = vunpack.c.l.s4 1934713408
          %v1830 = vunpack.c.0.s8 %v1829
          %v1831 = vlaneseq
          %v1832 = vshrl.u32 %v1831, 7
          %v1833 = vsub.s32 %v1830, %v1832
          %v1834 = vrot.slane %v1826, %v1833
          %v1836 = vunpack.c.l.s4 1934713408
          %v1837 = vunpack.c.0.s8 %v1836
          %v1838 = vlaneseq
          %v1839 = vshrl.u32 %v1838, 7
          %v1840 = vsub.s32 %v1837, %v1839
          %v1841 = vrot.slane %v1827, %v1840
          %v1842 = vcombine.low %v1809, %v1825
          %v1843 = vcombine.high %v1809, %v1825
          %v1845 = vunpack.c.l.s4 1934713408
          %v1846 = vunpack.c.0.s8 %v1845
          %v1847 = vlaneseq
          %v1848 = vshrl.u32 %v1847, 7
          %v1849 = vsub.s32 %v1846, %v1848
          %v1850 = vrot.slane %v1842, %v1849
          %v1852 = vunpack.c.l.s4 1934713408
          %v1853 = vunpack.c.0.s8 %v1852
          %v1854 = vlaneseq
          %v1855 = vshrl.u32 %v1854, 7
          %v1856 = vsub.s32 %v1853, %v1855
          %v1857 = vrot.slane %v1843, %v1856
          %v1858 = vcombine.high %v1834, 0.0
          %v1859 = vcombine.high %v1841, 0.0
          %v1860 = vcombine.high %v1850, 0.0
          %v1861 = vcombine.high %v1857, 0.0
          %v1862 = vcombine.low %v1834, %v1841
          %v1864 = vunpack.c.l.s4 1983009808
          %v1865 = vunpack.c.0.s8 %v1864
          %v1866 = vlaneseq
          %v1867 = vshrl.u32 %v1866, 7
          %v1868 = vsub.s32 %v1865, %v1867
          %v1869 = vrot.slane %v1862, %v1868
          %v1870 = vcombine.low %v1858, %v1859
          %v1872 = vunpack.c.l.s4 1983009808
          %v1873 = vunpack.c.0.s8 %v1872
          %v1874 = vlaneseq
          %v1875 = vshrl.u32 %v1874, 7
          %v1876 = vsub.s32 %v1873, %v1875
          %v1877 = vrot.slane %v1870, %v1876
          %v1878 = vcombine.low %v1850, %v1857
          %v1880 = vunpack.c.l.s4 1983009808
          %v1881 = vunpack.c.0.s8 %v1880
          %v1882 = vlaneseq
          %v1883 = vshrl.u32 %v1882, 7
          %v1884 = vsub.s32 %v1881, %v1883
          %v1885 = vrot.slane %v1878, %v1884
          %v1886 = vcombine.low %v1860, %v1861
          %v1888 = vunpack.c.l.s4 1983009808
          %v1889 = vunpack.c.0.s8 %v1888
          %v1890 = vlaneseq
          %v1891 = vshrl.u32 %v1890, 7
          %v1892 = vsub.s32 %v1889, %v1891
          %v1893 = vrot.slane %v1886, %v1892
          %v1894 = vcombine.low %v1869, %v1877
          %v1895 = vcombine.high %v1869, %v1877
          %v1897 = vunpack.c.l.s4 1934713408
          %v1898 = vunpack.c.0.s8 %v1897
          %v1899 = vlaneseq
          %v1900 = vshrl.u32 %v1899, 7
          %v1901 = vsub.s32 %v1898, %v1900
          %v1902 = vrot.slane %v1894, %v1901
          %v1904 = vunpack.c.l.s4 1934713408
          %v1905 = vunpack.c.0.s8 %v1904
          %v1906 = vlaneseq
          %v1907 = vshrl.u32 %v1906, 7
          %v1908 = vsub.s32 %v1905, %v1907
          %v1909 = vrot.slane %v1895, %v1908
          %v1910 = vcombine.low %v1885, %v1893
          %v1911 = vcombine.high %v1885, %v1893
          %v1913 = vunpack.c.l.s4 1934713408
          %v1914 = vunpack.c.0.s8 %v1913
          %v1915 = vlaneseq
          %v1916 = vshrl.u32 %v1915, 7
          %v1917 = vsub.s32 %v1914, %v1916
          %v1918 = vrot.slane %v1910, %v1917
          %v1920 = vunpack.c.l.s4 1934713408
          %v1921 = vunpack.c.0.s8 %v1920
          %v1922 = vlaneseq
          %v1923 = vshrl.u32 %v1922, 7
          %v1924 = vsub.s32 %v1921, %v1923
          %v1925 = vrot.slane %v1911, %v1924
          %v1926 = vcombine.low %v1902, %v1918
          %v1927 = vcombine.high %v1902, %v1918
          %v1928 = vcombine.low %v1909, %v1925
          %v1929 = vcombine.high %v1909, %v1925
          %1931 = vrot.lane.b32.xlu0 %v1927, 8
          %v1932 = vpop.permute.xlu0 %1931
          %1935 = vrot.lane.b32.xlu0 %v1928, 16
          %v1936 = vpop.permute.xlu0 %1935
          %1939 = vrot.lane.b32.xlu0 %v1929, 24
          %v1940 = vpop.permute.xlu0 %1939
          %v1942 = vsel %vm1248, %v1926, %v1932
          %vm1943 = vcmask 130048
          %v1944 = vsel %vm1943, %v1942, %v1936
          %vm1945 = vcmask 195584
          %v1946 = vsel %vm1945, %v1944, %v1940
          %v1947 = vld [vmem:[#allocation2] sm:$0xf]
          %v1948 = vld [vmem:[#allocation2 + $0x4] sm:$0xf]
          %v1949 = vld [vmem:[#allocation2 + $0x8] sm:$0xf]
          %v1950 = vld [vmem:[#allocation2 + $0xc] sm:$0xf]
          %v1951 = vld [vmem:[#allocation12] sm:$0xf]
          %v1952 = vld [vmem:[#allocation12 + $0x4] sm:$0xf]
          %v1953 = vld [vmem:[#allocation12 + $0x8] sm:$0xf]
          %v1954 = vld [vmem:[#allocation12 + $0xc] sm:$0xf]
          %v1955 = vld [vmem:[#allocation12 + $0x10] sm:$0xf]
          %v1956 = vld [vmem:[#allocation12 + $0x14] sm:$0xf]
          %v1957 = vld [vmem:[#allocation12 + $0x18] sm:$0xf]
          %v1958 = vld [vmem:[#allocation12 + $0x1c] sm:$0xf]
          %v1959 = vld [vmem:[#allocation15] sm:$0x1]
          %v1961 = vlaneseq
          %v1962 = vshrl.u32 %v1961, 7
          %v1963 = vsub.s32 0, %v1962
          %v1964 = vrot.slane %v1959, %v1963
          %v1968 = vunpack.c.l.b16 %v1951
          %v1969 = vunpack.c.l.b16 %v1952
          %v1970 = vpack.c.b16 %v1969, %v1968
          %v1972 = vsel %vm1248, %v1947, 0
          %v1975 = vsel %vm1248, %v1970, 0
          %1977 = vmatprep.subr.bf16.mxu0 0
          %1978 = vmatpush1.bf16.xpose.msra.mxu0 %v1975
          %1979 = vmatprep.subr.bf16.mxu0 0
          %1980 = vmatpush1.bf16.xpose.msra.mxu0 0
          %1981 = vmatprep.subr.bf16.mxu0 0
          %1982 = vmatpush1.bf16.xpose.msra.mxu0 0
          %1983 = vmatprep.subr.bf16.mxu0 0
          %1984 = vmatpush1.bf16.xpose.msra.mxu0 0
          %1985 = vmatprep.subr.bf16.mxu0 0
          %1986 = vmatpush1.bf16.xpose.msra.mxu0 0
          %1987 = vmatprep.subr.bf16.mxu0 0
          %1988 = vmatpush1.bf16.xpose.msra.mxu0 0
          %1989 = vmatprep.subr.bf16.mxu0 0
          %1990 = vmatpush1.bf16.xpose.msra.mxu0 0
          %1991 = vmatprep.subr.bf16.mxu0 0
          %1992 = vmatpush1.bf16.xpose.msra.mxu0 0
          %1993 = vmatprep.subr.bf16.mxu0 0
          %1994 = vmatpush1.bf16.xpose.msra.mxu0 0
          %1995 = vmatprep.subr.bf16.mxu0 0
          %1996 = vmatpush1.bf16.xpose.msra.mxu0 0
          %1997 = vmatprep.subr.bf16.mxu0 0
          %1998 = vmatpush1.bf16.xpose.msra.mxu0 0
          %1999 = vmatprep.subr.bf16.mxu0 0
          %2000 = vmatpush1.bf16.xpose.msra.mxu0 0
          %2001 = vmatprep.subr.bf16.mxu0 0
          %2002 = vmatpush1.bf16.xpose.msra.mxu0 0
          %2003 = vmatprep.subr.bf16.mxu0 0
          %2004 = vmatpush1.bf16.xpose.msra.mxu0 0
          %2005 = vmatprep.subr.bf16.mxu0 0
          %2006 = vmatpush1.bf16.xpose.msra.mxu0 0
          %2007 = vmatprep.subr.bf16.mxu0 0
          %2008 = vmatpush1.bf16.xpose.msra.mxu0 0
          %2009 = vmatprep.mubr.bf16.mxu0 0
          %2010 = vmatmul.mubr.bf16.gmra.mrb[0].mxu0 %v1972
          %v2011 = vpop.f32.mrb[0].mxu0
          %v2012 = vadd.f32 %v1964, %v2011
          %v2013 = vpop.f32.mrb[0].mxu0
          %v2014 = vpop.f32.mrb[0].mxu0
          %v2015 = vpop.f32.mrb[0].mxu0
          %2016 = vdwg.mxu0
          %v2019 = vunpack.c.l.b16 %v1953
          %v2020 = vunpack.c.l.b16 %v1954
          %v2021 = vpack.c.b16 %v2020, %v2019
          %v2023 = vsel %vm1248, %v1948, 0
          %v2026 = vsel %vm1248, %v2021, 0
          %2028 = vmatprep.subr.bf16.mxu0 0
          %2029 = vmatpush1.bf16.xpose.msra.mxu0 %v2026
          %2030 = vmatprep.subr.bf16.mxu0 0
          %2031 = vmatpush1.bf16.xpose.msra.mxu0 0
          %2032 = vmatprep.subr.bf16.mxu0 0
          %2033 = vmatpush1.bf16.xpose.msra.mxu0 0
          %2034 = vmatprep.subr.bf16.mxu0 0
          %2035 = vmatpush1.bf16.xpose.msra.mxu0 0
          %2036 = vmatprep.subr.bf16.mxu0 0
          %2037 = vmatpush1.bf16.xpose.msra.mxu0 0
          %2038 = vmatprep.subr.bf16.mxu0 0
          %2039 = vmatpush1.bf16.xpose.msra.mxu0 0
          %2040 = vmatprep.subr.bf16.mxu0 0
          %2041 = vmatpush1.bf16.xpose.msra.mxu0 0
          %2042 = vmatprep.subr.bf16.mxu0 0
          %2043 = vmatpush1.bf16.xpose.msra.mxu0 0
          %2044 = vmatprep.subr.bf16.mxu0 0
          %2045 = vmatpush1.bf16.xpose.msra.mxu0 0
          %2046 = vmatprep.subr.bf16.mxu0 0
          %2047 = vmatpush1.bf16.xpose.msra.mxu0 0
          %2048 = vmatprep.subr.bf16.mxu0 0
          %2049 = vmatpush1.bf16.xpose.msra.mxu0 0
          %2050 = vmatprep.subr.bf16.mxu0 0
          %2051 = vmatpush1.bf16.xpose.msra.mxu0 0
          %2052 = vmatprep.subr.bf16.mxu0 0
          %2053 = vmatpush1.bf16.xpose.msra.mxu0 0
          %2054 = vmatprep.subr.bf16.mxu0 0
          %2055 = vmatpush1.bf16.xpose.msra.mxu0 0
          %2056 = vmatprep.subr.bf16.mxu0 0
          %2057 = vmatpush1.bf16.xpose.msra.mxu0 0
          %2058 = vmatprep.subr.bf16.mxu0 0
          %2059 = vmatpush1.bf16.xpose.msra.mxu0 0
          %2060 = vmatprep.mubr.bf16.mxu0 0
          %2061 = vmatmul.mubr.bf16.gmra.mrb[0].mxu0 %v2023
          %v2062 = vpop.f32.mrb[0].mxu0
          %v2063 = vadd.f32 %v1964, %v2062
          %v2064 = vpop.f32.mrb[0].mxu0
          %v2065 = vpop.f32.mrb[0].mxu0
          %v2066 = vpop.f32.mrb[0].mxu0
          %2067 = vdwg.mxu0
          %v2070 = vunpack.c.l.b16 %v1955
          %v2071 = vunpack.c.l.b16 %v1956
          %v2072 = vpack.c.b16 %v2071, %v2070
          %v2074 = vsel %vm1248, %v1949, 0
          %v2077 = vsel %vm1248, %v2072, 0
          %2079 = vmatprep.subr.bf16.mxu0 0
          %2080 = vmatpush1.bf16.xpose.msra.mxu0 %v2077
          %2081 = vmatprep.subr.bf16.mxu0 0
          %2082 = vmatpush1.bf16.xpose.msra.mxu0 0
          %2083 = vmatprep.subr.bf16.mxu0 0
          %2084 = vmatpush1.bf16.xpose.msra.mxu0 0
          %2085 = vmatprep.subr.bf16.mxu0 0
          %2086 = vmatpush1.bf16.xpose.msra.mxu0 0
          %2087 = vmatprep.subr.bf16.mxu0 0
          %2088 = vmatpush1.bf16.xpose.msra.mxu0 0
          %2089 = vmatprep.subr.bf16.mxu0 0
          %2090 = vmatpush1.bf16.xpose.msra.mxu0 0
          %2091 = vmatprep.subr.bf16.mxu0 0
          %2092 = vmatpush1.bf16.xpose.msra.mxu0 0
          %2093 = vmatprep.subr.bf16.mxu0 0
          %2094 = vmatpush1.bf16.xpose.msra.mxu0 0
          %2095 = vmatprep.subr.bf16.mxu0 0
          %2096 = vmatpush1.bf16.xpose.msra.mxu0 0
          %2097 = vmatprep.subr.bf16.mxu0 0
          %2098 = vmatpush1.bf16.xpose.msra.mxu0 0
          %2099 = vmatprep.subr.bf16.mxu0 0
          %2100 = vmatpush1.bf16.xpose.msra.mxu0 0
          %2101 = vmatprep.subr.bf16.mxu0 0
          %2102 = vmatpush1.bf16.xpose.msra.mxu0 0
          %2103 = vmatprep.subr.bf16.mxu0 0
          %2104 = vmatpush1.bf16.xpose.msra.mxu0 0
          %2105 = vmatprep.subr.bf16.mxu0 0
          %2106 = vmatpush1.bf16.xpose.msra.mxu0 0
          %2107 = vmatprep.subr.bf16.mxu0 0
          %2108 = vmatpush1.bf16.xpose.msra.mxu0 0
          %2109 = vmatprep.subr.bf16.mxu0 0
          %2110 = vmatpush1.bf16.xpose.msra.mxu0 0
          %2111 = vmatprep.mubr.bf16.mxu0 0
          %2112 = vmatmul.mubr.bf16.gmra.mrb[0].mxu0 %v2074
          %v2113 = vpop.f32.mrb[0].mxu0
          %v2114 = vadd.f32 %v1964, %v2113
          %v2115 = vpop.f32.mrb[0].mxu0
          %v2116 = vpop.f32.mrb[0].mxu0
          %v2117 = vpop.f32.mrb[0].mxu0
          %2118 = vdwg.mxu0
          %v2121 = vunpack.c.l.b16 %v1957
          %v2122 = vunpack.c.l.b16 %v1958
          %v2123 = vpack.c.b16 %v2122, %v2121
          %v2125 = vsel %vm1248, %v1950, 0
          %v2128 = vsel %vm1248, %v2123, 0
          %2130 = vmatprep.subr.bf16.mxu0 0
          %2131 = vmatpush1.bf16.xpose.msra.mxu0 %v2128
          %2132 = vmatprep.subr.bf16.mxu0 0
          %2133 = vmatpush1.bf16.xpose.msra.mxu0 0
          %2134 = vmatprep.subr.bf16.mxu0 0
          %2135 = vmatpush1.bf16.xpose.msra.mxu0 0
          %2136 = vmatprep.subr.bf16.mxu0 0
          %2137 = vmatpush1.bf16.xpose.msra.mxu0 0
          %2138 = vmatprep.subr.bf16.mxu0 0
          %2139 = vmatpush1.bf16.xpose.msra.mxu0 0
          %2140 = vmatprep.subr.bf16.mxu0 0
          %2141 = vmatpush1.bf16.xpose.msra.mxu0 0
          %2142 = vmatprep.subr.bf16.mxu0 0
          %2143 = vmatpush1.bf16.xpose.msra.mxu0 0
          %2144 = vmatprep.subr.bf16.mxu0 0
          %2145 = vmatpush1.bf16.xpose.msra.mxu0 0
          %2146 = vmatprep.subr.bf16.mxu0 0
          %2147 = vmatpush1.bf16.xpose.msra.mxu0 0
          %2148 = vmatprep.subr.bf16.mxu0 0
          %2149 = vmatpush1.bf16.xpose.msra.mxu0 0
          %2150 = vmatprep.subr.bf16.mxu0 0
          %2151 = vmatpush1.bf16.xpose.msra.mxu0 0
          %2152 = vmatprep.subr.bf16.mxu0 0
          %2153 = vmatpush1.bf16.xpose.msra.mxu0 0
          %2154 = vmatprep.subr.bf16.mxu0 0
          %2155 = vmatpush1.bf16.xpose.msra.mxu0 0
          %2156 = vmatprep.subr.bf16.mxu0 0
          %2157 = vmatpush1.bf16.xpose.msra.mxu0 0
          %2158 = vmatprep.subr.bf16.mxu0 0
          %2159 = vmatpush1.bf16.xpose.msra.mxu0 0
          %2160 = vmatprep.subr.bf16.mxu0 0
          %2161 = vmatpush1.bf16.xpose.msra.mxu0 0
          %2162 = vmatprep.mubr.bf16.mxu0 0
          %2163 = vmatmul.mubr.bf16.gmra.mrb[0].mxu0 %v2125
          %v2164 = vpop.f32.mrb[0].mxu0
          %v2165 = vadd.f32 %v1964, %v2164
          %v2166 = vpop.f32.mrb[0].mxu0
          %v2167 = vpop.f32.mrb[0].mxu0
          %v2168 = vpop.f32.mrb[0].mxu0
          %2169 = vdwg.mxu0
          %v2170 = vsel %vm1943, %v2012, -inf
          %2171 = vmax.xlane.f32.xlu0 %v2170
          %v2172 = vpop.xlane.xlu0 %2171
          %v2173 = vsel %vm1943, %v2063, -inf
          %2174 = vmax.xlane.f32.xlu0 %v2173
          %v2175 = vpop.xlane.xlu0 %2174
          %v2176 = vsel %vm1943, %v2114, -inf
          %2177 = vmax.xlane.f32.xlu0 %v2176
          %v2178 = vpop.xlane.xlu0 %2177
          %v2179 = vsel %vm1943, %v2165, -inf
          %2180 = vmax.xlane.f32.xlu0 %v2179
          %v2181 = vpop.xlane.xlu0 %2180
          %v2182 = vsub.f32 %v2012, %v2172
          %v2183 = vsub.f32 %v2063, %v2175
          %v2184 = vsub.f32 %v2114, %v2178
          %v2185 = vsub.f32 %v2165, %v2181
          %v2186 = vmul.f32 %v2182, 1.442695
          %v2187 = vpow.pop %v2186
          %v2188 = vmul.f32 %v2183, 1.442695
          %v2189 = vpow.pop %v2188
          %v2190 = vmul.f32 %v2184, 1.442695
          %v2191 = vpow.pop %v2190
          %v2192 = vmul.f32 %v2185, 1.442695
          %v2193 = vpow.pop %v2192
          %v2194 = vsel %vm1943, %v2187, 0.0
          %2195 = vadd.xlane.f32.xlu0 %v2194
          %v2196 = vpop.xlane.xlu0 %2195
          %v2197 = vsel %vm1943, %v2189, 0.0
          %2198 = vadd.xlane.f32.xlu0 %v2197
          %v2199 = vpop.xlane.xlu0 %2198
          %v2200 = vsel %vm1943, %v2191, 0.0
          %2201 = vadd.xlane.f32.xlu0 %v2200
          %v2202 = vpop.xlane.xlu0 %2201
          %v2203 = vsel %vm1943, %v2193, 0.0
          %2204 = vadd.xlane.f32.xlu0 %v2203
          %v2205 = vpop.xlane.xlu0 %2204
          %v2206 = vrcp.pop %v2196
          %v2207 = vrcp.pop %v2199
          %v2208 = vrcp.pop %v2202
          %v2209 = vrcp.pop %v2205
          %v2210 = vmul.f32 %v2187, %v2206
          %v2211 = vmul.f32 %v2189, %v2207
          %v2212 = vmul.f32 %v2191, %v2208
          %v2213 = vmul.f32 %v2193, %v2209
          %v2214 = vpack.c.bf16 %v2210, %v2210
          %v2215 = vpack.c.bf16 %v2211, %v2211
          %v2216 = vpack.c.bf16 %v2212, %v2212
          %v2217 = vpack.c.bf16 %v2213, %v2213
          %v2218 = vld [vmem:[#allocation14] sm:$0xf]
          %v2219 = vld [vmem:[#allocation14 + $0x4] sm:$0xf]
          %v2220 = vld [vmem:[#allocation14 + $0x8] sm:$0xf]
          %v2221 = vld [vmem:[#allocation14 + $0xc] sm:$0xf]
          %v2222 = vld [vmem:[#allocation14 + $0x10] sm:$0xf]
          %v2223 = vld [vmem:[#allocation14 + $0x14] sm:$0xf]
          %v2224 = vld [vmem:[#allocation14 + $0x18] sm:$0xf]
          %v2225 = vld [vmem:[#allocation14 + $0x1c] sm:$0xf]
          %v2228 = vunpack.c.l.b16 %v2218
          %v2229 = vunpack.c.l.b16 %v2219
          %v2230 = vpack.c.b16 %v2229, %v2228
          %v2233 = vsel %vm1943, %v2214, 0
          %2235 = vmatprep.subr.bf16.mxu0 0
          %2236 = vmatpush1.bf16.msra.mxu0 %v2230
          %2237 = vmatprep.subr.bf16.mxu0 0
          %2238 = vmatpush1.bf16.msra.mxu0 0
          %2239 = vmatprep.subr.bf16.mxu0 0
          %2240 = vmatpush1.bf16.msra.mxu0 0
          %2241 = vmatprep.subr.bf16.mxu0 0
          %2242 = vmatpush1.bf16.msra.mxu0 0
          %2243 = vmatprep.subr.bf16.mxu0 0
          %2244 = vmatpush1.bf16.msra.mxu0 0
          %2245 = vmatprep.subr.bf16.mxu0 0
          %2246 = vmatpush1.bf16.msra.mxu0 0
          %2247 = vmatprep.subr.bf16.mxu0 0
          %2248 = vmatpush1.bf16.msra.mxu0 0
          %2249 = vmatprep.subr.bf16.mxu0 0
          %2250 = vmatpush1.bf16.msra.mxu0 0
          %2251 = vmatprep.subr.bf16.mxu0 0
          %2252 = vmatpush1.bf16.msra.mxu0 0
          %2253 = vmatprep.subr.bf16.mxu0 0
          %2254 = vmatpush1.bf16.msra.mxu0 0
          %2255 = vmatprep.subr.bf16.mxu0 0
          %2256 = vmatpush1.bf16.msra.mxu0 0
          %2257 = vmatprep.subr.bf16.mxu0 0
          %2258 = vmatpush1.bf16.msra.mxu0 0
          %2259 = vmatprep.subr.bf16.mxu0 0
          %2260 = vmatpush1.bf16.msra.mxu0 0
          %2261 = vmatprep.subr.bf16.mxu0 0
          %2262 = vmatpush1.bf16.msra.mxu0 0
          %2263 = vmatprep.subr.bf16.mxu0 0
          %2264 = vmatpush1.bf16.msra.mxu0 0
          %2265 = vmatprep.subr.bf16.mxu0 0
          %2266 = vmatpush1.bf16.msra.mxu0 0
          %2267 = vmatprep.mubr.bf16.mxu0 0
          %2268 = vmatmul.mubr.bf16.gmra.mrb[0].mxu0 %v2233
          %v2269 = vpop.f32.mrb[0].mxu0
          %v2270 = vadd.f32 0.0, %v2269
          %v2271 = vpop.f32.mrb[0].mxu0
          %v2272 = vpop.f32.mrb[0].mxu0
          %v2273 = vpop.f32.mrb[0].mxu0
          %2274 = vdwg.mxu0
          %v2277 = vunpack.c.l.b16 %v2220
          %v2278 = vunpack.c.l.b16 %v2221
          %v2279 = vpack.c.b16 %v2278, %v2277
          %v2282 = vsel %vm1943, %v2215, 0
          %2284 = vmatprep.subr.bf16.mxu0 0
          %2285 = vmatpush1.bf16.msra.mxu0 %v2279
          %2286 = vmatprep.subr.bf16.mxu0 0
          %2287 = vmatpush1.bf16.msra.mxu0 0
          %2288 = vmatprep.subr.bf16.mxu0 0
          %2289 = vmatpush1.bf16.msra.mxu0 0
          %2290 = vmatprep.subr.bf16.mxu0 0
          %2291 = vmatpush1.bf16.msra.mxu0 0
          %2292 = vmatprep.subr.bf16.mxu0 0
          %2293 = vmatpush1.bf16.msra.mxu0 0
          %2294 = vmatprep.subr.bf16.mxu0 0
          %2295 = vmatpush1.bf16.msra.mxu0 0
          %2296 = vmatprep.subr.bf16.mxu0 0
          %2297 = vmatpush1.bf16.msra.mxu0 0
          %2298 = vmatprep.subr.bf16.mxu0 0
          %2299 = vmatpush1.bf16.msra.mxu0 0
          %2300 = vmatprep.subr.bf16.mxu0 0
          %2301 = vmatpush1.bf16.msra.mxu0 0
          %2302 = vmatprep.subr.bf16.mxu0 0
          %2303 = vmatpush1.bf16.msra.mxu0 0
          %2304 = vmatprep.subr.bf16.mxu0 0
          %2305 = vmatpush1.bf16.msra.mxu0 0
          %2306 = vmatprep.subr.bf16.mxu0 0
          %2307 = vmatpush1.bf16.msra.mxu0 0
          %2308 = vmatprep.subr.bf16.mxu0 0
          %2309 = vmatpush1.bf16.msra.mxu0 0
          %2310 = vmatprep.subr.bf16.mxu0 0
          %2311 = vmatpush1.bf16.msra.mxu0 0
          %2312 = vmatprep.subr.bf16.mxu0 0
          %2313 = vmatpush1.bf16.msra.mxu0 0
          %2314 = vmatprep.subr.bf16.mxu0 0
          %2315 = vmatpush1.bf16.msra.mxu0 0
          %2316 = vmatprep.mubr.bf16.mxu0 0
          %2317 = vmatmul.mubr.bf16.gmra.mrb[0].mxu0 %v2282
          %v2318 = vpop.f32.mrb[0].mxu0
          %v2319 = vadd.f32 0.0, %v2318
          %v2320 = vpop.f32.mrb[0].mxu0
          %v2321 = vpop.f32.mrb[0].mxu0
          %v2322 = vpop.f32.mrb[0].mxu0
          %2323 = vdwg.mxu0
          %v2326 = vunpack.c.l.b16 %v2222
          %v2327 = vunpack.c.l.b16 %v2223
          %v2328 = vpack.c.b16 %v2327, %v2326
          %v2331 = vsel %vm1943, %v2216, 0
          %2333 = vmatprep.subr.bf16.mxu0 0
          %2334 = vmatpush1.bf16.msra.mxu0 %v2328
          %2335 = vmatprep.subr.bf16.mxu0 0
          %2336 = vmatpush1.bf16.msra.mxu0 0
          %2337 = vmatprep.subr.bf16.mxu0 0
          %2338 = vmatpush1.bf16.msra.mxu0 0
          %2339 = vmatprep.subr.bf16.mxu0 0
          %2340 = vmatpush1.bf16.msra.mxu0 0
          %2341 = vmatprep.subr.bf16.mxu0 0
          %2342 = vmatpush1.bf16.msra.mxu0 0
          %2343 = vmatprep.subr.bf16.mxu0 0
          %2344 = vmatpush1.bf16.msra.mxu0 0
          %2345 = vmatprep.subr.bf16.mxu0 0
          %2346 = vmatpush1.bf16.msra.mxu0 0
          %2347 = vmatprep.subr.bf16.mxu0 0
          %2348 = vmatpush1.bf16.msra.mxu0 0
          %2349 = vmatprep.subr.bf16.mxu0 0
          %2350 = vmatpush1.bf16.msra.mxu0 0
          %2351 = vmatprep.subr.bf16.mxu0 0
          %2352 = vmatpush1.bf16.msra.mxu0 0
          %2353 = vmatprep.subr.bf16.mxu0 0
          %2354 = vmatpush1.bf16.msra.mxu0 0
          %2355 = vmatprep.subr.bf16.mxu0 0
          %2356 = vmatpush1.bf16.msra.mxu0 0
          %2357 = vmatprep.subr.bf16.mxu0 0
          %2358 = vmatpush1.bf16.msra.mxu0 0
          %2359 = vmatprep.subr.bf16.mxu0 0
          %2360 = vmatpush1.bf16.msra.mxu0 0
          %2361 = vmatprep.subr.bf16.mxu0 0
          %2362 = vmatpush1.bf16.msra.mxu0 0
          %2363 = vmatprep.subr.bf16.mxu0 0
          %2364 = vmatpush1.bf16.msra.mxu0 0
          %2365 = vmatprep.mubr.bf16.mxu0 0
          %2366 = vmatmul.mubr.bf16.gmra.mrb[0].mxu0 %v2331
          %v2367 = vpop.f32.mrb[0].mxu0
          %v2368 = vadd.f32 0.0, %v2367
          %v2369 = vpop.f32.mrb[0].mxu0
          %v2370 = vpop.f32.mrb[0].mxu0
          %v2371 = vpop.f32.mrb[0].mxu0
          %2372 = vdwg.mxu0
          %v2375 = vunpack.c.l.b16 %v2224
          %v2376 = vunpack.c.l.b16 %v2225
          %v2377 = vpack.c.b16 %v2376, %v2375
          %v2380 = vsel %vm1943, %v2217, 0
          %2382 = vmatprep.subr.bf16.mxu0 0
          %2383 = vmatpush1.bf16.msra.mxu0 %v2377
          %2384 = vmatprep.subr.bf16.mxu0 0
          %2385 = vmatpush1.bf16.msra.mxu0 0
          %2386 = vmatprep.subr.bf16.mxu0 0
          %2387 = vmatpush1.bf16.msra.mxu0 0
          %2388 = vmatprep.subr.bf16.mxu0 0
          %2389 = vmatpush1.bf16.msra.mxu0 0
          %2390 = vmatprep.subr.bf16.mxu0 0
          %2391 = vmatpush1.bf16.msra.mxu0 0
          %2392 = vmatprep.subr.bf16.mxu0 0
          %2393 = vmatpush1.bf16.msra.mxu0 0
          %2394 = vmatprep.subr.bf16.mxu0 0
          %2395 = vmatpush1.bf16.msra.mxu0 0
          %2396 = vmatprep.subr.bf16.mxu0 0
          %2397 = vmatpush1.bf16.msra.mxu0 0
          %2398 = vmatprep.subr.bf16.mxu0 0
          %2399 = vmatpush1.bf16.msra.mxu0 0
          %2400 = vmatprep.subr.bf16.mxu0 0
          %2401 = vmatpush1.bf16.msra.mxu0 0
          %2402 = vmatprep.subr.bf16.mxu0 0
          %2403 = vmatpush1.bf16.msra.mxu0 0
          %2404 = vmatprep.subr.bf16.mxu0 0
          %2405 = vmatpush1.bf16.msra.mxu0 0
          %2406 = vmatprep.subr.bf16.mxu0 0
          %2407 = vmatpush1.bf16.msra.mxu0 0
          %2408 = vmatprep.subr.bf16.mxu0 0
          %2409 = vmatpush1.bf16.msra.mxu0 0
          %2410 = vmatprep.subr.bf16.mxu0 0
          %2411 = vmatpush1.bf16.msra.mxu0 0
          %2412 = vmatprep.subr.bf16.mxu0 0
          %2413 = vmatpush1.bf16.msra.mxu0 0
          %2414 = vmatprep.mubr.bf16.mxu0 0
          %2415 = vmatmul.mubr.bf16.gmra.mrb[0].mxu0 %v2380
          %v2416 = vpop.f32.mrb[0].mxu0
          %v2417 = vadd.f32 0.0, %v2416
          %v2418 = vpop.f32.mrb[0].mxu0
          %v2419 = vpop.f32.mrb[0].mxu0
          %v2420 = vpop.f32.mrb[0].mxu0
          %2421 = vdwg.mxu0
          %v2422 = vcombine.low %v2270, %v2368
          %v2423 = vcombine.high %v2270, %v2368
          %v2425 = vunpack.c.l.s4 1983009808
          %v2426 = vunpack.c.0.s8 %v2425
          %v2427 = vlaneseq
          %v2428 = vshrl.u32 %v2427, 7
          %v2429 = vsub.s32 %v2426, %v2428
          %v2430 = vrot.slane %v2422, %v2429
          %v2432 = vunpack.c.l.s4 1983009808
          %v2433 = vunpack.c.0.s8 %v2432
          %v2434 = vlaneseq
          %v2435 = vshrl.u32 %v2434, 7
          %v2436 = vsub.s32 %v2433, %v2435
          %v2437 = vrot.slane %v2423, %v2436
          %v2438 = vcombine.low %v2319, %v2417
          %v2439 = vcombine.high %v2319, %v2417
          %v2441 = vunpack.c.l.s4 1983009808
          %v2442 = vunpack.c.0.s8 %v2441
          %v2443 = vlaneseq
          %v2444 = vshrl.u32 %v2443, 7
          %v2445 = vsub.s32 %v2442, %v2444
          %v2446 = vrot.slane %v2438, %v2445
          %v2448 = vunpack.c.l.s4 1983009808
          %v2449 = vunpack.c.0.s8 %v2448
          %v2450 = vlaneseq
          %v2451 = vshrl.u32 %v2450, 7
          %v2452 = vsub.s32 %v2449, %v2451
          %v2453 = vrot.slane %v2439, %v2452
          %v2454 = vcombine.low %v2430, %v2446
          %v2455 = vcombine.high %v2430, %v2446
          %v2457 = vunpack.c.l.s4 1934713408
          %v2458 = vunpack.c.0.s8 %v2457
          %v2459 = vlaneseq
          %v2460 = vshrl.u32 %v2459, 7
          %v2461 = vsub.s32 %v2458, %v2460
          %v2462 = vrot.slane %v2454, %v2461
          %v2464 = vunpack.c.l.s4 1934713408
          %v2465 = vunpack.c.0.s8 %v2464
          %v2466 = vlaneseq
          %v2467 = vshrl.u32 %v2466, 7
          %v2468 = vsub.s32 %v2465, %v2467
          %v2469 = vrot.slane %v2455, %v2468
          %v2470 = vcombine.low %v2437, %v2453
          %v2471 = vcombine.high %v2437, %v2453
          %v2473 = vunpack.c.l.s4 1934713408
          %v2474 = vunpack.c.0.s8 %v2473
          %v2475 = vlaneseq
          %v2476 = vshrl.u32 %v2475, 7
          %v2477 = vsub.s32 %v2474, %v2476
          %v2478 = vrot.slane %v2470, %v2477
          %v2480 = vunpack.c.l.s4 1934713408
          %v2481 = vunpack.c.0.s8 %v2480
          %v2482 = vlaneseq
          %v2483 = vshrl.u32 %v2482, 7
          %v2484 = vsub.s32 %v2481, %v2483
          %v2485 = vrot.slane %v2471, %v2484
          %v2486 = vcombine.high %v2462, 0.0
          %v2487 = vcombine.high %v2469, 0.0
          %v2488 = vcombine.high %v2478, 0.0
          %v2489 = vcombine.high %v2485, 0.0
          %v2490 = vcombine.low %v2462, %v2469
          %v2492 = vunpack.c.l.s4 1983009808
          %v2493 = vunpack.c.0.s8 %v2492
          %v2494 = vlaneseq
          %v2495 = vshrl.u32 %v2494, 7
          %v2496 = vsub.s32 %v2493, %v2495
          %v2497 = vrot.slane %v2490, %v2496
          %v2498 = vcombine.low %v2486, %v2487
          %v2500 = vunpack.c.l.s4 1983009808
          %v2501 = vunpack.c.0.s8 %v2500
          %v2502 = vlaneseq
          %v2503 = vshrl.u32 %v2502, 7
          %v2504 = vsub.s32 %v2501, %v2503
          %v2505 = vrot.slane %v2498, %v2504
          %v2506 = vcombine.low %v2478, %v2485
          %v2508 = vunpack.c.l.s4 1983009808
          %v2509 = vunpack.c.0.s8 %v2508
          %v2510 = vlaneseq
          %v2511 = vshrl.u32 %v2510, 7
          %v2512 = vsub.s32 %v2509, %v2511
          %v2513 = vrot.slane %v2506, %v2512
          %v2514 = vcombine.low %v2488, %v2489
          %v2516 = vunpack.c.l.s4 1983009808
          %v2517 = vunpack.c.0.s8 %v2516
          %v2518 = vlaneseq
          %v2519 = vshrl.u32 %v2518, 7
          %v2520 = vsub.s32 %v2517, %v2519
          %v2521 = vrot.slane %v2514, %v2520
          %v2522 = vcombine.low %v2497, %v2505
          %v2523 = vcombine.high %v2497, %v2505
          %v2525 = vunpack.c.l.s4 1934713408
          %v2526 = vunpack.c.0.s8 %v2525
          %v2527 = vlaneseq
          %v2528 = vshrl.u32 %v2527, 7
          %v2529 = vsub.s32 %v2526, %v2528
          %v2530 = vrot.slane %v2522, %v2529
          %v2532 = vunpack.c.l.s4 1934713408
          %v2533 = vunpack.c.0.s8 %v2532
          %v2534 = vlaneseq
          %v2535 = vshrl.u32 %v2534, 7
          %v2536 = vsub.s32 %v2533, %v2535
          %v2537 = vrot.slane %v2523, %v2536
          %v2538 = vcombine.low %v2513, %v2521
          %v2539 = vcombine.high %v2513, %v2521
          %v2541 = vunpack.c.l.s4 1934713408
          %v2542 = vunpack.c.0.s8 %v2541
          %v2543 = vlaneseq
          %v2544 = vshrl.u32 %v2543, 7
          %v2545 = vsub.s32 %v2542, %v2544
          %v2546 = vrot.slane %v2538, %v2545
          %v2548 = vunpack.c.l.s4 1934713408
          %v2549 = vunpack.c.0.s8 %v2548
          %v2550 = vlaneseq
          %v2551 = vshrl.u32 %v2550, 7
          %v2552 = vsub.s32 %v2549, %v2551
          %v2553 = vrot.slane %v2539, %v2552
          %v2554 = vcombine.low %v2530, %v2546
          %v2555 = vcombine.high %v2530, %v2546
          %v2556 = vcombine.low %v2537, %v2553
          %v2557 = vcombine.high %v2537, %v2553
          %2559 = vrot.lane.b32.xlu0 %v2555, 8
          %v2560 = vpop.permute.xlu0 %2559
          %2563 = vrot.lane.b32.xlu0 %v2556, 16
          %v2564 = vpop.permute.xlu0 %2563
          %2567 = vrot.lane.b32.xlu0 %v2557, 24
          %v2568 = vpop.permute.xlu0 %2567
          %v2570 = vsel %vm1248, %v2554, %v2560
          %v2571 = vsel %vm1943, %v2570, %v2564
          %v2572 = vsel %vm1945, %v2571, %v2568
          %v2573 = vld [vmem:[#allocation17] sm:$0x1]
          %v2575 = vlaneseq
          %v2576 = vshrl.u32 %v2575, 7
          %v2577 = vsub.s32 0, %v2576
          %v2578 = vrot.slane %v2573, %v2577
          %v2580 = vmul.f32 %v2578, %v1946
          %v2581 = vld [vmem:[#allocation18] sm:$0x1]
          %v2583 = vlaneseq
          %v2584 = vshrl.u32 %v2583, 7
          %v2585 = vsub.s32 0, %v2584
          %v2586 = vrot.slane %v2581, %v2585
          %v2588 = vmul.f32 %v2586, %v2572
          %v2589 = vadd.f32 %v2580, %v2588
          %v2590 = vld [vmem:[%s840] sm:$0xff]
          %v2591 = vpack.c.bf16 %v2589, %v2589
          %v2592 = vld [vmem:[#allocation23] sm:$0xf]
          %v2593 = vld [vmem:[#allocation23 + $0x4] sm:$0xf]
          %v2594 = vld [vmem:[#allocation23 + $0x8] sm:$0xf]
          %v2595 = vld [vmem:[#allocation23 + $0xc] sm:$0xf]
          %v2596 = vld [vmem:[#allocation24] sm:$0x1]
          %v2598 = vlaneseq
          %v2599 = vshrl.u32 %v2598, 7
          %v2600 = vsub.s32 0, %v2599
          %v2601 = vrot.slane %v2596, %v2600
          %v2607 = vunpack.c.l.b16 %v2592
          %v2608 = vunpack.c.l.b16 %v2593
          %v2609 = vunpack.c.l.b16 %v2594
          %v2610 = vunpack.c.l.b16 %v2595
          %v2611 = vpack.c.b16 %v2608, %v2607
          %v2612 = vpack.c.b16 %v2610, %v2609
          %vm2615 = vcmask 261120
          %v2617 = vsel %vm2615, %v2591, 0
          %2619 = vmatprep.subr.bf16.mxu0 0
          %2620 = vmatpush1.bf16.msra.mxu0 %v2611
          %2621 = vmatprep.subr.bf16.mxu0 0
          %2622 = vmatpush1.bf16.msra.mxu0 %v2612
          %2623 = vmatprep.subr.bf16.mxu0 0
          %2624 = vmatpush1.bf16.msra.mxu0 0
          %2625 = vmatprep.subr.bf16.mxu0 0
          %2626 = vmatpush1.bf16.msra.mxu0 0
          %2627 = vmatprep.subr.bf16.mxu0 0
          %2628 = vmatpush1.bf16.msra.mxu0 0
          %2629 = vmatprep.subr.bf16.mxu0 0
          %2630 = vmatpush1.bf16.msra.mxu0 0
          %2631 = vmatprep.subr.bf16.mxu0 0
          %2632 = vmatpush1.bf16.msra.mxu0 0
          %2633 = vmatprep.subr.bf16.mxu0 0
          %2634 = vmatpush1.bf16.msra.mxu0 0
          %2635 = vmatprep.subr.bf16.mxu0 0
          %2636 = vmatpush1.bf16.msra.mxu0 0
          %2637 = vmatprep.subr.bf16.mxu0 0
          %2638 = vmatpush1.bf16.msra.mxu0 0
          %2639 = vmatprep.subr.bf16.mxu0 0
          %2640 = vmatpush1.bf16.msra.mxu0 0
          %2641 = vmatprep.subr.bf16.mxu0 0
          %2642 = vmatpush1.bf16.msra.mxu0 0
          %2643 = vmatprep.subr.bf16.mxu0 0
          %2644 = vmatpush1.bf16.msra.mxu0 0
          %2645 = vmatprep.subr.bf16.mxu0 0
          %2646 = vmatpush1.bf16.msra.mxu0 0
          %2647 = vmatprep.subr.bf16.mxu0 0
          %2648 = vmatpush1.bf16.msra.mxu0 0
          %2649 = vmatprep.subr.bf16.mxu0 0
          %2650 = vmatpush1.bf16.msra.mxu0 0
          %2651 = vmatprep.mubr.bf16.mxu0 0
          %2652 = vmatmul.mubr.bf16.gmra.mrb[0].mxu0 %v2617
          %v2653 = vpop.f32.mrb[0].mxu0
          %v2654 = vadd.f32 %v2601, %v2653
          %v2655 = vpop.f32.mrb[0].mxu0
          %v2656 = vpop.f32.mrb[0].mxu0
          %v2657 = vpop.f32.mrb[0].mxu0
          %2658 = vdwg.mxu0
          %v2659 = vadd.f32 %v2590, %v2654
          %v2660 = vld [vmem:[#allocation26] sm:$0x1]
          %v2661 = vld [vmem:[#allocation27] sm:$0x1]
          %v2662 = vsel %vm2615, %v2659, 0.0
          %2663 = vadd.xlane.f32.xlu0 %v2662
          %v2664 = vpop.xlane.xlu0 %2663
          %v2665 = vrcp.pop 32.0
          %v2666 = vmul.f32 %v2664, %v2665
          %v2667 = vsub.f32 %v2659, %v2666
          %v2668 = vmul.f32 %v2667, %v2667
          %v2669 = vsel %vm2615, %v2668, 0.0
          %2670 = vadd.xlane.f32.xlu0 %v2669
          %v2671 = vpop.xlane.xlu0 %2670
          %v2672 = vmul.f32 %v2671, %v2665
          %v2673 = vadd.f32 %v2672, 1e-12
          %v2674 = vrsqrt.pop %v2673
          %v2675 = vmul.f32 %v2667, %v2674
          %v2677 = vlaneseq
          %v2678 = vshrl.u32 %v2677, 7
          %v2679 = vsub.s32 0, %v2678
          %v2680 = vrot.slane %v2660, %v2679
          %v2682 = vmul.f32 %v2675, %v2680
          %v2684 = vlaneseq
          %v2685 = vshrl.u32 %v2684, 7
          %v2686 = vsub.s32 0, %v2685
          %v2687 = vrot.slane %v2661, %v2686
          %v2689 = vadd.f32 %v2682, %v2687
          %v2690 = vpack.c.bf16 %v2689, %v2689
          %v2691 = vld [vmem:[#allocation29] sm:$0xf]
          %v2692 = vld [vmem:[#allocation29 + $0x4] sm:$0xf]
          %v2693 = vld [vmem:[#allocation29 + $0x8] sm:$0xf]
          %v2694 = vld [vmem:[#allocation29 + $0xc] sm:$0xf]
          %v2695 = vld [vmem:[#allocation30] sm:$0x1]
          %v2697 = vlaneseq
          %v2698 = vshrl.u32 %v2697, 7
          %v2699 = vsub.s32 0, %v2698
          %v2700 = vrot.slane %v2695, %v2699
          %v2706 = vunpack.c.l.b16 %v2691
          %v2707 = vunpack.c.l.b16 %v2692
          %v2708 = vunpack.c.l.b16 %v2693
          %v2709 = vunpack.c.l.b16 %v2694
          %v2710 = vpack.c.b16 %v2707, %v2706
          %v2711 = vpack.c.b16 %v2709, %v2708
          %v2715 = vsel %vm2615, %v2690, 0
          %2717 = vmatprep.subr.bf16.mxu0 0
          %2718 = vmatpush1.bf16.msra.mxu0 %v2710
          %2719 = vmatprep.subr.bf16.mxu0 0
          %2720 = vmatpush1.bf16.msra.mxu0 %v2711
          %2721 = vmatprep.subr.bf16.mxu0 0
          %2722 = vmatpush1.bf16.msra.mxu0 0
          %2723 = vmatprep.subr.bf16.mxu0 0
          %2724 = vmatpush1.bf16.msra.mxu0 0
          %2725 = vmatprep.subr.bf16.mxu0 0
          %2726 = vmatpush1.bf16.msra.mxu0 0
          %2727 = vmatprep.subr.bf16.mxu0 0
          %2728 = vmatpush1.bf16.msra.mxu0 0
          %2729 = vmatprep.subr.bf16.mxu0 0
          %2730 = vmatpush1.bf16.msra.mxu0 0
          %2731 = vmatprep.subr.bf16.mxu0 0
          %2732 = vmatpush1.bf16.msra.mxu0 0
          %2733 = vmatprep.subr.bf16.mxu0 0
          %2734 = vmatpush1.bf16.msra.mxu0 0
          %2735 = vmatprep.subr.bf16.mxu0 0
          %2736 = vmatpush1.bf16.msra.mxu0 0
          %2737 = vmatprep.subr.bf16.mxu0 0
          %2738 = vmatpush1.bf16.msra.mxu0 0
          %2739 = vmatprep.subr.bf16.mxu0 0
          %2740 = vmatpush1.bf16.msra.mxu0 0
          %2741 = vmatprep.subr.bf16.mxu0 0
          %2742 = vmatpush1.bf16.msra.mxu0 0
          %2743 = vmatprep.subr.bf16.mxu0 0
          %2744 = vmatpush1.bf16.msra.mxu0 0
          %2745 = vmatprep.subr.bf16.mxu0 0
          %2746 = vmatpush1.bf16.msra.mxu0 0
          %2747 = vmatprep.subr.bf16.mxu0 0
          %2748 = vmatpush1.bf16.msra.mxu0 0
          %2749 = vmatprep.mubr.bf16.mxu0 0
          %2750 = vmatmul.mubr.bf16.gmra.mrb[0].mxu0 %v2715
          %v2751 = vpop.f32.mrb[0].mxu0
          %v2752 = vadd.f32 %v2700, %v2751
          %v2753 = vpop.f32.mrb[0].mxu0
          %v2754 = vpop.f32.mrb[0].mxu0
          %v2755 = vpop.f32.mrb[0].mxu0
          %2756 = vdwg.mxu0
          %v2757 = vmax.f32 %v2752, 0.0
          %v2758 = vpack.c.bf16 %v2757, %v2757
          %v2759 = vld [vmem:[#allocation32] sm:$0xf]
          %v2760 = vld [vmem:[#allocation32 + $0x4] sm:$0xf]
          %v2761 = vld [vmem:[#allocation32 + $0x8] sm:$0xf]
          %v2762 = vld [vmem:[#allocation32 + $0xc] sm:$0xf]
          %v2763 = vld [vmem:[#allocation32 + $0x10] sm:$0xf]
          %v2764 = vld [vmem:[#allocation32 + $0x14] sm:$0xf]
          %v2765 = vld [vmem:[#allocation32 + $0x18] sm:$0xf]
          %v2766 = vld [vmem:[#allocation32 + $0x1c] sm:$0xf]
          %v2767 = vld [vmem:[#allocation32 + $0x20] sm:$0xf]
          %v2768 = vld [vmem:[#allocation32 + $0x24] sm:$0xf]
          %v2769 = vld [vmem:[#allocation32 + $0x28] sm:$0xf]
          %v2770 = vld [vmem:[#allocation32 + $0x2c] sm:$0xf]
          %v2771 = vld [vmem:[#allocation32 + $0x30] sm:$0xf]
          %v2772 = vld [vmem:[#allocation32 + $0x34] sm:$0xf]
          %v2773 = vld [vmem:[#allocation32 + $0x38] sm:$0xf]
          %v2774 = vld [vmem:[#allocation32 + $0x3c] sm:$0xf]
          %v2775 = vld [vmem:[#allocation33] sm:$0x1]
          %v2777 = vlaneseq
          %v2778 = vshrl.u32 %v2777, 7
          %v2779 = vsub.s32 0, %v2778
          %v2780 = vrot.slane %v2775, %v2779
          %v2798 = vunpack.c.l.b16 %v2759
          %v2799 = vunpack.c.l.b16 %v2760
          %v2800 = vunpack.c.l.b16 %v2761
          %v2801 = vunpack.c.l.b16 %v2762
          %v2802 = vunpack.c.l.b16 %v2763
          %v2803 = vunpack.c.l.b16 %v2764
          %v2804 = vunpack.c.l.b16 %v2765
          %v2805 = vunpack.c.l.b16 %v2766
          %v2806 = vunpack.c.l.b16 %v2767
          %v2807 = vunpack.c.l.b16 %v2768
          %v2808 = vunpack.c.l.b16 %v2769
          %v2809 = vunpack.c.l.b16 %v2770
          %v2810 = vunpack.c.l.b16 %v2771
          %v2811 = vunpack.c.l.b16 %v2772
          %v2812 = vunpack.c.l.b16 %v2773
          %v2813 = vunpack.c.l.b16 %v2774
          %v2814 = vpack.c.b16 %v2799, %v2798
          %v2815 = vpack.c.b16 %v2801, %v2800
          %v2816 = vpack.c.b16 %v2803, %v2802
          %v2817 = vpack.c.b16 %v2805, %v2804
          %v2818 = vpack.c.b16 %v2807, %v2806
          %v2819 = vpack.c.b16 %v2809, %v2808
          %v2820 = vpack.c.b16 %v2811, %v2810
          %v2821 = vpack.c.b16 %v2813, %v2812
          %2830 = vmatprep.subr.bf16.mxu0 0
          %2831 = vmatpush1.bf16.msra.mxu0 %v2814
          %2832 = vmatprep.subr.bf16.mxu0 0
          %2833 = vmatpush1.bf16.msra.mxu0 %v2815
          %2834 = vmatprep.subr.bf16.mxu0 0
          %2835 = vmatpush1.bf16.msra.mxu0 %v2816
          %2836 = vmatprep.subr.bf16.mxu0 0
          %2837 = vmatpush1.bf16.msra.mxu0 %v2817
          %2838 = vmatprep.subr.bf16.mxu0 0
          %2839 = vmatpush1.bf16.msra.mxu0 %v2818
          %2840 = vmatprep.subr.bf16.mxu0 0
          %2841 = vmatpush1.bf16.msra.mxu0 %v2819
          %2842 = vmatprep.subr.bf16.mxu0 0
          %2843 = vmatpush1.bf16.msra.mxu0 %v2820
          %2844 = vmatprep.subr.bf16.mxu0 0
          %2845 = vmatpush1.bf16.msra.mxu0 %v2821
          %2846 = vmatprep.subr.bf16.mxu0 0
          %2847 = vmatpush1.bf16.msra.mxu0 0
          %2848 = vmatprep.subr.bf16.mxu0 0
          %2849 = vmatpush1.bf16.msra.mxu0 0
          %2850 = vmatprep.subr.bf16.mxu0 0
          %2851 = vmatpush1.bf16.msra.mxu0 0
          %2852 = vmatprep.subr.bf16.mxu0 0
          %2853 = vmatpush1.bf16.msra.mxu0 0
          %2854 = vmatprep.subr.bf16.mxu0 0
          %2855 = vmatpush1.bf16.msra.mxu0 0
          %2856 = vmatprep.subr.bf16.mxu0 0
          %2857 = vmatpush1.bf16.msra.mxu0 0
          %2858 = vmatprep.subr.bf16.mxu0 0
          %2859 = vmatpush1.bf16.msra.mxu0 0
          %2860 = vmatprep.subr.bf16.mxu0 0
          %2861 = vmatpush1.bf16.msra.mxu0 0
          %2862 = vmatprep.mubr.bf16.mxu0 0
          %2863 = vmatmul.mubr.bf16.gmra.mrb[0].mxu0 %v2758
          %v2864 = vpop.f32.mrb[0].mxu0
          %v2865 = vadd.f32 %v2780, %v2864
          %v2866 = vpop.f32.mrb[0].mxu0
          %v2867 = vpop.f32.mrb[0].mxu0
          %v2868 = vpop.f32.mrb[0].mxu0
          %2869 = vdwg.mxu0
          %v2870 = vadd.f32 %v2689, %v2865
          %v2871 = vld [vmem:[#allocation35] sm:$0x1]
          %v2872 = vld [vmem:[#allocation36] sm:$0x1]
          %v2873 = vsel %vm2615, %v2870, 0.0
          %2874 = vadd.xlane.f32.xlu0 %v2873
          %v2875 = vpop.xlane.xlu0 %2874
          %v2876 = vmul.f32 %v2875, %v2665
          %v2877 = vsub.f32 %v2870, %v2876
          %v2878 = vmul.f32 %v2877, %v2877
          %v2879 = vsel %vm2615, %v2878, 0.0
          %2880 = vadd.xlane.f32.xlu0 %v2879
          %v2881 = vpop.xlane.xlu0 %2880
          %v2882 = vmul.f32 %v2881, %v2665
          %v2883 = vadd.f32 %v2882, 1e-12
          %v2884 = vrsqrt.pop %v2883
          %v2885 = vmul.f32 %v2877, %v2884
          %v2887 = vlaneseq
          %v2888 = vshrl.u32 %v2887, 7
          %v2889 = vsub.s32 0, %v2888
          %v2890 = vrot.slane %v2871, %v2889
          %v2892 = vmul.f32 %v2885, %v2890
          %v2894 = vlaneseq
          %v2895 = vshrl.u32 %v2894, 7
          %v2896 = vsub.s32 0, %v2895
          %v2897 = vrot.slane %v2872, %v2896
          %v2899 = vadd.f32 %v2892, %v2897
          %2900 = vst.msk [vmem:[%s992] sm:$0xff] %vm2615, %v2899
        $region188: #{memorizing_transformer_forward.11} parent=99 // pred_fallthru
          _
        %s2901 = sand.u32 %s529, 1
        %s2902 = scalar_lea.sflag [#allocation8], %s2901
        %s2903 = sand.u32 %s529, 1
        %s2904 = smul.addr %s2903, 8
        %s2905 = scalar_lea.vmem [#allocation38], %s2904
        // Predicated region
        $region189: #{memorizing_transformer_forward.11} parent=99 // pred_check
          %p2906 = pneg %p539
        $region190: #{memorizing_transformer_forward.11} parent=99 // pred_check_branch
          %2908 = sbr.rel (%p2906) target = $region192
        $region191: #{memorizing_transformer_forward.11} parent=99 // pred_region
          %s2910 = ssub.s32 128, 128
          %2911 = vsyncadd %s2902, %s2910
          %s2912 = sadd.s32 %s55, %s54
          %s2913 = smul.addr %s2912, 128
          %s2914 = scalar_lea.hbm %s20, %s2913
          %s2916 = sshll.u32 %s2905, 4
          %s2917 = int_to_ptr.vmem [resolvable:$true] %s2916
          %2919 = dma.vmem_to_hbm [thread:$0]  %s2917, 128, %s2914, %s2902
        $region192: #{memorizing_transformer_forward.11} parent=99 // pred_fallthru
          _
      $region100: #{memorizing_transformer_forward.11} parent=5 // pred_fallthru
        _
      %p2920 = scmp.le.s32.totalorder 2, %s44
      // Predicated region
      $region193: #{memorizing_transformer_forward.11} parent=5 // pred_check
        %p2921 = pneg %p2920
      $region194: #{memorizing_transformer_forward.11} parent=5 // pred_check_branch
        %2923 = sbr.rel (%p2921) target = $region196
      $region195: #{memorizing_transformer_forward.11} parent=5 // pred_region
        %s2924 = ssub.s32 %s44, 2
        // Predicated region
        $region197: #{memorizing_transformer_forward.11} parent=195 // pred_check
          %p2925 = pneg %p545
        $region198: #{memorizing_transformer_forward.11} parent=195 // pred_check_branch
          %2927 = sbr.rel (%p2925) target = $region200
        $region199: #{memorizing_transformer_forward.11} parent=195 // pred_region
          %s2928 = sand.u32 %s530, 1
          %s2929 = scalar_lea.sflag [#allocation8], %s2928
          %s2930 = sand.u32 %s530, 1
          %s2931 = smul.addr %s2930, 8
          %s2932 = scalar_lea.vmem [#allocation38], %s2931
          %2933 = dma.done %s2929, 128
        $region200: #{memorizing_transformer_forward.11} parent=195 // pred_fallthru
          _
      $region196: #{memorizing_transformer_forward.11} parent=5 // pred_fallthru
        _
    $region6: #{memorizing_transformer_forward.11} parent=1 // loop_footer
      %s48 = sadd.s32 1, %s44
    $region7: #{memorizing_transformer_forward.11} parent=1 // loop_footer_branch
      %43 = sbr.rel target = $region3
    $region8: #{memorizing_transformer_forward.11} parent=1 // loop_exit
      _
    %2934 = vsyncpa [#allocation7], 1
    %s2935 = scalar_lea.sflag [#allocation7], 1
    %2936 = vsyncpa %s2935, 1
    %2937 = vsyncpa [#allocation10], 1
    %s2938 = scalar_lea.sflag [#allocation10], 1
    %2939 = vsyncpa %s2938, 1
    %2940 = vsyncpa [#allocation13], 1
    %2941 = vsyncpa [#allocation16], 1
    %2942 = vsyncpa [#allocation19], 1
    %2943 = vsyncpa [#allocation22], 1
    %2944 = vsyncpa [#allocation25], 1
    %2945 = vsyncpa [#allocation28], 1
    %2946 = vsyncpa [#allocation31], 1
    %2947 = vsyncpa [#allocation34], 1
    %2948 = vsyncpa [#allocation37], 1
    %2949 = vsyncpa [#allocation8], 1
    %s2950 = scalar_lea.sflag [#allocation8], 1
    %2951 = vsyncpa %s2950, 1

</llo_original>
